<compile_context>
chip_gen: v6e
topology: v6e:2x2x1
jax: 0.10.0
libtpu: 0.0.40
codegen_flags: <defaults>
</compile_context>

<pallas_src>
import functools

import jax
import jax.numpy as jnp
from jax.experimental import pallas as pl
from jax.experimental.pallas import tpu as pltpu

# "opt" values (deterministic, in-script):
TANH_CONSTANT = 150.0
PADDING_TYPE = "reflect"   # opt.padding_type

# Preferred tile sizes (safe on v5e/v6e/v7x VMEM budgets).
TM_PREF = 256
TK_PREF = 512
TN_PREF = 256


def _round_up(x, m):
    return (x + m - 1) // m * m


def _pick_tile(dim, pref):
    """Lane-aligned tile (multiple of 128, <= pref) minimizing padding."""
    dp = _round_up(dim, 128)
    if dp <= pref:
        return dp
    best_t, best_waste = 128, None
    for t in range(pref, 0, -128):
        waste = _round_up(dp, t) - dp
        if best_waste is None or waste < best_waste:
            best_t, best_waste = t, waste
        if waste == 0:
            break
    return best_t


# --------------------------- fused matmul kernel --------------------------- #
def _mm_kernel(a_ref, b_ref, bias_ref, *rest, act, scale, has_res):
    if has_res:
        res_ref, o_ref, acc_ref = rest
    else:
        o_ref, acc_ref = rest
        res_ref = None

    @pl.when(pl.program_id(2) == 0)
    def _():
        acc_ref[...] = jnp.zeros_like(acc_ref)

    acc_ref[...] += jnp.dot(a_ref[...], b_ref[...],
                            preferred_element_type=jnp.float32)

    @pl.when(pl.program_id(2) == pl.num_programs(2) - 1)
    def _():
        acc = acc_ref[...] + bias_ref[...]
        if act == "relu":
            acc = jnp.maximum(acc, 0.0)
        elif act == "tanh":
            acc = jnp.tanh(acc)
        if scale != 1.0:
            acc = acc * scale
        if has_res:
            acc = acc + res_ref[...]
        o_ref[...] = acc.astype(o_ref.dtype)


def fused_matmul(a, w_p, bias_p, n_valid, act="none", scale=1.0, residual=None):
    """A[M,K] (f32) @ pre-packed W[Kp,Np] (bf16) + bias, fused epilogue."""
    M, K = a.shape
    Kp, Np = w_p.shape
    tk = _pick_tile(K, TK_PREF)
    tn = _pick_tile(Np, TN_PREF)
    assert Kp == _round_up(K, tk) and Np % tn == 0
    tm = min(TM_PREF, _round_up(M, 16))          # 16: bf16 sublane tile
    Mp = _round_up(M, tm)

    a_p = jnp.pad(a.astype(jnp.bfloat16), ((0, Mp - M), (0, Kp - K)))

    in_specs = [
        pl.BlockSpec((tm, tk), lambda i, j, k: (i, k)),
        pl.BlockSpec((tk, tn), lambda i, j, k: (k, j)),
        pl.BlockSpec((1, tn), lambda i, j, k: (0, j)),
    ]
    inputs = [a_p, w_p, bias_p]
    has_res = residual is not None
    if has_res:
        r_p = jnp.pad(residual.astype(jnp.float32),
                      ((0, Mp - M), (0, Np - n_valid)))
        in_specs.append(pl.BlockSpec((tm, tn), lambda i, j, k: (i, j)))
        inputs.append(r_p)

    grid = (Mp // tm, Np // tn, Kp // tk)
    flops = 2 * Mp * Np * Kp
    bytes_accessed = (a_p.size * 2 * grid[1] + w_p.size * 2 * grid[0]
                      + bias_p.size * 4
                      + Mp * Np * 4 * (2 if has_res else 1))

    out = pl.pallas_call(
        functools.partial(_mm_kernel, act=act, scale=float(scale),
                          has_res=has_res),
        out_shape=jax.ShapeDtypeStruct((Mp, Np), jnp.float32),
        grid=grid,
        in_specs=in_specs,
        out_specs=pl.BlockSpec((tm, tn), lambda i, j, k: (i, j)),
        scratch_shapes=[pltpu.VMEM((tm, tn), jnp.float32)],
        compiler_params=pltpu.CompilerParams(
            dimension_semantics=("parallel", "parallel", "arbitrary")),
        cost_estimate=pl.CostEstimate(
            flops=flops,
            transcendentals=(Mp * Np if act == "tanh" else 0),
            bytes_accessed=bytes_accessed),
    )(*inputs)
    return out[:M, :n_valid]


# ------------------------------ conv lowering ------------------------------ #
def _im2col_nhwc(x, kh, kw, stride):
    n, h, w, c = x.shape
    ho = (h - kh) // stride + 1
    wo = (w - kw) // stride + 1
    cols = []
    for i in range(kh):
        for j in range(kw):
            cols.append(x[:, i:i + stride * ho:stride,
                          j:j + stride * wo:stride, :])
    p = jnp.concatenate(cols, axis=-1)          # (n, ho, wo, kh*kw*c), tap-major
    return p.reshape(n * ho * wo, kh * kw * c), (n, ho, wo)


def conv2d_nhwc(x, layer, stride=1, zero_pad=0, pad_mode=None,
                act="none", scale=1.0, residual=None):
    kh, kw, cout = layer["kh"], layer["kw"], layer["N"]
    if pad_mode in ("reflect", "replicate"):
        p = (kh - 1) // 2
        mode = "reflect" if pad_mode == "reflect" else "edge"
        x = jnp.pad(x, ((0, 0), (p, p), (p, p), (0, 0)), mode=mode)
    elif pad_mode == "none":
        p = (kh - 1) // 2
        if p:
            x = jnp.pad(x, ((0, 0), (p, p), (p, p), (0, 0)))
    elif zero_pad:
        x = jnp.pad(x, ((0, 0), (zero_pad, zero_pad),
                        (zero_pad, zero_pad), (0, 0)))
    a, (n, ho, wo) = _im2col_nhwc(x, kh, kw, stride)
    res = residual.reshape(n * ho * wo, cout) if residual is not None else None
    out = fused_matmul(a, layer["w"], layer["b"], cout,
                       act=act, scale=scale, residual=res)
    return out.reshape(n, ho, wo, cout)


def conv_transpose2d_nhwc(x, layer):
    """ConvTranspose2d(k=3, stride=2, pad=1, out_pad=1), sub-pixel phases."""
    n, h, w, cin = x.shape
    cout = layer["N"]
    # Shifted taps; out-of-range taps are zero (matches transposed-conv edges).
    x01 = jnp.pad(x, ((0, 0), (0, 0), (0, 1), (0, 0)))[:, :, 1:, :]   # (i, j+1)
    x10 = jnp.pad(x, ((0, 0), (0, 1), (0, 0), (0, 0)))[:, 1:, :, :]   # (i+1, j)
    x11 = jnp.pad(x, ((0, 0), (0, 1), (0, 1), (0, 0)))[:, 1:, 1:, :]  # (i+1, j+1)
    m = n * h * w
    a_phase = [
        x.reshape(m, cin),
        jnp.concatenate([x, x01], axis=-1).reshape(m, 2 * cin),
        jnp.concatenate([x, x10], axis=-1).reshape(m, 2 * cin),
        jnp.concatenate([x, x01, x10, x11], axis=-1).reshape(m, 4 * cin),
    ]
    ys = [fused_matmul(a, ph["w"], ph["b"], cout)
          for a, ph in zip(a_phase, layer["phases"])]
    out = jnp.zeros((n, 2 * h, 2 * w, cout), jnp.float32)
    out = out.at[:, 0::2, 0::2, :].set(ys[0].reshape(n, h, w, cout))
    out = out.at[:, 0::2, 1::2, :].set(ys[1].reshape(n, h, w, cout))
    out = out.at[:, 1::2, 0::2, :].set(ys[2].reshape(n, h, w, cout))
    out = out.at[:, 1::2, 1::2, :].set(ys[3].reshape(n, h, w, cout))
    return out


# ------------------------------- parameters -------------------------------- #
def init_params(key):
    def conv_p(k, cout, cin, ksz):
        k1, k2 = jax.random.split(k)
        fan = cin * ksz * ksz
        w = jax.random.normal(k1, (cout, cin, ksz, ksz), jnp.float32) / jnp.sqrt(fan)
        b = jax.random.normal(k2, (cout,), jnp.float32) * 0.01
        return w, b

    def convt_p(k, cin, cout, ksz):
        k1, k2 = jax.random.split(k)
        fan = cin * ksz * ksz
        w = jax.random.normal(k1, (cin, cout, ksz, ksz), jnp.float32) / jnp.sqrt(fan)
        b = jax.random.normal(k2, (cout,), jnp.float32) * 0.01
        return w, b

    keys = jax.random.split(key, 16)
    params = {
        "conv_1": conv_p(keys[0], 32, 3, 9),
        "down1": conv_p(keys[1], 64, 32, 3),
        "down2": conv_p(keys[2], 128, 64, 3),
        "up1": convt_p(keys[13], 128, 64, 3),
        "up2": convt_p(keys[14], 64, 32, 3),
        "conv_2": conv_p(keys[15], 3, 32, 9),
    }
    for i in range(5):
        params[f"res{i + 1}_c1"] = conv_p(keys[3 + 2 * i], 128, 128, 3)
        params[f"res{i + 1}_c2"] = conv_p(keys[4 + 2 * i], 128, 128, 3)
    return params


def _pack_matmul(wmat, bias):
    """Pad (K,N) weight to lane-aligned (Kp,Np) bf16, bias to (1,Np) f32."""
    K, N = wmat.shape
    tk = _pick_tile(K, TK_PREF)
    tn = _pick_tile(N, TN_PREF)
    Kp, Np = _round_up(K, tk), _round_up(N, tn)
    w_p = jnp.zeros((Kp, Np), jnp.bfloat16).at[:K, :N].set(
        wmat.astype(jnp.bfloat16))
    b_p = jnp.zeros((1, Np), jnp.float32).at[0, :N].set(
        bias.astype(jnp.float32))
    return w_p, b_p


# Sub-pixel phase taps for ConvTranspose(3, s=2, p=1, op=1), as (u,v) indices
# into the equivalent (flipped) conv kernel, matching the A-concat tap order
# [(i,j)], [(i,j),(i,j+1)], [(i,j),(i+1,j)], [(i,j),(i,j+1),(i+1,j),(i+1,j+1)].
_PHASE_TAPS = ([(1, 1)],
               [(1, 0), (1, 2)],
               [(0, 1), (2, 1)],
               [(0, 0), (0, 2), (2, 0), (2, 2)])


def pack_params(params):
    packed = {}
    conv_names = ["conv_1", "down1", "down2", "conv_2"] + \
                 [f"res{i + 1}_c{j}" for i in range(5) for j in (1, 2)]
    for name in conv_names:
        w, b = params[name]
        cout, cin, kh, kw = w.shape
        # tap-major, channel-minor K layout to match _im2col_nhwc
        wmat = w.transpose(2, 3, 1, 0).reshape(kh * kw * cin, cout)
        w_p, b_p = _pack_matmul(wmat, b)
        packed[name] = {"w": w_p, "b": b_p, "N": cout, "kh": kh, "kw": kw}
    for name in ("up1", "up2"):
        w_t, b = params[name]
        cin, cout, kh, kw = w_t.shape
        w_eq = jnp.flip(w_t, axis=(2, 3)).transpose(1, 0, 2, 3)  # (cout,cin,3,3)
        phases = []
        for taps in _PHASE_TAPS:
            wmat = jnp.concatenate([w_eq[:, :, u, v].T for (u, v) in taps],
                                   axis=0)
            w_p, b_p = _pack_matmul(wmat, b)
            phases.append({"w": w_p, "b": b_p})
        packed[name] = {"phases": phases, "N": cout}
    return packed


# -------------------------------- forward ---------------------------------- #
def artistic_net_forward(packed, x_nchw):
    x = x_nchw.transpose(0, 2, 3, 1)               # NCHW -> NHWC internally
    h = conv2d_nhwc(x, packed["conv_1"], stride=1, pad_mode=PADDING_TYPE)
    h = conv2d_nhwc(h, packed["down1"], stride=2, zero_pad=1)
    h = conv2d_nhwc(h, packed["down2"], stride=2, zero_pad=1)
    for i in range(5):
        # TODO(synk): ResBlock class not provided in the source; assumed the
        # standard Johnson-style block conv3x3 -> ReLU -> conv3x3 -> skip add
        # (module padding_type, no normalization). Skip-add is fused into the
        # second conv's Pallas epilogue.
        r = conv2d_nhwc(h, packed[f"res{i + 1}_c1"],
                        pad_mode=PADDING_TYPE, act="relu")
        h = conv2d_nhwc(r, packed[f"res{i + 1}_c2"],
                        pad_mode=PADDING_TYPE, residual=h)
    h = conv_transpose2d_nhwc(h, packed["up1"])
    h = conv_transpose2d_nhwc(h, packed["up2"])
    # final conv + tanh + * tanh_constant fused into the Pallas epilogue
    h = conv2d_nhwc(h, packed["conv_2"], stride=1, pad_mode=PADDING_TYPE,
                    act="tanh", scale=TANH_CONSTANT)
    return h.transpose(0, 3, 1, 2)                 # back to NCHW


if __name__ == "__main__":
    key = jax.random.PRNGKey(0)
    pkey, xkey = jax.random.split(key)
    params = init_params(pkey)
    packed = pack_params(params)                   # pack/pad/cast weights once
    x = jax.random.normal(xkey, (2, 3, 16, 16), jnp.float32)   # NCHW

    fwd = jax.jit(lambda inp: artistic_net_forward(packed, inp))
    y = jax.block_until_ready(fwd(x))
    assert y.shape == (2, 3, 16, 16), y.shape
    assert bool(jnp.all(jnp.isfinite(y)))
    print("KERNEL_OK")
</pallas_src>

<mosaic_0001>
module attributes {stable_mosaic.version = 11 : i64} {
  func.func @_mm_kernel(%arg0: i32, %arg1: i32, %arg2: i32, %arg3: memref<256x256xbf16, #tpu.memory_space<vmem>>, %arg4: memref<256x128xbf16, #tpu.memory_space<vmem>>, %arg5: memref<1x128xf32, #tpu.memory_space<vmem>>, %arg6: memref<256x128xf32, #tpu.memory_space<vmem>>, %arg7: memref<256x128xf32, #tpu.memory_space<vmem>>) attributes {dimension_semantics = [#tpu.dimension_semantics<parallel>, #tpu.dimension_semantics<parallel>, #tpu.dimension_semantics<arbitrary>], iteration_bounds = array<i64: 2, 1, 1>, scalar_prefetch = 0 : i64, scratch_operands = 1 : i64, tpu.core_type = #tpu.core_type<tc>, window_params = [{transform_indices = @transform_0, window_bounds = array<i64: 256, 256>}, {transform_indices = @transform_1, window_bounds = array<i64: 256, 128>}, {transform_indices = @transform_2, window_bounds = array<i64: 1, 128>}, {transform_indices = @transform_3, window_bounds = array<i64: 256, 128>}]} {
    %c0_i32 = arith.constant 0 : i32
    %0 = arith.cmpi eq, %arg2, %c0_i32 : i32
    %1 = arith.extui %0 : i1 to i32
    %c0_i32_0 = arith.constant 0 : i32
    %2 = arith.cmpi ne, %1, %c0_i32_0 : i32
    scf.if %2 {
      %cst_10 = arith.constant 0.000000e+00 : f32
      %12 = vector.broadcast %cst_10 : f32 to vector<256x128xf32>
      %c0_11 = arith.constant 0 : index
      %c0_12 = arith.constant 0 : index
      %13 = vector.load %arg7[%c0_11, %c0_12] : memref<256x128xf32, #tpu.memory_space<vmem>>, vector<256x128xf32>
      tpu.vector_store %arg7[%c0_11, %c0_12], %12 {strides = array<i32>} : memref<256x128xf32, #tpu.memory_space<vmem>>, vector<256x128xf32>,
    } else {
    }
    %c0 = arith.constant 0 : index
    %c0_1 = arith.constant 0 : index
    %3 = vector.load %arg7[%c0, %c0_1] : memref<256x128xf32, #tpu.memory_space<vmem>>, vector<256x128xf32>
    %c0_2 = arith.constant 0 : index
    %c0_3 = arith.constant 0 : index
    %4 = vector.load %arg3[%c0_2, %c0_3] : memref<256x256xbf16, #tpu.memory_space<vmem>>, vector<256x256xbf16>
    %c0_4 = arith.constant 0 : index
    %c0_5 = arith.constant 0 : index
    %5 = vector.load %arg4[%c0_4, %c0_5] : memref<256x128xbf16, #tpu.memory_space<vmem>>, vector<256x128xbf16>
    %cst = arith.constant dense<0.000000e+00> : vector<256x128xf32>
    %6 = tpu.matmul %4, %5, %cst {dimension_numbers = #tpu.dot_dimension_numbers<[1], [0], [0], [1], [0, 0, 1, 1], [], []>} : vector<256x256xbf16>, vector<256x128xbf16>, vector<256x128xf32> -> vector<256x128xf32>
    %7 = arith.addf %3, %6 : vector<256x128xf32>
    %c0_6 = arith.constant 0 : index
    %c0_7 = arith.constant 0 : index
    %8 = vector.load %arg7[%c0_6, %c0_7] : memref<256x128xf32, #tpu.memory_space<vmem>>, vector<256x128xf32>
    tpu.vector_store %arg7[%c0_6, %c0_7], %7 {strides = array<i32>} : memref<256x128xf32, #tpu.memory_space<vmem>>, vector<256x128xf32>,
    %c0_i32_8 = arith.constant 0 : i32
    %9 = arith.cmpi eq, %arg2, %c0_i32_8 : i32
    %10 = arith.extui %9 : i1 to i32
    %c0_i32_9 = arith.constant 0 : i32
    %11 = arith.cmpi ne, %10, %c0_i32_9 : i32
    scf.if %11 {
      %c0_10 = arith.constant 0 : index
      %c0_11 = arith.constant 0 : index
      %12 = vector.load %arg7[%c0_10, %c0_11] : memref<256x128xf32, #tpu.memory_space<vmem>>, vector<256x128xf32>
      %c0_12 = arith.constant 0 : index
      %c0_13 = arith.constant 0 : index
      %13 = vector.load %arg5[%c0_12, %c0_13] : memref<1x128xf32, #tpu.memory_space<vmem>>, vector<1x128xf32>
      %14 = vector.broadcast %13 : vector<1x128xf32> to vector<256x128xf32>
      %15 = arith.addf %12, %14 : vector<256x128xf32>
      %c0_14 = arith.constant 0 : index
      %c0_15 = arith.constant 0 : index
      %16 = vector.load %arg6[%c0_14, %c0_15] : memref<256x128xf32, #tpu.memory_space<vmem>>, vector<256x128xf32>
      tpu.vector_store %arg6[%c0_14, %c0_15], %15 {strides = array<i32>} : memref<256x128xf32, #tpu.memory_space<vmem>>, vector<256x128xf32>,
    } else {
    }
    return
  }
  func.func @transform_0(%arg0: i32, %arg1: i32, %arg2: i32) -> (i32, i32) {
    %c0_i32 = arith.constant 0 : i32
    return %arg0, %arg2 : i32, i32
  }
  func.func @transform_1(%arg0: i32, %arg1: i32, %arg2: i32) -> (i32, i32) {
    %c0_i32 = arith.constant 0 : i32
    return %arg2, %arg1 : i32, i32
  }
  func.func @transform_2(%arg0: i32, %arg1: i32, %arg2: i32) -> (i32, i32) {
    %c0_i32 = arith.constant 0 : i32
    %c0_i32_0 = arith.constant 0 : i32
    return %c0_i32, %arg1 : i32, i32
  }
  func.func @transform_3(%arg0: i32, %arg1: i32, %arg2: i32) -> (i32, i32) {
    %c0_i32 = arith.constant 0 : i32
    return %arg0, %arg1 : i32, i32
  }
}

module attributes {stable_mosaic.version = 11 : i64} {
  func.func @_mm_kernel(%arg0: i32, %arg1: i32, %arg2: i32, %arg3: memref<128x384xbf16, #tpu.memory_space<vmem>>, %arg4: memref<384x128xbf16, #tpu.memory_space<vmem>>, %arg5: memref<1x128xf32, #tpu.memory_space<vmem>>, %arg6: memref<128x128xf32, #tpu.memory_space<vmem>>, %arg7: memref<128x128xf32, #tpu.memory_space<vmem>>) attributes {dimension_semantics = [#tpu.dimension_semantics<parallel>, #tpu.dimension_semantics<parallel>, #tpu.dimension_semantics<arbitrary>], iteration_bounds = array<i64: 1, 1, 1>, scalar_prefetch = 0 : i64, scratch_operands = 1 : i64, tpu.core_type = #tpu.core_type<tc>, window_params = [{transform_indices = @transform_0, window_bounds = array<i64: 128, 384>}, {transform_indices = @transform_1, window_bounds = array<i64: 384, 128>}, {transform_indices = @transform_2, window_bounds = array<i64: 1, 128>}, {transform_indices = @transform_3, window_bounds = array<i64: 128, 128>}]} {
    %c0_i32 = arith.constant 0 : i32
    %0 = arith.cmpi eq, %arg2, %c0_i32 : i32
    %1 = arith.extui %0 : i1 to i32
    %c0_i32_0 = arith.constant 0 : i32
    %2 = arith.cmpi ne, %1, %c0_i32_0 : i32
    scf.if %2 {
      %cst_10 = arith.constant 0.000000e+00 : f32
      %12 = vector.broadcast %cst_10 : f32 to vector<128x128xf32>
      %c0_11 = arith.constant 0 : index
      %c0_12 = arith.constant 0 : index
      %13 = vector.load %arg7[%c0_11, %c0_12] : memref<128x128xf32, #tpu.memory_space<vmem>>, vector<128x128xf32>
      tpu.vector_store %arg7[%c0_11, %c0_12], %12 {strides = array<i32>} : memref<128x128xf32, #tpu.memory_space<vmem>>, vector<128x128xf32>,
    } else {
    }
    %c0 = arith.constant 0 : index
    %c0_1 = arith.constant 0 : index
    %3 = vector.load %arg7[%c0, %c0_1] : memref<128x128xf32, #tpu.memory_space<vmem>>, vector<128x128xf32>
    %c0_2 = arith.constant 0 : index
    %c0_3 = arith.constant 0 : index
    %4 = vector.load %arg3[%c0_2, %c0_3] : memref<128x384xbf16, #tpu.memory_space<vmem>>, vector<128x384xbf16>
    %c0_4 = arith.constant 0 : index
    %c0_5 = arith.constant 0 : index
    %5 = vector.load %arg4[%c0_4, %c0_5] : memref<384x128xbf16, #tpu.memory_space<vmem>>, vector<384x128xbf16>
    %cst = arith.constant dense<0.000000e+00> : vector<128x128xf32>
    %6 = tpu.matmul %4, %5, %cst {dimension_numbers = #tpu.dot_dimension_numbers<[1], [0], [0], [1], [0, 0, 1, 1], [], []>} : vector<128x384xbf16>, vector<384x128xbf16>, vector<128x128xf32> -> vector<128x128xf32>
    %7 = arith.addf %3, %6 : vector<128x128xf32>
    %c0_6 = arith.constant 0 : index
    %c0_7 = arith.constant 0 : index
    %8 = vector.load %arg7[%c0_6, %c0_7] : memref<128x128xf32, #tpu.memory_space<vmem>>, vector<128x128xf32>
    tpu.vector_store %arg7[%c0_6, %c0_7], %7 {strides = array<i32>} : memref<128x128xf32, #tpu.memory_space<vmem>>, vector<128x128xf32>,
    %c0_i32_8 = arith.constant 0 : i32
    %9 = arith.cmpi eq, %arg2, %c0_i32_8 : i32
    %10 = arith.extui %9 : i1 to i32
    %c0_i32_9 = arith.constant 0 : i32
    %11 = arith.cmpi ne, %10, %c0_i32_9 : i32
    scf.if %11 {
      %c0_10 = arith.constant 0 : index
      %c0_11 = arith.constant 0 : index
      %12 = vector.load %arg7[%c0_10, %c0_11] : memref<128x128xf32, #tpu.memory_space<vmem>>, vector<128x128xf32>
      %c0_12 = arith.constant 0 : index
      %c0_13 = arith.constant 0 : index
      %13 = vector.load %arg5[%c0_12, %c0_13] : memref<1x128xf32, #tpu.memory_space<vmem>>, vector<1x128xf32>
      %14 = vector.broadcast %13 : vector<1x128xf32> to vector<128x128xf32>
      %15 = arith.addf %12, %14 : vector<128x128xf32>
      %c0_14 = arith.constant 0 : index
      %c0_15 = arith.constant 0 : index
      %16 = vector.load %arg6[%c0_14, %c0_15] : memref<128x128xf32, #tpu.memory_space<vmem>>, vector<128x128xf32>
      tpu.vector_store %arg6[%c0_14, %c0_15], %15 {strides = array<i32>} : memref<128x128xf32, #tpu.memory_space<vmem>>, vector<128x128xf32>,
    } else {
    }
    return
  }
  func.func @transform_0(%arg0: i32, %arg1: i32, %arg2: i32) -> (i32, i32) {
    %c0_i32 = arith.constant 0 : i32
    return %arg0, %arg2 : i32, i32
  }
  func.func @transform_1(%arg0: i32, %arg1: i32, %arg2: i32) -> (i32, i32) {
    %c0_i32 = arith.constant 0 : i32
    return %arg2, %arg1 : i32, i32
  }
  func.func @transform_2(%arg0: i32, %arg1: i32, %arg2: i32) -> (i32, i32) {
    %c0_i32 = arith.constant 0 : i32
    %c0_i32_0 = arith.constant 0 : i32
    return %c0_i32, %arg1 : i32, i32
  }
  func.func @transform_3(%arg0: i32, %arg1: i32, %arg2: i32) -> (i32, i32) {
    %c0_i32 = arith.constant 0 : i32
    return %arg0, %arg1 : i32, i32
  }
}

module attributes {stable_mosaic.version = 11 : i64} {
  func.func @_mm_kernel(%arg0: i32, %arg1: i32, %arg2: i32, %arg3: memref<32x128xbf16, #tpu.memory_space<vmem>>, %arg4: memref<128x128xbf16, #tpu.memory_space<vmem>>, %arg5: memref<1x128xf32, #tpu.memory_space<vmem>>, %arg6: memref<32x128xf32, #tpu.memory_space<vmem>>, %arg7: memref<32x128xf32, #tpu.memory_space<vmem>>) attributes {dimension_semantics = [#tpu.dimension_semantics<parallel>, #tpu.dimension_semantics<parallel>, #tpu.dimension_semantics<arbitrary>], iteration_bounds = array<i64: 1, 1, 5>, scalar_prefetch = 0 : i64, scratch_operands = 1 : i64, tpu.core_type = #tpu.core_type<tc>, window_params = [{transform_indices = @transform_0, window_bounds = array<i64: 32, 128>}, {transform_indices = @transform_1, window_bounds = array<i64: 128, 128>}, {transform_indices = @transform_2, window_bounds = array<i64: 1, 128>}, {transform_indices = @transform_3, window_bounds = array<i64: 32, 128>}]} {
    %c0_i32 = arith.constant 0 : i32
    %0 = arith.cmpi eq, %arg2, %c0_i32 : i32
    %1 = arith.extui %0 : i1 to i32
    %c0_i32_0 = arith.constant 0 : i32
    %2 = arith.cmpi ne, %1, %c0_i32_0 : i32
    scf.if %2 {
      %cst_9 = arith.constant 0.000000e+00 : f32
      %12 = vector.broadcast %cst_9 : f32 to vector<32x128xf32>
      %c0_10 = arith.constant 0 : index
      %c0_11 = arith.constant 0 : index
      %13 = vector.load %arg7[%c0_10, %c0_11] : memref<32x128xf32, #tpu.memory_space<vmem>>, vector<32x128xf32>
      tpu.vector_store %arg7[%c0_10, %c0_11], %12 {strides = array<i32>} : memref<32x128xf32, #tpu.memory_space<vmem>>, vector<32x128xf32>,
    } else {
    }
    %c0 = arith.constant 0 : index
    %c0_1 = arith.constant 0 : index
    %3 = vector.load %arg7[%c0, %c0_1] : memref<32x128xf32, #tpu.memory_space<vmem>>, vector<32x128xf32>
    %c0_2 = arith.constant 0 : index
    %c0_3 = arith.constant 0 : index
    %4 = vector.load %arg3[%c0_2, %c0_3] : memref<32x128xbf16, #tpu.memory_space<vmem>>, vector<32x128xbf16>
    %c0_4 = arith.constant 0 : index
    %c0_5 = arith.constant 0 : index
    %5 = vector.load %arg4[%c0_4, %c0_5] : memref<128x128xbf16, #tpu.memory_space<vmem>>, vector<128x128xbf16>
    %cst = arith.constant dense<0.000000e+00> : vector<32x128xf32>
    %6 = tpu.matmul %4, %5, %cst {dimension_numbers = #tpu.dot_dimension_numbers<[1], [0], [0], [1], [0, 0, 1, 1], [], []>} : vector<32x128xbf16>, vector<128x128xbf16>, vector<32x128xf32> -> vector<32x128xf32>
    %7 = arith.addf %3, %6 : vector<32x128xf32>
    %c0_6 = arith.constant 0 : index
    %c0_7 = arith.constant 0 : index
    %8 = vector.load %arg7[%c0_6, %c0_7] : memref<32x128xf32, #tpu.memory_space<vmem>>, vector<32x128xf32>
    tpu.vector_store %arg7[%c0_6, %c0_7], %7 {strides = array<i32>} : memref<32x128xf32, #tpu.memory_space<vmem>>, vector<32x128xf32>,
    %c4_i32 = arith.constant 4 : i32
    %9 = arith.cmpi eq, %arg2, %c4_i32 : i32
    %10 = arith.extui %9 : i1 to i32
    %c0_i32_8 = arith.constant 0 : i32
    %11 = arith.cmpi ne, %10, %c0_i32_8 : i32
    scf.if %11 {
      %c0_9 = arith.constant 0 : index
      %c0_10 = arith.constant 0 : index
      %12 = vector.load %arg7[%c0_9, %c0_10] : memref<32x128xf32, #tpu.memory_space<vmem>>, vector<32x128xf32>
      %c0_11 = arith.constant 0 : index
      %c0_12 = arith.constant 0 : index
      %13 = vector.load %arg5[%c0_11, %c0_12] : memref<1x128xf32, #tpu.memory_space<vmem>>, vector<1x128xf32>
      %14 = vector.broadcast %13 : vector<1x128xf32> to vector<32x128xf32>
      %15 = arith.addf %12, %14 : vector<32x128xf32>
      %c0_13 = arith.constant 0 : index
      %c0_14 = arith.constant 0 : index
      %16 = vector.load %arg6[%c0_13, %c0_14] : memref<32x128xf32, #tpu.memory_space<vmem>>, vector<32x128xf32>
      tpu.vector_store %arg6[%c0_13, %c0_14], %15 {strides = array<i32>} : memref<32x128xf32, #tpu.memory_space<vmem>>, vector<32x128xf32>,
    } else {
    }
    return
  }
  func.func @transform_0(%arg0: i32, %arg1: i32, %arg2: i32) -> (i32, i32) {
    %c0_i32 = arith.constant 0 : i32
    return %arg0, %arg2 : i32, i32
  }
  func.func @transform_1(%arg0: i32, %arg1: i32, %arg2: i32) -> (i32, i32) {
    %c0_i32 = arith.constant 0 : i32
    return %arg2, %arg1 : i32, i32
  }
  func.func @transform_2(%arg0: i32, %arg1: i32, %arg2: i32) -> (i32, i32) {
    %c0_i32 = arith.constant 0 : i32
    %c0_i32_0 = arith.constant 0 : i32
    return %c0_i32, %arg1 : i32, i32
  }
  func.func @transform_3(%arg0: i32, %arg1: i32, %arg2: i32) -> (i32, i32) {
    %c0_i32 = arith.constant 0 : i32
    return %arg0, %arg1 : i32, i32
  }
}

module attributes {stable_mosaic.version = 11 : i64} {
  func.func @_mm_kernel(%arg0: i32, %arg1: i32, %arg2: i32, %arg3: memref<32x384xbf16, #tpu.memory_space<vmem>>, %arg4: memref<384x128xbf16, #tpu.memory_space<vmem>>, %arg5: memref<1x128xf32, #tpu.memory_space<vmem>>, %arg6: memref<32x128xf32, #tpu.memory_space<vmem>>, %arg7: memref<32x128xf32, #tpu.memory_space<vmem>>) attributes {dimension_semantics = [#tpu.dimension_semantics<parallel>, #tpu.dimension_semantics<parallel>, #tpu.dimension_semantics<arbitrary>], iteration_bounds = array<i64: 1, 1, 3>, scalar_prefetch = 0 : i64, scratch_operands = 1 : i64, tpu.core_type = #tpu.core_type<tc>, window_params = [{transform_indices = @transform_0, window_bounds = array<i64: 32, 384>}, {transform_indices = @transform_1, window_bounds = array<i64: 384, 128>}, {transform_indices = @transform_2, window_bounds = array<i64: 1, 128>}, {transform_indices = @transform_3, window_bounds = array<i64: 32, 128>}]} {
    %c0_i32 = arith.constant 0 : i32
    %0 = arith.cmpi eq, %arg2, %c0_i32 : i32
    %1 = arith.extui %0 : i1 to i32
    %c0_i32_0 = arith.constant 0 : i32
    %2 = arith.cmpi ne, %1, %c0_i32_0 : i32
    scf.if %2 {
      %cst_9 = arith.constant 0.000000e+00 : f32
      %12 = vector.broadcast %cst_9 : f32 to vector<32x128xf32>
      %c0_10 = arith.constant 0 : index
      %c0_11 = arith.constant 0 : index
      %13 = vector.load %arg7[%c0_10, %c0_11] : memref<32x128xf32, #tpu.memory_space<vmem>>, vector<32x128xf32>
      tpu.vector_store %arg7[%c0_10, %c0_11], %12 {strides = array<i32>} : memref<32x128xf32, #tpu.memory_space<vmem>>, vector<32x128xf32>,
    } else {
    }
    %c0 = arith.constant 0 : index
    %c0_1 = arith.constant 0 : index
    %3 = vector.load %arg7[%c0, %c0_1] : memref<32x128xf32, #tpu.memory_space<vmem>>, vector<32x128xf32>
    %c0_2 = arith.constant 0 : index
    %c0_3 = arith.constant 0 : index
    %4 = vector.load %arg3[%c0_2, %c0_3] : memref<32x384xbf16, #tpu.memory_space<vmem>>, vector<32x384xbf16>
    %c0_4 = arith.constant 0 : index
    %c0_5 = arith.constant 0 : index
    %5 = vector.load %arg4[%c0_4, %c0_5] : memref<384x128xbf16, #tpu.memory_space<vmem>>, vector<384x128xbf16>
    %cst = arith.constant dense<0.000000e+00> : vector<32x128xf32>
    %6 = tpu.matmul %4, %5, %cst {dimension_numbers = #tpu.dot_dimension_numbers<[1], [0], [0], [1], [0, 0, 1, 1], [], []>} : vector<32x384xbf16>, vector<384x128xbf16>, vector<32x128xf32> -> vector<32x128xf32>
    %7 = arith.addf %3, %6 : vector<32x128xf32>
    %c0_6 = arith.constant 0 : index
    %c0_7 = arith.constant 0 : index
    %8 = vector.load %arg7[%c0_6, %c0_7] : memref<32x128xf32, #tpu.memory_space<vmem>>, vector<32x128xf32>
    tpu.vector_store %arg7[%c0_6, %c0_7], %7 {strides = array<i32>} : memref<32x128xf32, #tpu.memory_space<vmem>>, vector<32x128xf32>,
    %c2_i32 = arith.constant 2 : i32
    %9 = arith.cmpi eq, %arg2, %c2_i32 : i32
    %10 = arith.extui %9 : i1 to i32
    %c0_i32_8 = arith.constant 0 : i32
    %11 = arith.cmpi ne, %10, %c0_i32_8 : i32
    scf.if %11 {
      %c0_9 = arith.constant 0 : index
      %c0_10 = arith.constant 0 : index
      %12 = vector.load %arg7[%c0_9, %c0_10] : memref<32x128xf32, #tpu.memory_space<vmem>>, vector<32x128xf32>
      %c0_11 = arith.constant 0 : index
      %c0_12 = arith.constant 0 : index
      %13 = vector.load %arg5[%c0_11, %c0_12] : memref<1x128xf32, #tpu.memory_space<vmem>>, vector<1x128xf32>
      %14 = vector.broadcast %13 : vector<1x128xf32> to vector<32x128xf32>
      %15 = arith.addf %12, %14 : vector<32x128xf32>
      %cst_13 = arith.constant 0.000000e+00 : f32
      %16 = vector.broadcast %cst_13 : f32 to vector<32x128xf32>
      %17 = arith.maximumf %15, %16 : vector<32x128xf32>
      %c0_14 = arith.constant 0 : index
      %c0_15 = arith.constant 0 : index
      %18 = vector.load %arg6[%c0_14, %c0_15] : memref<32x128xf32, #tpu.memory_space<vmem>>, vector<32x128xf32>
      tpu.vector_store %arg6[%c0_14, %c0_15], %17 {strides = array<i32>} : memref<32x128xf32, #tpu.memory_space<vmem>>, vector<32x128xf32>,
    } else {
    }
    return
  }
  func.func @transform_0(%arg0: i32, %arg1: i32, %arg2: i32) -> (i32, i32) {
    %c0_i32 = arith.constant 0 : i32
    return %arg0, %arg2 : i32, i32
  }
  func.func @transform_1(%arg0: i32, %arg1: i32, %arg2: i32) -> (i32, i32) {
    %c0_i32 = arith.constant 0 : i32
    return %arg2, %arg1 : i32, i32
  }
  func.func @transform_2(%arg0: i32, %arg1: i32, %arg2: i32) -> (i32, i32) {
    %c0_i32 = arith.constant 0 : i32
    %c0_i32_0 = arith.constant 0 : i32
    return %c0_i32, %arg1 : i32, i32
  }
  func.func @transform_3(%arg0: i32, %arg1: i32, %arg2: i32) -> (i32, i32) {
    %c0_i32 = arith.constant 0 : i32
    return %arg0, %arg1 : i32, i32
  }
}

module attributes {stable_mosaic.version = 11 : i64} {
  func.func @_mm_kernel(%arg0: i32, %arg1: i32, %arg2: i32, %arg3: memref<32x384xbf16, #tpu.memory_space<vmem>>, %arg4: memref<384x128xbf16, #tpu.memory_space<vmem>>, %arg5: memref<1x128xf32, #tpu.memory_space<vmem>>, %arg6: memref<32x128xf32, #tpu.memory_space<vmem>>, %arg7: memref<32x128xf32, #tpu.memory_space<vmem>>, %arg8: memref<32x128xf32, #tpu.memory_space<vmem>>) attributes {dimension_semantics = [#tpu.dimension_semantics<parallel>, #tpu.dimension_semantics<parallel>, #tpu.dimension_semantics<arbitrary>], iteration_bounds = array<i64: 1, 1, 3>, scalar_prefetch = 0 : i64, scratch_operands = 1 : i64, tpu.core_type = #tpu.core_type<tc>, window_params = [{transform_indices = @transform_0, window_bounds = array<i64: 32, 384>}, {transform_indices = @transform_1, window_bounds = array<i64: 384, 128>}, {transform_indices = @transform_2, window_bounds = array<i64: 1, 128>}, {transform_indices = @transform_3, window_bounds = array<i64: 32, 128>}, {transform_indices = @transform_4, window_bounds = array<i64: 32, 128>}]} {
    %c0_i32 = arith.constant 0 : i32
    %0 = arith.cmpi eq, %arg2, %c0_i32 : i32
    %1 = arith.extui %0 : i1 to i32
    %c0_i32_0 = arith.constant 0 : i32
    %2 = arith.cmpi ne, %1, %c0_i32_0 : i32
    scf.if %2 {
      %cst_9 = arith.constant 0.000000e+00 : f32
      %12 = vector.broadcast %cst_9 : f32 to vector<32x128xf32>
      %c0_10 = arith.constant 0 : index
      %c0_11 = arith.constant 0 : index
      %13 = vector.load %arg8[%c0_10, %c0_11] : memref<32x128xf32, #tpu.memory_space<vmem>>, vector<32x128xf32>
      tpu.vector_store %arg8[%c0_10, %c0_11], %12 {strides = array<i32>} : memref<32x128xf32, #tpu.memory_space<vmem>>, vector<32x128xf32>,
    } else {
    }
    %c0 = arith.constant 0 : index
    %c0_1 = arith.constant 0 : index
    %3 = vector.load %arg8[%c0, %c0_1] : memref<32x128xf32, #tpu.memory_space<vmem>>, vector<32x128xf32>
    %c0_2 = arith.constant 0 : index
    %c0_3 = arith.constant 0 : index
    %4 = vector.load %arg3[%c0_2, %c0_3] : memref<32x384xbf16, #tpu.memory_space<vmem>>, vector<32x384xbf16>
    %c0_4 = arith.constant 0 : index
    %c0_5 = arith.constant 0 : index
    %5 = vector.load %arg4[%c0_4, %c0_5] : memref<384x128xbf16, #tpu.memory_space<vmem>>, vector<384x128xbf16>
    %cst = arith.constant dense<0.000000e+00> : vector<32x128xf32>
    %6 = tpu.matmul %4, %5, %cst {dimension_numbers = #tpu.dot_dimension_numbers<[1], [0], [0], [1], [0, 0, 1, 1], [], []>} : vector<32x384xbf16>, vector<384x128xbf16>, vector<32x128xf32> -> vector<32x128xf32>
    %7 = arith.addf %3, %6 : vector<32x128xf32>
    %c0_6 = arith.constant 0 : index
    %c0_7 = arith.constant 0 : index
    %8 = vector.load %arg8[%c0_6, %c0_7] : memref<32x128xf32, #tpu.memory_space<vmem>>, vector<32x128xf32>
    tpu.vector_store %arg8[%c0_6, %c0_7], %7 {strides = array<i32>} : memref<32x128xf32, #tpu.memory_space<vmem>>, vector<32x128xf32>,
    %c2_i32 = arith.constant 2 : i32
    %9 = arith.cmpi eq, %arg2, %c2_i32 : i32
    %10 = arith.extui %9 : i1 to i32
    %c0_i32_8 = arith.constant 0 : i32
    %11 = arith.cmpi ne, %10, %c0_i32_8 : i32
    scf.if %11 {
      %c0_9 = arith.constant 0 : index
      %c0_10 = arith.constant 0 : index
      %12 = vector.load %arg8[%c0_9, %c0_10] : memref<32x128xf32, #tpu.memory_space<vmem>>, vector<32x128xf32>
      %c0_11 = arith.constant 0 : index
      %c0_12 = arith.constant 0 : index
      %13 = vector.load %arg5[%c0_11, %c0_12] : memref<1x128xf32, #tpu.memory_space<vmem>>, vector<1x128xf32>
      %14 = vector.broadcast %13 : vector<1x128xf32> to vector<32x128xf32>
      %15 = arith.addf %12, %14 : vector<32x128xf32>
      %c0_13 = arith.constant 0 : index
      %c0_14 = arith.constant 0 : index
      %16 = vector.load %arg6[%c0_13, %c0_14] : memref<32x128xf32, #tpu.memory_space<vmem>>, vector<32x128xf32>
      %17 = arith.addf %15, %16 : vector<32x128xf32>
      %c0_15 = arith.constant 0 : index
      %c0_16 = arith.constant 0 : index
      %18 = vector.load %arg7[%c0_15, %c0_16] : memref<32x128xf32, #tpu.memory_space<vmem>>, vector<32x128xf32>
      tpu.vector_store %arg7[%c0_15, %c0_16], %17 {strides = array<i32>} : memref<32x128xf32, #tpu.memory_space<vmem>>, vector<32x128xf32>,
    } else {
    }
    return
  }
  func.func @transform_0(%arg0: i32, %arg1: i32, %arg2: i32) -> (i32, i32) {
    %c0_i32 = arith.constant 0 : i32
    return %arg0, %arg2 : i32, i32
  }
  func.func @transform_1(%arg0: i32, %arg1: i32, %arg2: i32) -> (i32, i32) {
    %c0_i32 = arith.constant 0 : i32
    return %arg2, %arg1 : i32, i32
  }
  func.func @transform_2(%arg0: i32, %arg1: i32, %arg2: i32) -> (i32, i32) {
    %c0_i32 = arith.constant 0 : i32
    %c0_i32_0 = arith.constant 0 : i32
    return %c0_i32, %arg1 : i32, i32
  }
  func.func @transform_3(%arg0: i32, %arg1: i32, %arg2: i32) -> (i32, i32) {
    %c0_i32 = arith.constant 0 : i32
    return %arg0, %arg1 : i32, i32
  }
  func.func @transform_4(%arg0: i32, %arg1: i32, %arg2: i32) -> (i32, i32) {
    %c0_i32 = arith.constant 0 : i32
    return %arg0, %arg1 : i32, i32
  }
}

module attributes {stable_mosaic.version = 11 : i64} {
  func.func @_mm_kernel(%arg0: i32, %arg1: i32, %arg2: i32, %arg3: memref<32x128xbf16, #tpu.memory_space<vmem>>, %arg4: memref<128x128xbf16, #tpu.memory_space<vmem>>, %arg5: memref<1x128xf32, #tpu.memory_space<vmem>>, %arg6: memref<32x128xf32, #tpu.memory_space<vmem>>, %arg7: memref<32x128xf32, #tpu.memory_space<vmem>>) attributes {dimension_semantics = [#tpu.dimension_semantics<parallel>, #tpu.dimension_semantics<parallel>, #tpu.dimension_semantics<arbitrary>], iteration_bounds = array<i64: 1, 1, 1>, scalar_prefetch = 0 : i64, scratch_operands = 1 : i64, tpu.core_type = #tpu.core_type<tc>, window_params = [{transform_indices = @transform_0, window_bounds = array<i64: 32, 128>}, {transform_indices = @transform_1, window_bounds = array<i64: 128, 128>}, {transform_indices = @transform_2, window_bounds = array<i64: 1, 128>}, {transform_indices = @transform_3, window_bounds = array<i64: 32, 128>}]} {
    %c0_i32 = arith.constant 0 : i32
    %0 = arith.cmpi eq, %arg2, %c0_i32 : i32
    %1 = arith.extui %0 : i1 to i32
    %c0_i32_0 = arith.constant 0 : i32
    %2 = arith.cmpi ne, %1, %c0_i32_0 : i32
    scf.if %2 {
      %cst_10 = arith.constant 0.000000e+00 : f32
      %12 = vector.broadcast %cst_10 : f32 to vector<32x128xf32>
      %c0_11 = arith.constant 0 : index
      %c0_12 = arith.constant 0 : index
      %13 = vector.load %arg7[%c0_11, %c0_12] : memref<32x128xf32, #tpu.memory_space<vmem>>, vector<32x128xf32>
      tpu.vector_store %arg7[%c0_11, %c0_12], %12 {strides = array<i32>} : memref<32x128xf32, #tpu.memory_space<vmem>>, vector<32x128xf32>,
    } else {
    }
    %c0 = arith.constant 0 : index
    %c0_1 = arith.constant 0 : index
    %3 = vector.load %arg7[%c0, %c0_1] : memref<32x128xf32, #tpu.memory_space<vmem>>, vector<32x128xf32>
    %c0_2 = arith.constant 0 : index
    %c0_3 = arith.constant 0 : index
    %4 = vector.load %arg3[%c0_2, %c0_3] : memref<32x128xbf16, #tpu.memory_space<vmem>>, vector<32x128xbf16>
    %c0_4 = arith.constant 0 : index
    %c0_5 = arith.constant 0 : index
    %5 = vector.load %arg4[%c0_4, %c0_5] : memref<128x128xbf16, #tpu.memory_space<vmem>>, vector<128x128xbf16>
    %cst = arith.constant dense<0.000000e+00> : vector<32x128xf32>
    %6 = tpu.matmul %4, %5, %cst {dimension_numbers = #tpu.dot_dimension_numbers<[1], [0], [0], [1], [0, 0, 1, 1], [], []>} : vector<32x128xbf16>, vector<128x128xbf16>, vector<32x128xf32> -> vector<32x128xf32>
    %7 = arith.addf %3, %6 : vector<32x128xf32>
    %c0_6 = arith.constant 0 : index
    %c0_7 = arith.constant 0 : index
    %8 = vector.load %arg7[%c0_6, %c0_7] : memref<32x128xf32, #tpu.memory_space<vmem>>, vector<32x128xf32>
    tpu.vector_store %arg7[%c0_6, %c0_7], %7 {strides = array<i32>} : memref<32x128xf32, #tpu.memory_space<vmem>>, vector<32x128xf32>,
    %c0_i32_8 = arith.constant 0 : i32
    %9 = arith.cmpi eq, %arg2, %c0_i32_8 : i32
    %10 = arith.extui %9 : i1 to i32
    %c0_i32_9 = arith.constant 0 : i32
    %11 = arith.cmpi ne, %10, %c0_i32_9 : i32
    scf.if %11 {
      %c0_10 = arith.constant 0 : index
      %c0_11 = arith.constant 0 : index
      %12 = vector.load %arg7[%c0_10, %c0_11] : memref<32x128xf32, #tpu.memory_space<vmem>>, vector<32x128xf32>
      %c0_12 = arith.constant 0 : index
      %c0_13 = arith.constant 0 : index
      %13 = vector.load %arg5[%c0_12, %c0_13] : memref<1x128xf32, #tpu.memory_space<vmem>>, vector<1x128xf32>
      %14 = vector.broadcast %13 : vector<1x128xf32> to vector<32x128xf32>
      %15 = arith.addf %12, %14 : vector<32x128xf32>
      %c0_14 = arith.constant 0 : index
      %c0_15 = arith.constant 0 : index
      %16 = vector.load %arg6[%c0_14, %c0_15] : memref<32x128xf32, #tpu.memory_space<vmem>>, vector<32x128xf32>
      tpu.vector_store %arg6[%c0_14, %c0_15], %15 {strides = array<i32>} : memref<32x128xf32, #tpu.memory_space<vmem>>, vector<32x128xf32>,
    } else {
    }
    return
  }
  func.func @transform_0(%arg0: i32, %arg1: i32, %arg2: i32) -> (i32, i32) {
    %c0_i32 = arith.constant 0 : i32
    return %arg0, %arg2 : i32, i32
  }
  func.func @transform_1(%arg0: i32, %arg1: i32, %arg2: i32) -> (i32, i32) {
    %c0_i32 = arith.constant 0 : i32
    return %arg2, %arg1 : i32, i32
  }
  func.func @transform_2(%arg0: i32, %arg1: i32, %arg2: i32) -> (i32, i32) {
    %c0_i32 = arith.constant 0 : i32
    %c0_i32_0 = arith.constant 0 : i32
    return %c0_i32, %arg1 : i32, i32
  }
  func.func @transform_3(%arg0: i32, %arg1: i32, %arg2: i32) -> (i32, i32) {
    %c0_i32 = arith.constant 0 : i32
    return %arg0, %arg1 : i32, i32
  }
}

module attributes {stable_mosaic.version = 11 : i64} {
  func.func @_mm_kernel(%arg0: i32, %arg1: i32, %arg2: i32, %arg3: memref<32x512xbf16, #tpu.memory_space<vmem>>, %arg4: memref<512x128xbf16, #tpu.memory_space<vmem>>, %arg5: memref<1x128xf32, #tpu.memory_space<vmem>>, %arg6: memref<32x128xf32, #tpu.memory_space<vmem>>, %arg7: memref<32x128xf32, #tpu.memory_space<vmem>>) attributes {dimension_semantics = [#tpu.dimension_semantics<parallel>, #tpu.dimension_semantics<parallel>, #tpu.dimension_semantics<arbitrary>], iteration_bounds = array<i64: 1, 1, 1>, scalar_prefetch = 0 : i64, scratch_operands = 1 : i64, tpu.core_type = #tpu.core_type<tc>, window_params = [{transform_indices = @transform_0, window_bounds = array<i64: 32, 512>}, {transform_indices = @transform_1, window_bounds = array<i64: 512, 128>}, {transform_indices = @transform_2, window_bounds = array<i64: 1, 128>}, {transform_indices = @transform_3, window_bounds = array<i64: 32, 128>}]} {
    %c0_i32 = arith.constant 0 : i32
    %0 = arith.cmpi eq, %arg2, %c0_i32 : i32
    %1 = arith.extui %0 : i1 to i32
    %c0_i32_0 = arith.constant 0 : i32
    %2 = arith.cmpi ne, %1, %c0_i32_0 : i32
    scf.if %2 {
      %cst_10 = arith.constant 0.000000e+00 : f32
      %12 = vector.broadcast %cst_10 : f32 to vector<32x128xf32>
      %c0_11 = arith.constant 0 : index
      %c0_12 = arith.constant 0 : index
      %13 = vector.load %arg7[%c0_11, %c0_12] : memref<32x128xf32, #tpu.memory_space<vmem>>, vector<32x128xf32>
      tpu.vector_store %arg7[%c0_11, %c0_12], %12 {strides = array<i32>} : memref<32x128xf32, #tpu.memory_space<vmem>>, vector<32x128xf32>,
    } else {
    }
    %c0 = arith.constant 0 : index
    %c0_1 = arith.constant 0 : index
    %3 = vector.load %arg7[%c0, %c0_1] : memref<32x128xf32, #tpu.memory_space<vmem>>, vector<32x128xf32>
    %c0_2 = arith.constant 0 : index
    %c0_3 = arith.constant 0 : index
    %4 = vector.load %arg3[%c0_2, %c0_3] : memref<32x512xbf16, #tpu.memory_space<vmem>>, vector<32x512xbf16>
    %c0_4 = arith.constant 0 : index
    %c0_5 = arith.constant 0 : index
    %5 = vector.load %arg4[%c0_4, %c0_5] : memref<512x128xbf16, #tpu.memory_space<vmem>>, vector<512x128xbf16>
    %cst = arith.constant dense<0.000000e+00> : vector<32x128xf32>
    %6 = tpu.matmul %4, %5, %cst {dimension_numbers = #tpu.dot_dimension_numbers<[1], [0], [0], [1], [0, 0, 1, 1], [], []>} : vector<32x512xbf16>, vector<512x128xbf16>, vector<32x128xf32> -> vector<32x128xf32>
    %7 = arith.addf %3, %6 : vector<32x128xf32>
    %c0_6 = arith.constant 0 : index
    %c0_7 = arith.constant 0 : index
    %8 = vector.load %arg7[%c0_6, %c0_7] : memref<32x128xf32, #tpu.memory_space<vmem>>, vector<32x128xf32>
    tpu.vector_store %arg7[%c0_6, %c0_7], %7 {strides = array<i32>} : memref<32x128xf32, #tpu.memory_space<vmem>>, vector<32x128xf32>,
    %c0_i32_8 = arith.constant 0 : i32
    %9 = arith.cmpi eq, %arg2, %c0_i32_8 : i32
    %10 = arith.extui %9 : i1 to i32
    %c0_i32_9 = arith.constant 0 : i32
    %11 = arith.cmpi ne, %10, %c0_i32_9 : i32
    scf.if %11 {
      %c0_10 = arith.constant 0 : index
      %c0_11 = arith.constant 0 : index
      %12 = vector.load %arg7[%c0_10, %c0_11] : memref<32x128xf32, #tpu.memory_space<vmem>>, vector<32x128xf32>
      %c0_12 = arith.constant 0 : index
      %c0_13 = arith.constant 0 : index
      %13 = vector.load %arg5[%c0_12, %c0_13] : memref<1x128xf32, #tpu.memory_space<vmem>>, vector<1x128xf32>
      %14 = vector.broadcast %13 : vector<1x128xf32> to vector<32x128xf32>
      %15 = arith.addf %12, %14 : vector<32x128xf32>
      %c0_14 = arith.constant 0 : index
      %c0_15 = arith.constant 0 : index
      %16 = vector.load %arg6[%c0_14, %c0_15] : memref<32x128xf32, #tpu.memory_space<vmem>>, vector<32x128xf32>
      tpu.vector_store %arg6[%c0_14, %c0_15], %15 {strides = array<i32>} : memref<32x128xf32, #tpu.memory_space<vmem>>, vector<32x128xf32>,
    } else {
    }
    return
  }
  func.func @transform_0(%arg0: i32, %arg1: i32, %arg2: i32) -> (i32, i32) {
    %c0_i32 = arith.constant 0 : i32
    return %arg0, %arg2 : i32, i32
  }
  func.func @transform_1(%arg0: i32, %arg1: i32, %arg2: i32) -> (i32, i32) {
    %c0_i32 = arith.constant 0 : i32
    return %arg2, %arg1 : i32, i32
  }
  func.func @transform_2(%arg0: i32, %arg1: i32, %arg2: i32) -> (i32, i32) {
    %c0_i32 = arith.constant 0 : i32
    %c0_i32_0 = arith.constant 0 : i32
    return %c0_i32, %arg1 : i32, i32
  }
  func.func @transform_3(%arg0: i32, %arg1: i32, %arg2: i32) -> (i32, i32) {
    %c0_i32 = arith.constant 0 : i32
    return %arg0, %arg1 : i32, i32
  }
}

module attributes {stable_mosaic.version = 11 : i64} {
  func.func @_mm_kernel(%arg0: i32, %arg1: i32, %arg2: i32, %arg3: memref<32x256xbf16, #tpu.memory_space<vmem>>, %arg4: memref<256x128xbf16, #tpu.memory_space<vmem>>, %arg5: memref<1x128xf32, #tpu.memory_space<vmem>>, %arg6: memref<32x128xf32, #tpu.memory_space<vmem>>, %arg7: memref<32x128xf32, #tpu.memory_space<vmem>>) attributes {dimension_semantics = [#tpu.dimension_semantics<parallel>, #tpu.dimension_semantics<parallel>, #tpu.dimension_semantics<arbitrary>], iteration_bounds = array<i64: 1, 1, 1>, scalar_prefetch = 0 : i64, scratch_operands = 1 : i64, tpu.core_type = #tpu.core_type<tc>, window_params = [{transform_indices = @transform_0, window_bounds = array<i64: 32, 256>}, {transform_indices = @transform_1, window_bounds = array<i64: 256, 128>}, {transform_indices = @transform_2, window_bounds = array<i64: 1, 128>}, {transform_indices = @transform_3, window_bounds = array<i64: 32, 128>}]} {
    %c0_i32 = arith.constant 0 : i32
    %0 = arith.cmpi eq, %arg2, %c0_i32 : i32
    %1 = arith.extui %0 : i1 to i32
    %c0_i32_0 = arith.constant 0 : i32
    %2 = arith.cmpi ne, %1, %c0_i32_0 : i32
    scf.if %2 {
      %cst_10 = arith.constant 0.000000e+00 : f32
      %12 = vector.broadcast %cst_10 : f32 to vector<32x128xf32>
      %c0_11 = arith.constant 0 : index
      %c0_12 = arith.constant 0 : index
      %13 = vector.load %arg7[%c0_11, %c0_12] : memref<32x128xf32, #tpu.memory_space<vmem>>, vector<32x128xf32>
      tpu.vector_store %arg7[%c0_11, %c0_12], %12 {strides = array<i32>} : memref<32x128xf32, #tpu.memory_space<vmem>>, vector<32x128xf32>,
    } else {
    }
    %c0 = arith.constant 0 : index
    %c0_1 = arith.constant 0 : index
    %3 = vector.load %arg7[%c0, %c0_1] : memref<32x128xf32, #tpu.memory_space<vmem>>, vector<32x128xf32>
    %c0_2 = arith.constant 0 : index
    %c0_3 = arith.constant 0 : index
    %4 = vector.load %arg3[%c0_2, %c0_3] : memref<32x256xbf16, #tpu.memory_space<vmem>>, vector<32x256xbf16>
    %c0_4 = arith.constant 0 : index
    %c0_5 = arith.constant 0 : index
    %5 = vector.load %arg4[%c0_4, %c0_5] : memref<256x128xbf16, #tpu.memory_space<vmem>>, vector<256x128xbf16>
    %cst = arith.constant dense<0.000000e+00> : vector<32x128xf32>
    %6 = tpu.matmul %4, %5, %cst {dimension_numbers = #tpu.dot_dimension_numbers<[1], [0], [0], [1], [0, 0, 1, 1], [], []>} : vector<32x256xbf16>, vector<256x128xbf16>, vector<32x128xf32> -> vector<32x128xf32>
    %7 = arith.addf %3, %6 : vector<32x128xf32>
    %c0_6 = arith.constant 0 : index
    %c0_7 = arith.constant 0 : index
    %8 = vector.load %arg7[%c0_6, %c0_7] : memref<32x128xf32, #tpu.memory_space<vmem>>, vector<32x128xf32>
    tpu.vector_store %arg7[%c0_6, %c0_7], %7 {strides = array<i32>} : memref<32x128xf32, #tpu.memory_space<vmem>>, vector<32x128xf32>,
    %c0_i32_8 = arith.constant 0 : i32
    %9 = arith.cmpi eq, %arg2, %c0_i32_8 : i32
    %10 = arith.extui %9 : i1 to i32
    %c0_i32_9 = arith.constant 0 : i32
    %11 = arith.cmpi ne, %10, %c0_i32_9 : i32
    scf.if %11 {
      %c0_10 = arith.constant 0 : index
      %c0_11 = arith.constant 0 : index
      %12 = vector.load %arg7[%c0_10, %c0_11] : memref<32x128xf32, #tpu.memory_space<vmem>>, vector<32x128xf32>
      %c0_12 = arith.constant 0 : index
      %c0_13 = arith.constant 0 : index
      %13 = vector.load %arg5[%c0_12, %c0_13] : memref<1x128xf32, #tpu.memory_space<vmem>>, vector<1x128xf32>
      %14 = vector.broadcast %13 : vector<1x128xf32> to vector<32x128xf32>
      %15 = arith.addf %12, %14 : vector<32x128xf32>
      %c0_14 = arith.constant 0 : index
      %c0_15 = arith.constant 0 : index
      %16 = vector.load %arg6[%c0_14, %c0_15] : memref<32x128xf32, #tpu.memory_space<vmem>>, vector<32x128xf32>
      tpu.vector_store %arg6[%c0_14, %c0_15], %15 {strides = array<i32>} : memref<32x128xf32, #tpu.memory_space<vmem>>, vector<32x128xf32>,
    } else {
    }
    return
  }
  func.func @transform_0(%arg0: i32, %arg1: i32, %arg2: i32) -> (i32, i32) {
    %c0_i32 = arith.constant 0 : i32
    return %arg0, %arg2 : i32, i32
  }
  func.func @transform_1(%arg0: i32, %arg1: i32, %arg2: i32) -> (i32, i32) {
    %c0_i32 = arith.constant 0 : i32
    return %arg2, %arg1 : i32, i32
  }
  func.func @transform_2(%arg0: i32, %arg1: i32, %arg2: i32) -> (i32, i32) {
    %c0_i32 = arith.constant 0 : i32
    %c0_i32_0 = arith.constant 0 : i32
    return %c0_i32, %arg1 : i32, i32
  }
  func.func @transform_3(%arg0: i32, %arg1: i32, %arg2: i32) -> (i32, i32) {
    %c0_i32 = arith.constant 0 : i32
    return %arg0, %arg1 : i32, i32
  }
}

module attributes {stable_mosaic.version = 11 : i64} {
  func.func @_mm_kernel(%arg0: i32, %arg1: i32, %arg2: i32, %arg3: memref<128x256xbf16, #tpu.memory_space<vmem>>, %arg4: memref<256x128xbf16, #tpu.memory_space<vmem>>, %arg5: memref<1x128xf32, #tpu.memory_space<vmem>>, %arg6: memref<128x128xf32, #tpu.memory_space<vmem>>, %arg7: memref<128x128xf32, #tpu.memory_space<vmem>>) attributes {dimension_semantics = [#tpu.dimension_semantics<parallel>, #tpu.dimension_semantics<parallel>, #tpu.dimension_semantics<arbitrary>], iteration_bounds = array<i64: 1, 1, 1>, scalar_prefetch = 0 : i64, scratch_operands = 1 : i64, tpu.core_type = #tpu.core_type<tc>, window_params = [{transform_indices = @transform_0, window_bounds = array<i64: 128, 256>}, {transform_indices = @transform_1, window_bounds = array<i64: 256, 128>}, {transform_indices = @transform_2, window_bounds = array<i64: 1, 128>}, {transform_indices = @transform_3, window_bounds = array<i64: 128, 128>}]} {
    %c0_i32 = arith.constant 0 : i32
    %0 = arith.cmpi eq, %arg2, %c0_i32 : i32
    %1 = arith.extui %0 : i1 to i32
    %c0_i32_0 = arith.constant 0 : i32
    %2 = arith.cmpi ne, %1, %c0_i32_0 : i32
    scf.if %2 {
      %cst_10 = arith.constant 0.000000e+00 : f32
      %12 = vector.broadcast %cst_10 : f32 to vector<128x128xf32>
      %c0_11 = arith.constant 0 : index
      %c0_12 = arith.constant 0 : index
      %13 = vector.load %arg7[%c0_11, %c0_12] : memref<128x128xf32, #tpu.memory_space<vmem>>, vector<128x128xf32>
      tpu.vector_store %arg7[%c0_11, %c0_12], %12 {strides = array<i32>} : memref<128x128xf32, #tpu.memory_space<vmem>>, vector<128x128xf32>,
    } else {
    }
    %c0 = arith.constant 0 : index
    %c0_1 = arith.constant 0 : index
    %3 = vector.load %arg7[%c0, %c0_1] : memref<128x128xf32, #tpu.memory_space<vmem>>, vector<128x128xf32>
    %c0_2 = arith.constant 0 : index
    %c0_3 = arith.constant 0 : index
    %4 = vector.load %arg3[%c0_2, %c0_3] : memref<128x256xbf16, #tpu.memory_space<vmem>>, vector<128x256xbf16>
    %c0_4 = arith.constant 0 : index
    %c0_5 = arith.constant 0 : index
    %5 = vector.load %arg4[%c0_4, %c0_5] : memref<256x128xbf16, #tpu.memory_space<vmem>>, vector<256x128xbf16>
    %cst = arith.constant dense<0.000000e+00> : vector<128x128xf32>
    %6 = tpu.matmul %4, %5, %cst {dimension_numbers = #tpu.dot_dimension_numbers<[1], [0], [0], [1], [0, 0, 1, 1], [], []>} : vector<128x256xbf16>, vector<256x128xbf16>, vector<128x128xf32> -> vector<128x128xf32>
    %7 = arith.addf %3, %6 : vector<128x128xf32>
    %c0_6 = arith.constant 0 : index
    %c0_7 = arith.constant 0 : index
    %8 = vector.load %arg7[%c0_6, %c0_7] : memref<128x128xf32, #tpu.memory_space<vmem>>, vector<128x128xf32>
    tpu.vector_store %arg7[%c0_6, %c0_7], %7 {strides = array<i32>} : memref<128x128xf32, #tpu.memory_space<vmem>>, vector<128x128xf32>,
    %c0_i32_8 = arith.constant 0 : i32
    %9 = arith.cmpi eq, %arg2, %c0_i32_8 : i32
    %10 = arith.extui %9 : i1 to i32
    %c0_i32_9 = arith.constant 0 : i32
    %11 = arith.cmpi ne, %10, %c0_i32_9 : i32
    scf.if %11 {
      %c0_10 = arith.constant 0 : index
      %c0_11 = arith.constant 0 : index
      %12 = vector.load %arg7[%c0_10, %c0_11] : memref<128x128xf32, #tpu.memory_space<vmem>>, vector<128x128xf32>
      %c0_12 = arith.constant 0 : index
      %c0_13 = arith.constant 0 : index
      %13 = vector.load %arg5[%c0_12, %c0_13] : memref<1x128xf32, #tpu.memory_space<vmem>>, vector<1x128xf32>
      %14 = vector.broadcast %13 : vector<1x128xf32> to vector<128x128xf32>
      %15 = arith.addf %12, %14 : vector<128x128xf32>
      %c0_14 = arith.constant 0 : index
      %c0_15 = arith.constant 0 : index
      %16 = vector.load %arg6[%c0_14, %c0_15] : memref<128x128xf32, #tpu.memory_space<vmem>>, vector<128x128xf32>
      tpu.vector_store %arg6[%c0_14, %c0_15], %15 {strides = array<i32>} : memref<128x128xf32, #tpu.memory_space<vmem>>, vector<128x128xf32>,
    } else {
    }
    return
  }
  func.func @transform_0(%arg0: i32, %arg1: i32, %arg2: i32) -> (i32, i32) {
    %c0_i32 = arith.constant 0 : i32
    return %arg0, %arg2 : i32, i32
  }
  func.func @transform_1(%arg0: i32, %arg1: i32, %arg2: i32) -> (i32, i32) {
    %c0_i32 = arith.constant 0 : i32
    return %arg2, %arg1 : i32, i32
  }
  func.func @transform_2(%arg0: i32, %arg1: i32, %arg2: i32) -> (i32, i32) {
    %c0_i32 = arith.constant 0 : i32
    %c0_i32_0 = arith.constant 0 : i32
    return %c0_i32, %arg1 : i32, i32
  }
  func.func @transform_3(%arg0: i32, %arg1: i32, %arg2: i32) -> (i32, i32) {
    %c0_i32 = arith.constant 0 : i32
    return %arg0, %arg1 : i32, i32
  }
}

module attributes {stable_mosaic.version = 11 : i64} {
  func.func @_mm_kernel(%arg0: i32, %arg1: i32, %arg2: i32, %arg3: memref<128x128xbf16, #tpu.memory_space<vmem>>, %arg4: memref<128x128xbf16, #tpu.memory_space<vmem>>, %arg5: memref<1x128xf32, #tpu.memory_space<vmem>>, %arg6: memref<128x128xf32, #tpu.memory_space<vmem>>, %arg7: memref<128x128xf32, #tpu.memory_space<vmem>>) attributes {dimension_semantics = [#tpu.dimension_semantics<parallel>, #tpu.dimension_semantics<parallel>, #tpu.dimension_semantics<arbitrary>], iteration_bounds = array<i64: 1, 1, 1>, scalar_prefetch = 0 : i64, scratch_operands = 1 : i64, tpu.core_type = #tpu.core_type<tc>, window_params = [{transform_indices = @transform_0, window_bounds = array<i64: 128, 128>}, {transform_indices = @transform_1, window_bounds = array<i64: 128, 128>}, {transform_indices = @transform_2, window_bounds = array<i64: 1, 128>}, {transform_indices = @transform_3, window_bounds = array<i64: 128, 128>}]} {
    %c0_i32 = arith.constant 0 : i32
    %0 = arith.cmpi eq, %arg2, %c0_i32 : i32
    %1 = arith.extui %0 : i1 to i32
    %c0_i32_0 = arith.constant 0 : i32
    %2 = arith.cmpi ne, %1, %c0_i32_0 : i32
    scf.if %2 {
      %cst_10 = arith.constant 0.000000e+00 : f32
      %12 = vector.broadcast %cst_10 : f32 to vector<128x128xf32>
      %c0_11 = arith.constant 0 : index
      %c0_12 = arith.constant 0 : index
      %13 = vector.load %arg7[%c0_11, %c0_12] : memref<128x128xf32, #tpu.memory_space<vmem>>, vector<128x128xf32>
      tpu.vector_store %arg7[%c0_11, %c0_12], %12 {strides = array<i32>} : memref<128x128xf32, #tpu.memory_space<vmem>>, vector<128x128xf32>,
    } else {
    }
    %c0 = arith.constant 0 : index
    %c0_1 = arith.constant 0 : index
    %3 = vector.load %arg7[%c0, %c0_1] : memref<128x128xf32, #tpu.memory_space<vmem>>, vector<128x128xf32>
    %c0_2 = arith.constant 0 : index
    %c0_3 = arith.constant 0 : index
    %4 = vector.load %arg3[%c0_2, %c0_3] : memref<128x128xbf16, #tpu.memory_space<vmem>>, vector<128x128xbf16>
    %c0_4 = arith.constant 0 : index
    %c0_5 = arith.constant 0 : index
    %5 = vector.load %arg4[%c0_4, %c0_5] : memref<128x128xbf16, #tpu.memory_space<vmem>>, vector<128x128xbf16>
    %cst = arith.constant dense<0.000000e+00> : vector<128x128xf32>
    %6 = tpu.matmul %4, %5, %cst {dimension_numbers = #tpu.dot_dimension_numbers<[1], [0], [0], [1], [0, 0, 1, 1], [], []>} : vector<128x128xbf16>, vector<128x128xbf16>, vector<128x128xf32> -> vector<128x128xf32>
    %7 = arith.addf %3, %6 : vector<128x128xf32>
    %c0_6 = arith.constant 0 : index
    %c0_7 = arith.constant 0 : index
    %8 = vector.load %arg7[%c0_6, %c0_7] : memref<128x128xf32, #tpu.memory_space<vmem>>, vector<128x128xf32>
    tpu.vector_store %arg7[%c0_6, %c0_7], %7 {strides = array<i32>} : memref<128x128xf32, #tpu.memory_space<vmem>>, vector<128x128xf32>,
    %c0_i32_8 = arith.constant 0 : i32
    %9 = arith.cmpi eq, %arg2, %c0_i32_8 : i32
    %10 = arith.extui %9 : i1 to i32
    %c0_i32_9 = arith.constant 0 : i32
    %11 = arith.cmpi ne, %10, %c0_i32_9 : i32
    scf.if %11 {
      %c0_10 = arith.constant 0 : index
      %c0_11 = arith.constant 0 : index
      %12 = vector.load %arg7[%c0_10, %c0_11] : memref<128x128xf32, #tpu.memory_space<vmem>>, vector<128x128xf32>
      %c0_12 = arith.constant 0 : index
      %c0_13 = arith.constant 0 : index
      %13 = vector.load %arg5[%c0_12, %c0_13] : memref<1x128xf32, #tpu.memory_space<vmem>>, vector<1x128xf32>
      %14 = vector.broadcast %13 : vector<1x128xf32> to vector<128x128xf32>
      %15 = arith.addf %12, %14 : vector<128x128xf32>
      %c0_14 = arith.constant 0 : index
      %c0_15 = arith.constant 0 : index
      %16 = vector.load %arg6[%c0_14, %c0_15] : memref<128x128xf32, #tpu.memory_space<vmem>>, vector<128x128xf32>
      tpu.vector_store %arg6[%c0_14, %c0_15], %15 {strides = array<i32>} : memref<128x128xf32, #tpu.memory_space<vmem>>, vector<128x128xf32>,
    } else {
    }
    return
  }
  func.func @transform_0(%arg0: i32, %arg1: i32, %arg2: i32) -> (i32, i32) {
    %c0_i32 = arith.constant 0 : i32
    return %arg0, %arg2 : i32, i32
  }
  func.func @transform_1(%arg0: i32, %arg1: i32, %arg2: i32) -> (i32, i32) {
    %c0_i32 = arith.constant 0 : i32
    return %arg2, %arg1 : i32, i32
  }
  func.func @transform_2(%arg0: i32, %arg1: i32, %arg2: i32) -> (i32, i32) {
    %c0_i32 = arith.constant 0 : i32
    %c0_i32_0 = arith.constant 0 : i32
    return %c0_i32, %arg1 : i32, i32
  }
  func.func @transform_3(%arg0: i32, %arg1: i32, %arg2: i32) -> (i32, i32) {
    %c0_i32 = arith.constant 0 : i32
    return %arg0, %arg1 : i32, i32
  }
}

module attributes {stable_mosaic.version = 11 : i64} {
  func.func @_mm_kernel(%arg0: i32, %arg1: i32, %arg2: i32, %arg3: memref<256x384xbf16, #tpu.memory_space<vmem>>, %arg4: memref<384x128xbf16, #tpu.memory_space<vmem>>, %arg5: memref<1x128xf32, #tpu.memory_space<vmem>>, %arg6: memref<256x128xf32, #tpu.memory_space<vmem>>, %arg7: memref<256x128xf32, #tpu.memory_space<vmem>>) attributes {dimension_semantics = [#tpu.dimension_semantics<parallel>, #tpu.dimension_semantics<parallel>, #tpu.dimension_semantics<arbitrary>], iteration_bounds = array<i64: 2, 1, 7>, scalar_prefetch = 0 : i64, scratch_operands = 1 : i64, tpu.core_type = #tpu.core_type<tc>, window_params = [{transform_indices = @transform_0, window_bounds = array<i64: 256, 384>}, {transform_indices = @transform_1, window_bounds = array<i64: 384, 128>}, {transform_indices = @transform_2, window_bounds = array<i64: 1, 128>}, {transform_indices = @transform_3, window_bounds = array<i64: 256, 128>}]} {
    %c0_i32 = arith.constant 0 : i32
    %0 = arith.cmpi eq, %arg2, %c0_i32 : i32
    %1 = arith.extui %0 : i1 to i32
    %c0_i32_0 = arith.constant 0 : i32
    %2 = arith.cmpi ne, %1, %c0_i32_0 : i32
    scf.if %2 {
      %cst_9 = arith.constant 0.000000e+00 : f32
      %12 = vector.broadcast %cst_9 : f32 to vector<256x128xf32>
      %c0_10 = arith.constant 0 : index
      %c0_11 = arith.constant 0 : index
      %13 = vector.load %arg7[%c0_10, %c0_11] : memref<256x128xf32, #tpu.memory_space<vmem>>, vector<256x128xf32>
      tpu.vector_store %arg7[%c0_10, %c0_11], %12 {strides = array<i32>} : memref<256x128xf32, #tpu.memory_space<vmem>>, vector<256x128xf32>,
    } else {
    }
    %c0 = arith.constant 0 : index
    %c0_1 = arith.constant 0 : index
    %3 = vector.load %arg7[%c0, %c0_1] : memref<256x128xf32, #tpu.memory_space<vmem>>, vector<256x128xf32>
    %c0_2 = arith.constant 0 : index
    %c0_3 = arith.constant 0 : index
    %4 = vector.load %arg3[%c0_2, %c0_3] : memref<256x384xbf16, #tpu.memory_space<vmem>>, vector<256x384xbf16>
    %c0_4 = arith.constant 0 : index
    %c0_5 = arith.constant 0 : index
    %5 = vector.load %arg4[%c0_4, %c0_5] : memref<384x128xbf16, #tpu.memory_space<vmem>>, vector<384x128xbf16>
    %cst = arith.constant dense<0.000000e+00> : vector<256x128xf32>
    %6 = tpu.matmul %4, %5, %cst {dimension_numbers = #tpu.dot_dimension_numbers<[1], [0], [0], [1], [0, 0, 1, 1], [], []>} : vector<256x384xbf16>, vector<384x128xbf16>, vector<256x128xf32> -> vector<256x128xf32>
    %7 = arith.addf %3, %6 : vector<256x128xf32>
    %c0_6 = arith.constant 0 : index
    %c0_7 = arith.constant 0 : index
    %8 = vector.load %arg7[%c0_6, %c0_7] : memref<256x128xf32, #tpu.memory_space<vmem>>, vector<256x128xf32>
    tpu.vector_store %arg7[%c0_6, %c0_7], %7 {strides = array<i32>} : memref<256x128xf32, #tpu.memory_space<vmem>>, vector<256x128xf32>,
    %c6_i32 = arith.constant 6 : i32
    %9 = arith.cmpi eq, %arg2, %c6_i32 : i32
    %10 = arith.extui %9 : i1 to i32
    %c0_i32_8 = arith.constant 0 : i32
    %11 = arith.cmpi ne, %10, %c0_i32_8 : i32
    scf.if %11 {
      %c0_9 = arith.constant 0 : index
      %c0_10 = arith.constant 0 : index
      %12 = vector.load %arg7[%c0_9, %c0_10] : memref<256x128xf32, #tpu.memory_space<vmem>>, vector<256x128xf32>
      %c0_11 = arith.constant 0 : index
      %c0_12 = arith.constant 0 : index
      %13 = vector.load %arg5[%c0_11, %c0_12] : memref<1x128xf32, #tpu.memory_space<vmem>>, vector<1x128xf32>
      %14 = vector.broadcast %13 : vector<1x128xf32> to vector<256x128xf32>
      %15 = arith.addf %12, %14 : vector<256x128xf32>
      %16 = math.tanh %15 : vector<256x128xf32>
      %cst_13 = arith.constant 1.500000e+02 : f32
      %17 = vector.broadcast %cst_13 : f32 to vector<256x128xf32>
      %18 = arith.mulf %16, %17 : vector<256x128xf32>
      %c0_14 = arith.constant 0 : index
      %c0_15 = arith.constant 0 : index
      %19 = vector.load %arg6[%c0_14, %c0_15] : memref<256x128xf32, #tpu.memory_space<vmem>>, vector<256x128xf32>
      tpu.vector_store %arg6[%c0_14, %c0_15], %18 {strides = array<i32>} : memref<256x128xf32, #tpu.memory_space<vmem>>, vector<256x128xf32>,
    } else {
    }
    return
  }
  func.func @transform_0(%arg0: i32, %arg1: i32, %arg2: i32) -> (i32, i32) {
    %c0_i32 = arith.constant 0 : i32
    return %arg0, %arg2 : i32, i32
  }
  func.func @transform_1(%arg0: i32, %arg1: i32, %arg2: i32) -> (i32, i32) {
    %c0_i32 = arith.constant 0 : i32
    return %arg2, %arg1 : i32, i32
  }
  func.func @transform_2(%arg0: i32, %arg1: i32, %arg2: i32) -> (i32, i32) {
    %c0_i32 = arith.constant 0 : i32
    %c0_i32_0 = arith.constant 0 : i32
    return %c0_i32, %arg1 : i32, i32
  }
  func.func @transform_3(%arg0: i32, %arg1: i32, %arg2: i32) -> (i32, i32) {
    %c0_i32 = arith.constant 0 : i32
    return %arg0, %arg1 : i32, i32
  }
}

</mosaic_0001>

<llo_original>
// kernel: _lambda_.22
$region0: #{_lambda_.22}
  #allocation0 [shape = 'u32[]', space=smem, size = 0x4, offset = 0x4, fixed_abs, tag = 'smem constant byte address 0x4 - core index']
  #allocation1 [shape = 'u32[144,128]{1,0:T(1,128)}', space=vmem, size = 0x12000, scoped, tag = 'internal scratch']
  #allocation2 [shape = 'f32[256,128]{1,0:T(8,128)}', space=vmem, size = 0x20000, scoped, tag = 'scratch operand']
  %s0 = inlined_call_operand.vmem [shape: bf16[512,256], index: 0, kind: input, shape index: {}]
  %s1 = inlined_call_operand.vmem [shape: bf16[256,128], index: 1, kind: input, shape index: {}]
  %s2 = inlined_call_operand.vmem [shape: f32[1,128], index: 2, kind: input, shape index: {}]
  %s3 = inlined_call_operand.vmem [shape: f32[512,128], index: 3, kind: output, shape index: {}]
  %s4 = sld [smem:[#allocation0]]
  $region53: #{_lambda_.22} parent=0
    _
  %s6 = ssub.s32 1, %s4
  %s7 = scalar_select 0, %s6, %s4
  loop: start=0, step=1, limit=4
  $region2: #{_lambda_.22} parent=0 // loop_pre_header
    _
  $region3: #{_lambda_.22} parent=0 // loop_header
    %s9 = sphi 0, %s13
    %p10 = scmp.ge.s32.totalorder %s9, 4
    %s16 = sphi 0, %s35
    %s17 = sphi 0, %s31
    %s18 = sphi 0, %s27
    %s19 = sphi 0, %s16
    %s20 = sphi 0, %s17
    %s21 = sphi 0, %s18
    %s22 = sphi 0, %s19
    %s23 = sphi 0, %s20
    %s24 = sphi 0, %s21
    %s40 = sphi 0, %s42
    %s43 = sphi 0, %s40
    %s44 = sphi 0, %s43
    %s60 = sphi 0, %s44
    %s68 = sphi 0, %s70
    %s71 = sphi 0, %s68
    %s72 = sphi 0, %s71
    %s88 = sphi 0, %s72
    %s94 = sphi 0, %s96
    %s97 = sphi 0, %s94
    %s98 = sphi 0, %s97
    %s114 = sphi 0, %s98
    %s122 = sphi 0, %s124
    %s125 = sphi 0, %s122
    %s126 = sphi 0, %s125
    %s142 = sphi 0, %s126
  $region4: #{_lambda_.22} parent=0 // loop_header_branch
    %12 = sbr.rel (%p10) target = $region8
  $region5: #{_lambda_.22} parent=0 // loop_body
    %s14 = ssub.s32 %s9, 1
    %s15 = ssub.s32 %s9, 2
    %s25 = sadd.s32 1, %s18
    %p26 = scmp.ge.s32.totalorder %s25, 1
    %s27 = scalar_select %p26, 0, %s25
    %s28 = sadd.s32 1, %s17
    %s29 = scalar_select %p26, %s28, %s17
    %p30 = scmp.ge.s32.totalorder %s29, 1
    %s31 = scalar_select %p30, 0, %s29
    %s32 = sadd.s32 1, %s16
    %s33 = scalar_select %p30, %s32, %s16
    %p34 = scmp.ge.s32.totalorder %s33, 2
    %s35 = scalar_select %p34, 0, %s33
    %s36 = ssub.s32 %s16, %s35
    %s37 = ssub.s32 %s18, %s27
    %s38 = sor.u32 %s36, %s37
    %p39 = scmp.eq.s32.totalorder %s38, 0
    %s41 = sadd.s32 %s40, 1
    %s42 = scalar_select %p39, %s40, %s41
    %p45 = pneg %p39
    %p46 = scmp.eq.s32.totalorder %s9, 1
    %p47 = por %p45, %p46
    %p48 = scmp.ne.s32.totalorder %s40, %s43
    %p49 = scmp.eq.s32.totalorder %s9, 0
    %p50 = por %p48, %p49
    %p51 = scmp.ne.s32.totalorder %s40, %s43
    %p52 = scmp.eq.s32.totalorder %s14, 1
    %p53 = por %p51, %p52
    %p54 = scmp.ne.s32.totalorder %s43, %s44
    %p55 = scmp.eq.s32.totalorder %s14, 0
    %p56 = por %p54, %p55
    %p57 = scmp.ne.s32.totalorder %s43, %s44
    %p58 = scmp.eq.s32.totalorder %s15, 1
    %p59 = por %p57, %p58
    %p61 = scmp.ne.s32.totalorder %s44, %s60
    %p62 = scmp.eq.s32.totalorder %s15, 0
    %p63 = por %p61, %p62
    %s64 = ssub.s32 %s18, %s27
    %s65 = ssub.s32 %s17, %s31
    %s66 = sor.u32 %s64, %s65
    %p67 = scmp.eq.s32.totalorder %s66, 0
    %s69 = sadd.s32 %s68, 1
    %s70 = scalar_select %p67, %s68, %s69
    %p73 = pneg %p67
    %p74 = scmp.eq.s32.totalorder %s9, 1
    %p75 = por %p73, %p74
    %p76 = scmp.ne.s32.totalorder %s68, %s71
    %p77 = scmp.eq.s32.totalorder %s9, 0
    %p78 = por %p76, %p77
    %p79 = scmp.ne.s32.totalorder %s68, %s71
    %p80 = scmp.eq.s32.totalorder %s14, 1
    %p81 = por %p79, %p80
    %p82 = scmp.ne.s32.totalorder %s71, %s72
    %p83 = scmp.eq.s32.totalorder %s14, 0
    %p84 = por %p82, %p83
    %p85 = scmp.ne.s32.totalorder %s71, %s72
    %p86 = scmp.eq.s32.totalorder %s15, 1
    %p87 = por %p85, %p86
    %p89 = scmp.ne.s32.totalorder %s72, %s88
    %p90 = scmp.eq.s32.totalorder %s15, 0
    %p91 = por %p89, %p90
    %s92 = ssub.s32 %s17, %s31
    %p93 = scmp.eq.s32.totalorder %s92, 0
    %s95 = sadd.s32 %s94, 1
    %s96 = scalar_select %p93, %s94, %s95
    %p99 = pneg %p93
    %p100 = scmp.eq.s32.totalorder %s9, 1
    %p101 = por %p99, %p100
    %p102 = scmp.ne.s32.totalorder %s94, %s97
    %p103 = scmp.eq.s32.totalorder %s9, 0
    %p104 = por %p102, %p103
    %p105 = scmp.ne.s32.totalorder %s94, %s97
    %p106 = scmp.eq.s32.totalorder %s14, 1
    %p107 = por %p105, %p106
    %p108 = scmp.ne.s32.totalorder %s97, %s98
    %p109 = scmp.eq.s32.totalorder %s14, 0
    %p110 = por %p108, %p109
    %p111 = scmp.ne.s32.totalorder %s97, %s98
    %p112 = scmp.eq.s32.totalorder %s15, 1
    %p113 = por %p111, %p112
    %p115 = scmp.ne.s32.totalorder %s98, %s114
    %p116 = scmp.eq.s32.totalorder %s15, 0
    %p117 = por %p115, %p116
    %s118 = ssub.s32 %s16, %s35
    %s119 = ssub.s32 %s17, %s31
    %s120 = sor.u32 %s118, %s119
    %p121 = scmp.eq.s32.totalorder %s120, 0
    %s123 = sadd.s32 %s122, 1
    %s124 = scalar_select %p121, %s122, %s123
    %p127 = pneg %p121
    %p128 = scmp.eq.s32.totalorder %s9, 1
    %p129 = por %p127, %p128
    %p130 = scmp.ne.s32.totalorder %s122, %s125
    %p131 = scmp.eq.s32.totalorder %s9, 0
    %p132 = por %p130, %p131
    %p133 = scmp.ne.s32.totalorder %s122, %s125
    %p134 = scmp.eq.s32.totalorder %s14, 1
    %p135 = por %p133, %p134
    %p136 = scmp.ne.s32.totalorder %s125, %s126
    %p137 = scmp.eq.s32.totalorder %s14, 0
    %p138 = por %p136, %p137
    %p139 = scmp.ne.s32.totalorder %s125, %s126
    %p140 = scmp.eq.s32.totalorder %s15, 1
    %p141 = por %p139, %p140
    %p143 = scmp.ne.s32.totalorder %s126, %s142
    %p144 = scmp.eq.s32.totalorder %s15, 0
    %p145 = por %p143, %p144
    %p146 = scmp.le.s32.totalorder 1, %s9
    %p147 = scmp.lt.s32.totalorder %s9, 3
    %p148 = pnand %p146, %p147
    %p149 = pneg %p148
    // Predicated region
    $region9: #{_lambda_.22} parent=5 // pred_check
      _
    $region10: #{_lambda_.22} parent=5 // pred_check_branch
      %151 = sbr.rel (%p148) target = $region12
    $region11: #{_lambda_.22} parent=5 // pred_region
      %s152 = ssub.s32 %s9, 1
      // Predicated region
      $region13: #{_lambda_.22} parent=11 // pred_check
        %p153 = pneg %p84
      $region14: #{_lambda_.22} parent=11 // pred_check_branch
        %155 = sbr.rel (%p153) target = $region16
      $region15: #{_lambda_.22} parent=11 // pred_region
        %s156 = smul.u32 32, %s21
        %p157 = scmp.lt.s32.totalorder %s156, 31
        %s158 = scalar_select %p157, %s156, 31
        %p159 = scmp.lt.s32.totalorder %s20, 0
        %s160 = scalar_select %p159, %s20, 0
        %s161 = sadd.s32 %s160, %s158
        %s162 = smul.addr %s161, 4
        %s163 = scalar_lea.vmem %s1, %s162
        %s164 = smul.u32 32, %s21
      $region16: #{_lambda_.22} parent=11 // pred_fallthru
        _
      // Predicated region
      $region17: #{_lambda_.22} parent=11 // pred_check
        %p165 = pneg %p110
      $region18: #{_lambda_.22} parent=11 // pred_check_branch
        %167 = sbr.rel (%p165) target = $region20
      $region19: #{_lambda_.22} parent=11 // pred_region
        %p168 = scmp.lt.s32.totalorder %s20, 0
        %s169 = scalar_select %p168, %s20, 0
        %s170 = scalar_lea.vmem %s2, %s169
      $region20: #{_lambda_.22} parent=11 // pred_fallthru
        _
    $region12: #{_lambda_.22} parent=5 // pred_fallthru
      _
    %p171 = scmp.lt.s32.totalorder %s9, 2
    // Predicated region
    $region21: #{_lambda_.22} parent=5 // pred_check
      %p172 = pneg %p171
    $region22: #{_lambda_.22} parent=5 // pred_check_branch
      %174 = sbr.rel (%p172) target = $region24
    $region23: #{_lambda_.22} parent=5 // pred_region
      // Predicated region
      $region25: #{_lambda_.22} parent=23 // pred_check
        %p175 = pneg %p50
      $region26: #{_lambda_.22} parent=23 // pred_check_branch
        %177 = sbr.rel (%p175) target = $region28
      $region27: #{_lambda_.22} parent=23 // pred_region
        %s178 = smul.u32 32, %s16
        %s179 = smul.u32 2, %s18
        %p180 = scmp.lt.s32.totalorder %s178, 63
        %s181 = scalar_select %p180, %s178, 63
        %p182 = scmp.lt.s32.totalorder %s179, 1
        %s183 = scalar_select %p182, %s179, 1
        %s184 = smul.addr %s181, 2
        %s185 = sadd.s32 %s183, %s184
        %s186 = smul.addr %s185, 4
        %s187 = scalar_lea.vmem %s0, %s186
        %s188 = smul.u32 32, %s16
        %s189 = smul.u32 2, %s18
      $region28: #{_lambda_.22} parent=23 // pred_fallthru
        _
    $region24: #{_lambda_.22} parent=5 // pred_fallthru
      _
    %p190 = scmp.le.s32.totalorder 1, %s9
    %p191 = scmp.lt.s32.totalorder %s9, 3
    %p192 = pnand %p190, %p191
    %p193 = pneg %p192
    // Predicated region
    $region29: #{_lambda_.22} parent=5 // pred_check
      _
    $region30: #{_lambda_.22} parent=5 // pred_check_branch
      %195 = sbr.rel (%p192) target = $region32
    $region31: #{_lambda_.22} parent=5 // pred_region
      %s196 = ssub.s32 %s9, 1
      %s197 = smul.u32 32, %s19
      %s198 = smul.u32 2, %s21
      %p199 = scmp.lt.s32.totalorder %s197, 63
      %s200 = scalar_select %p199, %s197, 63
      %p201 = scmp.lt.s32.totalorder %s198, 1
      %s202 = scalar_select %p201, %s198, 1
      %s203 = smul.addr %s200, 2
      %s204 = sadd.s32 %s202, %s203
      %s205 = smul.addr %s204, 4
      %s206 = scalar_lea.vmem %s0, %s205
      %p207 = pneg %p56
      %p208 = pneg %p53
      %s209 = smul.u32 32, %s21
      %p210 = scmp.lt.s32.totalorder %s209, 31
      %s211 = scalar_select %p210, %s209, 31
      %p212 = scmp.lt.s32.totalorder %s20, 0
      %s213 = scalar_select %p212, %s20, 0
      %s214 = sadd.s32 %s213, %s211
      %s215 = smul.addr %s214, 4
      %s216 = scalar_lea.vmem %s1, %s215
      %p217 = pneg %p84
      %p218 = pneg %p81
      %p219 = scmp.lt.s32.totalorder %s20, 0
      %s220 = scalar_select %p219, %s20, 0
      %s221 = scalar_lea.vmem %s2, %s220
      %p222 = pneg %p110
      %p223 = pneg %p107
      %p224 = pneg %p138
      %p225 = pneg %p135
      %s226 = smul.u32 32, %s19
      %p227 = scmp.lt.s32.totalorder %s226, 63
      %s228 = scalar_select %p227, %s226, 63
      %p229 = scmp.lt.s32.totalorder %s20, 0
      %s230 = scalar_select %p229, %s20, 0
      %s231 = sadd.s32 %s230, %s228
      %s232 = smul.addr %s231, 8
      %s233 = scalar_lea.vmem %s3, %s232
      %s234 = smul.u32 32, %s19
      %s235 = smul.u32 2, %s21
      %p236 = scmp.lt.s32.totalorder %s234, 63
      %s237 = scalar_select %p236, %s234, 63
      %p238 = scmp.lt.s32.totalorder %s235, 1
      %s239 = scalar_select %p238, %s235, 1
      %s240 = smul.addr %s237, 2
      %s241 = sadd.s32 %s239, %s240
      %s242 = smul.addr %s241, 4
      %s243 = scalar_lea.vmem %s0, %s242
      %s244 = smul.u32 32, %s19
      %s245 = smul.u32 2, %s21
      %s246 = smul.u32 32, %s21
      %p247 = scmp.lt.s32.totalorder %s246, 31
      %s248 = scalar_select %p247, %s246, 31
      %p249 = scmp.lt.s32.totalorder %s20, 0
      %s250 = scalar_select %p249, %s20, 0
      %s251 = sadd.s32 %s250, %s248
      %s252 = smul.addr %s251, 4
      %s253 = scalar_lea.vmem %s1, %s252
      %s254 = smul.u32 32, %s21
      %p255 = scmp.lt.s32.totalorder %s20, 0
      %s256 = scalar_select %p255, %s20, 0
      %s257 = scalar_lea.vmem %s2, %s256
      %s258 = smul.u32 32, %s19
      %p259 = scmp.lt.s32.totalorder %s258, 63
      %s260 = scalar_select %p259, %s258, 63
      %p261 = scmp.lt.s32.totalorder %s20, 0
      %s262 = scalar_select %p261, %s20, 0
      %s263 = sadd.s32 %s262, %s260
      %s264 = smul.addr %s263, 8
      %s265 = scalar_lea.vmem %s3, %s264
      %s266 = smul.u32 32, %s19
      %p268 = scmp.eq.s32.totalorder %s21, 0
      // Predicated region
      $region33: #{_lambda_.22} parent=31 // pred_check
        %p269 = pneg %p268
      $region34: #{_lambda_.22} parent=31 // pred_check_branch
        %271 = sbr.rel (%p269) target = $region36
      $region35: #{_lambda_.22} parent=31 // pred_region
        %272 = vst [vmem:[#allocation2] sm:$0xff] 0.0
        %273 = vst [vmem:[#allocation2 + $0x8] sm:$0xff] 0.0
        %274 = vst [vmem:[#allocation2 + $0x10] sm:$0xff] 0.0
        %275 = vst [vmem:[#allocation2 + $0x18] sm:$0xff] 0.0
        %276 = vst [vmem:[#allocation2 + $0x20] sm:$0xff] 0.0
        %277 = vst [vmem:[#allocation2 + $0x28] sm:$0xff] 0.0
        %278 = vst [vmem:[#allocation2 + $0x30] sm:$0xff] 0.0
        %279 = vst [vmem:[#allocation2 + $0x38] sm:$0xff] 0.0
        %280 = vst [vmem:[#allocation2 + $0x40] sm:$0xff] 0.0
        %281 = vst [vmem:[#allocation2 + $0x48] sm:$0xff] 0.0
        %282 = vst [vmem:[#allocation2 + $0x50] sm:$0xff] 0.0
        %283 = vst [vmem:[#allocation2 + $0x58] sm:$0xff] 0.0
        %284 = vst [vmem:[#allocation2 + $0x60] sm:$0xff] 0.0
        %285 = vst [vmem:[#allocation2 + $0x68] sm:$0xff] 0.0
        %286 = vst [vmem:[#allocation2 + $0x70] sm:$0xff] 0.0
        %287 = vst [vmem:[#allocation2 + $0x78] sm:$0xff] 0.0
        %288 = vst [vmem:[#allocation2 + $0x80] sm:$0xff] 0.0
        %289 = vst [vmem:[#allocation2 + $0x88] sm:$0xff] 0.0
        %290 = vst [vmem:[#allocation2 + $0x90] sm:$0xff] 0.0
        %291 = vst [vmem:[#allocation2 + $0x98] sm:$0xff] 0.0
        %292 = vst [vmem:[#allocation2 + $0xa0] sm:$0xff] 0.0
        %293 = vst [vmem:[#allocation2 + $0xa8] sm:$0xff] 0.0
        %294 = vst [vmem:[#allocation2 + $0xb0] sm:$0xff] 0.0
        %295 = vst [vmem:[#allocation2 + $0xb8] sm:$0xff] 0.0
        %296 = vst [vmem:[#allocation2 + $0xc0] sm:$0xff] 0.0
        %297 = vst [vmem:[#allocation2 + $0xc8] sm:$0xff] 0.0
        %298 = vst [vmem:[#allocation2 + $0xd0] sm:$0xff] 0.0
        %299 = vst [vmem:[#allocation2 + $0xd8] sm:$0xff] 0.0
        %300 = vst [vmem:[#allocation2 + $0xe0] sm:$0xff] 0.0
        %301 = vst [vmem:[#allocation2 + $0xe8] sm:$0xff] 0.0
        %302 = vst [vmem:[#allocation2 + $0xf0] sm:$0xff] 0.0
        %303 = vst [vmem:[#allocation2 + $0xf8] sm:$0xff] 0.0
      $region36: #{_lambda_.22} parent=31 // pred_fallthru
        _
      %v304 = vld [vmem:[#allocation2] sm:$0xff]
      %v305 = vld [vmem:[#allocation2 + $0x8] sm:$0xff]
      %v306 = vld [vmem:[#allocation2 + $0x10] sm:$0xff]
      %v307 = vld [vmem:[#allocation2 + $0x18] sm:$0xff]
      %v308 = vld [vmem:[#allocation2 + $0x20] sm:$0xff]
      %v309 = vld [vmem:[#allocation2 + $0x28] sm:$0xff]
      %v310 = vld [vmem:[#allocation2 + $0x30] sm:$0xff]
      %v311 = vld [vmem:[#allocation2 + $0x38] sm:$0xff]
      %v312 = vld [vmem:[#allocation2 + $0x40] sm:$0xff]
      %v313 = vld [vmem:[#allocation2 + $0x48] sm:$0xff]
      %v314 = vld [vmem:[#allocation2 + $0x50] sm:$0xff]
      %v315 = vld [vmem:[#allocation2 + $0x58] sm:$0xff]
      %v316 = vld [vmem:[#allocation2 + $0x60] sm:$0xff]
      %v317 = vld [vmem:[#allocation2 + $0x68] sm:$0xff]
      %v318 = vld [vmem:[#allocation2 + $0x70] sm:$0xff]
      %v319 = vld [vmem:[#allocation2 + $0x78] sm:$0xff]
      %v320 = vld [vmem:[#allocation2 + $0x80] sm:$0xff]
      %v321 = vld [vmem:[#allocation2 + $0x88] sm:$0xff]
      %v322 = vld [vmem:[#allocation2 + $0x90] sm:$0xff]
      %v323 = vld [vmem:[#allocation2 + $0x98] sm:$0xff]
      %v324 = vld [vmem:[#allocation2 + $0xa0] sm:$0xff]
      %v325 = vld [vmem:[#allocation2 + $0xa8] sm:$0xff]
      %v326 = vld [vmem:[#allocation2 + $0xb0] sm:$0xff]
      %v327 = vld [vmem:[#allocation2 + $0xb8] sm:$0xff]
      %v328 = vld [vmem:[#allocation2 + $0xc0] sm:$0xff]
      %v329 = vld [vmem:[#allocation2 + $0xc8] sm:$0xff]
      %v330 = vld [vmem:[#allocation2 + $0xd0] sm:$0xff]
      %v331 = vld [vmem:[#allocation2 + $0xd8] sm:$0xff]
      %v332 = vld [vmem:[#allocation2 + $0xe0] sm:$0xff]
      %v333 = vld [vmem:[#allocation2 + $0xe8] sm:$0xff]
      %v334 = vld [vmem:[#allocation2 + $0xf0] sm:$0xff]
      %v335 = vld [vmem:[#allocation2 + $0xf8] sm:$0xff]
      %v336 = vld [vmem:[%s243] sm:$0xff]
      %v337 = vld [vmem:[%s243 + $0x8] sm:$0xff]
      %v338 = vld [vmem:[%s243 + $0x10] sm:$0xff]
      %v339 = vld [vmem:[%s243 + $0x18] sm:$0xff]
      %v340 = vld [vmem:[%s243 + $0x20] sm:$0xff]
      %v341 = vld [vmem:[%s243 + $0x28] sm:$0xff]
      %v342 = vld [vmem:[%s243 + $0x30] sm:$0xff]
      %v343 = vld [vmem:[%s243 + $0x38] sm:$0xff]
      %v344 = vld [vmem:[%s243 + $0x40] sm:$0xff]
      %v345 = vld [vmem:[%s243 + $0x48] sm:$0xff]
      %v346 = vld [vmem:[%s243 + $0x50] sm:$0xff]
      %v347 = vld [vmem:[%s243 + $0x58] sm:$0xff]
      %v348 = vld [vmem:[%s243 + $0x60] sm:$0xff]
      %v349 = vld [vmem:[%s243 + $0x68] sm:$0xff]
      %v350 = vld [vmem:[%s243 + $0x70] sm:$0xff]
      %v351 = vld [vmem:[%s243 + $0x78] sm:$0xff]
      %v352 = vld [vmem:[%s243 + $0x80] sm:$0xff]
      %v353 = vld [vmem:[%s243 + $0x88] sm:$0xff]
      %v354 = vld [vmem:[%s243 + $0x90] sm:$0xff]
      %v355 = vld [vmem:[%s243 + $0x98] sm:$0xff]
      %v356 = vld [vmem:[%s243 + $0xa0] sm:$0xff]
      %v357 = vld [vmem:[%s243 + $0xa8] sm:$0xff]
      %v358 = vld [vmem:[%s243 + $0xb0] sm:$0xff]
      %v359 = vld [vmem:[%s243 + $0xb8] sm:$0xff]
      %v360 = vld [vmem:[%s243 + $0xc0] sm:$0xff]
      %v361 = vld [vmem:[%s243 + $0xc8] sm:$0xff]
      %v362 = vld [vmem:[%s243 + $0xd0] sm:$0xff]
      %v363 = vld [vmem:[%s243 + $0xd8] sm:$0xff]
      %v364 = vld [vmem:[%s243 + $0xe0] sm:$0xff]
      %v365 = vld [vmem:[%s243 + $0xe8] sm:$0xff]
      %v366 = vld [vmem:[%s243 + $0xf0] sm:$0xff]
      %v367 = vld [vmem:[%s243 + $0xf8] sm:$0xff]
      %v368 = vld [vmem:[%s253] sm:$0xf]
      %v369 = vld [vmem:[%s253 + $0x4] sm:$0xf]
      %v370 = vld [vmem:[%s253 + $0x8] sm:$0xf]
      %v371 = vld [vmem:[%s253 + $0xc] sm:$0xf]
      %v372 = vld [vmem:[%s253 + $0x10] sm:$0xf]
      %v373 = vld [vmem:[%s253 + $0x14] sm:$0xf]
      %v374 = vld [vmem:[%s253 + $0x18] sm:$0xf]
      %v375 = vld [vmem:[%s253 + $0x1c] sm:$0xf]
      %v376 = vld [vmem:[%s253 + $0x20] sm:$0xf]
      %v377 = vld [vmem:[%s253 + $0x24] sm:$0xf]
      %v378 = vld [vmem:[%s253 + $0x28] sm:$0xf]
      %v379 = vld [vmem:[%s253 + $0x2c] sm:$0xf]
      %v380 = vld [vmem:[%s253 + $0x30] sm:$0xf]
      %v381 = vld [vmem:[%s253 + $0x34] sm:$0xf]
      %v382 = vld [vmem:[%s253 + $0x38] sm:$0xf]
      %v383 = vld [vmem:[%s253 + $0x3c] sm:$0xf]
      %v384 = vld [vmem:[%s253 + $0x40] sm:$0xf]
      %v385 = vld [vmem:[%s253 + $0x44] sm:$0xf]
      %v386 = vld [vmem:[%s253 + $0x48] sm:$0xf]
      %v387 = vld [vmem:[%s253 + $0x4c] sm:$0xf]
      %v388 = vld [vmem:[%s253 + $0x50] sm:$0xf]
      %v389 = vld [vmem:[%s253 + $0x54] sm:$0xf]
      %v390 = vld [vmem:[%s253 + $0x58] sm:$0xf]
      %v391 = vld [vmem:[%s253 + $0x5c] sm:$0xf]
      %v392 = vld [vmem:[%s253 + $0x60] sm:$0xf]
      %v393 = vld [vmem:[%s253 + $0x64] sm:$0xf]
      %v394 = vld [vmem:[%s253 + $0x68] sm:$0xf]
      %v395 = vld [vmem:[%s253 + $0x6c] sm:$0xf]
      %v396 = vld [vmem:[%s253 + $0x70] sm:$0xf]
      %v397 = vld [vmem:[%s253 + $0x74] sm:$0xf]
      %v398 = vld [vmem:[%s253 + $0x78] sm:$0xf]
      %v399 = vld [vmem:[%s253 + $0x7c] sm:$0xf]
      %v432 = vunpack.c.l.b16 %v336
      %v433 = vunpack.c.h.b16 %v336
      %v434 = vunpack.c.l.b16 %v337
      %v435 = vunpack.c.h.b16 %v337
      %v436 = vunpack.c.l.b16 %v338
      %v437 = vunpack.c.h.b16 %v338
      %v438 = vunpack.c.l.b16 %v339
      %v439 = vunpack.c.h.b16 %v339
      %v440 = vunpack.c.l.b16 %v340
      %v441 = vunpack.c.h.b16 %v340
      %v442 = vunpack.c.l.b16 %v341
      %v443 = vunpack.c.h.b16 %v341
      %v444 = vunpack.c.l.b16 %v342
      %v445 = vunpack.c.h.b16 %v342
      %v446 = vunpack.c.l.b16 %v343
      %v447 = vunpack.c.h.b16 %v343
      %v448 = vunpack.c.l.b16 %v344
      %v449 = vunpack.c.h.b16 %v344
      %v450 = vunpack.c.l.b16 %v345
      %v451 = vunpack.c.h.b16 %v345
      %v452 = vunpack.c.l.b16 %v346
      %v453 = vunpack.c.h.b16 %v346
      %v454 = vunpack.c.l.b16 %v347
      %v455 = vunpack.c.h.b16 %v347
      %v456 = vunpack.c.l.b16 %v348
      %v457 = vunpack.c.h.b16 %v348
      %v458 = vunpack.c.l.b16 %v349
      %v459 = vunpack.c.h.b16 %v349
      %v460 = vunpack.c.l.b16 %v350
      %v461 = vunpack.c.h.b16 %v350
      %v462 = vunpack.c.l.b16 %v351
      %v463 = vunpack.c.h.b16 %v351
      %v464 = vunpack.c.l.b16 %v352
      %v465 = vunpack.c.h.b16 %v352
      %v466 = vunpack.c.l.b16 %v353
      %v467 = vunpack.c.h.b16 %v353
      %v468 = vunpack.c.l.b16 %v354
      %v469 = vunpack.c.h.b16 %v354
      %v470 = vunpack.c.l.b16 %v355
      %v471 = vunpack.c.h.b16 %v355
      %v472 = vunpack.c.l.b16 %v356
      %v473 = vunpack.c.h.b16 %v356
      %v474 = vunpack.c.l.b16 %v357
      %v475 = vunpack.c.h.b16 %v357
      %v476 = vunpack.c.l.b16 %v358
      %v477 = vunpack.c.h.b16 %v358
      %v478 = vunpack.c.l.b16 %v359
      %v479 = vunpack.c.h.b16 %v359
      %v480 = vunpack.c.l.b16 %v360
      %v481 = vunpack.c.h.b16 %v360
      %v482 = vunpack.c.l.b16 %v361
      %v483 = vunpack.c.h.b16 %v361
      %v484 = vunpack.c.l.b16 %v362
      %v485 = vunpack.c.h.b16 %v362
      %v486 = vunpack.c.l.b16 %v363
      %v487 = vunpack.c.h.b16 %v363
      %v488 = vunpack.c.l.b16 %v364
      %v489 = vunpack.c.h.b16 %v364
      %v490 = vunpack.c.l.b16 %v365
      %v491 = vunpack.c.h.b16 %v365
      %v492 = vunpack.c.l.b16 %v366
      %v493 = vunpack.c.h.b16 %v366
      %v494 = vunpack.c.l.b16 %v367
      %v495 = vunpack.c.h.b16 %v367
      %v496 = vpack.c.b16 %v434, %v432
      %v497 = vpack.c.b16 %v435, %v433
      %v498 = vpack.c.b16 %v438, %v436
      %v499 = vpack.c.b16 %v439, %v437
      %v500 = vpack.c.b16 %v442, %v440
      %v501 = vpack.c.b16 %v443, %v441
      %v502 = vpack.c.b16 %v446, %v444
      %v503 = vpack.c.b16 %v447, %v445
      %v504 = vpack.c.b16 %v450, %v448
      %v505 = vpack.c.b16 %v451, %v449
      %v506 = vpack.c.b16 %v454, %v452
      %v507 = vpack.c.b16 %v455, %v453
      %v508 = vpack.c.b16 %v458, %v456
      %v509 = vpack.c.b16 %v459, %v457
      %v510 = vpack.c.b16 %v462, %v460
      %v511 = vpack.c.b16 %v463, %v461
      %v512 = vpack.c.b16 %v466, %v464
      %v513 = vpack.c.b16 %v467, %v465
      %v514 = vpack.c.b16 %v470, %v468
      %v515 = vpack.c.b16 %v471, %v469
      %v516 = vpack.c.b16 %v474, %v472
      %v517 = vpack.c.b16 %v475, %v473
      %v518 = vpack.c.b16 %v478, %v476
      %v519 = vpack.c.b16 %v479, %v477
      %v520 = vpack.c.b16 %v482, %v480
      %v521 = vpack.c.b16 %v483, %v481
      %v522 = vpack.c.b16 %v486, %v484
      %v523 = vpack.c.b16 %v487, %v485
      %v524 = vpack.c.b16 %v490, %v488
      %v525 = vpack.c.b16 %v491, %v489
      %v526 = vpack.c.b16 %v494, %v492
      %v527 = vpack.c.b16 %v495, %v493
      %v592 = vunpack.c.l.b16 %v368
      %v593 = vunpack.c.l.b16 %v369
      %v594 = vunpack.c.l.b16 %v370
      %v595 = vunpack.c.l.b16 %v371
      %v596 = vunpack.c.l.b16 %v372
      %v597 = vunpack.c.l.b16 %v373
      %v598 = vunpack.c.l.b16 %v374
      %v599 = vunpack.c.l.b16 %v375
      %v600 = vunpack.c.l.b16 %v376
      %v601 = vunpack.c.l.b16 %v377
      %v602 = vunpack.c.l.b16 %v378
      %v603 = vunpack.c.l.b16 %v379
      %v604 = vunpack.c.l.b16 %v380
      %v605 = vunpack.c.l.b16 %v381
      %v606 = vunpack.c.l.b16 %v382
      %v607 = vunpack.c.l.b16 %v383
      %v608 = vunpack.c.l.b16 %v384
      %v609 = vunpack.c.l.b16 %v385
      %v610 = vunpack.c.l.b16 %v386
      %v611 = vunpack.c.l.b16 %v387
      %v612 = vunpack.c.l.b16 %v388
      %v613 = vunpack.c.l.b16 %v389
      %v614 = vunpack.c.l.b16 %v390
      %v615 = vunpack.c.l.b16 %v391
      %v616 = vunpack.c.l.b16 %v392
      %v617 = vunpack.c.l.b16 %v393
      %v618 = vunpack.c.l.b16 %v394
      %v619 = vunpack.c.l.b16 %v395
      %v620 = vunpack.c.l.b16 %v396
      %v621 = vunpack.c.l.b16 %v397
      %v622 = vunpack.c.l.b16 %v398
      %v623 = vunpack.c.l.b16 %v399
      %v624 = vpack.c.b16 %v593, %v592
      %v625 = vpack.c.b16 %v595, %v594
      %v626 = vpack.c.b16 %v597, %v596
      %v627 = vpack.c.b16 %v599, %v598
      %v628 = vpack.c.b16 %v601, %v600
      %v629 = vpack.c.b16 %v603, %v602
      %v630 = vpack.c.b16 %v605, %v604
      %v631 = vpack.c.b16 %v607, %v606
      %v632 = vpack.c.b16 %v609, %v608
      %v633 = vpack.c.b16 %v611, %v610
      %v634 = vpack.c.b16 %v613, %v612
      %v635 = vpack.c.b16 %v615, %v614
      %v636 = vpack.c.b16 %v617, %v616
      %v637 = vpack.c.b16 %v619, %v618
      %v638 = vpack.c.b16 %v621, %v620
      %v639 = vpack.c.b16 %v623, %v622
      %656 = vmatprep.subr.bf16.mxu0 0
      %657 = vmatpush1.bf16.msra.mxu0 %v631
      %658 = vmatprep.subr.bf16.mxu0 0
      %659 = vmatpush1.bf16.msra.mxu0 %v630
      %660 = vmatprep.subr.bf16.mxu0 0
      %661 = vmatpush1.bf16.msra.mxu0 %v629
      %662 = vmatprep.subr.bf16.mxu0 0
      %663 = vmatpush1.bf16.msra.mxu0 %v628
      %664 = vmatprep.subr.bf16.mxu0 0
      %665 = vmatpush1.bf16.msra.mxu0 %v627
      %666 = vmatprep.subr.bf16.mxu0 0
      %667 = vmatpush1.bf16.msra.mxu0 %v626
      %668 = vmatprep.subr.bf16.mxu0 0
      %669 = vmatpush1.bf16.msra.mxu0 %v625
      %670 = vmatprep.subr.bf16.mxu0 0
      %671 = vmatpush1.bf16.msra.mxu0 %v624
      %672 = vmatprep.subr.bf16.mxu0 0
      %673 = vmatpush2.bf16.msra.mxu0 %v639
      %674 = vmatprep.subr.bf16.mxu0 0
      %675 = vmatpush2.bf16.msra.mxu0 %v638
      %676 = vmatprep.subr.bf16.mxu0 0
      %677 = vmatpush2.bf16.msra.mxu0 %v637
      %678 = vmatprep.subr.bf16.mxu0 0
      %679 = vmatpush2.bf16.msra.mxu0 %v636
      %680 = vmatprep.subr.bf16.mxu0 0
      %681 = vmatpush2.bf16.msra.mxu0 %v635
      %682 = vmatprep.subr.bf16.mxu0 0
      %683 = vmatpush2.bf16.msra.mxu0 %v634
      %684 = vmatprep.subr.bf16.mxu0 0
      %685 = vmatpush2.bf16.msra.mxu0 %v633
      %686 = vmatprep.subr.bf16.mxu0 0
      %687 = vmatpush2.bf16.msra.mxu0 %v632
      %688 = vmatprep.mubr.bf16.mxu0 %v497
      %689 = vmatmul.mubr.bf16.gmra.mxu0 %v496
      %v690 = vpop.f32.mrf.mxu0
      %v691 = vadd.f32 0.0, %v690
      %v692 = vpop.f32.mrf.mxu0
      %v693 = vpop.f32.mrf.mxu0
      %v694 = vadd.f32 0.0, %v693
      %v695 = vpop.f32.mrf.mxu0
      %696 = vmatprep.mubr.bf16.mxu0 %v499
      %697 = vmatmul.mubr.bf16.gmra.mxu0 %v498
      %v698 = vpop.f32.mrf.mxu0
      %v699 = vadd.f32 0.0, %v698
      %v700 = vpop.f32.mrf.mxu0
      %v701 = vpop.f32.mrf.mxu0
      %v702 = vadd.f32 0.0, %v701
      %v703 = vpop.f32.mrf.mxu0
      %704 = vmatprep.mubr.bf16.mxu0 %v501
      %705 = vmatmul.mubr.bf16.gmra.mxu0 %v500
      %v706 = vpop.f32.mrf.mxu0
      %v707 = vadd.f32 0.0, %v706
      %v708 = vpop.f32.mrf.mxu0
      %v709 = vpop.f32.mrf.mxu0
      %v710 = vadd.f32 0.0, %v709
      %v711 = vpop.f32.mrf.mxu0
      %712 = vmatprep.mubr.bf16.mxu0 %v503
      %713 = vmatmul.mubr.bf16.gmra.mxu0 %v502
      %v714 = vpop.f32.mrf.mxu0
      %v715 = vadd.f32 0.0, %v714
      %v716 = vpop.f32.mrf.mxu0
      %v717 = vpop.f32.mrf.mxu0
      %v718 = vadd.f32 0.0, %v717
      %v719 = vpop.f32.mrf.mxu0
      %720 = vmatprep.mubr.bf16.mxu0 %v505
      %721 = vmatmul.mubr.bf16.gmra.mxu0 %v504
      %v722 = vpop.f32.mrf.mxu0
      %v723 = vadd.f32 0.0, %v722
      %v724 = vpop.f32.mrf.mxu0
      %v725 = vpop.f32.mrf.mxu0
      %v726 = vadd.f32 0.0, %v725
      %v727 = vpop.f32.mrf.mxu0
      %728 = vmatprep.mubr.bf16.mxu0 %v507
      %729 = vmatmul.mubr.bf16.gmra.mxu0 %v506
      %v730 = vpop.f32.mrf.mxu0
      %v731 = vadd.f32 0.0, %v730
      %v732 = vpop.f32.mrf.mxu0
      %v733 = vpop.f32.mrf.mxu0
      %v734 = vadd.f32 0.0, %v733
      %v735 = vpop.f32.mrf.mxu0
      %736 = vmatprep.mubr.bf16.mxu0 %v509
      %737 = vmatmul.mubr.bf16.gmra.mxu0 %v508
      %v738 = vpop.f32.mrf.mxu0
      %v739 = vadd.f32 0.0, %v738
      %v740 = vpop.f32.mrf.mxu0
      %v741 = vpop.f32.mrf.mxu0
      %v742 = vadd.f32 0.0, %v741
      %v743 = vpop.f32.mrf.mxu0
      %744 = vmatprep.mubr.bf16.mxu0 %v511
      %745 = vmatmul.mubr.bf16.gmra.mxu0 %v510
      %v746 = vpop.f32.mrf.mxu0
      %v747 = vadd.f32 0.0, %v746
      %v748 = vpop.f32.mrf.mxu0
      %v749 = vpop.f32.mrf.mxu0
      %v750 = vadd.f32 0.0, %v749
      %v751 = vpop.f32.mrf.mxu0
      %752 = vmatprep.mubr.bf16.mxu0 %v513
      %753 = vmatmul.mubr.bf16.gmra.mxu0 %v512
      %v754 = vpop.f32.mrf.mxu0
      %v755 = vadd.f32 0.0, %v754
      %v756 = vpop.f32.mrf.mxu0
      %v757 = vpop.f32.mrf.mxu0
      %v758 = vadd.f32 0.0, %v757
      %v759 = vpop.f32.mrf.mxu0
      %760 = vmatprep.mubr.bf16.mxu0 %v515
      %761 = vmatmul.mubr.bf16.gmra.mxu0 %v514
      %v762 = vpop.f32.mrf.mxu0
      %v763 = vadd.f32 0.0, %v762
      %v764 = vpop.f32.mrf.mxu0
      %v765 = vpop.f32.mrf.mxu0
      %v766 = vadd.f32 0.0, %v765
      %v767 = vpop.f32.mrf.mxu0
      %768 = vmatprep.mubr.bf16.mxu0 %v517
      %769 = vmatmul.mubr.bf16.gmra.mxu0 %v516
      %v770 = vpop.f32.mrf.mxu0
      %v771 = vadd.f32 0.0, %v770
      %v772 = vpop.f32.mrf.mxu0
      %v773 = vpop.f32.mrf.mxu0
      %v774 = vadd.f32 0.0, %v773
      %v775 = vpop.f32.mrf.mxu0
      %776 = vmatprep.mubr.bf16.mxu0 %v519
      %777 = vmatmul.mubr.bf16.gmra.mxu0 %v518
      %v778 = vpop.f32.mrf.mxu0
      %v779 = vadd.f32 0.0, %v778
      %v780 = vpop.f32.mrf.mxu0
      %v781 = vpop.f32.mrf.mxu0
      %v782 = vadd.f32 0.0, %v781
      %v783 = vpop.f32.mrf.mxu0
      %784 = vmatprep.mubr.bf16.mxu0 %v521
      %785 = vmatmul.mubr.bf16.gmra.mxu0 %v520
      %v786 = vpop.f32.mrf.mxu0
      %v787 = vadd.f32 0.0, %v786
      %v788 = vpop.f32.mrf.mxu0
      %v789 = vpop.f32.mrf.mxu0
      %v790 = vadd.f32 0.0, %v789
      %v791 = vpop.f32.mrf.mxu0
      %792 = vmatprep.mubr.bf16.mxu0 %v523
      %793 = vmatmul.mubr.bf16.gmra.mxu0 %v522
      %v794 = vpop.f32.mrf.mxu0
      %v795 = vadd.f32 0.0, %v794
      %v796 = vpop.f32.mrf.mxu0
      %v797 = vpop.f32.mrf.mxu0
      %v798 = vadd.f32 0.0, %v797
      %v799 = vpop.f32.mrf.mxu0
      %800 = vmatprep.mubr.bf16.mxu0 %v525
      %801 = vmatmul.mubr.bf16.gmra.mxu0 %v524
      %v802 = vpop.f32.mrf.mxu0
      %v803 = vadd.f32 0.0, %v802
      %v804 = vpop.f32.mrf.mxu0
      %v805 = vpop.f32.mrf.mxu0
      %v806 = vadd.f32 0.0, %v805
      %v807 = vpop.f32.mrf.mxu0
      %808 = vmatprep.mubr.bf16.mxu0 %v527
      %809 = vmatmul.mubr.bf16.gmra.mxu0 %v526
      %v810 = vpop.f32.mrf.mxu0
      %v811 = vadd.f32 0.0, %v810
      %v812 = vpop.f32.mrf.mxu0
      %v813 = vpop.f32.mrf.mxu0
      %v814 = vadd.f32 0.0, %v813
      %v815 = vpop.f32.mrf.mxu0
      %816 = vdwg.mxu0
      %v817 = vadd.f32 %v304, %v691
      %v818 = vadd.f32 %v305, %v694
      %v819 = vadd.f32 %v306, %v699
      %v820 = vadd.f32 %v307, %v702
      %v821 = vadd.f32 %v308, %v707
      %v822 = vadd.f32 %v309, %v710
      %v823 = vadd.f32 %v310, %v715
      %v824 = vadd.f32 %v311, %v718
      %v825 = vadd.f32 %v312, %v723
      %v826 = vadd.f32 %v313, %v726
      %v827 = vadd.f32 %v314, %v731
      %v828 = vadd.f32 %v315, %v734
      %v829 = vadd.f32 %v316, %v739
      %v830 = vadd.f32 %v317, %v742
      %v831 = vadd.f32 %v318, %v747
      %v832 = vadd.f32 %v319, %v750
      %v833 = vadd.f32 %v320, %v755
      %v834 = vadd.f32 %v321, %v758
      %v835 = vadd.f32 %v322, %v763
      %v836 = vadd.f32 %v323, %v766
      %v837 = vadd.f32 %v324, %v771
      %v838 = vadd.f32 %v325, %v774
      %v839 = vadd.f32 %v326, %v779
      %v840 = vadd.f32 %v327, %v782
      %v841 = vadd.f32 %v328, %v787
      %v842 = vadd.f32 %v329, %v790
      %v843 = vadd.f32 %v330, %v795
      %v844 = vadd.f32 %v331, %v798
      %v845 = vadd.f32 %v332, %v803
      %v846 = vadd.f32 %v333, %v806
      %v847 = vadd.f32 %v334, %v811
      %v848 = vadd.f32 %v335, %v814
      %849 = vst [vmem:[#allocation2] sm:$0xff] %v817
      %850 = vst [vmem:[#allocation2 + $0x8] sm:$0xff] %v818
      %851 = vst [vmem:[#allocation2 + $0x10] sm:$0xff] %v819
      %852 = vst [vmem:[#allocation2 + $0x18] sm:$0xff] %v820
      %853 = vst [vmem:[#allocation2 + $0x20] sm:$0xff] %v821
      %854 = vst [vmem:[#allocation2 + $0x28] sm:$0xff] %v822
      %855 = vst [vmem:[#allocation2 + $0x30] sm:$0xff] %v823
      %856 = vst [vmem:[#allocation2 + $0x38] sm:$0xff] %v824
      %857 = vst [vmem:[#allocation2 + $0x40] sm:$0xff] %v825
      %858 = vst [vmem:[#allocation2 + $0x48] sm:$0xff] %v826
      %859 = vst [vmem:[#allocation2 + $0x50] sm:$0xff] %v827
      %860 = vst [vmem:[#allocation2 + $0x58] sm:$0xff] %v828
      %861 = vst [vmem:[#allocation2 + $0x60] sm:$0xff] %v829
      %862 = vst [vmem:[#allocation2 + $0x68] sm:$0xff] %v830
      %863 = vst [vmem:[#allocation2 + $0x70] sm:$0xff] %v831
      %864 = vst [vmem:[#allocation2 + $0x78] sm:$0xff] %v832
      %865 = vst [vmem:[#allocation2 + $0x80] sm:$0xff] %v833
      %866 = vst [vmem:[#allocation2 + $0x88] sm:$0xff] %v834
      %867 = vst [vmem:[#allocation2 + $0x90] sm:$0xff] %v835
      %868 = vst [vmem:[#allocation2 + $0x98] sm:$0xff] %v836
      %869 = vst [vmem:[#allocation2 + $0xa0] sm:$0xff] %v837
      %870 = vst [vmem:[#allocation2 + $0xa8] sm:$0xff] %v838
      %871 = vst [vmem:[#allocation2 + $0xb0] sm:$0xff] %v839
      %872 = vst [vmem:[#allocation2 + $0xb8] sm:$0xff] %v840
      %873 = vst [vmem:[#allocation2 + $0xc0] sm:$0xff] %v841
      %874 = vst [vmem:[#allocation2 + $0xc8] sm:$0xff] %v842
      %875 = vst [vmem:[#allocation2 + $0xd0] sm:$0xff] %v843
      %876 = vst [vmem:[#allocation2 + $0xd8] sm:$0xff] %v844
      %877 = vst [vmem:[#allocation2 + $0xe0] sm:$0xff] %v845
      %878 = vst [vmem:[#allocation2 + $0xe8] sm:$0xff] %v846
      %879 = vst [vmem:[#allocation2 + $0xf0] sm:$0xff] %v847
      %880 = vst [vmem:[#allocation2 + $0xf8] sm:$0xff] %v848
      // Predicated region
      $region37: #{_lambda_.22} parent=31 // pred_check
        %p881 = pneg %p268
      $region38: #{_lambda_.22} parent=31 // pred_check_branch
        %883 = sbr.rel (%p881) target = $region40
      $region39: #{_lambda_.22} parent=31 // pred_region
        %v884 = vld [vmem:[#allocation2] sm:$0xff]
        %v885 = vld [vmem:[#allocation2 + $0x8] sm:$0xff]
        %v886 = vld [vmem:[#allocation2 + $0x10] sm:$0xff]
        %v887 = vld [vmem:[#allocation2 + $0x18] sm:$0xff]
        %v888 = vld [vmem:[#allocation2 + $0x20] sm:$0xff]
        %v889 = vld [vmem:[#allocation2 + $0x28] sm:$0xff]
        %v890 = vld [vmem:[#allocation2 + $0x30] sm:$0xff]
        %v891 = vld [vmem:[#allocation2 + $0x38] sm:$0xff]
        %v892 = vld [vmem:[#allocation2 + $0x40] sm:$0xff]
        %v893 = vld [vmem:[#allocation2 + $0x48] sm:$0xff]
        %v894 = vld [vmem:[#allocation2 + $0x50] sm:$0xff]
        %v895 = vld [vmem:[#allocation2 + $0x58] sm:$0xff]
        %v896 = vld [vmem:[#allocation2 + $0x60] sm:$0xff]
        %v897 = vld [vmem:[#allocation2 + $0x68] sm:$0xff]
        %v898 = vld [vmem:[#allocation2 + $0x70] sm:$0xff]
        %v899 = vld [vmem:[#allocation2 + $0x78] sm:$0xff]
        %v900 = vld [vmem:[#allocation2 + $0x80] sm:$0xff]
        %v901 = vld [vmem:[#allocation2 + $0x88] sm:$0xff]
        %v902 = vld [vmem:[#allocation2 + $0x90] sm:$0xff]
        %v903 = vld [vmem:[#allocation2 + $0x98] sm:$0xff]
        %v904 = vld [vmem:[#allocation2 + $0xa0] sm:$0xff]
        %v905 = vld [vmem:[#allocation2 + $0xa8] sm:$0xff]
        %v906 = vld [vmem:[#allocation2 + $0xb0] sm:$0xff]
        %v907 = vld [vmem:[#allocation2 + $0xb8] sm:$0xff]
        %v908 = vld [vmem:[#allocation2 + $0xc0] sm:$0xff]
        %v909 = vld [vmem:[#allocation2 + $0xc8] sm:$0xff]
        %v910 = vld [vmem:[#allocation2 + $0xd0] sm:$0xff]
        %v911 = vld [vmem:[#allocation2 + $0xd8] sm:$0xff]
        %v912 = vld [vmem:[#allocation2 + $0xe0] sm:$0xff]
        %v913 = vld [vmem:[#allocation2 + $0xe8] sm:$0xff]
        %v914 = vld [vmem:[#allocation2 + $0xf0] sm:$0xff]
        %v915 = vld [vmem:[#allocation2 + $0xf8] sm:$0xff]
        %v916 = vld [vmem:[%s257] sm:$0x1]
        %v918 = vlaneseq
        %v919 = vshrl.u32 %v918, 7
        %v920 = vsub.s32 0, %v919
        %v921 = vrot.slane %v916, %v920
        %v923 = vadd.f32 %v884, %v921
        %v924 = vadd.f32 %v885, %v921
        %v925 = vadd.f32 %v886, %v921
        %v926 = vadd.f32 %v887, %v921
        %v927 = vadd.f32 %v888, %v921
        %v928 = vadd.f32 %v889, %v921
        %v929 = vadd.f32 %v890, %v921
        %v930 = vadd.f32 %v891, %v921
        %v931 = vadd.f32 %v892, %v921
        %v932 = vadd.f32 %v893, %v921
        %v933 = vadd.f32 %v894, %v921
        %v934 = vadd.f32 %v895, %v921
        %v935 = vadd.f32 %v896, %v921
        %v936 = vadd.f32 %v897, %v921
        %v937 = vadd.f32 %v898, %v921
        %v938 = vadd.f32 %v899, %v921
        %v939 = vadd.f32 %v900, %v921
        %v940 = vadd.f32 %v901, %v921
        %v941 = vadd.f32 %v902, %v921
        %v942 = vadd.f32 %v903, %v921
        %v943 = vadd.f32 %v904, %v921
        %v944 = vadd.f32 %v905, %v921
        %v945 = vadd.f32 %v906, %v921
        %v946 = vadd.f32 %v907, %v921
        %v947 = vadd.f32 %v908, %v921
        %v948 = vadd.f32 %v909, %v921
        %v949 = vadd.f32 %v910, %v921
        %v950 = vadd.f32 %v911, %v921
        %v951 = vadd.f32 %v912, %v921
        %v952 = vadd.f32 %v913, %v921
        %v953 = vadd.f32 %v914, %v921
        %v954 = vadd.f32 %v915, %v921
        %955 = vst [vmem:[%s265] sm:$0xff] %v923
        %956 = vst [vmem:[%s265 + $0x8] sm:$0xff] %v924
        %957 = vst [vmem:[%s265 + $0x10] sm:$0xff] %v925
        %958 = vst [vmem:[%s265 + $0x18] sm:$0xff] %v926
        %959 = vst [vmem:[%s265 + $0x20] sm:$0xff] %v927
        %960 = vst [vmem:[%s265 + $0x28] sm:$0xff] %v928
        %961 = vst [vmem:[%s265 + $0x30] sm:$0xff] %v929
        %962 = vst [vmem:[%s265 + $0x38] sm:$0xff] %v930
        %963 = vst [vmem:[%s265 + $0x40] sm:$0xff] %v931
        %964 = vst [vmem:[%s265 + $0x48] sm:$0xff] %v932
        %965 = vst [vmem:[%s265 + $0x50] sm:$0xff] %v933
        %966 = vst [vmem:[%s265 + $0x58] sm:$0xff] %v934
        %967 = vst [vmem:[%s265 + $0x60] sm:$0xff] %v935
        %968 = vst [vmem:[%s265 + $0x68] sm:$0xff] %v936
        %969 = vst [vmem:[%s265 + $0x70] sm:$0xff] %v937
        %970 = vst [vmem:[%s265 + $0x78] sm:$0xff] %v938
        %971 = vst [vmem:[%s265 + $0x80] sm:$0xff] %v939
        %972 = vst [vmem:[%s265 + $0x88] sm:$0xff] %v940
        %973 = vst [vmem:[%s265 + $0x90] sm:$0xff] %v941
        %974 = vst [vmem:[%s265 + $0x98] sm:$0xff] %v942
        %975 = vst [vmem:[%s265 + $0xa0] sm:$0xff] %v943
        %976 = vst [vmem:[%s265 + $0xa8] sm:$0xff] %v944
        %977 = vst [vmem:[%s265 + $0xb0] sm:$0xff] %v945
        %978 = vst [vmem:[%s265 + $0xb8] sm:$0xff] %v946
        %979 = vst [vmem:[%s265 + $0xc0] sm:$0xff] %v947
        %980 = vst [vmem:[%s265 + $0xc8] sm:$0xff] %v948
        %981 = vst [vmem:[%s265 + $0xd0] sm:$0xff] %v949
        %982 = vst [vmem:[%s265 + $0xd8] sm:$0xff] %v950
        %983 = vst [vmem:[%s265 + $0xe0] sm:$0xff] %v951
        %984 = vst [vmem:[%s265 + $0xe8] sm:$0xff] %v952
        %985 = vst [vmem:[%s265 + $0xf0] sm:$0xff] %v953
        %986 = vst [vmem:[%s265 + $0xf8] sm:$0xff] %v954
      $region40: #{_lambda_.22} parent=31 // pred_fallthru
        _
      %s987 = smul.u32 32, %s19
      %p988 = scmp.lt.s32.totalorder %s987, 63
      %s989 = scalar_select %p988, %s987, 63
      %p990 = scmp.lt.s32.totalorder %s20, 0
      %s991 = scalar_select %p990, %s20, 0
      %s992 = sadd.s32 %s991, %s989
      %s993 = smul.addr %s992, 8
      %s994 = scalar_lea.vmem %s3, %s993
      // Predicated region
      $region41: #{_lambda_.22} parent=31 // pred_check
        %p995 = pneg %p135
      $region42: #{_lambda_.22} parent=31 // pred_check_branch
        %997 = sbr.rel (%p995) target = $region44
      $region43: #{_lambda_.22} parent=31 // pred_region
        %s998 = smul.u32 32, %s19
      $region44: #{_lambda_.22} parent=31 // pred_fallthru
        _
    $region32: #{_lambda_.22} parent=5 // pred_fallthru
      _
    %p999 = scmp.le.s32.totalorder 2, %s9
    // Predicated region
    $region45: #{_lambda_.22} parent=5 // pred_check
      %p1000 = pneg %p999
    $region46: #{_lambda_.22} parent=5 // pred_check_branch
      %1002 = sbr.rel (%p1000) target = $region48
    $region47: #{_lambda_.22} parent=5 // pred_region
      %s1003 = ssub.s32 %s9, 2
      // Predicated region
      $region49: #{_lambda_.22} parent=47 // pred_check
        %p1004 = pneg %p141
      $region50: #{_lambda_.22} parent=47 // pred_check_branch
        %1006 = sbr.rel (%p1004) target = $region52
      $region51: #{_lambda_.22} parent=47 // pred_region
        %s1007 = smul.u32 32, %s22
        %p1008 = scmp.lt.s32.totalorder %s1007, 63
        %s1009 = scalar_select %p1008, %s1007, 63
        %p1010 = scmp.lt.s32.totalorder %s23, 0
        %s1011 = scalar_select %p1010, %s23, 0
        %s1012 = sadd.s32 %s1011, %s1009
        %s1013 = smul.addr %s1012, 8
        %s1014 = scalar_lea.vmem %s3, %s1013
      $region52: #{_lambda_.22} parent=47 // pred_fallthru
        _
    $region48: #{_lambda_.22} parent=5 // pred_fallthru
      _
  $region6: #{_lambda_.22} parent=0 // loop_footer
    %s13 = sadd.s32 1, %s9
  $region7: #{_lambda_.22} parent=0 // loop_footer_branch
    %8 = sbr.rel target = $region3
  $region8: #{_lambda_.22} parent=0 // loop_exit
    _

// kernel: _lambda_.23
$region0: #{_lambda_.23}
  #allocation0 [shape = 'u32[]', space=smem, size = 0x4, offset = 0x4, fixed_abs, tag = 'smem constant byte address 0x4 - core index']
  #allocation1 [shape = 'u32[144,128]{1,0:T(1,128)}', space=vmem, size = 0x12000, scoped, tag = 'internal scratch']
  #allocation2 [shape = 'f32[128,128]{1,0:T(8,128)}', space=vmem, size = 0x10000, scoped, tag = 'scratch operand']
  %s0 = inlined_call_operand.vmem [shape: bf16[128,384], index: 0, kind: input, shape index: {}]
  %s1 = inlined_call_operand.vmem [shape: bf16[384,128], index: 1, kind: input, shape index: {}]
  %s2 = inlined_call_operand.vmem [shape: f32[1,128], index: 2, kind: input, shape index: {}]
  %s3 = inlined_call_operand.vmem [shape: f32[128,128], index: 3, kind: output, shape index: {}]
  %s4 = sld [smem:[#allocation0]]
  $region30: #{_lambda_.23} parent=0
    _
  %s6 = ssub.s32 1, %s4
  %s7 = scalar_select 0, %s6, %s4
  // Predicated region
  $region2: #{_lambda_.23} parent=0 // pred_check
    _
  $region3: #{_lambda_.23} parent=0 // pred_check_branch
    %9 = sbr.rel (0) target = $region5
  $region4: #{_lambda_.23} parent=0 // pred_region
    _
  $region5: #{_lambda_.23} parent=0 // pred_fallthru
    _
  // Predicated region
  $region6: #{_lambda_.23} parent=0 // pred_check
    _
  $region7: #{_lambda_.23} parent=0 // pred_check_branch
    %11 = sbr.rel (0) target = $region9
  $region8: #{_lambda_.23} parent=0 // pred_region
    _
  $region9: #{_lambda_.23} parent=0 // pred_fallthru
    _
  // Predicated region
  $region10: #{_lambda_.23} parent=0 // pred_check
    _
  $region11: #{_lambda_.23} parent=0 // pred_check_branch
    %13 = sbr.rel (0) target = $region13
  $region12: #{_lambda_.23} parent=0 // pred_region
    _
  $region13: #{_lambda_.23} parent=0 // pred_fallthru
    _
  %p15 = scmp.eq.s32.totalorder 0, 0
  // Predicated region
  $region14: #{_lambda_.23} parent=0 // pred_check
    %p16 = pneg %p15
  $region15: #{_lambda_.23} parent=0 // pred_check_branch
    %18 = sbr.rel (%p16) target = $region17
  $region16: #{_lambda_.23} parent=0 // pred_region
    %19 = vst [vmem:[#allocation2] sm:$0xff] 0.0
    %20 = vst [vmem:[#allocation2 + $0x8] sm:$0xff] 0.0
    %21 = vst [vmem:[#allocation2 + $0x10] sm:$0xff] 0.0
    %22 = vst [vmem:[#allocation2 + $0x18] sm:$0xff] 0.0
    %23 = vst [vmem:[#allocation2 + $0x20] sm:$0xff] 0.0
    %24 = vst [vmem:[#allocation2 + $0x28] sm:$0xff] 0.0
    %25 = vst [vmem:[#allocation2 + $0x30] sm:$0xff] 0.0
    %26 = vst [vmem:[#allocation2 + $0x38] sm:$0xff] 0.0
    %27 = vst [vmem:[#allocation2 + $0x40] sm:$0xff] 0.0
    %28 = vst [vmem:[#allocation2 + $0x48] sm:$0xff] 0.0
    %29 = vst [vmem:[#allocation2 + $0x50] sm:$0xff] 0.0
    %30 = vst [vmem:[#allocation2 + $0x58] sm:$0xff] 0.0
    %31 = vst [vmem:[#allocation2 + $0x60] sm:$0xff] 0.0
    %32 = vst [vmem:[#allocation2 + $0x68] sm:$0xff] 0.0
    %33 = vst [vmem:[#allocation2 + $0x70] sm:$0xff] 0.0
    %34 = vst [vmem:[#allocation2 + $0x78] sm:$0xff] 0.0
  $region17: #{_lambda_.23} parent=0 // pred_fallthru
    _
  %v35 = vld [vmem:[#allocation2] sm:$0xff]
  %v36 = vld [vmem:[#allocation2 + $0x8] sm:$0xff]
  %v37 = vld [vmem:[#allocation2 + $0x10] sm:$0xff]
  %v38 = vld [vmem:[#allocation2 + $0x18] sm:$0xff]
  %v39 = vld [vmem:[#allocation2 + $0x20] sm:$0xff]
  %v40 = vld [vmem:[#allocation2 + $0x28] sm:$0xff]
  %v41 = vld [vmem:[#allocation2 + $0x30] sm:$0xff]
  %v42 = vld [vmem:[#allocation2 + $0x38] sm:$0xff]
  %v43 = vld [vmem:[#allocation2 + $0x40] sm:$0xff]
  %v44 = vld [vmem:[#allocation2 + $0x48] sm:$0xff]
  %v45 = vld [vmem:[#allocation2 + $0x50] sm:$0xff]
  %v46 = vld [vmem:[#allocation2 + $0x58] sm:$0xff]
  %v47 = vld [vmem:[#allocation2 + $0x60] sm:$0xff]
  %v48 = vld [vmem:[#allocation2 + $0x68] sm:$0xff]
  %v49 = vld [vmem:[#allocation2 + $0x70] sm:$0xff]
  %v50 = vld [vmem:[#allocation2 + $0x78] sm:$0xff]
  %v51 = vld [vmem:[%s0] sm:$0xff]
  %v52 = vld [vmem:[%s0 + $0x8] sm:$0xf]
  %v53 = vld [vmem:[%s0 + $0xc] sm:$0xff]
  %v54 = vld [vmem:[%s0 + $0x14] sm:$0xf]
  %v55 = vld [vmem:[%s0 + $0x18] sm:$0xff]
  %v56 = vld [vmem:[%s0 + $0x20] sm:$0xf]
  %v57 = vld [vmem:[%s0 + $0x24] sm:$0xff]
  %v58 = vld [vmem:[%s0 + $0x2c] sm:$0xf]
  %v59 = vld [vmem:[%s0 + $0x30] sm:$0xff]
  %v60 = vld [vmem:[%s0 + $0x38] sm:$0xf]
  %v61 = vld [vmem:[%s0 + $0x3c] sm:$0xff]
  %v62 = vld [vmem:[%s0 + $0x44] sm:$0xf]
  %v63 = vld [vmem:[%s0 + $0x48] sm:$0xff]
  %v64 = vld [vmem:[%s0 + $0x50] sm:$0xf]
  %v65 = vld [vmem:[%s0 + $0x54] sm:$0xff]
  %v66 = vld [vmem:[%s0 + $0x5c] sm:$0xf]
  %v67 = vld [vmem:[%s0 + $0x60] sm:$0xff]
  %v68 = vld [vmem:[%s0 + $0x68] sm:$0xf]
  %v69 = vld [vmem:[%s0 + $0x6c] sm:$0xff]
  %v70 = vld [vmem:[%s0 + $0x74] sm:$0xf]
  %v71 = vld [vmem:[%s0 + $0x78] sm:$0xff]
  %v72 = vld [vmem:[%s0 + $0x80] sm:$0xf]
  %v73 = vld [vmem:[%s0 + $0x84] sm:$0xff]
  %v74 = vld [vmem:[%s0 + $0x8c] sm:$0xf]
  %v75 = vld [vmem:[%s0 + $0x90] sm:$0xff]
  %v76 = vld [vmem:[%s0 + $0x98] sm:$0xf]
  %v77 = vld [vmem:[%s0 + $0x9c] sm:$0xff]
  %v78 = vld [vmem:[%s0 + $0xa4] sm:$0xf]
  %v79 = vld [vmem:[%s0 + $0xa8] sm:$0xff]
  %v80 = vld [vmem:[%s0 + $0xb0] sm:$0xf]
  %v81 = vld [vmem:[%s0 + $0xb4] sm:$0xff]
  %v82 = vld [vmem:[%s0 + $0xbc] sm:$0xf]
  %v83 = vld [vmem:[%s1] sm:$0xf]
  %v84 = vld [vmem:[%s1 + $0x4] sm:$0xf]
  %v85 = vld [vmem:[%s1 + $0x8] sm:$0xf]
  %v86 = vld [vmem:[%s1 + $0xc] sm:$0xf]
  %v87 = vld [vmem:[%s1 + $0x10] sm:$0xf]
  %v88 = vld [vmem:[%s1 + $0x14] sm:$0xf]
  %v89 = vld [vmem:[%s1 + $0x18] sm:$0xf]
  %v90 = vld [vmem:[%s1 + $0x1c] sm:$0xf]
  %v91 = vld [vmem:[%s1 + $0x20] sm:$0xf]
  %v92 = vld [vmem:[%s1 + $0x24] sm:$0xf]
  %v93 = vld [vmem:[%s1 + $0x28] sm:$0xf]
  %v94 = vld [vmem:[%s1 + $0x2c] sm:$0xf]
  %v95 = vld [vmem:[%s1 + $0x30] sm:$0xf]
  %v96 = vld [vmem:[%s1 + $0x34] sm:$0xf]
  %v97 = vld [vmem:[%s1 + $0x38] sm:$0xf]
  %v98 = vld [vmem:[%s1 + $0x3c] sm:$0xf]
  %v99 = vld [vmem:[%s1 + $0x40] sm:$0xf]
  %v100 = vld [vmem:[%s1 + $0x44] sm:$0xf]
  %v101 = vld [vmem:[%s1 + $0x48] sm:$0xf]
  %v102 = vld [vmem:[%s1 + $0x4c] sm:$0xf]
  %v103 = vld [vmem:[%s1 + $0x50] sm:$0xf]
  %v104 = vld [vmem:[%s1 + $0x54] sm:$0xf]
  %v105 = vld [vmem:[%s1 + $0x58] sm:$0xf]
  %v106 = vld [vmem:[%s1 + $0x5c] sm:$0xf]
  %v107 = vld [vmem:[%s1 + $0x60] sm:$0xf]
  %v108 = vld [vmem:[%s1 + $0x64] sm:$0xf]
  %v109 = vld [vmem:[%s1 + $0x68] sm:$0xf]
  %v110 = vld [vmem:[%s1 + $0x6c] sm:$0xf]
  %v111 = vld [vmem:[%s1 + $0x70] sm:$0xf]
  %v112 = vld [vmem:[%s1 + $0x74] sm:$0xf]
  %v113 = vld [vmem:[%s1 + $0x78] sm:$0xf]
  %v114 = vld [vmem:[%s1 + $0x7c] sm:$0xf]
  %v115 = vld [vmem:[%s1 + $0x80] sm:$0xf]
  %v116 = vld [vmem:[%s1 + $0x84] sm:$0xf]
  %v117 = vld [vmem:[%s1 + $0x88] sm:$0xf]
  %v118 = vld [vmem:[%s1 + $0x8c] sm:$0xf]
  %v119 = vld [vmem:[%s1 + $0x90] sm:$0xf]
  %v120 = vld [vmem:[%s1 + $0x94] sm:$0xf]
  %v121 = vld [vmem:[%s1 + $0x98] sm:$0xf]
  %v122 = vld [vmem:[%s1 + $0x9c] sm:$0xf]
  %v123 = vld [vmem:[%s1 + $0xa0] sm:$0xf]
  %v124 = vld [vmem:[%s1 + $0xa4] sm:$0xf]
  %v125 = vld [vmem:[%s1 + $0xa8] sm:$0xf]
  %v126 = vld [vmem:[%s1 + $0xac] sm:$0xf]
  %v127 = vld [vmem:[%s1 + $0xb0] sm:$0xf]
  %v128 = vld [vmem:[%s1 + $0xb4] sm:$0xf]
  %v129 = vld [vmem:[%s1 + $0xb8] sm:$0xf]
  %v130 = vld [vmem:[%s1 + $0xbc] sm:$0xf]
  %v163 = vunpack.c.l.b16 %v51
  %v164 = vunpack.c.h.b16 %v51
  %v165 = vunpack.c.l.b16 %v52
  %v166 = vunpack.c.l.b16 %v53
  %v167 = vunpack.c.h.b16 %v53
  %v168 = vunpack.c.l.b16 %v54
  %v169 = vunpack.c.l.b16 %v55
  %v170 = vunpack.c.h.b16 %v55
  %v171 = vunpack.c.l.b16 %v56
  %v172 = vunpack.c.l.b16 %v57
  %v173 = vunpack.c.h.b16 %v57
  %v174 = vunpack.c.l.b16 %v58
  %v175 = vunpack.c.l.b16 %v59
  %v176 = vunpack.c.h.b16 %v59
  %v177 = vunpack.c.l.b16 %v60
  %v178 = vunpack.c.l.b16 %v61
  %v179 = vunpack.c.h.b16 %v61
  %v180 = vunpack.c.l.b16 %v62
  %v181 = vunpack.c.l.b16 %v63
  %v182 = vunpack.c.h.b16 %v63
  %v183 = vunpack.c.l.b16 %v64
  %v184 = vunpack.c.l.b16 %v65
  %v185 = vunpack.c.h.b16 %v65
  %v186 = vunpack.c.l.b16 %v66
  %v187 = vunpack.c.l.b16 %v67
  %v188 = vunpack.c.h.b16 %v67
  %v189 = vunpack.c.l.b16 %v68
  %v190 = vunpack.c.l.b16 %v69
  %v191 = vunpack.c.h.b16 %v69
  %v192 = vunpack.c.l.b16 %v70
  %v193 = vunpack.c.l.b16 %v71
  %v194 = vunpack.c.h.b16 %v71
  %v195 = vunpack.c.l.b16 %v72
  %v196 = vunpack.c.l.b16 %v73
  %v197 = vunpack.c.h.b16 %v73
  %v198 = vunpack.c.l.b16 %v74
  %v199 = vunpack.c.l.b16 %v75
  %v200 = vunpack.c.h.b16 %v75
  %v201 = vunpack.c.l.b16 %v76
  %v202 = vunpack.c.l.b16 %v77
  %v203 = vunpack.c.h.b16 %v77
  %v204 = vunpack.c.l.b16 %v78
  %v205 = vunpack.c.l.b16 %v79
  %v206 = vunpack.c.h.b16 %v79
  %v207 = vunpack.c.l.b16 %v80
  %v208 = vunpack.c.l.b16 %v81
  %v209 = vunpack.c.h.b16 %v81
  %v210 = vunpack.c.l.b16 %v82
  %v211 = vpack.c.b16 %v166, %v163
  %v212 = vpack.c.b16 %v167, %v164
  %v213 = vpack.c.b16 %v168, %v165
  %v214 = vpack.c.b16 %v172, %v169
  %v215 = vpack.c.b16 %v173, %v170
  %v216 = vpack.c.b16 %v174, %v171
  %v217 = vpack.c.b16 %v178, %v175
  %v218 = vpack.c.b16 %v179, %v176
  %v219 = vpack.c.b16 %v180, %v177
  %v220 = vpack.c.b16 %v184, %v181
  %v221 = vpack.c.b16 %v185, %v182
  %v222 = vpack.c.b16 %v186, %v183
  %v223 = vpack.c.b16 %v190, %v187
  %v224 = vpack.c.b16 %v191, %v188
  %v225 = vpack.c.b16 %v192, %v189
  %v226 = vpack.c.b16 %v196, %v193
  %v227 = vpack.c.b16 %v197, %v194
  %v228 = vpack.c.b16 %v198, %v195
  %v229 = vpack.c.b16 %v202, %v199
  %v230 = vpack.c.b16 %v203, %v200
  %v231 = vpack.c.b16 %v204, %v201
  %v232 = vpack.c.b16 %v208, %v205
  %v233 = vpack.c.b16 %v209, %v206
  %v234 = vpack.c.b16 %v210, %v207
  %v307 = vunpack.c.l.b16 %v83
  %v308 = vunpack.c.l.b16 %v84
  %v309 = vunpack.c.l.b16 %v85
  %v310 = vunpack.c.l.b16 %v86
  %v311 = vunpack.c.l.b16 %v87
  %v312 = vunpack.c.l.b16 %v88
  %v313 = vunpack.c.l.b16 %v89
  %v314 = vunpack.c.l.b16 %v90
  %v315 = vunpack.c.l.b16 %v91
  %v316 = vunpack.c.l.b16 %v92
  %v317 = vunpack.c.l.b16 %v93
  %v318 = vunpack.c.l.b16 %v94
  %v319 = vunpack.c.l.b16 %v95
  %v320 = vunpack.c.l.b16 %v96
  %v321 = vunpack.c.l.b16 %v97
  %v322 = vunpack.c.l.b16 %v98
  %v323 = vunpack.c.l.b16 %v99
  %v324 = vunpack.c.l.b16 %v100
  %v325 = vunpack.c.l.b16 %v101
  %v326 = vunpack.c.l.b16 %v102
  %v327 = vunpack.c.l.b16 %v103
  %v328 = vunpack.c.l.b16 %v104
  %v329 = vunpack.c.l.b16 %v105
  %v330 = vunpack.c.l.b16 %v106
  %v331 = vunpack.c.l.b16 %v107
  %v332 = vunpack.c.l.b16 %v108
  %v333 = vunpack.c.l.b16 %v109
  %v334 = vunpack.c.l.b16 %v110
  %v335 = vunpack.c.l.b16 %v111
  %v336 = vunpack.c.l.b16 %v112
  %v337 = vunpack.c.l.b16 %v113
  %v338 = vunpack.c.l.b16 %v114
  %v339 = vunpack.c.l.b16 %v115
  %v340 = vunpack.c.l.b16 %v116
  %v341 = vunpack.c.l.b16 %v117
  %v342 = vunpack.c.l.b16 %v118
  %v343 = vunpack.c.l.b16 %v119
  %v344 = vunpack.c.l.b16 %v120
  %v345 = vunpack.c.l.b16 %v121
  %v346 = vunpack.c.l.b16 %v122
  %v347 = vunpack.c.l.b16 %v123
  %v348 = vunpack.c.l.b16 %v124
  %v349 = vunpack.c.l.b16 %v125
  %v350 = vunpack.c.l.b16 %v126
  %v351 = vunpack.c.l.b16 %v127
  %v352 = vunpack.c.l.b16 %v128
  %v353 = vunpack.c.l.b16 %v129
  %v354 = vunpack.c.l.b16 %v130
  %v355 = vpack.c.b16 %v308, %v307
  %v356 = vpack.c.b16 %v310, %v309
  %v357 = vpack.c.b16 %v312, %v311
  %v358 = vpack.c.b16 %v314, %v313
  %v359 = vpack.c.b16 %v316, %v315
  %v360 = vpack.c.b16 %v318, %v317
  %v361 = vpack.c.b16 %v320, %v319
  %v362 = vpack.c.b16 %v322, %v321
  %v363 = vpack.c.b16 %v324, %v323
  %v364 = vpack.c.b16 %v326, %v325
  %v365 = vpack.c.b16 %v328, %v327
  %v366 = vpack.c.b16 %v330, %v329
  %v367 = vpack.c.b16 %v332, %v331
  %v368 = vpack.c.b16 %v334, %v333
  %v369 = vpack.c.b16 %v336, %v335
  %v370 = vpack.c.b16 %v338, %v337
  %v371 = vpack.c.b16 %v340, %v339
  %v372 = vpack.c.b16 %v342, %v341
  %v373 = vpack.c.b16 %v344, %v343
  %v374 = vpack.c.b16 %v346, %v345
  %v375 = vpack.c.b16 %v348, %v347
  %v376 = vpack.c.b16 %v350, %v349
  %v377 = vpack.c.b16 %v352, %v351
  %v378 = vpack.c.b16 %v354, %v353
  %403 = vmatprep.subr.bf16.mxu0 0
  %404 = vmatpush1.bf16.msra.mxu0 %v362
  %405 = vmatprep.subr.bf16.mxu0 0
  %406 = vmatpush1.bf16.msra.mxu0 %v361
  %407 = vmatprep.subr.bf16.mxu0 0
  %408 = vmatpush1.bf16.msra.mxu0 %v360
  %409 = vmatprep.subr.bf16.mxu0 0
  %410 = vmatpush1.bf16.msra.mxu0 %v359
  %411 = vmatprep.subr.bf16.mxu0 0
  %412 = vmatpush1.bf16.msra.mxu0 %v358
  %413 = vmatprep.subr.bf16.mxu0 0
  %414 = vmatpush1.bf16.msra.mxu0 %v357
  %415 = vmatprep.subr.bf16.mxu0 0
  %416 = vmatpush1.bf16.msra.mxu0 %v356
  %417 = vmatprep.subr.bf16.mxu0 0
  %418 = vmatpush1.bf16.msra.mxu0 %v355
  %419 = vmatprep.subr.bf16.mxu0 0
  %420 = vmatpush2.bf16.msra.mxu0 %v370
  %421 = vmatprep.subr.bf16.mxu0 0
  %422 = vmatpush2.bf16.msra.mxu0 %v369
  %423 = vmatprep.subr.bf16.mxu0 0
  %424 = vmatpush2.bf16.msra.mxu0 %v368
  %425 = vmatprep.subr.bf16.mxu0 0
  %426 = vmatpush2.bf16.msra.mxu0 %v367
  %427 = vmatprep.subr.bf16.mxu0 0
  %428 = vmatpush2.bf16.msra.mxu0 %v366
  %429 = vmatprep.subr.bf16.mxu0 0
  %430 = vmatpush2.bf16.msra.mxu0 %v365
  %431 = vmatprep.subr.bf16.mxu0 0
  %432 = vmatpush2.bf16.msra.mxu0 %v364
  %433 = vmatprep.subr.bf16.mxu0 0
  %434 = vmatpush2.bf16.msra.mxu0 %v363
  %435 = vmatprep.mubr.bf16.mxu0 %v212
  %436 = vmatmul.mubr.bf16.gmra.mxu0 %v211
  %v437 = vpop.f32.mrf.mxu0
  %v438 = vadd.f32 0.0, %v437
  %v439 = vpop.f32.mrf.mxu0
  %v440 = vpop.f32.mrf.mxu0
  %v441 = vadd.f32 0.0, %v440
  %v442 = vpop.f32.mrf.mxu0
  %443 = vmatprep.mubr.bf16.mxu0 %v215
  %444 = vmatmul.mubr.bf16.gmra.mxu0 %v214
  %v445 = vpop.f32.mrf.mxu0
  %v446 = vadd.f32 0.0, %v445
  %v447 = vpop.f32.mrf.mxu0
  %v448 = vpop.f32.mrf.mxu0
  %v449 = vadd.f32 0.0, %v448
  %v450 = vpop.f32.mrf.mxu0
  %451 = vmatprep.mubr.bf16.mxu0 %v218
  %452 = vmatmul.mubr.bf16.gmra.mxu0 %v217
  %v453 = vpop.f32.mrf.mxu0
  %v454 = vadd.f32 0.0, %v453
  %v455 = vpop.f32.mrf.mxu0
  %v456 = vpop.f32.mrf.mxu0
  %v457 = vadd.f32 0.0, %v456
  %v458 = vpop.f32.mrf.mxu0
  %459 = vmatprep.mubr.bf16.mxu0 %v221
  %460 = vmatmul.mubr.bf16.gmra.mxu0 %v220
  %v461 = vpop.f32.mrf.mxu0
  %v462 = vadd.f32 0.0, %v461
  %v463 = vpop.f32.mrf.mxu0
  %v464 = vpop.f32.mrf.mxu0
  %v465 = vadd.f32 0.0, %v464
  %v466 = vpop.f32.mrf.mxu0
  %467 = vmatprep.mubr.bf16.mxu0 %v224
  %468 = vmatmul.mubr.bf16.gmra.mxu0 %v223
  %v469 = vpop.f32.mrf.mxu0
  %v470 = vadd.f32 0.0, %v469
  %v471 = vpop.f32.mrf.mxu0
  %v472 = vpop.f32.mrf.mxu0
  %v473 = vadd.f32 0.0, %v472
  %v474 = vpop.f32.mrf.mxu0
  %475 = vmatprep.mubr.bf16.mxu0 %v227
  %476 = vmatmul.mubr.bf16.gmra.mxu0 %v226
  %v477 = vpop.f32.mrf.mxu0
  %v478 = vadd.f32 0.0, %v477
  %v479 = vpop.f32.mrf.mxu0
  %v480 = vpop.f32.mrf.mxu0
  %v481 = vadd.f32 0.0, %v480
  %v482 = vpop.f32.mrf.mxu0
  %483 = vmatprep.mubr.bf16.mxu0 %v230
  %484 = vmatmul.mubr.bf16.gmra.mxu0 %v229
  %v485 = vpop.f32.mrf.mxu0
  %v486 = vadd.f32 0.0, %v485
  %v487 = vpop.f32.mrf.mxu0
  %v488 = vpop.f32.mrf.mxu0
  %v489 = vadd.f32 0.0, %v488
  %v490 = vpop.f32.mrf.mxu0
  %491 = vmatprep.mubr.bf16.mxu0 %v233
  %492 = vmatmul.mubr.bf16.gmra.mxu0 %v232
  %v493 = vpop.f32.mrf.mxu0
  %v494 = vadd.f32 0.0, %v493
  %v495 = vpop.f32.mrf.mxu0
  %v496 = vpop.f32.mrf.mxu0
  %v497 = vadd.f32 0.0, %v496
  %v498 = vpop.f32.mrf.mxu0
  %499 = vdwg.mxu0
  %500 = vmatprep.subr.bf16.mxu0 0
  %501 = vmatpush1.bf16.msra.mxu0 %v378
  %502 = vmatprep.subr.bf16.mxu0 0
  %503 = vmatpush1.bf16.msra.mxu0 %v377
  %504 = vmatprep.subr.bf16.mxu0 0
  %505 = vmatpush1.bf16.msra.mxu0 %v376
  %506 = vmatprep.subr.bf16.mxu0 0
  %507 = vmatpush1.bf16.msra.mxu0 %v375
  %508 = vmatprep.subr.bf16.mxu0 0
  %509 = vmatpush1.bf16.msra.mxu0 %v374
  %510 = vmatprep.subr.bf16.mxu0 0
  %511 = vmatpush1.bf16.msra.mxu0 %v373
  %512 = vmatprep.subr.bf16.mxu0 0
  %513 = vmatpush1.bf16.msra.mxu0 %v372
  %514 = vmatprep.subr.bf16.mxu0 0
  %515 = vmatpush1.bf16.msra.mxu0 %v371
  %516 = vmatprep.subr.bf16.mxu0 0
  %517 = vmatpush2.bf16.msra.mxu0 0
  %518 = vmatprep.subr.bf16.mxu0 0
  %519 = vmatpush2.bf16.msra.mxu0 0
  %520 = vmatprep.subr.bf16.mxu0 0
  %521 = vmatpush2.bf16.msra.mxu0 0
  %522 = vmatprep.subr.bf16.mxu0 0
  %523 = vmatpush2.bf16.msra.mxu0 0
  %524 = vmatprep.subr.bf16.mxu0 0
  %525 = vmatpush2.bf16.msra.mxu0 0
  %526 = vmatprep.subr.bf16.mxu0 0
  %527 = vmatpush2.bf16.msra.mxu0 0
  %528 = vmatprep.subr.bf16.mxu0 0
  %529 = vmatpush2.bf16.msra.mxu0 0
  %530 = vmatprep.subr.bf16.mxu0 0
  %531 = vmatpush2.bf16.msra.mxu0 0
  %532 = vmatprep.mubr.bf16.mxu0 0
  %533 = vmatmul.mubr.bf16.gmra.mxu0 %v213
  %v534 = vpop.f32.mrf.mxu0
  %v535 = vadd.f32 %v438, %v534
  %v536 = vpop.f32.mrf.mxu0
  %v537 = vpop.f32.mrf.mxu0
  %v538 = vadd.f32 %v441, %v537
  %v539 = vpop.f32.mrf.mxu0
  %540 = vmatprep.mubr.bf16.mxu0 0
  %541 = vmatmul.mubr.bf16.gmra.mxu0 %v216
  %v542 = vpop.f32.mrf.mxu0
  %v543 = vadd.f32 %v446, %v542
  %v544 = vpop.f32.mrf.mxu0
  %v545 = vpop.f32.mrf.mxu0
  %v546 = vadd.f32 %v449, %v545
  %v547 = vpop.f32.mrf.mxu0
  %548 = vmatprep.mubr.bf16.mxu0 0
  %549 = vmatmul.mubr.bf16.gmra.mxu0 %v219
  %v550 = vpop.f32.mrf.mxu0
  %v551 = vadd.f32 %v454, %v550
  %v552 = vpop.f32.mrf.mxu0
  %v553 = vpop.f32.mrf.mxu0
  %v554 = vadd.f32 %v457, %v553
  %v555 = vpop.f32.mrf.mxu0
  %556 = vmatprep.mubr.bf16.mxu0 0
  %557 = vmatmul.mubr.bf16.gmra.mxu0 %v222
  %v558 = vpop.f32.mrf.mxu0
  %v559 = vadd.f32 %v462, %v558
  %v560 = vpop.f32.mrf.mxu0
  %v561 = vpop.f32.mrf.mxu0
  %v562 = vadd.f32 %v465, %v561
  %v563 = vpop.f32.mrf.mxu0
  %564 = vmatprep.mubr.bf16.mxu0 0
  %565 = vmatmul.mubr.bf16.gmra.mxu0 %v225
  %v566 = vpop.f32.mrf.mxu0
  %v567 = vadd.f32 %v470, %v566
  %v568 = vpop.f32.mrf.mxu0
  %v569 = vpop.f32.mrf.mxu0
  %v570 = vadd.f32 %v473, %v569
  %v571 = vpop.f32.mrf.mxu0
  %572 = vmatprep.mubr.bf16.mxu0 0
  %573 = vmatmul.mubr.bf16.gmra.mxu0 %v228
  %v574 = vpop.f32.mrf.mxu0
  %v575 = vadd.f32 %v478, %v574
  %v576 = vpop.f32.mrf.mxu0
  %v577 = vpop.f32.mrf.mxu0
  %v578 = vadd.f32 %v481, %v577
  %v579 = vpop.f32.mrf.mxu0
  %580 = vmatprep.mubr.bf16.mxu0 0
  %581 = vmatmul.mubr.bf16.gmra.mxu0 %v231
  %v582 = vpop.f32.mrf.mxu0
  %v583 = vadd.f32 %v486, %v582
  %v584 = vpop.f32.mrf.mxu0
  %v585 = vpop.f32.mrf.mxu0
  %v586 = vadd.f32 %v489, %v585
  %v587 = vpop.f32.mrf.mxu0
  %588 = vmatprep.mubr.bf16.mxu0 0
  %589 = vmatmul.mubr.bf16.gmra.mxu0 %v234
  %v590 = vpop.f32.mrf.mxu0
  %v591 = vadd.f32 %v494, %v590
  %v592 = vpop.f32.mrf.mxu0
  %v593 = vpop.f32.mrf.mxu0
  %v594 = vadd.f32 %v497, %v593
  %v595 = vpop.f32.mrf.mxu0
  %596 = vdwg.mxu0
  %v597 = vadd.f32 %v35, %v535
  %v598 = vadd.f32 %v36, %v538
  %v599 = vadd.f32 %v37, %v543
  %v600 = vadd.f32 %v38, %v546
  %v601 = vadd.f32 %v39, %v551
  %v602 = vadd.f32 %v40, %v554
  %v603 = vadd.f32 %v41, %v559
  %v604 = vadd.f32 %v42, %v562
  %v605 = vadd.f32 %v43, %v567
  %v606 = vadd.f32 %v44, %v570
  %v607 = vadd.f32 %v45, %v575
  %v608 = vadd.f32 %v46, %v578
  %v609 = vadd.f32 %v47, %v583
  %v610 = vadd.f32 %v48, %v586
  %v611 = vadd.f32 %v49, %v591
  %v612 = vadd.f32 %v50, %v594
  %613 = vst [vmem:[#allocation2] sm:$0xff] %v597
  %614 = vst [vmem:[#allocation2 + $0x8] sm:$0xff] %v598
  %615 = vst [vmem:[#allocation2 + $0x10] sm:$0xff] %v599
  %616 = vst [vmem:[#allocation2 + $0x18] sm:$0xff] %v600
  %617 = vst [vmem:[#allocation2 + $0x20] sm:$0xff] %v601
  %618 = vst [vmem:[#allocation2 + $0x28] sm:$0xff] %v602
  %619 = vst [vmem:[#allocation2 + $0x30] sm:$0xff] %v603
  %620 = vst [vmem:[#allocation2 + $0x38] sm:$0xff] %v604
  %621 = vst [vmem:[#allocation2 + $0x40] sm:$0xff] %v605
  %622 = vst [vmem:[#allocation2 + $0x48] sm:$0xff] %v606
  %623 = vst [vmem:[#allocation2 + $0x50] sm:$0xff] %v607
  %624 = vst [vmem:[#allocation2 + $0x58] sm:$0xff] %v608
  %625 = vst [vmem:[#allocation2 + $0x60] sm:$0xff] %v609
  %626 = vst [vmem:[#allocation2 + $0x68] sm:$0xff] %v610
  %627 = vst [vmem:[#allocation2 + $0x70] sm:$0xff] %v611
  %628 = vst [vmem:[#allocation2 + $0x78] sm:$0xff] %v612
  // Predicated region
  $region18: #{_lambda_.23} parent=0 // pred_check
    %p629 = pneg %p15
  $region19: #{_lambda_.23} parent=0 // pred_check_branch
    %631 = sbr.rel (%p629) target = $region21
  $region20: #{_lambda_.23} parent=0 // pred_region
    %v632 = vld [vmem:[#allocation2] sm:$0xff]
    %v633 = vld [vmem:[#allocation2 + $0x8] sm:$0xff]
    %v634 = vld [vmem:[#allocation2 + $0x10] sm:$0xff]
    %v635 = vld [vmem:[#allocation2 + $0x18] sm:$0xff]
    %v636 = vld [vmem:[#allocation2 + $0x20] sm:$0xff]
    %v637 = vld [vmem:[#allocation2 + $0x28] sm:$0xff]
    %v638 = vld [vmem:[#allocation2 + $0x30] sm:$0xff]
    %v639 = vld [vmem:[#allocation2 + $0x38] sm:$0xff]
    %v640 = vld [vmem:[#allocation2 + $0x40] sm:$0xff]
    %v641 = vld [vmem:[#allocation2 + $0x48] sm:$0xff]
    %v642 = vld [vmem:[#allocation2 + $0x50] sm:$0xff]
    %v643 = vld [vmem:[#allocation2 + $0x58] sm:$0xff]
    %v644 = vld [vmem:[#allocation2 + $0x60] sm:$0xff]
    %v645 = vld [vmem:[#allocation2 + $0x68] sm:$0xff]
    %v646 = vld [vmem:[#allocation2 + $0x70] sm:$0xff]
    %v647 = vld [vmem:[#allocation2 + $0x78] sm:$0xff]
    %v648 = vld [vmem:[%s2] sm:$0x1]
    %v650 = vlaneseq
    %v651 = vshrl.u32 %v650, 7
    %v652 = vsub.s32 0, %v651
    %v653 = vrot.slane %v648, %v652
    %v655 = vadd.f32 %v632, %v653
    %v656 = vadd.f32 %v633, %v653
    %v657 = vadd.f32 %v634, %v653
    %v658 = vadd.f32 %v635, %v653
    %v659 = vadd.f32 %v636, %v653
    %v660 = vadd.f32 %v637, %v653
    %v661 = vadd.f32 %v638, %v653
    %v662 = vadd.f32 %v639, %v653
    %v663 = vadd.f32 %v640, %v653
    %v664 = vadd.f32 %v641, %v653
    %v665 = vadd.f32 %v642, %v653
    %v666 = vadd.f32 %v643, %v653
    %v667 = vadd.f32 %v644, %v653
    %v668 = vadd.f32 %v645, %v653
    %v669 = vadd.f32 %v646, %v653
    %v670 = vadd.f32 %v647, %v653
    %671 = vst [vmem:[%s3] sm:$0xff] %v655
    %672 = vst [vmem:[%s3 + $0x8] sm:$0xff] %v656
    %673 = vst [vmem:[%s3 + $0x10] sm:$0xff] %v657
    %674 = vst [vmem:[%s3 + $0x18] sm:$0xff] %v658
    %675 = vst [vmem:[%s3 + $0x20] sm:$0xff] %v659
    %676 = vst [vmem:[%s3 + $0x28] sm:$0xff] %v660
    %677 = vst [vmem:[%s3 + $0x30] sm:$0xff] %v661
    %678 = vst [vmem:[%s3 + $0x38] sm:$0xff] %v662
    %679 = vst [vmem:[%s3 + $0x40] sm:$0xff] %v663
    %680 = vst [vmem:[%s3 + $0x48] sm:$0xff] %v664
    %681 = vst [vmem:[%s3 + $0x50] sm:$0xff] %v665
    %682 = vst [vmem:[%s3 + $0x58] sm:$0xff] %v666
    %683 = vst [vmem:[%s3 + $0x60] sm:$0xff] %v667
    %684 = vst [vmem:[%s3 + $0x68] sm:$0xff] %v668
    %685 = vst [vmem:[%s3 + $0x70] sm:$0xff] %v669
    %686 = vst [vmem:[%s3 + $0x78] sm:$0xff] %v670
  $region21: #{_lambda_.23} parent=0 // pred_fallthru
    _
  // Predicated region
  $region22: #{_lambda_.23} parent=0 // pred_check
    _
  $region23: #{_lambda_.23} parent=0 // pred_check_branch
    %688 = sbr.rel (0) target = $region25
  $region24: #{_lambda_.23} parent=0 // pred_region
    _
  $region25: #{_lambda_.23} parent=0 // pred_fallthru
    _
  // Predicated region
  $region26: #{_lambda_.23} parent=0 // pred_check
    _
  $region27: #{_lambda_.23} parent=0 // pred_check_branch
    %690 = sbr.rel (0) target = $region29
  $region28: #{_lambda_.23} parent=0 // pred_region
    _
  $region29: #{_lambda_.23} parent=0 // pred_fallthru
    _

// kernel: _lambda_.24
$region0: #{_lambda_.24}
  #allocation0 [shape = 'u32[]', space=smem, size = 0x4, offset = 0x4, fixed_abs, tag = 'smem constant byte address 0x4 - core index']
  #allocation1 [shape = 'u32[144,128]{1,0:T(1,128)}', space=vmem, size = 0x12000, scoped, tag = 'internal scratch']
  #allocation2 [shape = 'f32[32,128]{1,0:T(8,128)}', space=vmem, size = 0x4000, scoped, tag = 'scratch operand']
  %s0 = inlined_call_operand.vmem [shape: bf16[32,640], index: 0, kind: input, shape index: {}]
  %s1 = inlined_call_operand.vmem [shape: bf16[640,128], index: 1, kind: input, shape index: {}]
  %s2 = inlined_call_operand.vmem [shape: f32[1,128], index: 2, kind: input, shape index: {}]
  %s3 = inlined_call_operand.vmem [shape: f32[32,128], index: 3, kind: output, shape index: {}]
  %s4 = sld [smem:[#allocation0]]
  $region94: #{_lambda_.24} parent=0
    _
  %s6 = ssub.s32 1, %s4
  %s7 = scalar_select 0, %s6, %s4
  $region1: #{_lambda_.24} parent=0
    #allocation3 [shape = 'u8[16384]{0}', space=vmem, size = 0x4000, scoped, tag = 'input window, operand 0']
    loop: start=0, step=1, limit=7
    $region2: #{_lambda_.24} parent=1 // loop_pre_header
      _
    $region3: #{_lambda_.24} parent=1 // loop_header
      %s9 = sphi 0, %s13
      %p10 = scmp.ge.s32.totalorder %s9, 7
      %s16 = sphi 0, %s35
      %s17 = sphi 0, %s31
      %s18 = sphi 0, %s27
      %s19 = sphi 0, %s16
      %s20 = sphi 0, %s17
      %s21 = sphi 0, %s18
      %s22 = sphi 0, %s19
      %s23 = sphi 0, %s20
      %s24 = sphi 0, %s21
      %s40 = sphi 0, %s42
      %s43 = sphi 0, %s40
      %s44 = sphi 0, %s43
      %s60 = sphi 0, %s44
      %s68 = sphi 0, %s70
      %s71 = sphi 0, %s68
      %s72 = sphi 0, %s71
      %s88 = sphi 0, %s72
      %s94 = sphi 0, %s96
      %s97 = sphi 0, %s94
      %s98 = sphi 0, %s97
      %s114 = sphi 0, %s98
      %s122 = sphi 0, %s124
      %s125 = sphi 0, %s122
      %s126 = sphi 0, %s125
      %s142 = sphi 0, %s126
    $region4: #{_lambda_.24} parent=1 // loop_header_branch
      %12 = sbr.rel (%p10) target = $region8
    $region5: #{_lambda_.24} parent=1 // loop_body
      %s14 = ssub.s32 %s9, 1
      %s15 = ssub.s32 %s9, 2
      %s25 = sadd.s32 1, %s18
      %p26 = scmp.ge.s32.totalorder %s25, 5
      %s27 = scalar_select %p26, 0, %s25
      %s28 = sadd.s32 1, %s17
      %s29 = scalar_select %p26, %s28, %s17
      %p30 = scmp.ge.s32.totalorder %s29, 1
      %s31 = scalar_select %p30, 0, %s29
      %s32 = sadd.s32 1, %s16
      %s33 = scalar_select %p30, %s32, %s16
      %p34 = scmp.ge.s32.totalorder %s33, 1
      %s35 = scalar_select %p34, 0, %s33
      %s36 = ssub.s32 %s16, %s35
      %s37 = ssub.s32 %s18, %s27
      %s38 = sor.u32 %s36, %s37
      %p39 = scmp.eq.s32.totalorder %s38, 0
      %s41 = sadd.s32 %s40, 1
      %s42 = scalar_select %p39, %s40, %s41
      %p45 = pneg %p39
      %p46 = scmp.eq.s32.totalorder %s9, 4
      %p47 = por %p45, %p46
      %p48 = scmp.ne.s32.totalorder %s40, %s43
      %p49 = scmp.eq.s32.totalorder %s9, 0
      %p50 = por %p48, %p49
      %p51 = scmp.ne.s32.totalorder %s40, %s43
      %p52 = scmp.eq.s32.totalorder %s14, 4
      %p53 = por %p51, %p52
      %p54 = scmp.ne.s32.totalorder %s43, %s44
      %p55 = scmp.eq.s32.totalorder %s14, 0
      %p56 = por %p54, %p55
      %p57 = scmp.ne.s32.totalorder %s43, %s44
      %p58 = scmp.eq.s32.totalorder %s15, 4
      %p59 = por %p57, %p58
      %p61 = scmp.ne.s32.totalorder %s44, %s60
      %p62 = scmp.eq.s32.totalorder %s15, 0
      %p63 = por %p61, %p62
      %s64 = ssub.s32 %s18, %s27
      %s65 = ssub.s32 %s17, %s31
      %s66 = sor.u32 %s64, %s65
      %p67 = scmp.eq.s32.totalorder %s66, 0
      %s69 = sadd.s32 %s68, 1
      %s70 = scalar_select %p67, %s68, %s69
      %p73 = pneg %p67
      %p74 = scmp.eq.s32.totalorder %s9, 4
      %p75 = por %p73, %p74
      %p76 = scmp.ne.s32.totalorder %s68, %s71
      %p77 = scmp.eq.s32.totalorder %s9, 0
      %p78 = por %p76, %p77
      %p79 = scmp.ne.s32.totalorder %s68, %s71
      %p80 = scmp.eq.s32.totalorder %s14, 4
      %p81 = por %p79, %p80
      %p82 = scmp.ne.s32.totalorder %s71, %s72
      %p83 = scmp.eq.s32.totalorder %s14, 0
      %p84 = por %p82, %p83
      %p85 = scmp.ne.s32.totalorder %s71, %s72
      %p86 = scmp.eq.s32.totalorder %s15, 4
      %p87 = por %p85, %p86
      %p89 = scmp.ne.s32.totalorder %s72, %s88
      %p90 = scmp.eq.s32.totalorder %s15, 0
      %p91 = por %p89, %p90
      %s92 = ssub.s32 %s17, %s31
      %p93 = scmp.eq.s32.totalorder %s92, 0
      %s95 = sadd.s32 %s94, 1
      %s96 = scalar_select %p93, %s94, %s95
      %p99 = pneg %p93
      %p100 = scmp.eq.s32.totalorder %s9, 4
      %p101 = por %p99, %p100
      %p102 = scmp.ne.s32.totalorder %s94, %s97
      %p103 = scmp.eq.s32.totalorder %s9, 0
      %p104 = por %p102, %p103
      %p105 = scmp.ne.s32.totalorder %s94, %s97
      %p106 = scmp.eq.s32.totalorder %s14, 4
      %p107 = por %p105, %p106
      %p108 = scmp.ne.s32.totalorder %s97, %s98
      %p109 = scmp.eq.s32.totalorder %s14, 0
      %p110 = por %p108, %p109
      %p111 = scmp.ne.s32.totalorder %s97, %s98
      %p112 = scmp.eq.s32.totalorder %s15, 4
      %p113 = por %p111, %p112
      %p115 = scmp.ne.s32.totalorder %s98, %s114
      %p116 = scmp.eq.s32.totalorder %s15, 0
      %p117 = por %p115, %p116
      %s118 = ssub.s32 %s16, %s35
      %s119 = ssub.s32 %s17, %s31
      %s120 = sor.u32 %s118, %s119
      %p121 = scmp.eq.s32.totalorder %s120, 0
      %s123 = sadd.s32 %s122, 1
      %s124 = scalar_select %p121, %s122, %s123
      %p127 = pneg %p121
      %p128 = scmp.eq.s32.totalorder %s9, 4
      %p129 = por %p127, %p128
      %p130 = scmp.ne.s32.totalorder %s122, %s125
      %p131 = scmp.eq.s32.totalorder %s9, 0
      %p132 = por %p130, %p131
      %p133 = scmp.ne.s32.totalorder %s122, %s125
      %p134 = scmp.eq.s32.totalorder %s14, 4
      %p135 = por %p133, %p134
      %p136 = scmp.ne.s32.totalorder %s125, %s126
      %p137 = scmp.eq.s32.totalorder %s14, 0
      %p138 = por %p136, %p137
      %p139 = scmp.ne.s32.totalorder %s125, %s126
      %p140 = scmp.eq.s32.totalorder %s15, 4
      %p141 = por %p139, %p140
      %p143 = scmp.ne.s32.totalorder %s126, %s142
      %p144 = scmp.eq.s32.totalorder %s15, 0
      %p145 = por %p143, %p144
      %p146 = scmp.le.s32.totalorder 1, %s9
      %p147 = scmp.lt.s32.totalorder %s9, 6
      %p148 = pnand %p146, %p147
      %p149 = pneg %p148
      // Predicated region
      $region9: #{_lambda_.24} parent=5 // pred_check
        _
      $region10: #{_lambda_.24} parent=5 // pred_check_branch
        %151 = sbr.rel (%p148) target = $region12
      $region11: #{_lambda_.24} parent=5 // pred_region
        %s152 = ssub.s32 %s9, 1
        // Predicated region
        $region13: #{_lambda_.24} parent=11 // pred_check
          %p153 = pneg %p110
        $region14: #{_lambda_.24} parent=11 // pred_check_branch
          %155 = sbr.rel (%p153) target = $region16
        $region15: #{_lambda_.24} parent=11 // pred_region
          %p156 = scmp.lt.s32.totalorder %s20, 0
          %s157 = scalar_select %p156, %s20, 0
          %s158 = scalar_lea.vmem %s2, %s157
        $region16: #{_lambda_.24} parent=11 // pred_fallthru
          _
      $region12: #{_lambda_.24} parent=5 // pred_fallthru
        _
      %p159 = scmp.lt.s32.totalorder %s9, 5
      // Predicated region
      $region17: #{_lambda_.24} parent=5 // pred_check
        %p160 = pneg %p159
      $region18: #{_lambda_.24} parent=5 // pred_check_branch
        %162 = sbr.rel (%p160) target = $region20
      $region19: #{_lambda_.24} parent=5 // pred_region
        // Predicated region
        $region21: #{_lambda_.24} parent=19 // pred_check
          %p163 = pneg %p50
        $region22: #{_lambda_.24} parent=19 // pred_check_branch
          %165 = sbr.rel (%p163) target = $region24
        $region23: #{_lambda_.24} parent=19 // pred_region
          %s166 = sand.u32 %s40, 1
          %s167 = sand.u32 %s40, 1
          %s168 = smul.addr %s167, 16
          %s169 = scalar_lea.vmem [#allocation3], %s168
          %s170 = smul.u32 4, %s16
          %s171 = smul.addr %s170, 5
          %s172 = sadd.s32 %s18, %s171
          %s173 = smul.addr %s172, 4
          %s174 = scalar_lea.vmem %s0, %s173
          // Predicated region
          $region25: #{_lambda_.24} parent=23 // pred_check
            _
          $region26: #{_lambda_.24} parent=23 // pred_check_branch
            %176 = sbr.rel (0) target = $region28
          $region27: #{_lambda_.24} parent=23 // pred_region
            // Predicated region
            $region29: #{_lambda_.24} parent=27 // pred_check
              _
            $region30: #{_lambda_.24} parent=27 // pred_check_branch
              %178 = sbr.rel target = $region32
            $region31: #{_lambda_.24} parent=27 // pred_region
              // Predicated region
              $region44: #{_lambda_.24} parent=31 // pred_check
                _
              $region45: #{_lambda_.24} parent=31 // pred_check_branch
                %200 = sbr.rel (0) target = $region47
              $region46: #{_lambda_.24} parent=31 // pred_region
                loop: start=0, step=1, limit=1
                $region48: #{_lambda_.24} parent=46 // loop_pre_header
                  _
                $region49: #{_lambda_.24} parent=46 // loop_header
                  %s202 = sphi 0, %s206
                  %p203 = scmp.ge.s32.totalorder %s202, 1
                  %s207 = sphi %s174, %s174
                  %s208 = sphi %s169, %s169
                $region50: #{_lambda_.24} parent=46 // loop_header_branch
                  %205 = sbr.rel (%p203) target = $region54
                $region51: #{_lambda_.24} parent=46 // loop_body
                  _
                $region52: #{_lambda_.24} parent=46 // loop_footer
                  %s206 = sadd.s32 1, %s202
                $region53: #{_lambda_.24} parent=46 // loop_footer_branch
                  %201 = sbr.rel target = $region49
                $region54: #{_lambda_.24} parent=46 // loop_exit
                  _
                %s210 = ssub.s32 16, 1
                loop: start=0, step=1, limit=1
                $region55: #{_lambda_.24} parent=46 // loop_pre_header
                  _
                $region56: #{_lambda_.24} parent=46 // loop_header
                  %s212 = sphi 0, %s216
                  %p213 = scmp.ge.s32.totalorder %s212, 1
                  %s217 = sphi %s174, %s174
                  %s218 = sphi %s169, %s169
                $region57: #{_lambda_.24} parent=46 // loop_header_branch
                  %215 = sbr.rel (%p213) target = $region61
                $region58: #{_lambda_.24} parent=46 // loop_body
                  %v219 = vld [vmem:[%s217] sm:%s210]
                  %220 = vst [vmem:[%s218] sm:%s210] %v219
                  %v221 = vld [vmem:[%s217 + $0x14] sm:%s210]
                  %222 = vst [vmem:[%s218 + $0x4] sm:%s210] %v221
                  %v223 = vld [vmem:[%s217 + $0x28] sm:%s210]
                  %224 = vst [vmem:[%s218 + $0x8] sm:%s210] %v223
                  %v225 = vld [vmem:[%s217 + $0x3c] sm:%s210]
                  %226 = vst [vmem:[%s218 + $0xc] sm:%s210] %v225
                $region59: #{_lambda_.24} parent=46 // loop_footer
                  %s216 = sadd.s32 1, %s212
                $region60: #{_lambda_.24} parent=46 // loop_footer_branch
                  %211 = sbr.rel target = $region56
                $region61: #{_lambda_.24} parent=46 // loop_exit
                  _
              $region47: #{_lambda_.24} parent=31 // pred_fallthru
                _
            $region32: #{_lambda_.24} parent=27 // pred_fallthru
              _
            // Predicated region
            $region33: #{_lambda_.24} parent=27 // pred_check
              _
            $region34: #{_lambda_.24} parent=27 // pred_check_branch
              %180 = sbr.rel (0) target = $region36
            $region35: #{_lambda_.24} parent=27 // pred_region
              %s182 = ssub.s32 16, 1
              loop: start=0, step=1, limit=1
              $region37: #{_lambda_.24} parent=35 // loop_pre_header
                _
              $region38: #{_lambda_.24} parent=35 // loop_header
                %s184 = sphi 0, %s188
                %p185 = scmp.ge.s32.totalorder %s184, 1
                %s189 = sphi %s174, %s174
                %s190 = sphi %s169, %s169
              $region39: #{_lambda_.24} parent=35 // loop_header_branch
                %187 = sbr.rel (%p185) target = $region43
              $region40: #{_lambda_.24} parent=35 // loop_body
                %v191 = vld [vmem:[%s189] sm:%s182]
                %192 = vst [vmem:[%s190] sm:%s182] %v191
                %v193 = vld [vmem:[%s189 + $0x14] sm:%s182]
                %194 = vst [vmem:[%s190 + $0x4] sm:%s182] %v193
                %v195 = vld [vmem:[%s189 + $0x28] sm:%s182]
                %196 = vst [vmem:[%s190 + $0x8] sm:%s182] %v195
                %v197 = vld [vmem:[%s189 + $0x3c] sm:%s182]
                %198 = vst [vmem:[%s190 + $0xc] sm:%s182] %v197
              $region41: #{_lambda_.24} parent=35 // loop_footer
                %s188 = sadd.s32 1, %s184
              $region42: #{_lambda_.24} parent=35 // loop_footer_branch
                %183 = sbr.rel target = $region38
              $region43: #{_lambda_.24} parent=35 // loop_exit
                _
            $region36: #{_lambda_.24} parent=27 // pred_fallthru
              _
          $region28: #{_lambda_.24} parent=23 // pred_fallthru
            _
          %227 = vnop
        $region24: #{_lambda_.24} parent=19 // pred_fallthru
          _
        // Predicated region
        $region62: #{_lambda_.24} parent=19 // pred_check
          %p228 = pneg %p78
        $region63: #{_lambda_.24} parent=19 // pred_check_branch
          %230 = sbr.rel (%p228) target = $region65
        $region64: #{_lambda_.24} parent=19 // pred_region
          %s231 = smul.u32 16, %s18
          %p232 = scmp.lt.s32.totalorder %s231, 79
          %s233 = scalar_select %p232, %s231, 79
          %p234 = scmp.lt.s32.totalorder %s17, 0
          %s235 = scalar_select %p234, %s17, 0
          %s236 = sadd.s32 %s235, %s233
          %s237 = smul.addr %s236, 4
          %s238 = scalar_lea.vmem %s1, %s237
          %s239 = smul.u32 16, %s18
        $region65: #{_lambda_.24} parent=19 // pred_fallthru
          _
      $region20: #{_lambda_.24} parent=5 // pred_fallthru
        _
      %p240 = scmp.le.s32.totalorder 1, %s9
      %p241 = scmp.lt.s32.totalorder %s9, 6
      %p242 = pnand %p240, %p241
      %p243 = pneg %p242
      // Predicated region
      $region66: #{_lambda_.24} parent=5 // pred_check
        _
      $region67: #{_lambda_.24} parent=5 // pred_check_branch
        %245 = sbr.rel (%p242) target = $region69
      $region68: #{_lambda_.24} parent=5 // pred_region
        %s246 = ssub.s32 %s9, 1
        %s247 = sand.u32 %s43, 1
        %s248 = sand.u32 %s43, 1
        %s249 = smul.addr %s248, 16
        %s250 = scalar_lea.vmem [#allocation3], %s249
        // Predicated region
        $region70: #{_lambda_.24} parent=68 // pred_check
          %p251 = pneg %p56
        $region71: #{_lambda_.24} parent=68 // pred_check_branch
          %253 = sbr.rel (%p251) target = $region73
        $region72: #{_lambda_.24} parent=68 // pred_region
          _
        $region73: #{_lambda_.24} parent=68 // pred_fallthru
          _
        %s254 = sand.u32 %s43, 1
        %s255 = sand.u32 %s43, 1
        %s256 = smul.addr %s255, 16
        %s257 = scalar_lea.vmem [#allocation3], %s256
        %p258 = pneg %p56
        %p259 = pneg %p53
        %s260 = smul.u32 16, %s21
        %p261 = scmp.lt.s32.totalorder %s260, 79
        %s262 = scalar_select %p261, %s260, 79
        %p263 = scmp.lt.s32.totalorder %s20, 0
        %s264 = scalar_select %p263, %s20, 0
        %s265 = sadd.s32 %s264, %s262
        %s266 = smul.addr %s265, 4
        %s267 = scalar_lea.vmem %s1, %s266
        %p268 = pneg %p84
        %p269 = pneg %p81
        %p270 = scmp.lt.s32.totalorder %s20, 0
        %s271 = scalar_select %p270, %s20, 0
        %s272 = scalar_lea.vmem %s2, %s271
        %p273 = pneg %p110
        %p274 = pneg %p107
        %p275 = pneg %p138
        %p276 = pneg %p135
        %s277 = smul.u32 4, %s19
        %p278 = scmp.lt.s32.totalorder %s277, 3
        %s279 = scalar_select %p278, %s277, 3
        %p280 = scmp.lt.s32.totalorder %s20, 0
        %s281 = scalar_select %p280, %s20, 0
        %s282 = sadd.s32 %s281, %s279
        %s283 = smul.addr %s282, 8
        %s284 = scalar_lea.vmem %s3, %s283
        %s285 = smul.u32 4, %s19
        %s286 = smul.u32 16, %s21
        %p287 = scmp.lt.s32.totalorder %s286, 79
        %s288 = scalar_select %p287, %s286, 79
        %p289 = scmp.lt.s32.totalorder %s20, 0
        %s290 = scalar_select %p289, %s20, 0
        %s291 = sadd.s32 %s290, %s288
        %s292 = smul.addr %s291, 4
        %s293 = scalar_lea.vmem %s1, %s292
        %s294 = smul.u32 16, %s21
        %p295 = scmp.lt.s32.totalorder %s20, 0
        %s296 = scalar_select %p295, %s20, 0
        %s297 = scalar_lea.vmem %s2, %s296
        %s298 = smul.u32 4, %s19
        %p299 = scmp.lt.s32.totalorder %s298, 3
        %s300 = scalar_select %p299, %s298, 3
        %p301 = scmp.lt.s32.totalorder %s20, 0
        %s302 = scalar_select %p301, %s20, 0
        %s303 = sadd.s32 %s302, %s300
        %s304 = smul.addr %s303, 8
        %s305 = scalar_lea.vmem %s3, %s304
        %s306 = smul.u32 4, %s19
        %p308 = scmp.eq.s32.totalorder %s21, 0
        // Predicated region
        $region74: #{_lambda_.24} parent=68 // pred_check
          %p309 = pneg %p308
        $region75: #{_lambda_.24} parent=68 // pred_check_branch
          %311 = sbr.rel (%p309) target = $region77
        $region76: #{_lambda_.24} parent=68 // pred_region
          %312 = vst [vmem:[#allocation2] sm:$0xff] 0.0
          %313 = vst [vmem:[#allocation2 + $0x8] sm:$0xff] 0.0
          %314 = vst [vmem:[#allocation2 + $0x10] sm:$0xff] 0.0
          %315 = vst [vmem:[#allocation2 + $0x18] sm:$0xff] 0.0
        $region77: #{_lambda_.24} parent=68 // pred_fallthru
          _
        %v316 = vld [vmem:[#allocation2] sm:$0xff]
        %v317 = vld [vmem:[#allocation2 + $0x8] sm:$0xff]
        %v318 = vld [vmem:[#allocation2 + $0x10] sm:$0xff]
        %v319 = vld [vmem:[#allocation2 + $0x18] sm:$0xff]
        %v320 = vld [vmem:[%s250] sm:$0xf]
        %v321 = vld [vmem:[%s250 + $0x4] sm:$0xf]
        %v322 = vld [vmem:[%s250 + $0x8] sm:$0xf]
        %v323 = vld [vmem:[%s250 + $0xc] sm:$0xf]
        %v324 = vld [vmem:[%s293] sm:$0xf]
        %v325 = vld [vmem:[%s293 + $0x4] sm:$0xf]
        %v326 = vld [vmem:[%s293 + $0x8] sm:$0xf]
        %v327 = vld [vmem:[%s293 + $0xc] sm:$0xf]
        %v328 = vld [vmem:[%s293 + $0x10] sm:$0xf]
        %v329 = vld [vmem:[%s293 + $0x14] sm:$0xf]
        %v330 = vld [vmem:[%s293 + $0x18] sm:$0xf]
        %v331 = vld [vmem:[%s293 + $0x1c] sm:$0xf]
        %v332 = vld [vmem:[%s293 + $0x20] sm:$0xf]
        %v333 = vld [vmem:[%s293 + $0x24] sm:$0xf]
        %v334 = vld [vmem:[%s293 + $0x28] sm:$0xf]
        %v335 = vld [vmem:[%s293 + $0x2c] sm:$0xf]
        %v336 = vld [vmem:[%s293 + $0x30] sm:$0xf]
        %v337 = vld [vmem:[%s293 + $0x34] sm:$0xf]
        %v338 = vld [vmem:[%s293 + $0x38] sm:$0xf]
        %v339 = vld [vmem:[%s293 + $0x3c] sm:$0xf]
        %v344 = vunpack.c.l.b16 %v320
        %v345 = vunpack.c.l.b16 %v321
        %v346 = vunpack.c.l.b16 %v322
        %v347 = vunpack.c.l.b16 %v323
        %v348 = vpack.c.b16 %v345, %v344
        %v349 = vpack.c.b16 %v347, %v346
        %v368 = vunpack.c.l.b16 %v324
        %v369 = vunpack.c.l.b16 %v325
        %v370 = vunpack.c.l.b16 %v326
        %v371 = vunpack.c.l.b16 %v327
        %v372 = vunpack.c.l.b16 %v328
        %v373 = vunpack.c.l.b16 %v329
        %v374 = vunpack.c.l.b16 %v330
        %v375 = vunpack.c.l.b16 %v331
        %v376 = vunpack.c.l.b16 %v332
        %v377 = vunpack.c.l.b16 %v333
        %v378 = vunpack.c.l.b16 %v334
        %v379 = vunpack.c.l.b16 %v335
        %v380 = vunpack.c.l.b16 %v336
        %v381 = vunpack.c.l.b16 %v337
        %v382 = vunpack.c.l.b16 %v338
        %v383 = vunpack.c.l.b16 %v339
        %v384 = vpack.c.b16 %v369, %v368
        %v385 = vpack.c.b16 %v371, %v370
        %v386 = vpack.c.b16 %v373, %v372
        %v387 = vpack.c.b16 %v375, %v374
        %v388 = vpack.c.b16 %v377, %v376
        %v389 = vpack.c.b16 %v379, %v378
        %v390 = vpack.c.b16 %v381, %v380
        %v391 = vpack.c.b16 %v383, %v382
        %400 = vmatprep.subr.bf16.mxu0 0
        %401 = vmatpush1.bf16.msra.mxu0 %v391
        %402 = vmatprep.subr.bf16.mxu0 0
        %403 = vmatpush1.bf16.msra.mxu0 %v390
        %404 = vmatprep.subr.bf16.mxu0 0
        %405 = vmatpush1.bf16.msra.mxu0 %v389
        %406 = vmatprep.subr.bf16.mxu0 0
        %407 = vmatpush1.bf16.msra.mxu0 %v388
        %408 = vmatprep.subr.bf16.mxu0 0
        %409 = vmatpush1.bf16.msra.mxu0 %v387
        %410 = vmatprep.subr.bf16.mxu0 0
        %411 = vmatpush1.bf16.msra.mxu0 %v386
        %412 = vmatprep.subr.bf16.mxu0 0
        %413 = vmatpush1.bf16.msra.mxu0 %v385
        %414 = vmatprep.subr.bf16.mxu0 0
        %415 = vmatpush1.bf16.msra.mxu0 %v384
        %416 = vmatprep.subr.bf16.mxu0 0
        %417 = vmatpush2.bf16.msra.mxu0 0
        %418 = vmatprep.subr.bf16.mxu0 0
        %419 = vmatpush2.bf16.msra.mxu0 0
        %420 = vmatprep.subr.bf16.mxu0 0
        %421 = vmatpush2.bf16.msra.mxu0 0
        %422 = vmatprep.subr.bf16.mxu0 0
        %423 = vmatpush2.bf16.msra.mxu0 0
        %424 = vmatprep.subr.bf16.mxu0 0
        %425 = vmatpush2.bf16.msra.mxu0 0
        %426 = vmatprep.subr.bf16.mxu0 0
        %427 = vmatpush2.bf16.msra.mxu0 0
        %428 = vmatprep.subr.bf16.mxu0 0
        %429 = vmatpush2.bf16.msra.mxu0 0
        %430 = vmatprep.subr.bf16.mxu0 0
        %431 = vmatpush2.bf16.msra.mxu0 0
        %432 = vmatprep.mubr.bf16.mxu0 0
        %433 = vmatmul.mubr.bf16.gmra.mxu0 %v348
        %v434 = vpop.f32.mrf.mxu0
        %v435 = vadd.f32 0.0, %v434
        %v436 = vpop.f32.mrf.mxu0
        %v437 = vpop.f32.mrf.mxu0
        %v438 = vadd.f32 0.0, %v437
        %v439 = vpop.f32.mrf.mxu0
        %440 = vmatprep.mubr.bf16.mxu0 0
        %441 = vmatmul.mubr.bf16.gmra.mxu0 %v349
        %v442 = vpop.f32.mrf.mxu0
        %v443 = vadd.f32 0.0, %v442
        %v444 = vpop.f32.mrf.mxu0
        %v445 = vpop.f32.mrf.mxu0
        %v446 = vadd.f32 0.0, %v445
        %v447 = vpop.f32.mrf.mxu0
        %448 = vdwg.mxu0
        %v449 = vadd.f32 %v316, %v435
        %v450 = vadd.f32 %v317, %v438
        %v451 = vadd.f32 %v318, %v443
        %v452 = vadd.f32 %v319, %v446
        %453 = vst [vmem:[#allocation2] sm:$0xff] %v449
        %454 = vst [vmem:[#allocation2 + $0x8] sm:$0xff] %v450
        %455 = vst [vmem:[#allocation2 + $0x10] sm:$0xff] %v451
        %456 = vst [vmem:[#allocation2 + $0x18] sm:$0xff] %v452
        %p457 = scmp.eq.s32.totalorder %s21, 4
        // Predicated region
        $region78: #{_lambda_.24} parent=68 // pred_check
          %p458 = pneg %p457
        $region79: #{_lambda_.24} parent=68 // pred_check_branch
          %460 = sbr.rel (%p458) target = $region81
        $region80: #{_lambda_.24} parent=68 // pred_region
          %v461 = vld [vmem:[#allocation2] sm:$0xff]
          %v462 = vld [vmem:[#allocation2 + $0x8] sm:$0xff]
          %v463 = vld [vmem:[#allocation2 + $0x10] sm:$0xff]
          %v464 = vld [vmem:[#allocation2 + $0x18] sm:$0xff]
          %v465 = vld [vmem:[%s297] sm:$0x1]
          %v467 = vlaneseq
          %v468 = vshrl.u32 %v467, 7
          %v469 = vsub.s32 0, %v468
          %v470 = vrot.slane %v465, %v469
          %v472 = vadd.f32 %v461, %v470
          %v473 = vadd.f32 %v462, %v470
          %v474 = vadd.f32 %v463, %v470
          %v475 = vadd.f32 %v464, %v470
          %476 = vst [vmem:[%s305] sm:$0xff] %v472
          %477 = vst [vmem:[%s305 + $0x8] sm:$0xff] %v473
          %478 = vst [vmem:[%s305 + $0x10] sm:$0xff] %v474
          %479 = vst [vmem:[%s305 + $0x18] sm:$0xff] %v475
        $region81: #{_lambda_.24} parent=68 // pred_fallthru
          _
        %s480 = smul.u32 4, %s19
        %p481 = scmp.lt.s32.totalorder %s480, 3
        %s482 = scalar_select %p481, %s480, 3
        %p483 = scmp.lt.s32.totalorder %s20, 0
        %s484 = scalar_select %p483, %s20, 0
        %s485 = sadd.s32 %s484, %s482
        %s486 = smul.addr %s485, 8
        %s487 = scalar_lea.vmem %s3, %s486
        // Predicated region
        $region82: #{_lambda_.24} parent=68 // pred_check
          %p488 = pneg %p135
        $region83: #{_lambda_.24} parent=68 // pred_check_branch
          %490 = sbr.rel (%p488) target = $region85
        $region84: #{_lambda_.24} parent=68 // pred_region
          %s491 = smul.u32 4, %s19
        $region85: #{_lambda_.24} parent=68 // pred_fallthru
          _
        // Predicated region
        $region86: #{_lambda_.24} parent=68 // pred_check
          %p492 = pneg %p135
        $region87: #{_lambda_.24} parent=68 // pred_check_branch
          %494 = sbr.rel (%p492) target = $region89
        $region88: #{_lambda_.24} parent=68 // pred_region
          %s495 = smul.u32 4, %s19
          %p496 = scmp.lt.s32.totalorder %s495, 3
          %s497 = scalar_select %p496, %s495, 3
          %p498 = scmp.lt.s32.totalorder %s20, 0
          %s499 = scalar_select %p498, %s20, 0
          %s500 = sadd.s32 %s499, %s497
          %s501 = smul.addr %s500, 8
          %s502 = scalar_lea.vmem %s3, %s501
        $region89: #{_lambda_.24} parent=68 // pred_fallthru
          _
      $region69: #{_lambda_.24} parent=5 // pred_fallthru
        _
      %p503 = scmp.le.s32.totalorder 2, %s9
      // Predicated region
      $region90: #{_lambda_.24} parent=5 // pred_check
        %p504 = pneg %p503
      $region91: #{_lambda_.24} parent=5 // pred_check_branch
        %506 = sbr.rel (%p504) target = $region93
      $region92: #{_lambda_.24} parent=5 // pred_region
        %s507 = ssub.s32 %s9, 2
      $region93: #{_lambda_.24} parent=5 // pred_fallthru
        _
    $region6: #{_lambda_.24} parent=1 // loop_footer
      %s13 = sadd.s32 1, %s9
    $region7: #{_lambda_.24} parent=1 // loop_footer_branch
      %8 = sbr.rel target = $region3
    $region8: #{_lambda_.24} parent=1 // loop_exit
      _

// kernel: _lambda_.26
$region0: #{_lambda_.26}
  #allocation0 [shape = 'u32[]', space=smem, size = 0x4, offset = 0x4, fixed_abs, tag = 'smem constant byte address 0x4 - core index']
  #allocation1 [shape = 'u32[144,128]{1,0:T(1,128)}', space=vmem, size = 0x12000, scoped, tag = 'internal scratch']
  #allocation2 [shape = 'f32[32,128]{1,0:T(8,128)}', space=vmem, size = 0x4000, scoped, tag = 'scratch operand']
  %s0 = inlined_call_operand.vmem [shape: bf16[32,1152], index: 0, kind: input, shape index: {}]
  %s1 = inlined_call_operand.vmem [shape: bf16[1152,128], index: 1, kind: input, shape index: {}]
  %s2 = inlined_call_operand.vmem [shape: f32[1,128], index: 2, kind: input, shape index: {}]
  %s3 = inlined_call_operand.vmem [shape: f32[32,128], index: 3, kind: input, shape index: {}]
  %s4 = inlined_call_operand.vmem [shape: f32[32,128], index: 4, kind: output, shape index: {}]
  %s5 = sld [smem:[#allocation0]]
  $region83: #{_lambda_.26} parent=0
    _
  %s7 = ssub.s32 1, %s5
  %s8 = scalar_select 0, %s7, %s5
  $region1: #{_lambda_.26} parent=0
    #allocation3 [shape = 'u8[49152]{0}', space=vmem, size = 0xc000, scoped, tag = 'input window, operand 0']
    loop: start=0, step=1, limit=5
    $region2: #{_lambda_.26} parent=1 // loop_pre_header
      _
    $region3: #{_lambda_.26} parent=1 // loop_header
      %s10 = sphi 0, %s14
      %p11 = scmp.ge.s32.totalorder %s10, 5
      %s17 = sphi 0, %s36
      %s18 = sphi 0, %s32
      %s19 = sphi 0, %s28
      %s20 = sphi 0, %s17
      %s21 = sphi 0, %s18
      %s22 = sphi 0, %s19
      %s23 = sphi 0, %s20
      %s24 = sphi 0, %s21
      %s25 = sphi 0, %s22
      %s41 = sphi 0, %s43
      %s44 = sphi 0, %s41
      %s45 = sphi 0, %s44
      %s61 = sphi 0, %s45
      %s69 = sphi 0, %s71
      %s72 = sphi 0, %s69
      %s73 = sphi 0, %s72
      %s89 = sphi 0, %s73
      %s95 = sphi 0, %s97
      %s98 = sphi 0, %s95
      %s99 = sphi 0, %s98
      %s115 = sphi 0, %s99
      %s123 = sphi 0, %s125
      %s126 = sphi 0, %s123
      %s127 = sphi 0, %s126
      %s143 = sphi 0, %s127
      %s151 = sphi 0, %s153
      %s154 = sphi 0, %s151
      %s155 = sphi 0, %s154
      %s171 = sphi 0, %s155
    $region4: #{_lambda_.26} parent=1 // loop_header_branch
      %13 = sbr.rel (%p11) target = $region8
    $region5: #{_lambda_.26} parent=1 // loop_body
      %s15 = ssub.s32 %s10, 1
      %s16 = ssub.s32 %s10, 2
      %s26 = sadd.s32 1, %s19
      %p27 = scmp.ge.s32.totalorder %s26, 3
      %s28 = scalar_select %p27, 0, %s26
      %s29 = sadd.s32 1, %s18
      %s30 = scalar_select %p27, %s29, %s18
      %p31 = scmp.ge.s32.totalorder %s30, 1
      %s32 = scalar_select %p31, 0, %s30
      %s33 = sadd.s32 1, %s17
      %s34 = scalar_select %p31, %s33, %s17
      %p35 = scmp.ge.s32.totalorder %s34, 1
      %s36 = scalar_select %p35, 0, %s34
      %s37 = ssub.s32 %s17, %s36
      %s38 = ssub.s32 %s19, %s28
      %s39 = sor.u32 %s37, %s38
      %p40 = scmp.eq.s32.totalorder %s39, 0
      %s42 = sadd.s32 %s41, 1
      %s43 = scalar_select %p40, %s41, %s42
      %p46 = pneg %p40
      %p47 = scmp.eq.s32.totalorder %s10, 2
      %p48 = por %p46, %p47
      %p49 = scmp.ne.s32.totalorder %s41, %s44
      %p50 = scmp.eq.s32.totalorder %s10, 0
      %p51 = por %p49, %p50
      %p52 = scmp.ne.s32.totalorder %s41, %s44
      %p53 = scmp.eq.s32.totalorder %s15, 2
      %p54 = por %p52, %p53
      %p55 = scmp.ne.s32.totalorder %s44, %s45
      %p56 = scmp.eq.s32.totalorder %s15, 0
      %p57 = por %p55, %p56
      %p58 = scmp.ne.s32.totalorder %s44, %s45
      %p59 = scmp.eq.s32.totalorder %s16, 2
      %p60 = por %p58, %p59
      %p62 = scmp.ne.s32.totalorder %s45, %s61
      %p63 = scmp.eq.s32.totalorder %s16, 0
      %p64 = por %p62, %p63
      %s65 = ssub.s32 %s19, %s28
      %s66 = ssub.s32 %s18, %s32
      %s67 = sor.u32 %s65, %s66
      %p68 = scmp.eq.s32.totalorder %s67, 0
      %s70 = sadd.s32 %s69, 1
      %s71 = scalar_select %p68, %s69, %s70
      %p74 = pneg %p68
      %p75 = scmp.eq.s32.totalorder %s10, 2
      %p76 = por %p74, %p75
      %p77 = scmp.ne.s32.totalorder %s69, %s72
      %p78 = scmp.eq.s32.totalorder %s10, 0
      %p79 = por %p77, %p78
      %p80 = scmp.ne.s32.totalorder %s69, %s72
      %p81 = scmp.eq.s32.totalorder %s15, 2
      %p82 = por %p80, %p81
      %p83 = scmp.ne.s32.totalorder %s72, %s73
      %p84 = scmp.eq.s32.totalorder %s15, 0
      %p85 = por %p83, %p84
      %p86 = scmp.ne.s32.totalorder %s72, %s73
      %p87 = scmp.eq.s32.totalorder %s16, 2
      %p88 = por %p86, %p87
      %p90 = scmp.ne.s32.totalorder %s73, %s89
      %p91 = scmp.eq.s32.totalorder %s16, 0
      %p92 = por %p90, %p91
      %s93 = ssub.s32 %s18, %s32
      %p94 = scmp.eq.s32.totalorder %s93, 0
      %s96 = sadd.s32 %s95, 1
      %s97 = scalar_select %p94, %s95, %s96
      %p100 = pneg %p94
      %p101 = scmp.eq.s32.totalorder %s10, 2
      %p102 = por %p100, %p101
      %p103 = scmp.ne.s32.totalorder %s95, %s98
      %p104 = scmp.eq.s32.totalorder %s10, 0
      %p105 = por %p103, %p104
      %p106 = scmp.ne.s32.totalorder %s95, %s98
      %p107 = scmp.eq.s32.totalorder %s15, 2
      %p108 = por %p106, %p107
      %p109 = scmp.ne.s32.totalorder %s98, %s99
      %p110 = scmp.eq.s32.totalorder %s15, 0
      %p111 = por %p109, %p110
      %p112 = scmp.ne.s32.totalorder %s98, %s99
      %p113 = scmp.eq.s32.totalorder %s16, 2
      %p114 = por %p112, %p113
      %p116 = scmp.ne.s32.totalorder %s99, %s115
      %p117 = scmp.eq.s32.totalorder %s16, 0
      %p118 = por %p116, %p117
      %s119 = ssub.s32 %s17, %s36
      %s120 = ssub.s32 %s18, %s32
      %s121 = sor.u32 %s119, %s120
      %p122 = scmp.eq.s32.totalorder %s121, 0
      %s124 = sadd.s32 %s123, 1
      %s125 = scalar_select %p122, %s123, %s124
      %p128 = pneg %p122
      %p129 = scmp.eq.s32.totalorder %s10, 2
      %p130 = por %p128, %p129
      %p131 = scmp.ne.s32.totalorder %s123, %s126
      %p132 = scmp.eq.s32.totalorder %s10, 0
      %p133 = por %p131, %p132
      %p134 = scmp.ne.s32.totalorder %s123, %s126
      %p135 = scmp.eq.s32.totalorder %s15, 2
      %p136 = por %p134, %p135
      %p137 = scmp.ne.s32.totalorder %s126, %s127
      %p138 = scmp.eq.s32.totalorder %s15, 0
      %p139 = por %p137, %p138
      %p140 = scmp.ne.s32.totalorder %s126, %s127
      %p141 = scmp.eq.s32.totalorder %s16, 2
      %p142 = por %p140, %p141
      %p144 = scmp.ne.s32.totalorder %s127, %s143
      %p145 = scmp.eq.s32.totalorder %s16, 0
      %p146 = por %p144, %p145
      %s147 = ssub.s32 %s17, %s36
      %s148 = ssub.s32 %s18, %s32
      %s149 = sor.u32 %s147, %s148
      %p150 = scmp.eq.s32.totalorder %s149, 0
      %s152 = sadd.s32 %s151, 1
      %s153 = scalar_select %p150, %s151, %s152
      %p156 = pneg %p150
      %p157 = scmp.eq.s32.totalorder %s10, 2
      %p158 = por %p156, %p157
      %p159 = scmp.ne.s32.totalorder %s151, %s154
      %p160 = scmp.eq.s32.totalorder %s10, 0
      %p161 = por %p159, %p160
      %p162 = scmp.ne.s32.totalorder %s151, %s154
      %p163 = scmp.eq.s32.totalorder %s15, 2
      %p164 = por %p162, %p163
      %p165 = scmp.ne.s32.totalorder %s154, %s155
      %p166 = scmp.eq.s32.totalorder %s15, 0
      %p167 = por %p165, %p166
      %p168 = scmp.ne.s32.totalorder %s154, %s155
      %p169 = scmp.eq.s32.totalorder %s16, 2
      %p170 = por %p168, %p169
      %p172 = scmp.ne.s32.totalorder %s155, %s171
      %p173 = scmp.eq.s32.totalorder %s16, 0
      %p174 = por %p172, %p173
      %p175 = scmp.le.s32.totalorder 1, %s10
      %p176 = scmp.lt.s32.totalorder %s10, 4
      %p177 = pnand %p175, %p176
      %p178 = pneg %p177
      // Predicated region
      $region9: #{_lambda_.26} parent=5 // pred_check
        _
      $region10: #{_lambda_.26} parent=5 // pred_check_branch
        %180 = sbr.rel (%p177) target = $region12
      $region11: #{_lambda_.26} parent=5 // pred_region
        %s181 = ssub.s32 %s10, 1
        // Predicated region
        $region13: #{_lambda_.26} parent=11 // pred_check
          %p182 = pneg %p111
        $region14: #{_lambda_.26} parent=11 // pred_check_branch
          %184 = sbr.rel (%p182) target = $region16
        $region15: #{_lambda_.26} parent=11 // pred_region
          %p185 = scmp.lt.s32.totalorder %s21, 0
          %s186 = scalar_select %p185, %s21, 0
          %s187 = scalar_lea.vmem %s2, %s186
        $region16: #{_lambda_.26} parent=11 // pred_fallthru
          _
        // Predicated region
        $region17: #{_lambda_.26} parent=11 // pred_check
          %p188 = pneg %p139
        $region18: #{_lambda_.26} parent=11 // pred_check_branch
          %190 = sbr.rel (%p188) target = $region20
        $region19: #{_lambda_.26} parent=11 // pred_region
          %s191 = smul.u32 4, %s20
          %p192 = scmp.lt.s32.totalorder %s191, 3
          %s193 = scalar_select %p192, %s191, 3
          %p194 = scmp.lt.s32.totalorder %s21, 0
          %s195 = scalar_select %p194, %s21, 0
          %s196 = sadd.s32 %s195, %s193
          %s197 = smul.addr %s196, 8
          %s198 = scalar_lea.vmem %s3, %s197
          %s199 = smul.u32 4, %s20
        $region20: #{_lambda_.26} parent=11 // pred_fallthru
          _
      $region12: #{_lambda_.26} parent=5 // pred_fallthru
        _
      %p200 = scmp.lt.s32.totalorder %s10, 3
      // Predicated region
      $region21: #{_lambda_.26} parent=5 // pred_check
        %p201 = pneg %p200
      $region22: #{_lambda_.26} parent=5 // pred_check_branch
        %203 = sbr.rel (%p201) target = $region24
      $region23: #{_lambda_.26} parent=5 // pred_region
        // Predicated region
        $region25: #{_lambda_.26} parent=23 // pred_check
          %p204 = pneg %p51
        $region26: #{_lambda_.26} parent=23 // pred_check_branch
          %206 = sbr.rel (%p204) target = $region28
        $region27: #{_lambda_.26} parent=23 // pred_region
          %s207 = sand.u32 %s41, 1
          %s208 = sand.u32 %s41, 1
          %s209 = smul.addr %s208, 48
          %s210 = scalar_lea.vmem [#allocation3], %s209
          %s211 = smul.u32 4, %s17
          %s212 = smul.u32 3, %s19
          %s213 = smul.addr %s211, 9
          %s214 = sadd.s32 %s212, %s213
          %s215 = smul.addr %s214, 4
          %s216 = scalar_lea.vmem %s0, %s215
          // Predicated region
          $region29: #{_lambda_.26} parent=27 // pred_check
            _
          $region30: #{_lambda_.26} parent=27 // pred_check_branch
            %218 = sbr.rel (0) target = $region32
          $region31: #{_lambda_.26} parent=27 // pred_region
            // Predicated region
            $region33: #{_lambda_.26} parent=31 // pred_check
              _
            $region34: #{_lambda_.26} parent=31 // pred_check_branch
              %220 = sbr.rel (0) target = $region36
            $region35: #{_lambda_.26} parent=31 // pred_region
              %s221 = scalar_lea.vmem %s216, 8
              %s222 = scalar_lea.vmem %s210, 8 [#allocation3]
              loop: start=0, step=1, limit=1
              $region37: #{_lambda_.26} parent=35 // loop_pre_header
                _
              $region38: #{_lambda_.26} parent=35 // loop_header
                %s224 = sphi 0, %s228
                %p225 = scmp.ge.s32.totalorder %s224, 1
                %s229 = sphi %s216, %s216
                %s230 = sphi %s210, %s210
              $region39: #{_lambda_.26} parent=35 // loop_header_branch
                %227 = sbr.rel (%p225) target = $region43
              $region40: #{_lambda_.26} parent=35 // loop_body
                %v231 = vld [vmem:[%s229] sm:$0xff]
                %232 = vst [vmem:[%s230] sm:$0xff] %v231
                %v233 = vld [vmem:[%s229 + $0x24] sm:$0xff]
                %234 = vst [vmem:[%s230 + $0xc] sm:$0xff] %v233
                %v235 = vld [vmem:[%s229 + $0x48] sm:$0xff]
                %236 = vst [vmem:[%s230 + $0x18] sm:$0xff] %v235
                %v237 = vld [vmem:[%s229 + $0x6c] sm:$0xff]
                %238 = vst [vmem:[%s230 + $0x24] sm:$0xff] %v237
              $region41: #{_lambda_.26} parent=35 // loop_footer
                %s228 = sadd.s32 1, %s224
              $region42: #{_lambda_.26} parent=35 // loop_footer_branch
                %223 = sbr.rel target = $region38
              $region43: #{_lambda_.26} parent=35 // loop_exit
                _
              %s240 = ssub.s32 16, 1
              loop: start=0, step=1, limit=1
              $region44: #{_lambda_.26} parent=35 // loop_pre_header
                _
              $region45: #{_lambda_.26} parent=35 // loop_header
                %s242 = sphi 0, %s246
                %p243 = scmp.ge.s32.totalorder %s242, 1
                %s247 = sphi %s221, %s221
                %s248 = sphi %s222, %s222
              $region46: #{_lambda_.26} parent=35 // loop_header_branch
                %245 = sbr.rel (%p243) target = $region50
              $region47: #{_lambda_.26} parent=35 // loop_body
                %v249 = vld [vmem:[%s247] sm:%s240]
                %250 = vst [vmem:[%s248] sm:%s240] %v249
                %v251 = vld [vmem:[%s247 + $0x24] sm:%s240]
                %252 = vst [vmem:[%s248 + $0xc] sm:%s240] %v251
                %v253 = vld [vmem:[%s247 + $0x48] sm:%s240]
                %254 = vst [vmem:[%s248 + $0x18] sm:%s240] %v253
                %v255 = vld [vmem:[%s247 + $0x6c] sm:%s240]
                %256 = vst [vmem:[%s248 + $0x24] sm:%s240] %v255
              $region48: #{_lambda_.26} parent=35 // loop_footer
                %s246 = sadd.s32 1, %s242
              $region49: #{_lambda_.26} parent=35 // loop_footer_branch
                %241 = sbr.rel target = $region45
              $region50: #{_lambda_.26} parent=35 // loop_exit
                _
            $region36: #{_lambda_.26} parent=31 // pred_fallthru
              _
          $region32: #{_lambda_.26} parent=27 // pred_fallthru
            _
          %257 = vnop
        $region28: #{_lambda_.26} parent=23 // pred_fallthru
          _
        // Predicated region
        $region51: #{_lambda_.26} parent=23 // pred_check
          %p258 = pneg %p79
        $region52: #{_lambda_.26} parent=23 // pred_check_branch
          %260 = sbr.rel (%p258) target = $region54
        $region53: #{_lambda_.26} parent=23 // pred_region
          %s261 = smul.u32 48, %s19
          %p262 = scmp.lt.s32.totalorder %s261, 143
          %s263 = scalar_select %p262, %s261, 143
          %p264 = scmp.lt.s32.totalorder %s18, 0
          %s265 = scalar_select %p264, %s18, 0
          %s266 = sadd.s32 %s265, %s263
          %s267 = smul.addr %s266, 4
          %s268 = scalar_lea.vmem %s1, %s267
          %s269 = smul.u32 48, %s19
        $region54: #{_lambda_.26} parent=23 // pred_fallthru
          _
      $region24: #{_lambda_.26} parent=5 // pred_fallthru
        _
      %p270 = scmp.le.s32.totalorder 1, %s10
      %p271 = scmp.lt.s32.totalorder %s10, 4
      %p272 = pnand %p270, %p271
      %p273 = pneg %p272
      // Predicated region
      $region55: #{_lambda_.26} parent=5 // pred_check
        _
      $region56: #{_lambda_.26} parent=5 // pred_check_branch
        %275 = sbr.rel (%p272) target = $region58
      $region57: #{_lambda_.26} parent=5 // pred_region
        %s276 = ssub.s32 %s10, 1
        %s277 = sand.u32 %s44, 1
        %s278 = sand.u32 %s44, 1
        %s279 = smul.addr %s278, 48
        %s280 = scalar_lea.vmem [#allocation3], %s279
        // Predicated region
        $region59: #{_lambda_.26} parent=57 // pred_check
          %p281 = pneg %p57
        $region60: #{_lambda_.26} parent=57 // pred_check_branch
          %283 = sbr.rel (%p281) target = $region62
        $region61: #{_lambda_.26} parent=57 // pred_region
          _
        $region62: #{_lambda_.26} parent=57 // pred_fallthru
          _
        %s284 = sand.u32 %s44, 1
        %s285 = sand.u32 %s44, 1
        %s286 = smul.addr %s285, 48
        %s287 = scalar_lea.vmem [#allocation3], %s286
        %p288 = pneg %p57
        %p289 = pneg %p54
        %s290 = smul.u32 48, %s22
        %p291 = scmp.lt.s32.totalorder %s290, 143
        %s292 = scalar_select %p291, %s290, 143
        %p293 = scmp.lt.s32.totalorder %s21, 0
        %s294 = scalar_select %p293, %s21, 0
        %s295 = sadd.s32 %s294, %s292
        %s296 = smul.addr %s295, 4
        %s297 = scalar_lea.vmem %s1, %s296
        %p298 = pneg %p85
        %p299 = pneg %p82
        %p300 = scmp.lt.s32.totalorder %s21, 0
        %s301 = scalar_select %p300, %s21, 0
        %s302 = scalar_lea.vmem %s2, %s301
        %p303 = pneg %p111
        %p304 = pneg %p108
        %s305 = smul.u32 4, %s20
        %p306 = scmp.lt.s32.totalorder %s305, 3
        %s307 = scalar_select %p306, %s305, 3
        %p308 = scmp.lt.s32.totalorder %s21, 0
        %s309 = scalar_select %p308, %s21, 0
        %s310 = sadd.s32 %s309, %s307
        %s311 = smul.addr %s310, 8
        %s312 = scalar_lea.vmem %s3, %s311
        %p313 = pneg %p139
        %p314 = pneg %p136
        %p315 = pneg %p167
        %p316 = pneg %p164
        %s317 = smul.u32 4, %s20
        %p318 = scmp.lt.s32.totalorder %s317, 3
        %s319 = scalar_select %p318, %s317, 3
        %p320 = scmp.lt.s32.totalorder %s21, 0
        %s321 = scalar_select %p320, %s21, 0
        %s322 = sadd.s32 %s321, %s319
        %s323 = smul.addr %s322, 8
        %s324 = scalar_lea.vmem %s4, %s323
        %s325 = smul.u32 4, %s20
        %s326 = smul.u32 3, %s22
        %s327 = smul.u32 48, %s22
        %p328 = scmp.lt.s32.totalorder %s327, 143
        %s329 = scalar_select %p328, %s327, 143
        %p330 = scmp.lt.s32.totalorder %s21, 0
        %s331 = scalar_select %p330, %s21, 0
        %s332 = sadd.s32 %s331, %s329
        %s333 = smul.addr %s332, 4
        %s334 = scalar_lea.vmem %s1, %s333
        %s335 = smul.u32 48, %s22
        %p336 = scmp.lt.s32.totalorder %s21, 0
        %s337 = scalar_select %p336, %s21, 0
        %s338 = scalar_lea.vmem %s2, %s337
        %s339 = smul.u32 4, %s20
        %p340 = scmp.lt.s32.totalorder %s339, 3
        %s341 = scalar_select %p340, %s339, 3
        %p342 = scmp.lt.s32.totalorder %s21, 0
        %s343 = scalar_select %p342, %s21, 0
        %s344 = sadd.s32 %s343, %s341
        %s345 = smul.addr %s344, 8
        %s346 = scalar_lea.vmem %s3, %s345
        %s347 = smul.u32 4, %s20
        %s348 = smul.u32 4, %s20
        %p349 = scmp.lt.s32.totalorder %s348, 3
        %s350 = scalar_select %p349, %s348, 3
        %p351 = scmp.lt.s32.totalorder %s21, 0
        %s352 = scalar_select %p351, %s21, 0
        %s353 = sadd.s32 %s352, %s350
        %s354 = smul.addr %s353, 8
        %s355 = scalar_lea.vmem %s4, %s354
        %s356 = smul.u32 4, %s20
        %p358 = scmp.eq.s32.totalorder %s22, 0
        // Predicated region
        $region63: #{_lambda_.26} parent=57 // pred_check
          %p359 = pneg %p358
        $region64: #{_lambda_.26} parent=57 // pred_check_branch
          %361 = sbr.rel (%p359) target = $region66
        $region65: #{_lambda_.26} parent=57 // pred_region
          %362 = vst [vmem:[#allocation2] sm:$0xff] 0.0
          %363 = vst [vmem:[#allocation2 + $0x8] sm:$0xff] 0.0
          %364 = vst [vmem:[#allocation2 + $0x10] sm:$0xff] 0.0
          %365 = vst [vmem:[#allocation2 + $0x18] sm:$0xff] 0.0
        $region66: #{_lambda_.26} parent=57 // pred_fallthru
          _
        %v366 = vld [vmem:[#allocation2] sm:$0xff]
        %v367 = vld [vmem:[#allocation2 + $0x8] sm:$0xff]
        %v368 = vld [vmem:[#allocation2 + $0x10] sm:$0xff]
        %v369 = vld [vmem:[#allocation2 + $0x18] sm:$0xff]
        %v370 = vld [vmem:[%s280] sm:$0xff]
        %v371 = vld [vmem:[%s280 + $0x8] sm:$0xf]
        %v372 = vld [vmem:[%s280 + $0xc] sm:$0xff]
        %v373 = vld [vmem:[%s280 + $0x14] sm:$0xf]
        %v374 = vld [vmem:[%s280 + $0x18] sm:$0xff]
        %v375 = vld [vmem:[%s280 + $0x20] sm:$0xf]
        %v376 = vld [vmem:[%s280 + $0x24] sm:$0xff]
        %v377 = vld [vmem:[%s280 + $0x2c] sm:$0xf]
        %v378 = vld [vmem:[%s334] sm:$0xf]
        %v379 = vld [vmem:[%s334 + $0x4] sm:$0xf]
        %v380 = vld [vmem:[%s334 + $0x8] sm:$0xf]
        %v381 = vld [vmem:[%s334 + $0xc] sm:$0xf]
        %v382 = vld [vmem:[%s334 + $0x10] sm:$0xf]
        %v383 = vld [vmem:[%s334 + $0x14] sm:$0xf]
        %v384 = vld [vmem:[%s334 + $0x18] sm:$0xf]
        %v385 = vld [vmem:[%s334 + $0x1c] sm:$0xf]
        %v386 = vld [vmem:[%s334 + $0x20] sm:$0xf]
        %v387 = vld [vmem:[%s334 + $0x24] sm:$0xf]
        %v388 = vld [vmem:[%s334 + $0x28] sm:$0xf]
        %v389 = vld [vmem:[%s334 + $0x2c] sm:$0xf]
        %v390 = vld [vmem:[%s334 + $0x30] sm:$0xf]
        %v391 = vld [vmem:[%s334 + $0x34] sm:$0xf]
        %v392 = vld [vmem:[%s334 + $0x38] sm:$0xf]
        %v393 = vld [vmem:[%s334 + $0x3c] sm:$0xf]
        %v394 = vld [vmem:[%s334 + $0x40] sm:$0xf]
        %v395 = vld [vmem:[%s334 + $0x44] sm:$0xf]
        %v396 = vld [vmem:[%s334 + $0x48] sm:$0xf]
        %v397 = vld [vmem:[%s334 + $0x4c] sm:$0xf]
        %v398 = vld [vmem:[%s334 + $0x50] sm:$0xf]
        %v399 = vld [vmem:[%s334 + $0x54] sm:$0xf]
        %v400 = vld [vmem:[%s334 + $0x58] sm:$0xf]
        %v401 = vld [vmem:[%s334 + $0x5c] sm:$0xf]
        %v402 = vld [vmem:[%s334 + $0x60] sm:$0xf]
        %v403 = vld [vmem:[%s334 + $0x64] sm:$0xf]
        %v404 = vld [vmem:[%s334 + $0x68] sm:$0xf]
        %v405 = vld [vmem:[%s334 + $0x6c] sm:$0xf]
        %v406 = vld [vmem:[%s334 + $0x70] sm:$0xf]
        %v407 = vld [vmem:[%s334 + $0x74] sm:$0xf]
        %v408 = vld [vmem:[%s334 + $0x78] sm:$0xf]
        %v409 = vld [vmem:[%s334 + $0x7c] sm:$0xf]
        %v410 = vld [vmem:[%s334 + $0x80] sm:$0xf]
        %v411 = vld [vmem:[%s334 + $0x84] sm:$0xf]
        %v412 = vld [vmem:[%s334 + $0x88] sm:$0xf]
        %v413 = vld [vmem:[%s334 + $0x8c] sm:$0xf]
        %v414 = vld [vmem:[%s334 + $0x90] sm:$0xf]
        %v415 = vld [vmem:[%s334 + $0x94] sm:$0xf]
        %v416 = vld [vmem:[%s334 + $0x98] sm:$0xf]
        %v417 = vld [vmem:[%s334 + $0x9c] sm:$0xf]
        %v418 = vld [vmem:[%s334 + $0xa0] sm:$0xf]
        %v419 = vld [vmem:[%s334 + $0xa4] sm:$0xf]
        %v420 = vld [vmem:[%s334 + $0xa8] sm:$0xf]
        %v421 = vld [vmem:[%s334 + $0xac] sm:$0xf]
        %v422 = vld [vmem:[%s334 + $0xb0] sm:$0xf]
        %v423 = vld [vmem:[%s334 + $0xb4] sm:$0xf]
        %v424 = vld [vmem:[%s334 + $0xb8] sm:$0xf]
        %v425 = vld [vmem:[%s334 + $0xbc] sm:$0xf]
        %v434 = vunpack.c.l.b16 %v370
        %v435 = vunpack.c.h.b16 %v370
        %v436 = vunpack.c.l.b16 %v371
        %v437 = vunpack.c.l.b16 %v372
        %v438 = vunpack.c.h.b16 %v372
        %v439 = vunpack.c.l.b16 %v373
        %v440 = vunpack.c.l.b16 %v374
        %v441 = vunpack.c.h.b16 %v374
        %v442 = vunpack.c.l.b16 %v375
        %v443 = vunpack.c.l.b16 %v376
        %v444 = vunpack.c.h.b16 %v376
        %v445 = vunpack.c.l.b16 %v377
        %v446 = vpack.c.b16 %v437, %v434
        %v447 = vpack.c.b16 %v438, %v435
        %v448 = vpack.c.b16 %v439, %v436
        %v449 = vpack.c.b16 %v443, %v440
        %v450 = vpack.c.b16 %v444, %v441
        %v451 = vpack.c.b16 %v445, %v442
        %v506 = vunpack.c.l.b16 %v378
        %v507 = vunpack.c.l.b16 %v379
        %v508 = vunpack.c.l.b16 %v380
        %v509 = vunpack.c.l.b16 %v381
        %v510 = vunpack.c.l.b16 %v382
        %v511 = vunpack.c.l.b16 %v383
        %v512 = vunpack.c.l.b16 %v384
        %v513 = vunpack.c.l.b16 %v385
        %v514 = vunpack.c.l.b16 %v386
        %v515 = vunpack.c.l.b16 %v387
        %v516 = vunpack.c.l.b16 %v388
        %v517 = vunpack.c.l.b16 %v389
        %v518 = vunpack.c.l.b16 %v390
        %v519 = vunpack.c.l.b16 %v391
        %v520 = vunpack.c.l.b16 %v392
        %v521 = vunpack.c.l.b16 %v393
        %v522 = vunpack.c.l.b16 %v394
        %v523 = vunpack.c.l.b16 %v395
        %v524 = vunpack.c.l.b16 %v396
        %v525 = vunpack.c.l.b16 %v397
        %v526 = vunpack.c.l.b16 %v398
        %v527 = vunpack.c.l.b16 %v399
        %v528 = vunpack.c.l.b16 %v400
        %v529 = vunpack.c.l.b16 %v401
        %v530 = vunpack.c.l.b16 %v402
        %v531 = vunpack.c.l.b16 %v403
        %v532 = vunpack.c.l.b16 %v404
        %v533 = vunpack.c.l.b16 %v405
        %v534 = vunpack.c.l.b16 %v406
        %v535 = vunpack.c.l.b16 %v407
        %v536 = vunpack.c.l.b16 %v408
        %v537 = vunpack.c.l.b16 %v409
        %v538 = vunpack.c.l.b16 %v410
        %v539 = vunpack.c.l.b16 %v411
        %v540 = vunpack.c.l.b16 %v412
        %v541 = vunpack.c.l.b16 %v413
        %v542 = vunpack.c.l.b16 %v414
        %v543 = vunpack.c.l.b16 %v415
        %v544 = vunpack.c.l.b16 %v416
        %v545 = vunpack.c.l.b16 %v417
        %v546 = vunpack.c.l.b16 %v418
        %v547 = vunpack.c.l.b16 %v419
        %v548 = vunpack.c.l.b16 %v420
        %v549 = vunpack.c.l.b16 %v421
        %v550 = vunpack.c.l.b16 %v422
        %v551 = vunpack.c.l.b16 %v423
        %v552 = vunpack.c.l.b16 %v424
        %v553 = vunpack.c.l.b16 %v425
        %v554 = vpack.c.b16 %v507, %v506
        %v555 = vpack.c.b16 %v509, %v508
        %v556 = vpack.c.b16 %v511, %v510
        %v557 = vpack.c.b16 %v513, %v512
        %v558 = vpack.c.b16 %v515, %v514
        %v559 = vpack.c.b16 %v517, %v516
        %v560 = vpack.c.b16 %v519, %v518
        %v561 = vpack.c.b16 %v521, %v520
        %v562 = vpack.c.b16 %v523, %v522
        %v563 = vpack.c.b16 %v525, %v524
        %v564 = vpack.c.b16 %v527, %v526
        %v565 = vpack.c.b16 %v529, %v528
        %v566 = vpack.c.b16 %v531, %v530
        %v567 = vpack.c.b16 %v533, %v532
        %v568 = vpack.c.b16 %v535, %v534
        %v569 = vpack.c.b16 %v537, %v536
        %v570 = vpack.c.b16 %v539, %v538
        %v571 = vpack.c.b16 %v541, %v540
        %v572 = vpack.c.b16 %v543, %v542
        %v573 = vpack.c.b16 %v545, %v544
        %v574 = vpack.c.b16 %v547, %v546
        %v575 = vpack.c.b16 %v549, %v548
        %v576 = vpack.c.b16 %v551, %v550
        %v577 = vpack.c.b16 %v553, %v552
        %602 = vmatprep.subr.bf16.mxu0 0
        %603 = vmatpush1.bf16.msra.mxu0 %v561
        %604 = vmatprep.subr.bf16.mxu0 0
        %605 = vmatpush1.bf16.msra.mxu0 %v560
        %606 = vmatprep.subr.bf16.mxu0 0
        %607 = vmatpush1.bf16.msra.mxu0 %v559
        %608 = vmatprep.subr.bf16.mxu0 0
        %609 = vmatpush1.bf16.msra.mxu0 %v558
        %610 = vmatprep.subr.bf16.mxu0 0
        %611 = vmatpush1.bf16.msra.mxu0 %v557
        %612 = vmatprep.subr.bf16.mxu0 0
        %613 = vmatpush1.bf16.msra.mxu0 %v556
        %614 = vmatprep.subr.bf16.mxu0 0
        %615 = vmatpush1.bf16.msra.mxu0 %v555
        %616 = vmatprep.subr.bf16.mxu0 0
        %617 = vmatpush1.bf16.msra.mxu0 %v554
        %618 = vmatprep.subr.bf16.mxu0 0
        %619 = vmatpush2.bf16.msra.mxu0 %v569
        %620 = vmatprep.subr.bf16.mxu0 0
        %621 = vmatpush2.bf16.msra.mxu0 %v568
        %622 = vmatprep.subr.bf16.mxu0 0
        %623 = vmatpush2.bf16.msra.mxu0 %v567
        %624 = vmatprep.subr.bf16.mxu0 0
        %625 = vmatpush2.bf16.msra.mxu0 %v566
        %626 = vmatprep.subr.bf16.mxu0 0
        %627 = vmatpush2.bf16.msra.mxu0 %v565
        %628 = vmatprep.subr.bf16.mxu0 0
        %629 = vmatpush2.bf16.msra.mxu0 %v564
        %630 = vmatprep.subr.bf16.mxu0 0
        %631 = vmatpush2.bf16.msra.mxu0 %v563
        %632 = vmatprep.subr.bf16.mxu0 0
        %633 = vmatpush2.bf16.msra.mxu0 %v562
        %634 = vmatprep.mubr.bf16.mxu0 %v447
        %635 = vmatmul.mubr.bf16.gmra.mxu0 %v446
        %v636 = vpop.f32.mrf.mxu0
        %v637 = vadd.f32 0.0, %v636
        %v638 = vpop.f32.mrf.mxu0
        %v639 = vpop.f32.mrf.mxu0
        %v640 = vadd.f32 0.0, %v639
        %v641 = vpop.f32.mrf.mxu0
        %642 = vmatprep.mubr.bf16.mxu0 %v450
        %643 = vmatmul.mubr.bf16.gmra.mxu0 %v449
        %v644 = vpop.f32.mrf.mxu0
        %v645 = vadd.f32 0.0, %v644
        %v646 = vpop.f32.mrf.mxu0
        %v647 = vpop.f32.mrf.mxu0
        %v648 = vadd.f32 0.0, %v647
        %v649 = vpop.f32.mrf.mxu0
        %650 = vdwg.mxu0
        %651 = vmatprep.subr.bf16.mxu0 0
        %652 = vmatpush1.bf16.msra.mxu0 %v577
        %653 = vmatprep.subr.bf16.mxu0 0
        %654 = vmatpush1.bf16.msra.mxu0 %v576
        %655 = vmatprep.subr.bf16.mxu0 0
        %656 = vmatpush1.bf16.msra.mxu0 %v575
        %657 = vmatprep.subr.bf16.mxu0 0
        %658 = vmatpush1.bf16.msra.mxu0 %v574
        %659 = vmatprep.subr.bf16.mxu0 0
        %660 = vmatpush1.bf16.msra.mxu0 %v573
        %661 = vmatprep.subr.bf16.mxu0 0
        %662 = vmatpush1.bf16.msra.mxu0 %v572
        %663 = vmatprep.subr.bf16.mxu0 0
        %664 = vmatpush1.bf16.msra.mxu0 %v571
        %665 = vmatprep.subr.bf16.mxu0 0
        %666 = vmatpush1.bf16.msra.mxu0 %v570
        %667 = vmatprep.subr.bf16.mxu0 0
        %668 = vmatpush2.bf16.msra.mxu0 0
        %669 = vmatprep.subr.bf16.mxu0 0
        %670 = vmatpush2.bf16.msra.mxu0 0
        %671 = vmatprep.subr.bf16.mxu0 0
        %672 = vmatpush2.bf16.msra.mxu0 0
        %673 = vmatprep.subr.bf16.mxu0 0
        %674 = vmatpush2.bf16.msra.mxu0 0
        %675 = vmatprep.subr.bf16.mxu0 0
        %676 = vmatpush2.bf16.msra.mxu0 0
        %677 = vmatprep.subr.bf16.mxu0 0
        %678 = vmatpush2.bf16.msra.mxu0 0
        %679 = vmatprep.subr.bf16.mxu0 0
        %680 = vmatpush2.bf16.msra.mxu0 0
        %681 = vmatprep.subr.bf16.mxu0 0
        %682 = vmatpush2.bf16.msra.mxu0 0
        %683 = vmatprep.mubr.bf16.mxu0 0
        %684 = vmatmul.mubr.bf16.gmra.mxu0 %v448
        %v685 = vpop.f32.mrf.mxu0
        %v686 = vadd.f32 %v637, %v685
        %v687 = vpop.f32.mrf.mxu0
        %v688 = vpop.f32.mrf.mxu0
        %v689 = vadd.f32 %v640, %v688
        %v690 = vpop.f32.mrf.mxu0
        %691 = vmatprep.mubr.bf16.mxu0 0
        %692 = vmatmul.mubr.bf16.gmra.mxu0 %v451
        %v693 = vpop.f32.mrf.mxu0
        %v694 = vadd.f32 %v645, %v693
        %v695 = vpop.f32.mrf.mxu0
        %v696 = vpop.f32.mrf.mxu0
        %v697 = vadd.f32 %v648, %v696
        %v698 = vpop.f32.mrf.mxu0
        %699 = vdwg.mxu0
        %v700 = vadd.f32 %v366, %v686
        %v701 = vadd.f32 %v367, %v689
        %v702 = vadd.f32 %v368, %v694
        %v703 = vadd.f32 %v369, %v697
        %704 = vst [vmem:[#allocation2] sm:$0xff] %v700
        %705 = vst [vmem:[#allocation2 + $0x8] sm:$0xff] %v701
        %706 = vst [vmem:[#allocation2 + $0x10] sm:$0xff] %v702
        %707 = vst [vmem:[#allocation2 + $0x18] sm:$0xff] %v703
        %p708 = scmp.eq.s32.totalorder %s22, 2
        // Predicated region
        $region67: #{_lambda_.26} parent=57 // pred_check
          %p709 = pneg %p708
        $region68: #{_lambda_.26} parent=57 // pred_check_branch
          %711 = sbr.rel (%p709) target = $region70
        $region69: #{_lambda_.26} parent=57 // pred_region
          %v712 = vld [vmem:[#allocation2] sm:$0xff]
          %v713 = vld [vmem:[#allocation2 + $0x8] sm:$0xff]
          %v714 = vld [vmem:[#allocation2 + $0x10] sm:$0xff]
          %v715 = vld [vmem:[#allocation2 + $0x18] sm:$0xff]
          %v716 = vld [vmem:[%s338] sm:$0x1]
          %v718 = vlaneseq
          %v719 = vshrl.u32 %v718, 7
          %v720 = vsub.s32 0, %v719
          %v721 = vrot.slane %v716, %v720
          %v723 = vadd.f32 %v712, %v721
          %v724 = vadd.f32 %v713, %v721
          %v725 = vadd.f32 %v714, %v721
          %v726 = vadd.f32 %v715, %v721
          %v727 = vld [vmem:[%s346] sm:$0xff]
          %v728 = vld [vmem:[%s346 + $0x8] sm:$0xff]
          %v729 = vld [vmem:[%s346 + $0x10] sm:$0xff]
          %v730 = vld [vmem:[%s346 + $0x18] sm:$0xff]
          %v731 = vadd.f32 %v723, %v727
          %v732 = vadd.f32 %v724, %v728
          %v733 = vadd.f32 %v725, %v729
          %v734 = vadd.f32 %v726, %v730
          %735 = vst [vmem:[%s355] sm:$0xff] %v731
          %736 = vst [vmem:[%s355 + $0x8] sm:$0xff] %v732
          %737 = vst [vmem:[%s355 + $0x10] sm:$0xff] %v733
          %738 = vst [vmem:[%s355 + $0x18] sm:$0xff] %v734
        $region70: #{_lambda_.26} parent=57 // pred_fallthru
          _
        %s739 = smul.u32 4, %s20
        %p740 = scmp.lt.s32.totalorder %s739, 3
        %s741 = scalar_select %p740, %s739, 3
        %p742 = scmp.lt.s32.totalorder %s21, 0
        %s743 = scalar_select %p742, %s21, 0
        %s744 = sadd.s32 %s743, %s741
        %s745 = smul.addr %s744, 8
        %s746 = scalar_lea.vmem %s4, %s745
        // Predicated region
        $region71: #{_lambda_.26} parent=57 // pred_check
          %p747 = pneg %p164
        $region72: #{_lambda_.26} parent=57 // pred_check_branch
          %749 = sbr.rel (%p747) target = $region74
        $region73: #{_lambda_.26} parent=57 // pred_region
          %s750 = smul.u32 4, %s20
        $region74: #{_lambda_.26} parent=57 // pred_fallthru
          _
        // Predicated region
        $region75: #{_lambda_.26} parent=57 // pred_check
          %p751 = pneg %p164
        $region76: #{_lambda_.26} parent=57 // pred_check_branch
          %753 = sbr.rel (%p751) target = $region78
        $region77: #{_lambda_.26} parent=57 // pred_region
          %s754 = smul.u32 4, %s20
          %p755 = scmp.lt.s32.totalorder %s754, 3
          %s756 = scalar_select %p755, %s754, 3
          %p757 = scmp.lt.s32.totalorder %s21, 0
          %s758 = scalar_select %p757, %s21, 0
          %s759 = sadd.s32 %s758, %s756
          %s760 = smul.addr %s759, 8
          %s761 = scalar_lea.vmem %s4, %s760
        $region78: #{_lambda_.26} parent=57 // pred_fallthru
          _
      $region58: #{_lambda_.26} parent=5 // pred_fallthru
        _
      %p762 = scmp.le.s32.totalorder 2, %s10
      // Predicated region
      $region79: #{_lambda_.26} parent=5 // pred_check
        %p763 = pneg %p762
      $region80: #{_lambda_.26} parent=5 // pred_check_branch
        %765 = sbr.rel (%p763) target = $region82
      $region81: #{_lambda_.26} parent=5 // pred_region
        %s766 = ssub.s32 %s10, 2
      $region82: #{_lambda_.26} parent=5 // pred_fallthru
        _
    $region6: #{_lambda_.26} parent=1 // loop_footer
      %s14 = sadd.s32 1, %s10
    $region7: #{_lambda_.26} parent=1 // loop_footer_branch
      %9 = sbr.rel target = $region3
    $region8: #{_lambda_.26} parent=1 // loop_exit
      _

// kernel: _lambda_.25
$region0: #{_lambda_.25}
  #allocation0 [shape = 'u32[]', space=smem, size = 0x4, offset = 0x4, fixed_abs, tag = 'smem constant byte address 0x4 - core index']
  #allocation1 [shape = 'u32[144,128]{1,0:T(1,128)}', space=vmem, size = 0x12000, scoped, tag = 'internal scratch']
  #allocation2 [shape = 'f32[32,128]{1,0:T(8,128)}', space=vmem, size = 0x4000, scoped, tag = 'scratch operand']
  %s0 = inlined_call_operand.vmem [shape: bf16[32,1152], index: 0, kind: input, shape index: {}]
  %s1 = inlined_call_operand.vmem [shape: bf16[1152,128], index: 1, kind: input, shape index: {}]
  %s2 = inlined_call_operand.vmem [shape: f32[1,128], index: 2, kind: input, shape index: {}]
  %s3 = inlined_call_operand.vmem [shape: f32[32,128], index: 3, kind: output, shape index: {}]
  %s4 = sld [smem:[#allocation0]]
  $region79: #{_lambda_.25} parent=0
    _
  %s6 = ssub.s32 1, %s4
  %s7 = scalar_select 0, %s6, %s4
  $region1: #{_lambda_.25} parent=0
    #allocation3 [shape = 'u8[49152]{0}', space=vmem, size = 0xc000, scoped, tag = 'input window, operand 0']
    loop: start=0, step=1, limit=5
    $region2: #{_lambda_.25} parent=1 // loop_pre_header
      _
    $region3: #{_lambda_.25} parent=1 // loop_header
      %s9 = sphi 0, %s13
      %p10 = scmp.ge.s32.totalorder %s9, 5
      %s16 = sphi 0, %s35
      %s17 = sphi 0, %s31
      %s18 = sphi 0, %s27
      %s19 = sphi 0, %s16
      %s20 = sphi 0, %s17
      %s21 = sphi 0, %s18
      %s22 = sphi 0, %s19
      %s23 = sphi 0, %s20
      %s24 = sphi 0, %s21
      %s40 = sphi 0, %s42
      %s43 = sphi 0, %s40
      %s44 = sphi 0, %s43
      %s60 = sphi 0, %s44
      %s68 = sphi 0, %s70
      %s71 = sphi 0, %s68
      %s72 = sphi 0, %s71
      %s88 = sphi 0, %s72
      %s94 = sphi 0, %s96
      %s97 = sphi 0, %s94
      %s98 = sphi 0, %s97
      %s114 = sphi 0, %s98
      %s122 = sphi 0, %s124
      %s125 = sphi 0, %s122
      %s126 = sphi 0, %s125
      %s142 = sphi 0, %s126
    $region4: #{_lambda_.25} parent=1 // loop_header_branch
      %12 = sbr.rel (%p10) target = $region8
    $region5: #{_lambda_.25} parent=1 // loop_body
      %s14 = ssub.s32 %s9, 1
      %s15 = ssub.s32 %s9, 2
      %s25 = sadd.s32 1, %s18
      %p26 = scmp.ge.s32.totalorder %s25, 3
      %s27 = scalar_select %p26, 0, %s25
      %s28 = sadd.s32 1, %s17
      %s29 = scalar_select %p26, %s28, %s17
      %p30 = scmp.ge.s32.totalorder %s29, 1
      %s31 = scalar_select %p30, 0, %s29
      %s32 = sadd.s32 1, %s16
      %s33 = scalar_select %p30, %s32, %s16
      %p34 = scmp.ge.s32.totalorder %s33, 1
      %s35 = scalar_select %p34, 0, %s33
      %s36 = ssub.s32 %s16, %s35
      %s37 = ssub.s32 %s18, %s27
      %s38 = sor.u32 %s36, %s37
      %p39 = scmp.eq.s32.totalorder %s38, 0
      %s41 = sadd.s32 %s40, 1
      %s42 = scalar_select %p39, %s40, %s41
      %p45 = pneg %p39
      %p46 = scmp.eq.s32.totalorder %s9, 2
      %p47 = por %p45, %p46
      %p48 = scmp.ne.s32.totalorder %s40, %s43
      %p49 = scmp.eq.s32.totalorder %s9, 0
      %p50 = por %p48, %p49
      %p51 = scmp.ne.s32.totalorder %s40, %s43
      %p52 = scmp.eq.s32.totalorder %s14, 2
      %p53 = por %p51, %p52
      %p54 = scmp.ne.s32.totalorder %s43, %s44
      %p55 = scmp.eq.s32.totalorder %s14, 0
      %p56 = por %p54, %p55
      %p57 = scmp.ne.s32.totalorder %s43, %s44
      %p58 = scmp.eq.s32.totalorder %s15, 2
      %p59 = por %p57, %p58
      %p61 = scmp.ne.s32.totalorder %s44, %s60
      %p62 = scmp.eq.s32.totalorder %s15, 0
      %p63 = por %p61, %p62
      %s64 = ssub.s32 %s18, %s27
      %s65 = ssub.s32 %s17, %s31
      %s66 = sor.u32 %s64, %s65
      %p67 = scmp.eq.s32.totalorder %s66, 0
      %s69 = sadd.s32 %s68, 1
      %s70 = scalar_select %p67, %s68, %s69
      %p73 = pneg %p67
      %p74 = scmp.eq.s32.totalorder %s9, 2
      %p75 = por %p73, %p74
      %p76 = scmp.ne.s32.totalorder %s68, %s71
      %p77 = scmp.eq.s32.totalorder %s9, 0
      %p78 = por %p76, %p77
      %p79 = scmp.ne.s32.totalorder %s68, %s71
      %p80 = scmp.eq.s32.totalorder %s14, 2
      %p81 = por %p79, %p80
      %p82 = scmp.ne.s32.totalorder %s71, %s72
      %p83 = scmp.eq.s32.totalorder %s14, 0
      %p84 = por %p82, %p83
      %p85 = scmp.ne.s32.totalorder %s71, %s72
      %p86 = scmp.eq.s32.totalorder %s15, 2
      %p87 = por %p85, %p86
      %p89 = scmp.ne.s32.totalorder %s72, %s88
      %p90 = scmp.eq.s32.totalorder %s15, 0
      %p91 = por %p89, %p90
      %s92 = ssub.s32 %s17, %s31
      %p93 = scmp.eq.s32.totalorder %s92, 0
      %s95 = sadd.s32 %s94, 1
      %s96 = scalar_select %p93, %s94, %s95
      %p99 = pneg %p93
      %p100 = scmp.eq.s32.totalorder %s9, 2
      %p101 = por %p99, %p100
      %p102 = scmp.ne.s32.totalorder %s94, %s97
      %p103 = scmp.eq.s32.totalorder %s9, 0
      %p104 = por %p102, %p103
      %p105 = scmp.ne.s32.totalorder %s94, %s97
      %p106 = scmp.eq.s32.totalorder %s14, 2
      %p107 = por %p105, %p106
      %p108 = scmp.ne.s32.totalorder %s97, %s98
      %p109 = scmp.eq.s32.totalorder %s14, 0
      %p110 = por %p108, %p109
      %p111 = scmp.ne.s32.totalorder %s97, %s98
      %p112 = scmp.eq.s32.totalorder %s15, 2
      %p113 = por %p111, %p112
      %p115 = scmp.ne.s32.totalorder %s98, %s114
      %p116 = scmp.eq.s32.totalorder %s15, 0
      %p117 = por %p115, %p116
      %s118 = ssub.s32 %s16, %s35
      %s119 = ssub.s32 %s17, %s31
      %s120 = sor.u32 %s118, %s119
      %p121 = scmp.eq.s32.totalorder %s120, 0
      %s123 = sadd.s32 %s122, 1
      %s124 = scalar_select %p121, %s122, %s123
      %p127 = pneg %p121
      %p128 = scmp.eq.s32.totalorder %s9, 2
      %p129 = por %p127, %p128
      %p130 = scmp.ne.s32.totalorder %s122, %s125
      %p131 = scmp.eq.s32.totalorder %s9, 0
      %p132 = por %p130, %p131
      %p133 = scmp.ne.s32.totalorder %s122, %s125
      %p134 = scmp.eq.s32.totalorder %s14, 2
      %p135 = por %p133, %p134
      %p136 = scmp.ne.s32.totalorder %s125, %s126
      %p137 = scmp.eq.s32.totalorder %s14, 0
      %p138 = por %p136, %p137
      %p139 = scmp.ne.s32.totalorder %s125, %s126
      %p140 = scmp.eq.s32.totalorder %s15, 2
      %p141 = por %p139, %p140
      %p143 = scmp.ne.s32.totalorder %s126, %s142
      %p144 = scmp.eq.s32.totalorder %s15, 0
      %p145 = por %p143, %p144
      %p146 = scmp.le.s32.totalorder 1, %s9
      %p147 = scmp.lt.s32.totalorder %s9, 4
      %p148 = pnand %p146, %p147
      %p149 = pneg %p148
      // Predicated region
      $region9: #{_lambda_.25} parent=5 // pred_check
        _
      $region10: #{_lambda_.25} parent=5 // pred_check_branch
        %151 = sbr.rel (%p148) target = $region12
      $region11: #{_lambda_.25} parent=5 // pred_region
        %s152 = ssub.s32 %s9, 1
        // Predicated region
        $region13: #{_lambda_.25} parent=11 // pred_check
          %p153 = pneg %p110
        $region14: #{_lambda_.25} parent=11 // pred_check_branch
          %155 = sbr.rel (%p153) target = $region16
        $region15: #{_lambda_.25} parent=11 // pred_region
          %p156 = scmp.lt.s32.totalorder %s20, 0
          %s157 = scalar_select %p156, %s20, 0
          %s158 = scalar_lea.vmem %s2, %s157
        $region16: #{_lambda_.25} parent=11 // pred_fallthru
          _
      $region12: #{_lambda_.25} parent=5 // pred_fallthru
        _
      %p159 = scmp.lt.s32.totalorder %s9, 3
      // Predicated region
      $region17: #{_lambda_.25} parent=5 // pred_check
        %p160 = pneg %p159
      $region18: #{_lambda_.25} parent=5 // pred_check_branch
        %162 = sbr.rel (%p160) target = $region20
      $region19: #{_lambda_.25} parent=5 // pred_region
        // Predicated region
        $region21: #{_lambda_.25} parent=19 // pred_check
          %p163 = pneg %p50
        $region22: #{_lambda_.25} parent=19 // pred_check_branch
          %165 = sbr.rel (%p163) target = $region24
        $region23: #{_lambda_.25} parent=19 // pred_region
          %s166 = sand.u32 %s40, 1
          %s167 = sand.u32 %s40, 1
          %s168 = smul.addr %s167, 48
          %s169 = scalar_lea.vmem [#allocation3], %s168
          %s170 = smul.u32 4, %s16
          %s171 = smul.u32 3, %s18
          %s172 = smul.addr %s170, 9
          %s173 = sadd.s32 %s171, %s172
          %s174 = smul.addr %s173, 4
          %s175 = scalar_lea.vmem %s0, %s174
          // Predicated region
          $region25: #{_lambda_.25} parent=23 // pred_check
            _
          $region26: #{_lambda_.25} parent=23 // pred_check_branch
            %177 = sbr.rel (0) target = $region28
          $region27: #{_lambda_.25} parent=23 // pred_region
            // Predicated region
            $region29: #{_lambda_.25} parent=27 // pred_check
              _
            $region30: #{_lambda_.25} parent=27 // pred_check_branch
              %179 = sbr.rel (0) target = $region32
            $region31: #{_lambda_.25} parent=27 // pred_region
              %s180 = scalar_lea.vmem %s175, 8
              %s181 = scalar_lea.vmem %s169, 8 [#allocation3]
              loop: start=0, step=1, limit=1
              $region33: #{_lambda_.25} parent=31 // loop_pre_header
                _
              $region34: #{_lambda_.25} parent=31 // loop_header
                %s183 = sphi 0, %s187
                %p184 = scmp.ge.s32.totalorder %s183, 1
                %s188 = sphi %s175, %s175
                %s189 = sphi %s169, %s169
              $region35: #{_lambda_.25} parent=31 // loop_header_branch
                %186 = sbr.rel (%p184) target = $region39
              $region36: #{_lambda_.25} parent=31 // loop_body
                %v190 = vld [vmem:[%s188] sm:$0xff]
                %191 = vst [vmem:[%s189] sm:$0xff] %v190
                %v192 = vld [vmem:[%s188 + $0x24] sm:$0xff]
                %193 = vst [vmem:[%s189 + $0xc] sm:$0xff] %v192
                %v194 = vld [vmem:[%s188 + $0x48] sm:$0xff]
                %195 = vst [vmem:[%s189 + $0x18] sm:$0xff] %v194
                %v196 = vld [vmem:[%s188 + $0x6c] sm:$0xff]
                %197 = vst [vmem:[%s189 + $0x24] sm:$0xff] %v196
              $region37: #{_lambda_.25} parent=31 // loop_footer
                %s187 = sadd.s32 1, %s183
              $region38: #{_lambda_.25} parent=31 // loop_footer_branch
                %182 = sbr.rel target = $region34
              $region39: #{_lambda_.25} parent=31 // loop_exit
                _
              %s199 = ssub.s32 16, 1
              loop: start=0, step=1, limit=1
              $region40: #{_lambda_.25} parent=31 // loop_pre_header
                _
              $region41: #{_lambda_.25} parent=31 // loop_header
                %s201 = sphi 0, %s205
                %p202 = scmp.ge.s32.totalorder %s201, 1
                %s206 = sphi %s180, %s180
                %s207 = sphi %s181, %s181
              $region42: #{_lambda_.25} parent=31 // loop_header_branch
                %204 = sbr.rel (%p202) target = $region46
              $region43: #{_lambda_.25} parent=31 // loop_body
                %v208 = vld [vmem:[%s206] sm:%s199]
                %209 = vst [vmem:[%s207] sm:%s199] %v208
                %v210 = vld [vmem:[%s206 + $0x24] sm:%s199]
                %211 = vst [vmem:[%s207 + $0xc] sm:%s199] %v210
                %v212 = vld [vmem:[%s206 + $0x48] sm:%s199]
                %213 = vst [vmem:[%s207 + $0x18] sm:%s199] %v212
                %v214 = vld [vmem:[%s206 + $0x6c] sm:%s199]
                %215 = vst [vmem:[%s207 + $0x24] sm:%s199] %v214
              $region44: #{_lambda_.25} parent=31 // loop_footer
                %s205 = sadd.s32 1, %s201
              $region45: #{_lambda_.25} parent=31 // loop_footer_branch
                %200 = sbr.rel target = $region41
              $region46: #{_lambda_.25} parent=31 // loop_exit
                _
            $region32: #{_lambda_.25} parent=27 // pred_fallthru
              _
          $region28: #{_lambda_.25} parent=23 // pred_fallthru
            _
          %216 = vnop
        $region24: #{_lambda_.25} parent=19 // pred_fallthru
          _
        // Predicated region
        $region47: #{_lambda_.25} parent=19 // pred_check
          %p217 = pneg %p78
        $region48: #{_lambda_.25} parent=19 // pred_check_branch
          %219 = sbr.rel (%p217) target = $region50
        $region49: #{_lambda_.25} parent=19 // pred_region
          %s220 = smul.u32 48, %s18
          %p221 = scmp.lt.s32.totalorder %s220, 143
          %s222 = scalar_select %p221, %s220, 143
          %p223 = scmp.lt.s32.totalorder %s17, 0
          %s224 = scalar_select %p223, %s17, 0
          %s225 = sadd.s32 %s224, %s222
          %s226 = smul.addr %s225, 4
          %s227 = scalar_lea.vmem %s1, %s226
          %s228 = smul.u32 48, %s18
        $region50: #{_lambda_.25} parent=19 // pred_fallthru
          _
      $region20: #{_lambda_.25} parent=5 // pred_fallthru
        _
      %p229 = scmp.le.s32.totalorder 1, %s9
      %p230 = scmp.lt.s32.totalorder %s9, 4
      %p231 = pnand %p229, %p230
      %p232 = pneg %p231
      // Predicated region
      $region51: #{_lambda_.25} parent=5 // pred_check
        _
      $region52: #{_lambda_.25} parent=5 // pred_check_branch
        %234 = sbr.rel (%p231) target = $region54
      $region53: #{_lambda_.25} parent=5 // pred_region
        %s235 = ssub.s32 %s9, 1
        %s236 = sand.u32 %s43, 1
        %s237 = sand.u32 %s43, 1
        %s238 = smul.addr %s237, 48
        %s239 = scalar_lea.vmem [#allocation3], %s238
        // Predicated region
        $region55: #{_lambda_.25} parent=53 // pred_check
          %p240 = pneg %p56
        $region56: #{_lambda_.25} parent=53 // pred_check_branch
          %242 = sbr.rel (%p240) target = $region58
        $region57: #{_lambda_.25} parent=53 // pred_region
          _
        $region58: #{_lambda_.25} parent=53 // pred_fallthru
          _
        %s243 = sand.u32 %s43, 1
        %s244 = sand.u32 %s43, 1
        %s245 = smul.addr %s244, 48
        %s246 = scalar_lea.vmem [#allocation3], %s245
        %p247 = pneg %p56
        %p248 = pneg %p53
        %s249 = smul.u32 48, %s21
        %p250 = scmp.lt.s32.totalorder %s249, 143
        %s251 = scalar_select %p250, %s249, 143
        %p252 = scmp.lt.s32.totalorder %s20, 0
        %s253 = scalar_select %p252, %s20, 0
        %s254 = sadd.s32 %s253, %s251
        %s255 = smul.addr %s254, 4
        %s256 = scalar_lea.vmem %s1, %s255
        %p257 = pneg %p84
        %p258 = pneg %p81
        %p259 = scmp.lt.s32.totalorder %s20, 0
        %s260 = scalar_select %p259, %s20, 0
        %s261 = scalar_lea.vmem %s2, %s260
        %p262 = pneg %p110
        %p263 = pneg %p107
        %p264 = pneg %p138
        %p265 = pneg %p135
        %s266 = smul.u32 4, %s19
        %p267 = scmp.lt.s32.totalorder %s266, 3
        %s268 = scalar_select %p267, %s266, 3
        %p269 = scmp.lt.s32.totalorder %s20, 0
        %s270 = scalar_select %p269, %s20, 0
        %s271 = sadd.s32 %s270, %s268
        %s272 = smul.addr %s271, 8
        %s273 = scalar_lea.vmem %s3, %s272
        %s274 = smul.u32 4, %s19
        %s275 = smul.u32 3, %s21
        %s276 = smul.u32 48, %s21
        %p277 = scmp.lt.s32.totalorder %s276, 143
        %s278 = scalar_select %p277, %s276, 143
        %p279 = scmp.lt.s32.totalorder %s20, 0
        %s280 = scalar_select %p279, %s20, 0
        %s281 = sadd.s32 %s280, %s278
        %s282 = smul.addr %s281, 4
        %s283 = scalar_lea.vmem %s1, %s282
        %s284 = smul.u32 48, %s21
        %p285 = scmp.lt.s32.totalorder %s20, 0
        %s286 = scalar_select %p285, %s20, 0
        %s287 = scalar_lea.vmem %s2, %s286
        %s288 = smul.u32 4, %s19
        %p289 = scmp.lt.s32.totalorder %s288, 3
        %s290 = scalar_select %p289, %s288, 3
        %p291 = scmp.lt.s32.totalorder %s20, 0
        %s292 = scalar_select %p291, %s20, 0
        %s293 = sadd.s32 %s292, %s290
        %s294 = smul.addr %s293, 8
        %s295 = scalar_lea.vmem %s3, %s294
        %s296 = smul.u32 4, %s19
        %p298 = scmp.eq.s32.totalorder %s21, 0
        // Predicated region
        $region59: #{_lambda_.25} parent=53 // pred_check
          %p299 = pneg %p298
        $region60: #{_lambda_.25} parent=53 // pred_check_branch
          %301 = sbr.rel (%p299) target = $region62
        $region61: #{_lambda_.25} parent=53 // pred_region
          %302 = vst [vmem:[#allocation2] sm:$0xff] 0.0
          %303 = vst [vmem:[#allocation2 + $0x8] sm:$0xff] 0.0
          %304 = vst [vmem:[#allocation2 + $0x10] sm:$0xff] 0.0
          %305 = vst [vmem:[#allocation2 + $0x18] sm:$0xff] 0.0
        $region62: #{_lambda_.25} parent=53 // pred_fallthru
          _
        %v306 = vld [vmem:[#allocation2] sm:$0xff]
        %v307 = vld [vmem:[#allocation2 + $0x8] sm:$0xff]
        %v308 = vld [vmem:[#allocation2 + $0x10] sm:$0xff]
        %v309 = vld [vmem:[#allocation2 + $0x18] sm:$0xff]
        %v310 = vld [vmem:[%s239] sm:$0xff]
        %v311 = vld [vmem:[%s239 + $0x8] sm:$0xf]
        %v312 = vld [vmem:[%s239 + $0xc] sm:$0xff]
        %v313 = vld [vmem:[%s239 + $0x14] sm:$0xf]
        %v314 = vld [vmem:[%s239 + $0x18] sm:$0xff]
        %v315 = vld [vmem:[%s239 + $0x20] sm:$0xf]
        %v316 = vld [vmem:[%s239 + $0x24] sm:$0xff]
        %v317 = vld [vmem:[%s239 + $0x2c] sm:$0xf]
        %v318 = vld [vmem:[%s283] sm:$0xf]
        %v319 = vld [vmem:[%s283 + $0x4] sm:$0xf]
        %v320 = vld [vmem:[%s283 + $0x8] sm:$0xf]
        %v321 = vld [vmem:[%s283 + $0xc] sm:$0xf]
        %v322 = vld [vmem:[%s283 + $0x10] sm:$0xf]
        %v323 = vld [vmem:[%s283 + $0x14] sm:$0xf]
        %v324 = vld [vmem:[%s283 + $0x18] sm:$0xf]
        %v325 = vld [vmem:[%s283 + $0x1c] sm:$0xf]
        %v326 = vld [vmem:[%s283 + $0x20] sm:$0xf]
        %v327 = vld [vmem:[%s283 + $0x24] sm:$0xf]
        %v328 = vld [vmem:[%s283 + $0x28] sm:$0xf]
        %v329 = vld [vmem:[%s283 + $0x2c] sm:$0xf]
        %v330 = vld [vmem:[%s283 + $0x30] sm:$0xf]
        %v331 = vld [vmem:[%s283 + $0x34] sm:$0xf]
        %v332 = vld [vmem:[%s283 + $0x38] sm:$0xf]
        %v333 = vld [vmem:[%s283 + $0x3c] sm:$0xf]
        %v334 = vld [vmem:[%s283 + $0x40] sm:$0xf]
        %v335 = vld [vmem:[%s283 + $0x44] sm:$0xf]
        %v336 = vld [vmem:[%s283 + $0x48] sm:$0xf]
        %v337 = vld [vmem:[%s283 + $0x4c] sm:$0xf]
        %v338 = vld [vmem:[%s283 + $0x50] sm:$0xf]
        %v339 = vld [vmem:[%s283 + $0x54] sm:$0xf]
        %v340 = vld [vmem:[%s283 + $0x58] sm:$0xf]
        %v341 = vld [vmem:[%s283 + $0x5c] sm:$0xf]
        %v342 = vld [vmem:[%s283 + $0x60] sm:$0xf]
        %v343 = vld [vmem:[%s283 + $0x64] sm:$0xf]
        %v344 = vld [vmem:[%s283 + $0x68] sm:$0xf]
        %v345 = vld [vmem:[%s283 + $0x6c] sm:$0xf]
        %v346 = vld [vmem:[%s283 + $0x70] sm:$0xf]
        %v347 = vld [vmem:[%s283 + $0x74] sm:$0xf]
        %v348 = vld [vmem:[%s283 + $0x78] sm:$0xf]
        %v349 = vld [vmem:[%s283 + $0x7c] sm:$0xf]
        %v350 = vld [vmem:[%s283 + $0x80] sm:$0xf]
        %v351 = vld [vmem:[%s283 + $0x84] sm:$0xf]
        %v352 = vld [vmem:[%s283 + $0x88] sm:$0xf]
        %v353 = vld [vmem:[%s283 + $0x8c] sm:$0xf]
        %v354 = vld [vmem:[%s283 + $0x90] sm:$0xf]
        %v355 = vld [vmem:[%s283 + $0x94] sm:$0xf]
        %v356 = vld [vmem:[%s283 + $0x98] sm:$0xf]
        %v357 = vld [vmem:[%s283 + $0x9c] sm:$0xf]
        %v358 = vld [vmem:[%s283 + $0xa0] sm:$0xf]
        %v359 = vld [vmem:[%s283 + $0xa4] sm:$0xf]
        %v360 = vld [vmem:[%s283 + $0xa8] sm:$0xf]
        %v361 = vld [vmem:[%s283 + $0xac] sm:$0xf]
        %v362 = vld [vmem:[%s283 + $0xb0] sm:$0xf]
        %v363 = vld [vmem:[%s283 + $0xb4] sm:$0xf]
        %v364 = vld [vmem:[%s283 + $0xb8] sm:$0xf]
        %v365 = vld [vmem:[%s283 + $0xbc] sm:$0xf]
        %v374 = vunpack.c.l.b16 %v310
        %v375 = vunpack.c.h.b16 %v310
        %v376 = vunpack.c.l.b16 %v311
        %v377 = vunpack.c.l.b16 %v312
        %v378 = vunpack.c.h.b16 %v312
        %v379 = vunpack.c.l.b16 %v313
        %v380 = vunpack.c.l.b16 %v314
        %v381 = vunpack.c.h.b16 %v314
        %v382 = vunpack.c.l.b16 %v315
        %v383 = vunpack.c.l.b16 %v316
        %v384 = vunpack.c.h.b16 %v316
        %v385 = vunpack.c.l.b16 %v317
        %v386 = vpack.c.b16 %v377, %v374
        %v387 = vpack.c.b16 %v378, %v375
        %v388 = vpack.c.b16 %v379, %v376
        %v389 = vpack.c.b16 %v383, %v380
        %v390 = vpack.c.b16 %v384, %v381
        %v391 = vpack.c.b16 %v385, %v382
        %v446 = vunpack.c.l.b16 %v318
        %v447 = vunpack.c.l.b16 %v319
        %v448 = vunpack.c.l.b16 %v320
        %v449 = vunpack.c.l.b16 %v321
        %v450 = vunpack.c.l.b16 %v322
        %v451 = vunpack.c.l.b16 %v323
        %v452 = vunpack.c.l.b16 %v324
        %v453 = vunpack.c.l.b16 %v325
        %v454 = vunpack.c.l.b16 %v326
        %v455 = vunpack.c.l.b16 %v327
        %v456 = vunpack.c.l.b16 %v328
        %v457 = vunpack.c.l.b16 %v329
        %v458 = vunpack.c.l.b16 %v330
        %v459 = vunpack.c.l.b16 %v331
        %v460 = vunpack.c.l.b16 %v332
        %v461 = vunpack.c.l.b16 %v333
        %v462 = vunpack.c.l.b16 %v334
        %v463 = vunpack.c.l.b16 %v335
        %v464 = vunpack.c.l.b16 %v336
        %v465 = vunpack.c.l.b16 %v337
        %v466 = vunpack.c.l.b16 %v338
        %v467 = vunpack.c.l.b16 %v339
        %v468 = vunpack.c.l.b16 %v340
        %v469 = vunpack.c.l.b16 %v341
        %v470 = vunpack.c.l.b16 %v342
        %v471 = vunpack.c.l.b16 %v343
        %v472 = vunpack.c.l.b16 %v344
        %v473 = vunpack.c.l.b16 %v345
        %v474 = vunpack.c.l.b16 %v346
        %v475 = vunpack.c.l.b16 %v347
        %v476 = vunpack.c.l.b16 %v348
        %v477 = vunpack.c.l.b16 %v349
        %v478 = vunpack.c.l.b16 %v350
        %v479 = vunpack.c.l.b16 %v351
        %v480 = vunpack.c.l.b16 %v352
        %v481 = vunpack.c.l.b16 %v353
        %v482 = vunpack.c.l.b16 %v354
        %v483 = vunpack.c.l.b16 %v355
        %v484 = vunpack.c.l.b16 %v356
        %v485 = vunpack.c.l.b16 %v357
        %v486 = vunpack.c.l.b16 %v358
        %v487 = vunpack.c.l.b16 %v359
        %v488 = vunpack.c.l.b16 %v360
        %v489 = vunpack.c.l.b16 %v361
        %v490 = vunpack.c.l.b16 %v362
        %v491 = vunpack.c.l.b16 %v363
        %v492 = vunpack.c.l.b16 %v364
        %v493 = vunpack.c.l.b16 %v365
        %v494 = vpack.c.b16 %v447, %v446
        %v495 = vpack.c.b16 %v449, %v448
        %v496 = vpack.c.b16 %v451, %v450
        %v497 = vpack.c.b16 %v453, %v452
        %v498 = vpack.c.b16 %v455, %v454
        %v499 = vpack.c.b16 %v457, %v456
        %v500 = vpack.c.b16 %v459, %v458
        %v501 = vpack.c.b16 %v461, %v460
        %v502 = vpack.c.b16 %v463, %v462
        %v503 = vpack.c.b16 %v465, %v464
        %v504 = vpack.c.b16 %v467, %v466
        %v505 = vpack.c.b16 %v469, %v468
        %v506 = vpack.c.b16 %v471, %v470
        %v507 = vpack.c.b16 %v473, %v472
        %v508 = vpack.c.b16 %v475, %v474
        %v509 = vpack.c.b16 %v477, %v476
        %v510 = vpack.c.b16 %v479, %v478
        %v511 = vpack.c.b16 %v481, %v480
        %v512 = vpack.c.b16 %v483, %v482
        %v513 = vpack.c.b16 %v485, %v484
        %v514 = vpack.c.b16 %v487, %v486
        %v515 = vpack.c.b16 %v489, %v488
        %v516 = vpack.c.b16 %v491, %v490
        %v517 = vpack.c.b16 %v493, %v492
        %542 = vmatprep.subr.bf16.mxu0 0
        %543 = vmatpush1.bf16.msra.mxu0 %v501
        %544 = vmatprep.subr.bf16.mxu0 0
        %545 = vmatpush1.bf16.msra.mxu0 %v500
        %546 = vmatprep.subr.bf16.mxu0 0
        %547 = vmatpush1.bf16.msra.mxu0 %v499
        %548 = vmatprep.subr.bf16.mxu0 0
        %549 = vmatpush1.bf16.msra.mxu0 %v498
        %550 = vmatprep.subr.bf16.mxu0 0
        %551 = vmatpush1.bf16.msra.mxu0 %v497
        %552 = vmatprep.subr.bf16.mxu0 0
        %553 = vmatpush1.bf16.msra.mxu0 %v496
        %554 = vmatprep.subr.bf16.mxu0 0
        %555 = vmatpush1.bf16.msra.mxu0 %v495
        %556 = vmatprep.subr.bf16.mxu0 0
        %557 = vmatpush1.bf16.msra.mxu0 %v494
        %558 = vmatprep.subr.bf16.mxu0 0
        %559 = vmatpush2.bf16.msra.mxu0 %v509
        %560 = vmatprep.subr.bf16.mxu0 0
        %561 = vmatpush2.bf16.msra.mxu0 %v508
        %562 = vmatprep.subr.bf16.mxu0 0
        %563 = vmatpush2.bf16.msra.mxu0 %v507
        %564 = vmatprep.subr.bf16.mxu0 0
        %565 = vmatpush2.bf16.msra.mxu0 %v506
        %566 = vmatprep.subr.bf16.mxu0 0
        %567 = vmatpush2.bf16.msra.mxu0 %v505
        %568 = vmatprep.subr.bf16.mxu0 0
        %569 = vmatpush2.bf16.msra.mxu0 %v504
        %570 = vmatprep.subr.bf16.mxu0 0
        %571 = vmatpush2.bf16.msra.mxu0 %v503
        %572 = vmatprep.subr.bf16.mxu0 0
        %573 = vmatpush2.bf16.msra.mxu0 %v502
        %574 = vmatprep.mubr.bf16.mxu0 %v387
        %575 = vmatmul.mubr.bf16.gmra.mxu0 %v386
        %v576 = vpop.f32.mrf.mxu0
        %v577 = vadd.f32 0.0, %v576
        %v578 = vpop.f32.mrf.mxu0
        %v579 = vpop.f32.mrf.mxu0
        %v580 = vadd.f32 0.0, %v579
        %v581 = vpop.f32.mrf.mxu0
        %582 = vmatprep.mubr.bf16.mxu0 %v390
        %583 = vmatmul.mubr.bf16.gmra.mxu0 %v389
        %v584 = vpop.f32.mrf.mxu0
        %v585 = vadd.f32 0.0, %v584
        %v586 = vpop.f32.mrf.mxu0
        %v587 = vpop.f32.mrf.mxu0
        %v588 = vadd.f32 0.0, %v587
        %v589 = vpop.f32.mrf.mxu0
        %590 = vdwg.mxu0
        %591 = vmatprep.subr.bf16.mxu0 0
        %592 = vmatpush1.bf16.msra.mxu0 %v517
        %593 = vmatprep.subr.bf16.mxu0 0
        %594 = vmatpush1.bf16.msra.mxu0 %v516
        %595 = vmatprep.subr.bf16.mxu0 0
        %596 = vmatpush1.bf16.msra.mxu0 %v515
        %597 = vmatprep.subr.bf16.mxu0 0
        %598 = vmatpush1.bf16.msra.mxu0 %v514
        %599 = vmatprep.subr.bf16.mxu0 0
        %600 = vmatpush1.bf16.msra.mxu0 %v513
        %601 = vmatprep.subr.bf16.mxu0 0
        %602 = vmatpush1.bf16.msra.mxu0 %v512
        %603 = vmatprep.subr.bf16.mxu0 0
        %604 = vmatpush1.bf16.msra.mxu0 %v511
        %605 = vmatprep.subr.bf16.mxu0 0
        %606 = vmatpush1.bf16.msra.mxu0 %v510
        %607 = vmatprep.subr.bf16.mxu0 0
        %608 = vmatpush2.bf16.msra.mxu0 0
        %609 = vmatprep.subr.bf16.mxu0 0
        %610 = vmatpush2.bf16.msra.mxu0 0
        %611 = vmatprep.subr.bf16.mxu0 0
        %612 = vmatpush2.bf16.msra.mxu0 0
        %613 = vmatprep.subr.bf16.mxu0 0
        %614 = vmatpush2.bf16.msra.mxu0 0
        %615 = vmatprep.subr.bf16.mxu0 0
        %616 = vmatpush2.bf16.msra.mxu0 0
        %617 = vmatprep.subr.bf16.mxu0 0
        %618 = vmatpush2.bf16.msra.mxu0 0
        %619 = vmatprep.subr.bf16.mxu0 0
        %620 = vmatpush2.bf16.msra.mxu0 0
        %621 = vmatprep.subr.bf16.mxu0 0
        %622 = vmatpush2.bf16.msra.mxu0 0
        %623 = vmatprep.mubr.bf16.mxu0 0
        %624 = vmatmul.mubr.bf16.gmra.mxu0 %v388
        %v625 = vpop.f32.mrf.mxu0
        %v626 = vadd.f32 %v577, %v625
        %v627 = vpop.f32.mrf.mxu0
        %v628 = vpop.f32.mrf.mxu0
        %v629 = vadd.f32 %v580, %v628
        %v630 = vpop.f32.mrf.mxu0
        %631 = vmatprep.mubr.bf16.mxu0 0
        %632 = vmatmul.mubr.bf16.gmra.mxu0 %v391
        %v633 = vpop.f32.mrf.mxu0
        %v634 = vadd.f32 %v585, %v633
        %v635 = vpop.f32.mrf.mxu0
        %v636 = vpop.f32.mrf.mxu0
        %v637 = vadd.f32 %v588, %v636
        %v638 = vpop.f32.mrf.mxu0
        %639 = vdwg.mxu0
        %v640 = vadd.f32 %v306, %v626
        %v641 = vadd.f32 %v307, %v629
        %v642 = vadd.f32 %v308, %v634
        %v643 = vadd.f32 %v309, %v637
        %644 = vst [vmem:[#allocation2] sm:$0xff] %v640
        %645 = vst [vmem:[#allocation2 + $0x8] sm:$0xff] %v641
        %646 = vst [vmem:[#allocation2 + $0x10] sm:$0xff] %v642
        %647 = vst [vmem:[#allocation2 + $0x18] sm:$0xff] %v643
        %p648 = scmp.eq.s32.totalorder %s21, 2
        // Predicated region
        $region63: #{_lambda_.25} parent=53 // pred_check
          %p649 = pneg %p648
        $region64: #{_lambda_.25} parent=53 // pred_check_branch
          %651 = sbr.rel (%p649) target = $region66
        $region65: #{_lambda_.25} parent=53 // pred_region
          %v652 = vld [vmem:[#allocation2] sm:$0xff]
          %v653 = vld [vmem:[#allocation2 + $0x8] sm:$0xff]
          %v654 = vld [vmem:[#allocation2 + $0x10] sm:$0xff]
          %v655 = vld [vmem:[#allocation2 + $0x18] sm:$0xff]
          %v656 = vld [vmem:[%s287] sm:$0x1]
          %v658 = vlaneseq
          %v659 = vshrl.u32 %v658, 7
          %v660 = vsub.s32 0, %v659
          %v661 = vrot.slane %v656, %v660
          %v663 = vadd.f32 %v652, %v661
          %v664 = vadd.f32 %v653, %v661
          %v665 = vadd.f32 %v654, %v661
          %v666 = vadd.f32 %v655, %v661
          %v667 = vmax.f32 %v663, 0.0
          %v668 = vmax.f32 %v664, 0.0
          %v669 = vmax.f32 %v665, 0.0
          %v670 = vmax.f32 %v666, 0.0
          %671 = vst [vmem:[%s295] sm:$0xff] %v667
          %672 = vst [vmem:[%s295 + $0x8] sm:$0xff] %v668
          %673 = vst [vmem:[%s295 + $0x10] sm:$0xff] %v669
          %674 = vst [vmem:[%s295 + $0x18] sm:$0xff] %v670
        $region66: #{_lambda_.25} parent=53 // pred_fallthru
          _
        %s675 = smul.u32 4, %s19
        %p676 = scmp.lt.s32.totalorder %s675, 3
        %s677 = scalar_select %p676, %s675, 3
        %p678 = scmp.lt.s32.totalorder %s20, 0
        %s679 = scalar_select %p678, %s20, 0
        %s680 = sadd.s32 %s679, %s677
        %s681 = smul.addr %s680, 8
        %s682 = scalar_lea.vmem %s3, %s681
        // Predicated region
        $region67: #{_lambda_.25} parent=53 // pred_check
          %p683 = pneg %p135
        $region68: #{_lambda_.25} parent=53 // pred_check_branch
          %685 = sbr.rel (%p683) target = $region70
        $region69: #{_lambda_.25} parent=53 // pred_region
          %s686 = smul.u32 4, %s19
        $region70: #{_lambda_.25} parent=53 // pred_fallthru
          _
        // Predicated region
        $region71: #{_lambda_.25} parent=53 // pred_check
          %p687 = pneg %p135
        $region72: #{_lambda_.25} parent=53 // pred_check_branch
          %689 = sbr.rel (%p687) target = $region74
        $region73: #{_lambda_.25} parent=53 // pred_region
          %s690 = smul.u32 4, %s19
          %p691 = scmp.lt.s32.totalorder %s690, 3
          %s692 = scalar_select %p691, %s690, 3
          %p693 = scmp.lt.s32.totalorder %s20, 0
          %s694 = scalar_select %p693, %s20, 0
          %s695 = sadd.s32 %s694, %s692
          %s696 = smul.addr %s695, 8
          %s697 = scalar_lea.vmem %s3, %s696
        $region74: #{_lambda_.25} parent=53 // pred_fallthru
          _
      $region54: #{_lambda_.25} parent=5 // pred_fallthru
        _
      %p698 = scmp.le.s32.totalorder 2, %s9
      // Predicated region
      $region75: #{_lambda_.25} parent=5 // pred_check
        %p699 = pneg %p698
      $region76: #{_lambda_.25} parent=5 // pred_check_branch
        %701 = sbr.rel (%p699) target = $region78
      $region77: #{_lambda_.25} parent=5 // pred_region
        %s702 = ssub.s32 %s9, 2
      $region78: #{_lambda_.25} parent=5 // pred_fallthru
        _
    $region6: #{_lambda_.25} parent=1 // loop_footer
      %s13 = sadd.s32 1, %s9
    $region7: #{_lambda_.25} parent=1 // loop_footer_branch
      %8 = sbr.rel target = $region3
    $region8: #{_lambda_.25} parent=1 // loop_exit
      _

// kernel: _lambda_.35
$region0: #{_lambda_.35}
  #allocation0 [shape = 'u32[]', space=smem, size = 0x4, offset = 0x4, fixed_abs, tag = 'smem constant byte address 0x4 - core index']
  #allocation1 [shape = 'u32[144,128]{1,0:T(1,128)}', space=vmem, size = 0x12000, scoped, tag = 'internal scratch']
  #allocation2 [shape = 'f32[32,128]{1,0:T(8,128)}', space=vmem, size = 0x4000, scoped, tag = 'scratch operand']
  %s0 = inlined_call_operand.vmem [shape: bf16[32,128], index: 0, kind: input, shape index: {}]
  %s1 = inlined_call_operand.vmem [shape: bf16[128,128], index: 1, kind: input, shape index: {}]
  %s2 = inlined_call_operand.vmem [shape: f32[1,128], index: 2, kind: input, shape index: {}]
  %s3 = inlined_call_operand.vmem [shape: f32[32,128], index: 3, kind: output, shape index: {}]
  %s4 = sld [smem:[#allocation0]]
  $region30: #{_lambda_.35} parent=0
    _
  %s6 = ssub.s32 1, %s4
  %s7 = scalar_select 0, %s6, %s4
  // Predicated region
  $region2: #{_lambda_.35} parent=0 // pred_check
    _
  $region3: #{_lambda_.35} parent=0 // pred_check_branch
    %9 = sbr.rel (0) target = $region5
  $region4: #{_lambda_.35} parent=0 // pred_region
    _
  $region5: #{_lambda_.35} parent=0 // pred_fallthru
    _
  // Predicated region
  $region6: #{_lambda_.35} parent=0 // pred_check
    _
  $region7: #{_lambda_.35} parent=0 // pred_check_branch
    %11 = sbr.rel (0) target = $region9
  $region8: #{_lambda_.35} parent=0 // pred_region
    _
  $region9: #{_lambda_.35} parent=0 // pred_fallthru
    _
  // Predicated region
  $region10: #{_lambda_.35} parent=0 // pred_check
    _
  $region11: #{_lambda_.35} parent=0 // pred_check_branch
    %13 = sbr.rel (0) target = $region13
  $region12: #{_lambda_.35} parent=0 // pred_region
    _
  $region13: #{_lambda_.35} parent=0 // pred_fallthru
    _
  %p15 = scmp.eq.s32.totalorder 0, 0
  // Predicated region
  $region14: #{_lambda_.35} parent=0 // pred_check
    %p16 = pneg %p15
  $region15: #{_lambda_.35} parent=0 // pred_check_branch
    %18 = sbr.rel (%p16) target = $region17
  $region16: #{_lambda_.35} parent=0 // pred_region
    %19 = vst [vmem:[#allocation2] sm:$0xff] 0.0
    %20 = vst [vmem:[#allocation2 + $0x8] sm:$0xff] 0.0
    %21 = vst [vmem:[#allocation2 + $0x10] sm:$0xff] 0.0
    %22 = vst [vmem:[#allocation2 + $0x18] sm:$0xff] 0.0
  $region17: #{_lambda_.35} parent=0 // pred_fallthru
    _
  %v23 = vld [vmem:[#allocation2] sm:$0xff]
  %v24 = vld [vmem:[#allocation2 + $0x8] sm:$0xff]
  %v25 = vld [vmem:[#allocation2 + $0x10] sm:$0xff]
  %v26 = vld [vmem:[#allocation2 + $0x18] sm:$0xff]
  %v27 = vld [vmem:[%s0] sm:$0xf]
  %v28 = vld [vmem:[%s0 + $0x4] sm:$0xf]
  %v29 = vld [vmem:[%s0 + $0x8] sm:$0xf]
  %v30 = vld [vmem:[%s0 + $0xc] sm:$0xf]
  %v31 = vld [vmem:[%s1] sm:$0xf]
  %v32 = vld [vmem:[%s1 + $0x4] sm:$0xf]
  %v33 = vld [vmem:[%s1 + $0x8] sm:$0xf]
  %v34 = vld [vmem:[%s1 + $0xc] sm:$0xf]
  %v35 = vld [vmem:[%s1 + $0x10] sm:$0xf]
  %v36 = vld [vmem:[%s1 + $0x14] sm:$0xf]
  %v37 = vld [vmem:[%s1 + $0x18] sm:$0xf]
  %v38 = vld [vmem:[%s1 + $0x1c] sm:$0xf]
  %v39 = vld [vmem:[%s1 + $0x20] sm:$0xf]
  %v40 = vld [vmem:[%s1 + $0x24] sm:$0xf]
  %v41 = vld [vmem:[%s1 + $0x28] sm:$0xf]
  %v42 = vld [vmem:[%s1 + $0x2c] sm:$0xf]
  %v43 = vld [vmem:[%s1 + $0x30] sm:$0xf]
  %v44 = vld [vmem:[%s1 + $0x34] sm:$0xf]
  %v45 = vld [vmem:[%s1 + $0x38] sm:$0xf]
  %v46 = vld [vmem:[%s1 + $0x3c] sm:$0xf]
  %v51 = vunpack.c.l.b16 %v27
  %v52 = vunpack.c.l.b16 %v28
  %v53 = vunpack.c.l.b16 %v29
  %v54 = vunpack.c.l.b16 %v30
  %v55 = vpack.c.b16 %v52, %v51
  %v56 = vpack.c.b16 %v54, %v53
  %v75 = vunpack.c.l.b16 %v31
  %v76 = vunpack.c.l.b16 %v32
  %v77 = vunpack.c.l.b16 %v33
  %v78 = vunpack.c.l.b16 %v34
  %v79 = vunpack.c.l.b16 %v35
  %v80 = vunpack.c.l.b16 %v36
  %v81 = vunpack.c.l.b16 %v37
  %v82 = vunpack.c.l.b16 %v38
  %v83 = vunpack.c.l.b16 %v39
  %v84 = vunpack.c.l.b16 %v40
  %v85 = vunpack.c.l.b16 %v41
  %v86 = vunpack.c.l.b16 %v42
  %v87 = vunpack.c.l.b16 %v43
  %v88 = vunpack.c.l.b16 %v44
  %v89 = vunpack.c.l.b16 %v45
  %v90 = vunpack.c.l.b16 %v46
  %v91 = vpack.c.b16 %v76, %v75
  %v92 = vpack.c.b16 %v78, %v77
  %v93 = vpack.c.b16 %v80, %v79
  %v94 = vpack.c.b16 %v82, %v81
  %v95 = vpack.c.b16 %v84, %v83
  %v96 = vpack.c.b16 %v86, %v85
  %v97 = vpack.c.b16 %v88, %v87
  %v98 = vpack.c.b16 %v90, %v89
  %107 = vmatprep.subr.bf16.mxu0 0
  %108 = vmatpush1.bf16.msra.mxu0 %v98
  %109 = vmatprep.subr.bf16.mxu0 0
  %110 = vmatpush1.bf16.msra.mxu0 %v97
  %111 = vmatprep.subr.bf16.mxu0 0
  %112 = vmatpush1.bf16.msra.mxu0 %v96
  %113 = vmatprep.subr.bf16.mxu0 0
  %114 = vmatpush1.bf16.msra.mxu0 %v95
  %115 = vmatprep.subr.bf16.mxu0 0
  %116 = vmatpush1.bf16.msra.mxu0 %v94
  %117 = vmatprep.subr.bf16.mxu0 0
  %118 = vmatpush1.bf16.msra.mxu0 %v93
  %119 = vmatprep.subr.bf16.mxu0 0
  %120 = vmatpush1.bf16.msra.mxu0 %v92
  %121 = vmatprep.subr.bf16.mxu0 0
  %122 = vmatpush1.bf16.msra.mxu0 %v91
  %123 = vmatprep.subr.bf16.mxu0 0
  %124 = vmatpush2.bf16.msra.mxu0 0
  %125 = vmatprep.subr.bf16.mxu0 0
  %126 = vmatpush2.bf16.msra.mxu0 0
  %127 = vmatprep.subr.bf16.mxu0 0
  %128 = vmatpush2.bf16.msra.mxu0 0
  %129 = vmatprep.subr.bf16.mxu0 0
  %130 = vmatpush2.bf16.msra.mxu0 0
  %131 = vmatprep.subr.bf16.mxu0 0
  %132 = vmatpush2.bf16.msra.mxu0 0
  %133 = vmatprep.subr.bf16.mxu0 0
  %134 = vmatpush2.bf16.msra.mxu0 0
  %135 = vmatprep.subr.bf16.mxu0 0
  %136 = vmatpush2.bf16.msra.mxu0 0
  %137 = vmatprep.subr.bf16.mxu0 0
  %138 = vmatpush2.bf16.msra.mxu0 0
  %139 = vmatprep.mubr.bf16.mxu0 0
  %140 = vmatmul.mubr.bf16.gmra.mxu0 %v55
  %v141 = vpop.f32.mrf.mxu0
  %v142 = vadd.f32 0.0, %v141
  %v143 = vpop.f32.mrf.mxu0
  %v144 = vpop.f32.mrf.mxu0
  %v145 = vadd.f32 0.0, %v144
  %v146 = vpop.f32.mrf.mxu0
  %147 = vmatprep.mubr.bf16.mxu0 0
  %148 = vmatmul.mubr.bf16.gmra.mxu0 %v56
  %v149 = vpop.f32.mrf.mxu0
  %v150 = vadd.f32 0.0, %v149
  %v151 = vpop.f32.mrf.mxu0
  %v152 = vpop.f32.mrf.mxu0
  %v153 = vadd.f32 0.0, %v152
  %v154 = vpop.f32.mrf.mxu0
  %155 = vdwg.mxu0
  %v156 = vadd.f32 %v23, %v142
  %v157 = vadd.f32 %v24, %v145
  %v158 = vadd.f32 %v25, %v150
  %v159 = vadd.f32 %v26, %v153
  %160 = vst [vmem:[#allocation2] sm:$0xff] %v156
  %161 = vst [vmem:[#allocation2 + $0x8] sm:$0xff] %v157
  %162 = vst [vmem:[#allocation2 + $0x10] sm:$0xff] %v158
  %163 = vst [vmem:[#allocation2 + $0x18] sm:$0xff] %v159
  // Predicated region
  $region18: #{_lambda_.35} parent=0 // pred_check
    %p164 = pneg %p15
  $region19: #{_lambda_.35} parent=0 // pred_check_branch
    %166 = sbr.rel (%p164) target = $region21
  $region20: #{_lambda_.35} parent=0 // pred_region
    %v167 = vld [vmem:[#allocation2] sm:$0xff]
    %v168 = vld [vmem:[#allocation2 + $0x8] sm:$0xff]
    %v169 = vld [vmem:[#allocation2 + $0x10] sm:$0xff]
    %v170 = vld [vmem:[#allocation2 + $0x18] sm:$0xff]
    %v171 = vld [vmem:[%s2] sm:$0x1]
    %v173 = vlaneseq
    %v174 = vshrl.u32 %v173, 7
    %v175 = vsub.s32 0, %v174
    %v176 = vrot.slane %v171, %v175
    %v178 = vadd.f32 %v167, %v176
    %v179 = vadd.f32 %v168, %v176
    %v180 = vadd.f32 %v169, %v176
    %v181 = vadd.f32 %v170, %v176
    %182 = vst [vmem:[%s3] sm:$0xff] %v178
    %183 = vst [vmem:[%s3 + $0x8] sm:$0xff] %v179
    %184 = vst [vmem:[%s3 + $0x10] sm:$0xff] %v180
    %185 = vst [vmem:[%s3 + $0x18] sm:$0xff] %v181
  $region21: #{_lambda_.35} parent=0 // pred_fallthru
    _
  // Predicated region
  $region22: #{_lambda_.35} parent=0 // pred_check
    _
  $region23: #{_lambda_.35} parent=0 // pred_check_branch
    %187 = sbr.rel (0) target = $region25
  $region24: #{_lambda_.35} parent=0 // pred_region
    _
  $region25: #{_lambda_.35} parent=0 // pred_fallthru
    _
  // Predicated region
  $region26: #{_lambda_.35} parent=0 // pred_check
    _
  $region27: #{_lambda_.35} parent=0 // pred_check_branch
    %189 = sbr.rel (0) target = $region29
  $region28: #{_lambda_.35} parent=0 // pred_region
    _
  $region29: #{_lambda_.35} parent=0 // pred_fallthru
    _

// kernel: _lambda_.38
$region0: #{_lambda_.38}
  #allocation0 [shape = 'u32[]', space=smem, size = 0x4, offset = 0x4, fixed_abs, tag = 'smem constant byte address 0x4 - core index']
  #allocation1 [shape = 'u32[144,128]{1,0:T(1,128)}', space=vmem, size = 0x12000, scoped, tag = 'internal scratch']
  #allocation2 [shape = 'f32[32,128]{1,0:T(8,128)}', space=vmem, size = 0x4000, scoped, tag = 'scratch operand']
  %s0 = inlined_call_operand.vmem [shape: bf16[32,512], index: 0, kind: input, shape index: {}]
  %s1 = inlined_call_operand.vmem [shape: bf16[512,128], index: 1, kind: input, shape index: {}]
  %s2 = inlined_call_operand.vmem [shape: f32[1,128], index: 2, kind: input, shape index: {}]
  %s3 = inlined_call_operand.vmem [shape: f32[32,128], index: 3, kind: output, shape index: {}]
  %s4 = sld [smem:[#allocation0]]
  $region30: #{_lambda_.38} parent=0
    _
  %s6 = ssub.s32 1, %s4
  %s7 = scalar_select 0, %s6, %s4
  // Predicated region
  $region2: #{_lambda_.38} parent=0 // pred_check
    _
  $region3: #{_lambda_.38} parent=0 // pred_check_branch
    %9 = sbr.rel (0) target = $region5
  $region4: #{_lambda_.38} parent=0 // pred_region
    _
  $region5: #{_lambda_.38} parent=0 // pred_fallthru
    _
  // Predicated region
  $region6: #{_lambda_.38} parent=0 // pred_check
    _
  $region7: #{_lambda_.38} parent=0 // pred_check_branch
    %11 = sbr.rel (0) target = $region9
  $region8: #{_lambda_.38} parent=0 // pred_region
    _
  $region9: #{_lambda_.38} parent=0 // pred_fallthru
    _
  // Predicated region
  $region10: #{_lambda_.38} parent=0 // pred_check
    _
  $region11: #{_lambda_.38} parent=0 // pred_check_branch
    %13 = sbr.rel (0) target = $region13
  $region12: #{_lambda_.38} parent=0 // pred_region
    _
  $region13: #{_lambda_.38} parent=0 // pred_fallthru
    _
  %p15 = scmp.eq.s32.totalorder 0, 0
  // Predicated region
  $region14: #{_lambda_.38} parent=0 // pred_check
    %p16 = pneg %p15
  $region15: #{_lambda_.38} parent=0 // pred_check_branch
    %18 = sbr.rel (%p16) target = $region17
  $region16: #{_lambda_.38} parent=0 // pred_region
    %19 = vst [vmem:[#allocation2] sm:$0xff] 0.0
    %20 = vst [vmem:[#allocation2 + $0x8] sm:$0xff] 0.0
    %21 = vst [vmem:[#allocation2 + $0x10] sm:$0xff] 0.0
    %22 = vst [vmem:[#allocation2 + $0x18] sm:$0xff] 0.0
  $region17: #{_lambda_.38} parent=0 // pred_fallthru
    _
  %v23 = vld [vmem:[#allocation2] sm:$0xff]
  %v24 = vld [vmem:[#allocation2 + $0x8] sm:$0xff]
  %v25 = vld [vmem:[#allocation2 + $0x10] sm:$0xff]
  %v26 = vld [vmem:[#allocation2 + $0x18] sm:$0xff]
  %v27 = vld [vmem:[%s0] sm:$0xff]
  %v28 = vld [vmem:[%s0 + $0x8] sm:$0xff]
  %v29 = vld [vmem:[%s0 + $0x10] sm:$0xff]
  %v30 = vld [vmem:[%s0 + $0x18] sm:$0xff]
  %v31 = vld [vmem:[%s0 + $0x20] sm:$0xff]
  %v32 = vld [vmem:[%s0 + $0x28] sm:$0xff]
  %v33 = vld [vmem:[%s0 + $0x30] sm:$0xff]
  %v34 = vld [vmem:[%s0 + $0x38] sm:$0xff]
  %v35 = vld [vmem:[%s1] sm:$0xf]
  %v36 = vld [vmem:[%s1 + $0x4] sm:$0xf]
  %v37 = vld [vmem:[%s1 + $0x8] sm:$0xf]
  %v38 = vld [vmem:[%s1 + $0xc] sm:$0xf]
  %v39 = vld [vmem:[%s1 + $0x10] sm:$0xf]
  %v40 = vld [vmem:[%s1 + $0x14] sm:$0xf]
  %v41 = vld [vmem:[%s1 + $0x18] sm:$0xf]
  %v42 = vld [vmem:[%s1 + $0x1c] sm:$0xf]
  %v43 = vld [vmem:[%s1 + $0x20] sm:$0xf]
  %v44 = vld [vmem:[%s1 + $0x24] sm:$0xf]
  %v45 = vld [vmem:[%s1 + $0x28] sm:$0xf]
  %v46 = vld [vmem:[%s1 + $0x2c] sm:$0xf]
  %v47 = vld [vmem:[%s1 + $0x30] sm:$0xf]
  %v48 = vld [vmem:[%s1 + $0x34] sm:$0xf]
  %v49 = vld [vmem:[%s1 + $0x38] sm:$0xf]
  %v50 = vld [vmem:[%s1 + $0x3c] sm:$0xf]
  %v51 = vld [vmem:[%s1 + $0x40] sm:$0xf]
  %v52 = vld [vmem:[%s1 + $0x44] sm:$0xf]
  %v53 = vld [vmem:[%s1 + $0x48] sm:$0xf]
  %v54 = vld [vmem:[%s1 + $0x4c] sm:$0xf]
  %v55 = vld [vmem:[%s1 + $0x50] sm:$0xf]
  %v56 = vld [vmem:[%s1 + $0x54] sm:$0xf]
  %v57 = vld [vmem:[%s1 + $0x58] sm:$0xf]
  %v58 = vld [vmem:[%s1 + $0x5c] sm:$0xf]
  %v59 = vld [vmem:[%s1 + $0x60] sm:$0xf]
  %v60 = vld [vmem:[%s1 + $0x64] sm:$0xf]
  %v61 = vld [vmem:[%s1 + $0x68] sm:$0xf]
  %v62 = vld [vmem:[%s1 + $0x6c] sm:$0xf]
  %v63 = vld [vmem:[%s1 + $0x70] sm:$0xf]
  %v64 = vld [vmem:[%s1 + $0x74] sm:$0xf]
  %v65 = vld [vmem:[%s1 + $0x78] sm:$0xf]
  %v66 = vld [vmem:[%s1 + $0x7c] sm:$0xf]
  %v67 = vld [vmem:[%s1 + $0x80] sm:$0xf]
  %v68 = vld [vmem:[%s1 + $0x84] sm:$0xf]
  %v69 = vld [vmem:[%s1 + $0x88] sm:$0xf]
  %v70 = vld [vmem:[%s1 + $0x8c] sm:$0xf]
  %v71 = vld [vmem:[%s1 + $0x90] sm:$0xf]
  %v72 = vld [vmem:[%s1 + $0x94] sm:$0xf]
  %v73 = vld [vmem:[%s1 + $0x98] sm:$0xf]
  %v74 = vld [vmem:[%s1 + $0x9c] sm:$0xf]
  %v75 = vld [vmem:[%s1 + $0xa0] sm:$0xf]
  %v76 = vld [vmem:[%s1 + $0xa4] sm:$0xf]
  %v77 = vld [vmem:[%s1 + $0xa8] sm:$0xf]
  %v78 = vld [vmem:[%s1 + $0xac] sm:$0xf]
  %v79 = vld [vmem:[%s1 + $0xb0] sm:$0xf]
  %v80 = vld [vmem:[%s1 + $0xb4] sm:$0xf]
  %v81 = vld [vmem:[%s1 + $0xb8] sm:$0xf]
  %v82 = vld [vmem:[%s1 + $0xbc] sm:$0xf]
  %v83 = vld [vmem:[%s1 + $0xc0] sm:$0xf]
  %v84 = vld [vmem:[%s1 + $0xc4] sm:$0xf]
  %v85 = vld [vmem:[%s1 + $0xc8] sm:$0xf]
  %v86 = vld [vmem:[%s1 + $0xcc] sm:$0xf]
  %v87 = vld [vmem:[%s1 + $0xd0] sm:$0xf]
  %v88 = vld [vmem:[%s1 + $0xd4] sm:$0xf]
  %v89 = vld [vmem:[%s1 + $0xd8] sm:$0xf]
  %v90 = vld [vmem:[%s1 + $0xdc] sm:$0xf]
  %v91 = vld [vmem:[%s1 + $0xe0] sm:$0xf]
  %v92 = vld [vmem:[%s1 + $0xe4] sm:$0xf]
  %v93 = vld [vmem:[%s1 + $0xe8] sm:$0xf]
  %v94 = vld [vmem:[%s1 + $0xec] sm:$0xf]
  %v95 = vld [vmem:[%s1 + $0xf0] sm:$0xf]
  %v96 = vld [vmem:[%s1 + $0xf4] sm:$0xf]
  %v97 = vld [vmem:[%s1 + $0xf8] sm:$0xf]
  %v98 = vld [vmem:[%s1 + $0xfc] sm:$0xf]
  %v107 = vunpack.c.l.b16 %v27
  %v108 = vunpack.c.h.b16 %v27
  %v109 = vunpack.c.l.b16 %v28
  %v110 = vunpack.c.h.b16 %v28
  %v111 = vunpack.c.l.b16 %v29
  %v112 = vunpack.c.h.b16 %v29
  %v113 = vunpack.c.l.b16 %v30
  %v114 = vunpack.c.h.b16 %v30
  %v115 = vunpack.c.l.b16 %v31
  %v116 = vunpack.c.h.b16 %v31
  %v117 = vunpack.c.l.b16 %v32
  %v118 = vunpack.c.h.b16 %v32
  %v119 = vunpack.c.l.b16 %v33
  %v120 = vunpack.c.h.b16 %v33
  %v121 = vunpack.c.l.b16 %v34
  %v122 = vunpack.c.h.b16 %v34
  %v123 = vpack.c.b16 %v111, %v107
  %v124 = vpack.c.b16 %v112, %v108
  %v125 = vpack.c.b16 %v113, %v109
  %v126 = vpack.c.b16 %v114, %v110
  %v127 = vpack.c.b16 %v119, %v115
  %v128 = vpack.c.b16 %v120, %v116
  %v129 = vpack.c.b16 %v121, %v117
  %v130 = vpack.c.b16 %v122, %v118
  %v203 = vunpack.c.l.b16 %v35
  %v204 = vunpack.c.l.b16 %v36
  %v205 = vunpack.c.l.b16 %v37
  %v206 = vunpack.c.l.b16 %v38
  %v207 = vunpack.c.l.b16 %v39
  %v208 = vunpack.c.l.b16 %v40
  %v209 = vunpack.c.l.b16 %v41
  %v210 = vunpack.c.l.b16 %v42
  %v211 = vunpack.c.l.b16 %v43
  %v212 = vunpack.c.l.b16 %v44
  %v213 = vunpack.c.l.b16 %v45
  %v214 = vunpack.c.l.b16 %v46
  %v215 = vunpack.c.l.b16 %v47
  %v216 = vunpack.c.l.b16 %v48
  %v217 = vunpack.c.l.b16 %v49
  %v218 = vunpack.c.l.b16 %v50
  %v219 = vunpack.c.l.b16 %v51
  %v220 = vunpack.c.l.b16 %v52
  %v221 = vunpack.c.l.b16 %v53
  %v222 = vunpack.c.l.b16 %v54
  %v223 = vunpack.c.l.b16 %v55
  %v224 = vunpack.c.l.b16 %v56
  %v225 = vunpack.c.l.b16 %v57
  %v226 = vunpack.c.l.b16 %v58
  %v227 = vunpack.c.l.b16 %v59
  %v228 = vunpack.c.l.b16 %v60
  %v229 = vunpack.c.l.b16 %v61
  %v230 = vunpack.c.l.b16 %v62
  %v231 = vunpack.c.l.b16 %v63
  %v232 = vunpack.c.l.b16 %v64
  %v233 = vunpack.c.l.b16 %v65
  %v234 = vunpack.c.l.b16 %v66
  %v235 = vunpack.c.l.b16 %v67
  %v236 = vunpack.c.l.b16 %v68
  %v237 = vunpack.c.l.b16 %v69
  %v238 = vunpack.c.l.b16 %v70
  %v239 = vunpack.c.l.b16 %v71
  %v240 = vunpack.c.l.b16 %v72
  %v241 = vunpack.c.l.b16 %v73
  %v242 = vunpack.c.l.b16 %v74
  %v243 = vunpack.c.l.b16 %v75
  %v244 = vunpack.c.l.b16 %v76
  %v245 = vunpack.c.l.b16 %v77
  %v246 = vunpack.c.l.b16 %v78
  %v247 = vunpack.c.l.b16 %v79
  %v248 = vunpack.c.l.b16 %v80
  %v249 = vunpack.c.l.b16 %v81
  %v250 = vunpack.c.l.b16 %v82
  %v251 = vunpack.c.l.b16 %v83
  %v252 = vunpack.c.l.b16 %v84
  %v253 = vunpack.c.l.b16 %v85
  %v254 = vunpack.c.l.b16 %v86
  %v255 = vunpack.c.l.b16 %v87
  %v256 = vunpack.c.l.b16 %v88
  %v257 = vunpack.c.l.b16 %v89
  %v258 = vunpack.c.l.b16 %v90
  %v259 = vunpack.c.l.b16 %v91
  %v260 = vunpack.c.l.b16 %v92
  %v261 = vunpack.c.l.b16 %v93
  %v262 = vunpack.c.l.b16 %v94
  %v263 = vunpack.c.l.b16 %v95
  %v264 = vunpack.c.l.b16 %v96
  %v265 = vunpack.c.l.b16 %v97
  %v266 = vunpack.c.l.b16 %v98
  %v267 = vpack.c.b16 %v204, %v203
  %v268 = vpack.c.b16 %v206, %v205
  %v269 = vpack.c.b16 %v208, %v207
  %v270 = vpack.c.b16 %v210, %v209
  %v271 = vpack.c.b16 %v212, %v211
  %v272 = vpack.c.b16 %v214, %v213
  %v273 = vpack.c.b16 %v216, %v215
  %v274 = vpack.c.b16 %v218, %v217
  %v275 = vpack.c.b16 %v220, %v219
  %v276 = vpack.c.b16 %v222, %v221
  %v277 = vpack.c.b16 %v224, %v223
  %v278 = vpack.c.b16 %v226, %v225
  %v279 = vpack.c.b16 %v228, %v227
  %v280 = vpack.c.b16 %v230, %v229
  %v281 = vpack.c.b16 %v232, %v231
  %v282 = vpack.c.b16 %v234, %v233
  %v283 = vpack.c.b16 %v236, %v235
  %v284 = vpack.c.b16 %v238, %v237
  %v285 = vpack.c.b16 %v240, %v239
  %v286 = vpack.c.b16 %v242, %v241
  %v287 = vpack.c.b16 %v244, %v243
  %v288 = vpack.c.b16 %v246, %v245
  %v289 = vpack.c.b16 %v248, %v247
  %v290 = vpack.c.b16 %v250, %v249
  %v291 = vpack.c.b16 %v252, %v251
  %v292 = vpack.c.b16 %v254, %v253
  %v293 = vpack.c.b16 %v256, %v255
  %v294 = vpack.c.b16 %v258, %v257
  %v295 = vpack.c.b16 %v260, %v259
  %v296 = vpack.c.b16 %v262, %v261
  %v297 = vpack.c.b16 %v264, %v263
  %v298 = vpack.c.b16 %v266, %v265
  %331 = vmatprep.subr.bf16.mxu0 0
  %332 = vmatpush1.bf16.msra.mxu0 %v274
  %333 = vmatprep.subr.bf16.mxu0 0
  %334 = vmatpush1.bf16.msra.mxu0 %v273
  %335 = vmatprep.subr.bf16.mxu0 0
  %336 = vmatpush1.bf16.msra.mxu0 %v272
  %337 = vmatprep.subr.bf16.mxu0 0
  %338 = vmatpush1.bf16.msra.mxu0 %v271
  %339 = vmatprep.subr.bf16.mxu0 0
  %340 = vmatpush1.bf16.msra.mxu0 %v270
  %341 = vmatprep.subr.bf16.mxu0 0
  %342 = vmatpush1.bf16.msra.mxu0 %v269
  %343 = vmatprep.subr.bf16.mxu0 0
  %344 = vmatpush1.bf16.msra.mxu0 %v268
  %345 = vmatprep.subr.bf16.mxu0 0
  %346 = vmatpush1.bf16.msra.mxu0 %v267
  %347 = vmatprep.subr.bf16.mxu0 0
  %348 = vmatpush2.bf16.msra.mxu0 %v282
  %349 = vmatprep.subr.bf16.mxu0 0
  %350 = vmatpush2.bf16.msra.mxu0 %v281
  %351 = vmatprep.subr.bf16.mxu0 0
  %352 = vmatpush2.bf16.msra.mxu0 %v280
  %353 = vmatprep.subr.bf16.mxu0 0
  %354 = vmatpush2.bf16.msra.mxu0 %v279
  %355 = vmatprep.subr.bf16.mxu0 0
  %356 = vmatpush2.bf16.msra.mxu0 %v278
  %357 = vmatprep.subr.bf16.mxu0 0
  %358 = vmatpush2.bf16.msra.mxu0 %v277
  %359 = vmatprep.subr.bf16.mxu0 0
  %360 = vmatpush2.bf16.msra.mxu0 %v276
  %361 = vmatprep.subr.bf16.mxu0 0
  %362 = vmatpush2.bf16.msra.mxu0 %v275
  %363 = vmatprep.mubr.bf16.mxu0 %v124
  %364 = vmatmul.mubr.bf16.gmra.mxu0 %v123
  %v365 = vpop.f32.mrf.mxu0
  %v366 = vadd.f32 0.0, %v365
  %v367 = vpop.f32.mrf.mxu0
  %v368 = vpop.f32.mrf.mxu0
  %v369 = vadd.f32 0.0, %v368
  %v370 = vpop.f32.mrf.mxu0
  %371 = vmatprep.mubr.bf16.mxu0 %v128
  %372 = vmatmul.mubr.bf16.gmra.mxu0 %v127
  %v373 = vpop.f32.mrf.mxu0
  %v374 = vadd.f32 0.0, %v373
  %v375 = vpop.f32.mrf.mxu0
  %v376 = vpop.f32.mrf.mxu0
  %v377 = vadd.f32 0.0, %v376
  %v378 = vpop.f32.mrf.mxu0
  %379 = vdwg.mxu0
  %380 = vmatprep.subr.bf16.mxu0 0
  %381 = vmatpush1.bf16.msra.mxu0 %v290
  %382 = vmatprep.subr.bf16.mxu0 0
  %383 = vmatpush1.bf16.msra.mxu0 %v289
  %384 = vmatprep.subr.bf16.mxu0 0
  %385 = vmatpush1.bf16.msra.mxu0 %v288
  %386 = vmatprep.subr.bf16.mxu0 0
  %387 = vmatpush1.bf16.msra.mxu0 %v287
  %388 = vmatprep.subr.bf16.mxu0 0
  %389 = vmatpush1.bf16.msra.mxu0 %v286
  %390 = vmatprep.subr.bf16.mxu0 0
  %391 = vmatpush1.bf16.msra.mxu0 %v285
  %392 = vmatprep.subr.bf16.mxu0 0
  %393 = vmatpush1.bf16.msra.mxu0 %v284
  %394 = vmatprep.subr.bf16.mxu0 0
  %395 = vmatpush1.bf16.msra.mxu0 %v283
  %396 = vmatprep.subr.bf16.mxu0 0
  %397 = vmatpush2.bf16.msra.mxu0 %v298
  %398 = vmatprep.subr.bf16.mxu0 0
  %399 = vmatpush2.bf16.msra.mxu0 %v297
  %400 = vmatprep.subr.bf16.mxu0 0
  %401 = vmatpush2.bf16.msra.mxu0 %v296
  %402 = vmatprep.subr.bf16.mxu0 0
  %403 = vmatpush2.bf16.msra.mxu0 %v295
  %404 = vmatprep.subr.bf16.mxu0 0
  %405 = vmatpush2.bf16.msra.mxu0 %v294
  %406 = vmatprep.subr.bf16.mxu0 0
  %407 = vmatpush2.bf16.msra.mxu0 %v293
  %408 = vmatprep.subr.bf16.mxu0 0
  %409 = vmatpush2.bf16.msra.mxu0 %v292
  %410 = vmatprep.subr.bf16.mxu0 0
  %411 = vmatpush2.bf16.msra.mxu0 %v291
  %412 = vmatprep.mubr.bf16.mxu0 %v126
  %413 = vmatmul.mubr.bf16.gmra.mxu0 %v125
  %v414 = vpop.f32.mrf.mxu0
  %v415 = vadd.f32 %v366, %v414
  %v416 = vpop.f32.mrf.mxu0
  %v417 = vpop.f32.mrf.mxu0
  %v418 = vadd.f32 %v369, %v417
  %v419 = vpop.f32.mrf.mxu0
  %420 = vmatprep.mubr.bf16.mxu0 %v130
  %421 = vmatmul.mubr.bf16.gmra.mxu0 %v129
  %v422 = vpop.f32.mrf.mxu0
  %v423 = vadd.f32 %v374, %v422
  %v424 = vpop.f32.mrf.mxu0
  %v425 = vpop.f32.mrf.mxu0
  %v426 = vadd.f32 %v377, %v425
  %v427 = vpop.f32.mrf.mxu0
  %428 = vdwg.mxu0
  %v429 = vadd.f32 %v23, %v415
  %v430 = vadd.f32 %v24, %v418
  %v431 = vadd.f32 %v25, %v423
  %v432 = vadd.f32 %v26, %v426
  %433 = vst [vmem:[#allocation2] sm:$0xff] %v429
  %434 = vst [vmem:[#allocation2 + $0x8] sm:$0xff] %v430
  %435 = vst [vmem:[#allocation2 + $0x10] sm:$0xff] %v431
  %436 = vst [vmem:[#allocation2 + $0x18] sm:$0xff] %v432
  // Predicated region
  $region18: #{_lambda_.38} parent=0 // pred_check
    %p437 = pneg %p15
  $region19: #{_lambda_.38} parent=0 // pred_check_branch
    %439 = sbr.rel (%p437) target = $region21
  $region20: #{_lambda_.38} parent=0 // pred_region
    %v440 = vld [vmem:[#allocation2] sm:$0xff]
    %v441 = vld [vmem:[#allocation2 + $0x8] sm:$0xff]
    %v442 = vld [vmem:[#allocation2 + $0x10] sm:$0xff]
    %v443 = vld [vmem:[#allocation2 + $0x18] sm:$0xff]
    %v444 = vld [vmem:[%s2] sm:$0x1]
    %v446 = vlaneseq
    %v447 = vshrl.u32 %v446, 7
    %v448 = vsub.s32 0, %v447
    %v449 = vrot.slane %v444, %v448
    %v451 = vadd.f32 %v440, %v449
    %v452 = vadd.f32 %v441, %v449
    %v453 = vadd.f32 %v442, %v449
    %v454 = vadd.f32 %v443, %v449
    %455 = vst [vmem:[%s3] sm:$0xff] %v451
    %456 = vst [vmem:[%s3 + $0x8] sm:$0xff] %v452
    %457 = vst [vmem:[%s3 + $0x10] sm:$0xff] %v453
    %458 = vst [vmem:[%s3 + $0x18] sm:$0xff] %v454
  $region21: #{_lambda_.38} parent=0 // pred_fallthru
    _
  // Predicated region
  $region22: #{_lambda_.38} parent=0 // pred_check
    _
  $region23: #{_lambda_.38} parent=0 // pred_check_branch
    %460 = sbr.rel (0) target = $region25
  $region24: #{_lambda_.38} parent=0 // pred_region
    _
  $region25: #{_lambda_.38} parent=0 // pred_fallthru
    _
  // Predicated region
  $region26: #{_lambda_.38} parent=0 // pred_check
    _
  $region27: #{_lambda_.38} parent=0 // pred_check_branch
    %462 = sbr.rel (0) target = $region29
  $region28: #{_lambda_.38} parent=0 // pred_region
    _
  $region29: #{_lambda_.38} parent=0 // pred_fallthru
    _

// kernel: _lambda_.37
$region0: #{_lambda_.37}
  #allocation0 [shape = 'u32[]', space=smem, size = 0x4, offset = 0x4, fixed_abs, tag = 'smem constant byte address 0x4 - core index']
  #allocation1 [shape = 'u32[144,128]{1,0:T(1,128)}', space=vmem, size = 0x12000, scoped, tag = 'internal scratch']
  #allocation2 [shape = 'f32[32,128]{1,0:T(8,128)}', space=vmem, size = 0x4000, scoped, tag = 'scratch operand']
  %s0 = inlined_call_operand.vmem [shape: bf16[32,256], index: 0, kind: input, shape index: {}]
  %s1 = inlined_call_operand.vmem [shape: bf16[256,128], index: 1, kind: input, shape index: {}]
  %s2 = inlined_call_operand.vmem [shape: f32[1,128], index: 2, kind: input, shape index: {}]
  %s3 = inlined_call_operand.vmem [shape: f32[32,128], index: 3, kind: output, shape index: {}]
  %s4 = sld [smem:[#allocation0]]
  $region30: #{_lambda_.37} parent=0
    _
  %s6 = ssub.s32 1, %s4
  %s7 = scalar_select 0, %s6, %s4
  // Predicated region
  $region2: #{_lambda_.37} parent=0 // pred_check
    _
  $region3: #{_lambda_.37} parent=0 // pred_check_branch
    %9 = sbr.rel (0) target = $region5
  $region4: #{_lambda_.37} parent=0 // pred_region
    _
  $region5: #{_lambda_.37} parent=0 // pred_fallthru
    _
  // Predicated region
  $region6: #{_lambda_.37} parent=0 // pred_check
    _
  $region7: #{_lambda_.37} parent=0 // pred_check_branch
    %11 = sbr.rel (0) target = $region9
  $region8: #{_lambda_.37} parent=0 // pred_region
    _
  $region9: #{_lambda_.37} parent=0 // pred_fallthru
    _
  // Predicated region
  $region10: #{_lambda_.37} parent=0 // pred_check
    _
  $region11: #{_lambda_.37} parent=0 // pred_check_branch
    %13 = sbr.rel (0) target = $region13
  $region12: #{_lambda_.37} parent=0 // pred_region
    _
  $region13: #{_lambda_.37} parent=0 // pred_fallthru
    _
  %p15 = scmp.eq.s32.totalorder 0, 0
  // Predicated region
  $region14: #{_lambda_.37} parent=0 // pred_check
    %p16 = pneg %p15
  $region15: #{_lambda_.37} parent=0 // pred_check_branch
    %18 = sbr.rel (%p16) target = $region17
  $region16: #{_lambda_.37} parent=0 // pred_region
    %19 = vst [vmem:[#allocation2] sm:$0xff] 0.0
    %20 = vst [vmem:[#allocation2 + $0x8] sm:$0xff] 0.0
    %21 = vst [vmem:[#allocation2 + $0x10] sm:$0xff] 0.0
    %22 = vst [vmem:[#allocation2 + $0x18] sm:$0xff] 0.0
  $region17: #{_lambda_.37} parent=0 // pred_fallthru
    _
  %v23 = vld [vmem:[#allocation2] sm:$0xff]
  %v24 = vld [vmem:[#allocation2 + $0x8] sm:$0xff]
  %v25 = vld [vmem:[#allocation2 + $0x10] sm:$0xff]
  %v26 = vld [vmem:[#allocation2 + $0x18] sm:$0xff]
  %v27 = vld [vmem:[%s0] sm:$0xff]
  %v28 = vld [vmem:[%s0 + $0x8] sm:$0xff]
  %v29 = vld [vmem:[%s0 + $0x10] sm:$0xff]
  %v30 = vld [vmem:[%s0 + $0x18] sm:$0xff]
  %v31 = vld [vmem:[%s1] sm:$0xf]
  %v32 = vld [vmem:[%s1 + $0x4] sm:$0xf]
  %v33 = vld [vmem:[%s1 + $0x8] sm:$0xf]
  %v34 = vld [vmem:[%s1 + $0xc] sm:$0xf]
  %v35 = vld [vmem:[%s1 + $0x10] sm:$0xf]
  %v36 = vld [vmem:[%s1 + $0x14] sm:$0xf]
  %v37 = vld [vmem:[%s1 + $0x18] sm:$0xf]
  %v38 = vld [vmem:[%s1 + $0x1c] sm:$0xf]
  %v39 = vld [vmem:[%s1 + $0x20] sm:$0xf]
  %v40 = vld [vmem:[%s1 + $0x24] sm:$0xf]
  %v41 = vld [vmem:[%s1 + $0x28] sm:$0xf]
  %v42 = vld [vmem:[%s1 + $0x2c] sm:$0xf]
  %v43 = vld [vmem:[%s1 + $0x30] sm:$0xf]
  %v44 = vld [vmem:[%s1 + $0x34] sm:$0xf]
  %v45 = vld [vmem:[%s1 + $0x38] sm:$0xf]
  %v46 = vld [vmem:[%s1 + $0x3c] sm:$0xf]
  %v47 = vld [vmem:[%s1 + $0x40] sm:$0xf]
  %v48 = vld [vmem:[%s1 + $0x44] sm:$0xf]
  %v49 = vld [vmem:[%s1 + $0x48] sm:$0xf]
  %v50 = vld [vmem:[%s1 + $0x4c] sm:$0xf]
  %v51 = vld [vmem:[%s1 + $0x50] sm:$0xf]
  %v52 = vld [vmem:[%s1 + $0x54] sm:$0xf]
  %v53 = vld [vmem:[%s1 + $0x58] sm:$0xf]
  %v54 = vld [vmem:[%s1 + $0x5c] sm:$0xf]
  %v55 = vld [vmem:[%s1 + $0x60] sm:$0xf]
  %v56 = vld [vmem:[%s1 + $0x64] sm:$0xf]
  %v57 = vld [vmem:[%s1 + $0x68] sm:$0xf]
  %v58 = vld [vmem:[%s1 + $0x6c] sm:$0xf]
  %v59 = vld [vmem:[%s1 + $0x70] sm:$0xf]
  %v60 = vld [vmem:[%s1 + $0x74] sm:$0xf]
  %v61 = vld [vmem:[%s1 + $0x78] sm:$0xf]
  %v62 = vld [vmem:[%s1 + $0x7c] sm:$0xf]
  %v67 = vunpack.c.l.b16 %v27
  %v68 = vunpack.c.h.b16 %v27
  %v69 = vunpack.c.l.b16 %v28
  %v70 = vunpack.c.h.b16 %v28
  %v71 = vunpack.c.l.b16 %v29
  %v72 = vunpack.c.h.b16 %v29
  %v73 = vunpack.c.l.b16 %v30
  %v74 = vunpack.c.h.b16 %v30
  %v75 = vpack.c.b16 %v69, %v67
  %v76 = vpack.c.b16 %v70, %v68
  %v77 = vpack.c.b16 %v73, %v71
  %v78 = vpack.c.b16 %v74, %v72
  %v115 = vunpack.c.l.b16 %v31
  %v116 = vunpack.c.l.b16 %v32
  %v117 = vunpack.c.l.b16 %v33
  %v118 = vunpack.c.l.b16 %v34
  %v119 = vunpack.c.l.b16 %v35
  %v120 = vunpack.c.l.b16 %v36
  %v121 = vunpack.c.l.b16 %v37
  %v122 = vunpack.c.l.b16 %v38
  %v123 = vunpack.c.l.b16 %v39
  %v124 = vunpack.c.l.b16 %v40
  %v125 = vunpack.c.l.b16 %v41
  %v126 = vunpack.c.l.b16 %v42
  %v127 = vunpack.c.l.b16 %v43
  %v128 = vunpack.c.l.b16 %v44
  %v129 = vunpack.c.l.b16 %v45
  %v130 = vunpack.c.l.b16 %v46
  %v131 = vunpack.c.l.b16 %v47
  %v132 = vunpack.c.l.b16 %v48
  %v133 = vunpack.c.l.b16 %v49
  %v134 = vunpack.c.l.b16 %v50
  %v135 = vunpack.c.l.b16 %v51
  %v136 = vunpack.c.l.b16 %v52
  %v137 = vunpack.c.l.b16 %v53
  %v138 = vunpack.c.l.b16 %v54
  %v139 = vunpack.c.l.b16 %v55
  %v140 = vunpack.c.l.b16 %v56
  %v141 = vunpack.c.l.b16 %v57
  %v142 = vunpack.c.l.b16 %v58
  %v143 = vunpack.c.l.b16 %v59
  %v144 = vunpack.c.l.b16 %v60
  %v145 = vunpack.c.l.b16 %v61
  %v146 = vunpack.c.l.b16 %v62
  %v147 = vpack.c.b16 %v116, %v115
  %v148 = vpack.c.b16 %v118, %v117
  %v149 = vpack.c.b16 %v120, %v119
  %v150 = vpack.c.b16 %v122, %v121
  %v151 = vpack.c.b16 %v124, %v123
  %v152 = vpack.c.b16 %v126, %v125
  %v153 = vpack.c.b16 %v128, %v127
  %v154 = vpack.c.b16 %v130, %v129
  %v155 = vpack.c.b16 %v132, %v131
  %v156 = vpack.c.b16 %v134, %v133
  %v157 = vpack.c.b16 %v136, %v135
  %v158 = vpack.c.b16 %v138, %v137
  %v159 = vpack.c.b16 %v140, %v139
  %v160 = vpack.c.b16 %v142, %v141
  %v161 = vpack.c.b16 %v144, %v143
  %v162 = vpack.c.b16 %v146, %v145
  %179 = vmatprep.subr.bf16.mxu0 0
  %180 = vmatpush1.bf16.msra.mxu0 %v154
  %181 = vmatprep.subr.bf16.mxu0 0
  %182 = vmatpush1.bf16.msra.mxu0 %v153
  %183 = vmatprep.subr.bf16.mxu0 0
  %184 = vmatpush1.bf16.msra.mxu0 %v152
  %185 = vmatprep.subr.bf16.mxu0 0
  %186 = vmatpush1.bf16.msra.mxu0 %v151
  %187 = vmatprep.subr.bf16.mxu0 0
  %188 = vmatpush1.bf16.msra.mxu0 %v150
  %189 = vmatprep.subr.bf16.mxu0 0
  %190 = vmatpush1.bf16.msra.mxu0 %v149
  %191 = vmatprep.subr.bf16.mxu0 0
  %192 = vmatpush1.bf16.msra.mxu0 %v148
  %193 = vmatprep.subr.bf16.mxu0 0
  %194 = vmatpush1.bf16.msra.mxu0 %v147
  %195 = vmatprep.subr.bf16.mxu0 0
  %196 = vmatpush2.bf16.msra.mxu0 %v162
  %197 = vmatprep.subr.bf16.mxu0 0
  %198 = vmatpush2.bf16.msra.mxu0 %v161
  %199 = vmatprep.subr.bf16.mxu0 0
  %200 = vmatpush2.bf16.msra.mxu0 %v160
  %201 = vmatprep.subr.bf16.mxu0 0
  %202 = vmatpush2.bf16.msra.mxu0 %v159
  %203 = vmatprep.subr.bf16.mxu0 0
  %204 = vmatpush2.bf16.msra.mxu0 %v158
  %205 = vmatprep.subr.bf16.mxu0 0
  %206 = vmatpush2.bf16.msra.mxu0 %v157
  %207 = vmatprep.subr.bf16.mxu0 0
  %208 = vmatpush2.bf16.msra.mxu0 %v156
  %209 = vmatprep.subr.bf16.mxu0 0
  %210 = vmatpush2.bf16.msra.mxu0 %v155
  %211 = vmatprep.mubr.bf16.mxu0 %v76
  %212 = vmatmul.mubr.bf16.gmra.mxu0 %v75
  %v213 = vpop.f32.mrf.mxu0
  %v214 = vadd.f32 0.0, %v213
  %v215 = vpop.f32.mrf.mxu0
  %v216 = vpop.f32.mrf.mxu0
  %v217 = vadd.f32 0.0, %v216
  %v218 = vpop.f32.mrf.mxu0
  %219 = vmatprep.mubr.bf16.mxu0 %v78
  %220 = vmatmul.mubr.bf16.gmra.mxu0 %v77
  %v221 = vpop.f32.mrf.mxu0
  %v222 = vadd.f32 0.0, %v221
  %v223 = vpop.f32.mrf.mxu0
  %v224 = vpop.f32.mrf.mxu0
  %v225 = vadd.f32 0.0, %v224
  %v226 = vpop.f32.mrf.mxu0
  %227 = vdwg.mxu0
  %v228 = vadd.f32 %v23, %v214
  %v229 = vadd.f32 %v24, %v217
  %v230 = vadd.f32 %v25, %v222
  %v231 = vadd.f32 %v26, %v225
  %232 = vst [vmem:[#allocation2] sm:$0xff] %v228
  %233 = vst [vmem:[#allocation2 + $0x8] sm:$0xff] %v229
  %234 = vst [vmem:[#allocation2 + $0x10] sm:$0xff] %v230
  %235 = vst [vmem:[#allocation2 + $0x18] sm:$0xff] %v231
  // Predicated region
  $region18: #{_lambda_.37} parent=0 // pred_check
    %p236 = pneg %p15
  $region19: #{_lambda_.37} parent=0 // pred_check_branch
    %238 = sbr.rel (%p236) target = $region21
  $region20: #{_lambda_.37} parent=0 // pred_region
    %v239 = vld [vmem:[#allocation2] sm:$0xff]
    %v240 = vld [vmem:[#allocation2 + $0x8] sm:$0xff]
    %v241 = vld [vmem:[#allocation2 + $0x10] sm:$0xff]
    %v242 = vld [vmem:[#allocation2 + $0x18] sm:$0xff]
    %v243 = vld [vmem:[%s2] sm:$0x1]
    %v245 = vlaneseq
    %v246 = vshrl.u32 %v245, 7
    %v247 = vsub.s32 0, %v246
    %v248 = vrot.slane %v243, %v247
    %v250 = vadd.f32 %v239, %v248
    %v251 = vadd.f32 %v240, %v248
    %v252 = vadd.f32 %v241, %v248
    %v253 = vadd.f32 %v242, %v248
    %254 = vst [vmem:[%s3] sm:$0xff] %v250
    %255 = vst [vmem:[%s3 + $0x8] sm:$0xff] %v251
    %256 = vst [vmem:[%s3 + $0x10] sm:$0xff] %v252
    %257 = vst [vmem:[%s3 + $0x18] sm:$0xff] %v253
  $region21: #{_lambda_.37} parent=0 // pred_fallthru
    _
  // Predicated region
  $region22: #{_lambda_.37} parent=0 // pred_check
    _
  $region23: #{_lambda_.37} parent=0 // pred_check_branch
    %259 = sbr.rel (0) target = $region25
  $region24: #{_lambda_.37} parent=0 // pred_region
    _
  $region25: #{_lambda_.37} parent=0 // pred_fallthru
    _
  // Predicated region
  $region26: #{_lambda_.37} parent=0 // pred_check
    _
  $region27: #{_lambda_.37} parent=0 // pred_check_branch
    %261 = sbr.rel (0) target = $region29
  $region28: #{_lambda_.37} parent=0 // pred_region
    _
  $region29: #{_lambda_.37} parent=0 // pred_fallthru
    _

// kernel: _lambda_.42
$region0: #{_lambda_.42}
  #allocation0 [shape = 'u32[]', space=smem, size = 0x4, offset = 0x4, fixed_abs, tag = 'smem constant byte address 0x4 - core index']
  #allocation1 [shape = 'u32[144,128]{1,0:T(1,128)}', space=vmem, size = 0x12000, scoped, tag = 'internal scratch']
  #allocation2 [shape = 'f32[128,128]{1,0:T(8,128)}', space=vmem, size = 0x10000, scoped, tag = 'scratch operand']
  %s0 = inlined_call_operand.vmem [shape: bf16[128,256], index: 0, kind: input, shape index: {}]
  %s1 = inlined_call_operand.vmem [shape: bf16[256,128], index: 1, kind: input, shape index: {}]
  %s2 = inlined_call_operand.vmem [shape: f32[1,128], index: 2, kind: input, shape index: {}]
  %s3 = inlined_call_operand.vmem [shape: f32[128,128], index: 3, kind: output, shape index: {}]
  %s4 = sld [smem:[#allocation0]]
  $region30: #{_lambda_.42} parent=0
    _
  %s6 = ssub.s32 1, %s4
  %s7 = scalar_select 0, %s6, %s4
  // Predicated region
  $region2: #{_lambda_.42} parent=0 // pred_check
    _
  $region3: #{_lambda_.42} parent=0 // pred_check_branch
    %9 = sbr.rel (0) target = $region5
  $region4: #{_lambda_.42} parent=0 // pred_region
    _
  $region5: #{_lambda_.42} parent=0 // pred_fallthru
    _
  // Predicated region
  $region6: #{_lambda_.42} parent=0 // pred_check
    _
  $region7: #{_lambda_.42} parent=0 // pred_check_branch
    %11 = sbr.rel (0) target = $region9
  $region8: #{_lambda_.42} parent=0 // pred_region
    _
  $region9: #{_lambda_.42} parent=0 // pred_fallthru
    _
  // Predicated region
  $region10: #{_lambda_.42} parent=0 // pred_check
    _
  $region11: #{_lambda_.42} parent=0 // pred_check_branch
    %13 = sbr.rel (0) target = $region13
  $region12: #{_lambda_.42} parent=0 // pred_region
    _
  $region13: #{_lambda_.42} parent=0 // pred_fallthru
    _
  %p15 = scmp.eq.s32.totalorder 0, 0
  // Predicated region
  $region14: #{_lambda_.42} parent=0 // pred_check
    %p16 = pneg %p15
  $region15: #{_lambda_.42} parent=0 // pred_check_branch
    %18 = sbr.rel (%p16) target = $region17
  $region16: #{_lambda_.42} parent=0 // pred_region
    %19 = vst [vmem:[#allocation2] sm:$0xff] 0.0
    %20 = vst [vmem:[#allocation2 + $0x8] sm:$0xff] 0.0
    %21 = vst [vmem:[#allocation2 + $0x10] sm:$0xff] 0.0
    %22 = vst [vmem:[#allocation2 + $0x18] sm:$0xff] 0.0
    %23 = vst [vmem:[#allocation2 + $0x20] sm:$0xff] 0.0
    %24 = vst [vmem:[#allocation2 + $0x28] sm:$0xff] 0.0
    %25 = vst [vmem:[#allocation2 + $0x30] sm:$0xff] 0.0
    %26 = vst [vmem:[#allocation2 + $0x38] sm:$0xff] 0.0
    %27 = vst [vmem:[#allocation2 + $0x40] sm:$0xff] 0.0
    %28 = vst [vmem:[#allocation2 + $0x48] sm:$0xff] 0.0
    %29 = vst [vmem:[#allocation2 + $0x50] sm:$0xff] 0.0
    %30 = vst [vmem:[#allocation2 + $0x58] sm:$0xff] 0.0
    %31 = vst [vmem:[#allocation2 + $0x60] sm:$0xff] 0.0
    %32 = vst [vmem:[#allocation2 + $0x68] sm:$0xff] 0.0
    %33 = vst [vmem:[#allocation2 + $0x70] sm:$0xff] 0.0
    %34 = vst [vmem:[#allocation2 + $0x78] sm:$0xff] 0.0
  $region17: #{_lambda_.42} parent=0 // pred_fallthru
    _
  %v35 = vld [vmem:[#allocation2] sm:$0xff]
  %v36 = vld [vmem:[#allocation2 + $0x8] sm:$0xff]
  %v37 = vld [vmem:[#allocation2 + $0x10] sm:$0xff]
  %v38 = vld [vmem:[#allocation2 + $0x18] sm:$0xff]
  %v39 = vld [vmem:[#allocation2 + $0x20] sm:$0xff]
  %v40 = vld [vmem:[#allocation2 + $0x28] sm:$0xff]
  %v41 = vld [vmem:[#allocation2 + $0x30] sm:$0xff]
  %v42 = vld [vmem:[#allocation2 + $0x38] sm:$0xff]
  %v43 = vld [vmem:[#allocation2 + $0x40] sm:$0xff]
  %v44 = vld [vmem:[#allocation2 + $0x48] sm:$0xff]
  %v45 = vld [vmem:[#allocation2 + $0x50] sm:$0xff]
  %v46 = vld [vmem:[#allocation2 + $0x58] sm:$0xff]
  %v47 = vld [vmem:[#allocation2 + $0x60] sm:$0xff]
  %v48 = vld [vmem:[#allocation2 + $0x68] sm:$0xff]
  %v49 = vld [vmem:[#allocation2 + $0x70] sm:$0xff]
  %v50 = vld [vmem:[#allocation2 + $0x78] sm:$0xff]
  %v51 = vld [vmem:[%s0] sm:$0xff]
  %v52 = vld [vmem:[%s0 + $0x8] sm:$0xff]
  %v53 = vld [vmem:[%s0 + $0x10] sm:$0xff]
  %v54 = vld [vmem:[%s0 + $0x18] sm:$0xff]
  %v55 = vld [vmem:[%s0 + $0x20] sm:$0xff]
  %v56 = vld [vmem:[%s0 + $0x28] sm:$0xff]
  %v57 = vld [vmem:[%s0 + $0x30] sm:$0xff]
  %v58 = vld [vmem:[%s0 + $0x38] sm:$0xff]
  %v59 = vld [vmem:[%s0 + $0x40] sm:$0xff]
  %v60 = vld [vmem:[%s0 + $0x48] sm:$0xff]
  %v61 = vld [vmem:[%s0 + $0x50] sm:$0xff]
  %v62 = vld [vmem:[%s0 + $0x58] sm:$0xff]
  %v63 = vld [vmem:[%s0 + $0x60] sm:$0xff]
  %v64 = vld [vmem:[%s0 + $0x68] sm:$0xff]
  %v65 = vld [vmem:[%s0 + $0x70] sm:$0xff]
  %v66 = vld [vmem:[%s0 + $0x78] sm:$0xff]
  %v67 = vld [vmem:[%s1] sm:$0xf]
  %v68 = vld [vmem:[%s1 + $0x4] sm:$0xf]
  %v69 = vld [vmem:[%s1 + $0x8] sm:$0xf]
  %v70 = vld [vmem:[%s1 + $0xc] sm:$0xf]
  %v71 = vld [vmem:[%s1 + $0x10] sm:$0xf]
  %v72 = vld [vmem:[%s1 + $0x14] sm:$0xf]
  %v73 = vld [vmem:[%s1 + $0x18] sm:$0xf]
  %v74 = vld [vmem:[%s1 + $0x1c] sm:$0xf]
  %v75 = vld [vmem:[%s1 + $0x20] sm:$0xf]
  %v76 = vld [vmem:[%s1 + $0x24] sm:$0xf]
  %v77 = vld [vmem:[%s1 + $0x28] sm:$0xf]
  %v78 = vld [vmem:[%s1 + $0x2c] sm:$0xf]
  %v79 = vld [vmem:[%s1 + $0x30] sm:$0xf]
  %v80 = vld [vmem:[%s1 + $0x34] sm:$0xf]
  %v81 = vld [vmem:[%s1 + $0x38] sm:$0xf]
  %v82 = vld [vmem:[%s1 + $0x3c] sm:$0xf]
  %v83 = vld [vmem:[%s1 + $0x40] sm:$0xf]
  %v84 = vld [vmem:[%s1 + $0x44] sm:$0xf]
  %v85 = vld [vmem:[%s1 + $0x48] sm:$0xf]
  %v86 = vld [vmem:[%s1 + $0x4c] sm:$0xf]
  %v87 = vld [vmem:[%s1 + $0x50] sm:$0xf]
  %v88 = vld [vmem:[%s1 + $0x54] sm:$0xf]
  %v89 = vld [vmem:[%s1 + $0x58] sm:$0xf]
  %v90 = vld [vmem:[%s1 + $0x5c] sm:$0xf]
  %v91 = vld [vmem:[%s1 + $0x60] sm:$0xf]
  %v92 = vld [vmem:[%s1 + $0x64] sm:$0xf]
  %v93 = vld [vmem:[%s1 + $0x68] sm:$0xf]
  %v94 = vld [vmem:[%s1 + $0x6c] sm:$0xf]
  %v95 = vld [vmem:[%s1 + $0x70] sm:$0xf]
  %v96 = vld [vmem:[%s1 + $0x74] sm:$0xf]
  %v97 = vld [vmem:[%s1 + $0x78] sm:$0xf]
  %v98 = vld [vmem:[%s1 + $0x7c] sm:$0xf]
  %v115 = vunpack.c.l.b16 %v51
  %v116 = vunpack.c.h.b16 %v51
  %v117 = vunpack.c.l.b16 %v52
  %v118 = vunpack.c.h.b16 %v52
  %v119 = vunpack.c.l.b16 %v53
  %v120 = vunpack.c.h.b16 %v53
  %v121 = vunpack.c.l.b16 %v54
  %v122 = vunpack.c.h.b16 %v54
  %v123 = vunpack.c.l.b16 %v55
  %v124 = vunpack.c.h.b16 %v55
  %v125 = vunpack.c.l.b16 %v56
  %v126 = vunpack.c.h.b16 %v56
  %v127 = vunpack.c.l.b16 %v57
  %v128 = vunpack.c.h.b16 %v57
  %v129 = vunpack.c.l.b16 %v58
  %v130 = vunpack.c.h.b16 %v58
  %v131 = vunpack.c.l.b16 %v59
  %v132 = vunpack.c.h.b16 %v59
  %v133 = vunpack.c.l.b16 %v60
  %v134 = vunpack.c.h.b16 %v60
  %v135 = vunpack.c.l.b16 %v61
  %v136 = vunpack.c.h.b16 %v61
  %v137 = vunpack.c.l.b16 %v62
  %v138 = vunpack.c.h.b16 %v62
  %v139 = vunpack.c.l.b16 %v63
  %v140 = vunpack.c.h.b16 %v63
  %v141 = vunpack.c.l.b16 %v64
  %v142 = vunpack.c.h.b16 %v64
  %v143 = vunpack.c.l.b16 %v65
  %v144 = vunpack.c.h.b16 %v65
  %v145 = vunpack.c.l.b16 %v66
  %v146 = vunpack.c.h.b16 %v66
  %v147 = vpack.c.b16 %v117, %v115
  %v148 = vpack.c.b16 %v118, %v116
  %v149 = vpack.c.b16 %v121, %v119
  %v150 = vpack.c.b16 %v122, %v120
  %v151 = vpack.c.b16 %v125, %v123
  %v152 = vpack.c.b16 %v126, %v124
  %v153 = vpack.c.b16 %v129, %v127
  %v154 = vpack.c.b16 %v130, %v128
  %v155 = vpack.c.b16 %v133, %v131
  %v156 = vpack.c.b16 %v134, %v132
  %v157 = vpack.c.b16 %v137, %v135
  %v158 = vpack.c.b16 %v138, %v136
  %v159 = vpack.c.b16 %v141, %v139
  %v160 = vpack.c.b16 %v142, %v140
  %v161 = vpack.c.b16 %v145, %v143
  %v162 = vpack.c.b16 %v146, %v144
  %v211 = vunpack.c.l.b16 %v67
  %v212 = vunpack.c.l.b16 %v68
  %v213 = vunpack.c.l.b16 %v69
  %v214 = vunpack.c.l.b16 %v70
  %v215 = vunpack.c.l.b16 %v71
  %v216 = vunpack.c.l.b16 %v72
  %v217 = vunpack.c.l.b16 %v73
  %v218 = vunpack.c.l.b16 %v74
  %v219 = vunpack.c.l.b16 %v75
  %v220 = vunpack.c.l.b16 %v76
  %v221 = vunpack.c.l.b16 %v77
  %v222 = vunpack.c.l.b16 %v78
  %v223 = vunpack.c.l.b16 %v79
  %v224 = vunpack.c.l.b16 %v80
  %v225 = vunpack.c.l.b16 %v81
  %v226 = vunpack.c.l.b16 %v82
  %v227 = vunpack.c.l.b16 %v83
  %v228 = vunpack.c.l.b16 %v84
  %v229 = vunpack.c.l.b16 %v85
  %v230 = vunpack.c.l.b16 %v86
  %v231 = vunpack.c.l.b16 %v87
  %v232 = vunpack.c.l.b16 %v88
  %v233 = vunpack.c.l.b16 %v89
  %v234 = vunpack.c.l.b16 %v90
  %v235 = vunpack.c.l.b16 %v91
  %v236 = vunpack.c.l.b16 %v92
  %v237 = vunpack.c.l.b16 %v93
  %v238 = vunpack.c.l.b16 %v94
  %v239 = vunpack.c.l.b16 %v95
  %v240 = vunpack.c.l.b16 %v96
  %v241 = vunpack.c.l.b16 %v97
  %v242 = vunpack.c.l.b16 %v98
  %v243 = vpack.c.b16 %v212, %v211
  %v244 = vpack.c.b16 %v214, %v213
  %v245 = vpack.c.b16 %v216, %v215
  %v246 = vpack.c.b16 %v218, %v217
  %v247 = vpack.c.b16 %v220, %v219
  %v248 = vpack.c.b16 %v222, %v221
  %v249 = vpack.c.b16 %v224, %v223
  %v250 = vpack.c.b16 %v226, %v225
  %v251 = vpack.c.b16 %v228, %v227
  %v252 = vpack.c.b16 %v230, %v229
  %v253 = vpack.c.b16 %v232, %v231
  %v254 = vpack.c.b16 %v234, %v233
  %v255 = vpack.c.b16 %v236, %v235
  %v256 = vpack.c.b16 %v238, %v237
  %v257 = vpack.c.b16 %v240, %v239
  %v258 = vpack.c.b16 %v242, %v241
  %275 = vmatprep.subr.bf16.mxu0 0
  %276 = vmatpush1.bf16.msra.mxu0 %v250
  %277 = vmatprep.subr.bf16.mxu0 0
  %278 = vmatpush1.bf16.msra.mxu0 %v249
  %279 = vmatprep.subr.bf16.mxu0 0
  %280 = vmatpush1.bf16.msra.mxu0 %v248
  %281 = vmatprep.subr.bf16.mxu0 0
  %282 = vmatpush1.bf16.msra.mxu0 %v247
  %283 = vmatprep.subr.bf16.mxu0 0
  %284 = vmatpush1.bf16.msra.mxu0 %v246
  %285 = vmatprep.subr.bf16.mxu0 0
  %286 = vmatpush1.bf16.msra.mxu0 %v245
  %287 = vmatprep.subr.bf16.mxu0 0
  %288 = vmatpush1.bf16.msra.mxu0 %v244
  %289 = vmatprep.subr.bf16.mxu0 0
  %290 = vmatpush1.bf16.msra.mxu0 %v243
  %291 = vmatprep.subr.bf16.mxu0 0
  %292 = vmatpush2.bf16.msra.mxu0 %v258
  %293 = vmatprep.subr.bf16.mxu0 0
  %294 = vmatpush2.bf16.msra.mxu0 %v257
  %295 = vmatprep.subr.bf16.mxu0 0
  %296 = vmatpush2.bf16.msra.mxu0 %v256
  %297 = vmatprep.subr.bf16.mxu0 0
  %298 = vmatpush2.bf16.msra.mxu0 %v255
  %299 = vmatprep.subr.bf16.mxu0 0
  %300 = vmatpush2.bf16.msra.mxu0 %v254
  %301 = vmatprep.subr.bf16.mxu0 0
  %302 = vmatpush2.bf16.msra.mxu0 %v253
  %303 = vmatprep.subr.bf16.mxu0 0
  %304 = vmatpush2.bf16.msra.mxu0 %v252
  %305 = vmatprep.subr.bf16.mxu0 0
  %306 = vmatpush2.bf16.msra.mxu0 %v251
  %307 = vmatprep.mubr.bf16.mxu0 %v148
  %308 = vmatmul.mubr.bf16.gmra.mxu0 %v147
  %v309 = vpop.f32.mrf.mxu0
  %v310 = vadd.f32 0.0, %v309
  %v311 = vpop.f32.mrf.mxu0
  %v312 = vpop.f32.mrf.mxu0
  %v313 = vadd.f32 0.0, %v312
  %v314 = vpop.f32.mrf.mxu0
  %315 = vmatprep.mubr.bf16.mxu0 %v150
  %316 = vmatmul.mubr.bf16.gmra.mxu0 %v149
  %v317 = vpop.f32.mrf.mxu0
  %v318 = vadd.f32 0.0, %v317
  %v319 = vpop.f32.mrf.mxu0
  %v320 = vpop.f32.mrf.mxu0
  %v321 = vadd.f32 0.0, %v320
  %v322 = vpop.f32.mrf.mxu0
  %323 = vmatprep.mubr.bf16.mxu0 %v152
  %324 = vmatmul.mubr.bf16.gmra.mxu0 %v151
  %v325 = vpop.f32.mrf.mxu0
  %v326 = vadd.f32 0.0, %v325
  %v327 = vpop.f32.mrf.mxu0
  %v328 = vpop.f32.mrf.mxu0
  %v329 = vadd.f32 0.0, %v328
  %v330 = vpop.f32.mrf.mxu0
  %331 = vmatprep.mubr.bf16.mxu0 %v154
  %332 = vmatmul.mubr.bf16.gmra.mxu0 %v153
  %v333 = vpop.f32.mrf.mxu0
  %v334 = vadd.f32 0.0, %v333
  %v335 = vpop.f32.mrf.mxu0
  %v336 = vpop.f32.mrf.mxu0
  %v337 = vadd.f32 0.0, %v336
  %v338 = vpop.f32.mrf.mxu0
  %339 = vmatprep.mubr.bf16.mxu0 %v156
  %340 = vmatmul.mubr.bf16.gmra.mxu0 %v155
  %v341 = vpop.f32.mrf.mxu0
  %v342 = vadd.f32 0.0, %v341
  %v343 = vpop.f32.mrf.mxu0
  %v344 = vpop.f32.mrf.mxu0
  %v345 = vadd.f32 0.0, %v344
  %v346 = vpop.f32.mrf.mxu0
  %347 = vmatprep.mubr.bf16.mxu0 %v158
  %348 = vmatmul.mubr.bf16.gmra.mxu0 %v157
  %v349 = vpop.f32.mrf.mxu0
  %v350 = vadd.f32 0.0, %v349
  %v351 = vpop.f32.mrf.mxu0
  %v352 = vpop.f32.mrf.mxu0
  %v353 = vadd.f32 0.0, %v352
  %v354 = vpop.f32.mrf.mxu0
  %355 = vmatprep.mubr.bf16.mxu0 %v160
  %356 = vmatmul.mubr.bf16.gmra.mxu0 %v159
  %v357 = vpop.f32.mrf.mxu0
  %v358 = vadd.f32 0.0, %v357
  %v359 = vpop.f32.mrf.mxu0
  %v360 = vpop.f32.mrf.mxu0
  %v361 = vadd.f32 0.0, %v360
  %v362 = vpop.f32.mrf.mxu0
  %363 = vmatprep.mubr.bf16.mxu0 %v162
  %364 = vmatmul.mubr.bf16.gmra.mxu0 %v161
  %v365 = vpop.f32.mrf.mxu0
  %v366 = vadd.f32 0.0, %v365
  %v367 = vpop.f32.mrf.mxu0
  %v368 = vpop.f32.mrf.mxu0
  %v369 = vadd.f32 0.0, %v368
  %v370 = vpop.f32.mrf.mxu0
  %371 = vdwg.mxu0
  %v372 = vadd.f32 %v35, %v310
  %v373 = vadd.f32 %v36, %v313
  %v374 = vadd.f32 %v37, %v318
  %v375 = vadd.f32 %v38, %v321
  %v376 = vadd.f32 %v39, %v326
  %v377 = vadd.f32 %v40, %v329
  %v378 = vadd.f32 %v41, %v334
  %v379 = vadd.f32 %v42, %v337
  %v380 = vadd.f32 %v43, %v342
  %v381 = vadd.f32 %v44, %v345
  %v382 = vadd.f32 %v45, %v350
  %v383 = vadd.f32 %v46, %v353
  %v384 = vadd.f32 %v47, %v358
  %v385 = vadd.f32 %v48, %v361
  %v386 = vadd.f32 %v49, %v366
  %v387 = vadd.f32 %v50, %v369
  %388 = vst [vmem:[#allocation2] sm:$0xff] %v372
  %389 = vst [vmem:[#allocation2 + $0x8] sm:$0xff] %v373
  %390 = vst [vmem:[#allocation2 + $0x10] sm:$0xff] %v374
  %391 = vst [vmem:[#allocation2 + $0x18] sm:$0xff] %v375
  %392 = vst [vmem:[#allocation2 + $0x20] sm:$0xff] %v376
  %393 = vst [vmem:[#allocation2 + $0x28] sm:$0xff] %v377
  %394 = vst [vmem:[#allocation2 + $0x30] sm:$0xff] %v378
  %395 = vst [vmem:[#allocation2 + $0x38] sm:$0xff] %v379
  %396 = vst [vmem:[#allocation2 + $0x40] sm:$0xff] %v380
  %397 = vst [vmem:[#allocation2 + $0x48] sm:$0xff] %v381
  %398 = vst [vmem:[#allocation2 + $0x50] sm:$0xff] %v382
  %399 = vst [vmem:[#allocation2 + $0x58] sm:$0xff] %v383
  %400 = vst [vmem:[#allocation2 + $0x60] sm:$0xff] %v384
  %401 = vst [vmem:[#allocation2 + $0x68] sm:$0xff] %v385
  %402 = vst [vmem:[#allocation2 + $0x70] sm:$0xff] %v386
  %403 = vst [vmem:[#allocation2 + $0x78] sm:$0xff] %v387
  // Predicated region
  $region18: #{_lambda_.42} parent=0 // pred_check
    %p404 = pneg %p15
  $region19: #{_lambda_.42} parent=0 // pred_check_branch
    %406 = sbr.rel (%p404) target = $region21
  $region20: #{_lambda_.42} parent=0 // pred_region
    %v407 = vld [vmem:[#allocation2] sm:$0xff]
    %v408 = vld [vmem:[#allocation2 + $0x8] sm:$0xff]
    %v409 = vld [vmem:[#allocation2 + $0x10] sm:$0xff]
    %v410 = vld [vmem:[#allocation2 + $0x18] sm:$0xff]
    %v411 = vld [vmem:[#allocation2 + $0x20] sm:$0xff]
    %v412 = vld [vmem:[#allocation2 + $0x28] sm:$0xff]
    %v413 = vld [vmem:[#allocation2 + $0x30] sm:$0xff]
    %v414 = vld [vmem:[#allocation2 + $0x38] sm:$0xff]
    %v415 = vld [vmem:[#allocation2 + $0x40] sm:$0xff]
    %v416 = vld [vmem:[#allocation2 + $0x48] sm:$0xff]
    %v417 = vld [vmem:[#allocation2 + $0x50] sm:$0xff]
    %v418 = vld [vmem:[#allocation2 + $0x58] sm:$0xff]
    %v419 = vld [vmem:[#allocation2 + $0x60] sm:$0xff]
    %v420 = vld [vmem:[#allocation2 + $0x68] sm:$0xff]
    %v421 = vld [vmem:[#allocation2 + $0x70] sm:$0xff]
    %v422 = vld [vmem:[#allocation2 + $0x78] sm:$0xff]
    %v423 = vld [vmem:[%s2] sm:$0x1]
    %v425 = vlaneseq
    %v426 = vshrl.u32 %v425, 7
    %v427 = vsub.s32 0, %v426
    %v428 = vrot.slane %v423, %v427
    %v430 = vadd.f32 %v407, %v428
    %v431 = vadd.f32 %v408, %v428
    %v432 = vadd.f32 %v409, %v428
    %v433 = vadd.f32 %v410, %v428
    %v434 = vadd.f32 %v411, %v428
    %v435 = vadd.f32 %v412, %v428
    %v436 = vadd.f32 %v413, %v428
    %v437 = vadd.f32 %v414, %v428
    %v438 = vadd.f32 %v415, %v428
    %v439 = vadd.f32 %v416, %v428
    %v440 = vadd.f32 %v417, %v428
    %v441 = vadd.f32 %v418, %v428
    %v442 = vadd.f32 %v419, %v428
    %v443 = vadd.f32 %v420, %v428
    %v444 = vadd.f32 %v421, %v428
    %v445 = vadd.f32 %v422, %v428
    %446 = vst [vmem:[%s3] sm:$0xff] %v430
    %447 = vst [vmem:[%s3 + $0x8] sm:$0xff] %v431
    %448 = vst [vmem:[%s3 + $0x10] sm:$0xff] %v432
    %449 = vst [vmem:[%s3 + $0x18] sm:$0xff] %v433
    %450 = vst [vmem:[%s3 + $0x20] sm:$0xff] %v434
    %451 = vst [vmem:[%s3 + $0x28] sm:$0xff] %v435
    %452 = vst [vmem:[%s3 + $0x30] sm:$0xff] %v436
    %453 = vst [vmem:[%s3 + $0x38] sm:$0xff] %v437
    %454 = vst [vmem:[%s3 + $0x40] sm:$0xff] %v438
    %455 = vst [vmem:[%s3 + $0x48] sm:$0xff] %v439
    %456 = vst [vmem:[%s3 + $0x50] sm:$0xff] %v440
    %457 = vst [vmem:[%s3 + $0x58] sm:$0xff] %v441
    %458 = vst [vmem:[%s3 + $0x60] sm:$0xff] %v442
    %459 = vst [vmem:[%s3 + $0x68] sm:$0xff] %v443
    %460 = vst [vmem:[%s3 + $0x70] sm:$0xff] %v444
    %461 = vst [vmem:[%s3 + $0x78] sm:$0xff] %v445
  $region21: #{_lambda_.42} parent=0 // pred_fallthru
    _
  // Predicated region
  $region22: #{_lambda_.42} parent=0 // pred_check
    _
  $region23: #{_lambda_.42} parent=0 // pred_check_branch
    %463 = sbr.rel (0) target = $region25
  $region24: #{_lambda_.42} parent=0 // pred_region
    _
  $region25: #{_lambda_.42} parent=0 // pred_fallthru
    _
  // Predicated region
  $region26: #{_lambda_.42} parent=0 // pred_check
    _
  $region27: #{_lambda_.42} parent=0 // pred_check_branch
    %465 = sbr.rel (0) target = $region29
  $region28: #{_lambda_.42} parent=0 // pred_region
    _
  $region29: #{_lambda_.42} parent=0 // pred_fallthru
    _

// kernel: _lambda_.41
$region0: #{_lambda_.41}
  #allocation0 [shape = 'u32[]', space=smem, size = 0x4, offset = 0x4, fixed_abs, tag = 'smem constant byte address 0x4 - core index']
  #allocation1 [shape = 'u32[144,128]{1,0:T(1,128)}', space=vmem, size = 0x12000, scoped, tag = 'internal scratch']
  #allocation2 [shape = 'f32[128,128]{1,0:T(8,128)}', space=vmem, size = 0x10000, scoped, tag = 'scratch operand']
  %s0 = inlined_call_operand.vmem [shape: bf16[128,128], index: 0, kind: input, shape index: {}]
  %s1 = inlined_call_operand.vmem [shape: bf16[128,128], index: 1, kind: input, shape index: {}]
  %s2 = inlined_call_operand.vmem [shape: f32[1,128], index: 2, kind: input, shape index: {}]
  %s3 = inlined_call_operand.vmem [shape: f32[128,128], index: 3, kind: output, shape index: {}]
  %s4 = sld [smem:[#allocation0]]
  $region30: #{_lambda_.41} parent=0
    _
  %s6 = ssub.s32 1, %s4
  %s7 = scalar_select 0, %s6, %s4
  // Predicated region
  $region2: #{_lambda_.41} parent=0 // pred_check
    _
  $region3: #{_lambda_.41} parent=0 // pred_check_branch
    %9 = sbr.rel (0) target = $region5
  $region4: #{_lambda_.41} parent=0 // pred_region
    _
  $region5: #{_lambda_.41} parent=0 // pred_fallthru
    _
  // Predicated region
  $region6: #{_lambda_.41} parent=0 // pred_check
    _
  $region7: #{_lambda_.41} parent=0 // pred_check_branch
    %11 = sbr.rel (0) target = $region9
  $region8: #{_lambda_.41} parent=0 // pred_region
    _
  $region9: #{_lambda_.41} parent=0 // pred_fallthru
    _
  // Predicated region
  $region10: #{_lambda_.41} parent=0 // pred_check
    _
  $region11: #{_lambda_.41} parent=0 // pred_check_branch
    %13 = sbr.rel (0) target = $region13
  $region12: #{_lambda_.41} parent=0 // pred_region
    _
  $region13: #{_lambda_.41} parent=0 // pred_fallthru
    _
  %p15 = scmp.eq.s32.totalorder 0, 0
  // Predicated region
  $region14: #{_lambda_.41} parent=0 // pred_check
    %p16 = pneg %p15
  $region15: #{_lambda_.41} parent=0 // pred_check_branch
    %18 = sbr.rel (%p16) target = $region17
  $region16: #{_lambda_.41} parent=0 // pred_region
    %19 = vst [vmem:[#allocation2] sm:$0xff] 0.0
    %20 = vst [vmem:[#allocation2 + $0x8] sm:$0xff] 0.0
    %21 = vst [vmem:[#allocation2 + $0x10] sm:$0xff] 0.0
    %22 = vst [vmem:[#allocation2 + $0x18] sm:$0xff] 0.0
    %23 = vst [vmem:[#allocation2 + $0x20] sm:$0xff] 0.0
    %24 = vst [vmem:[#allocation2 + $0x28] sm:$0xff] 0.0
    %25 = vst [vmem:[#allocation2 + $0x30] sm:$0xff] 0.0
    %26 = vst [vmem:[#allocation2 + $0x38] sm:$0xff] 0.0
    %27 = vst [vmem:[#allocation2 + $0x40] sm:$0xff] 0.0
    %28 = vst [vmem:[#allocation2 + $0x48] sm:$0xff] 0.0
    %29 = vst [vmem:[#allocation2 + $0x50] sm:$0xff] 0.0
    %30 = vst [vmem:[#allocation2 + $0x58] sm:$0xff] 0.0
    %31 = vst [vmem:[#allocation2 + $0x60] sm:$0xff] 0.0
    %32 = vst [vmem:[#allocation2 + $0x68] sm:$0xff] 0.0
    %33 = vst [vmem:[#allocation2 + $0x70] sm:$0xff] 0.0
    %34 = vst [vmem:[#allocation2 + $0x78] sm:$0xff] 0.0
  $region17: #{_lambda_.41} parent=0 // pred_fallthru
    _
  %v35 = vld [vmem:[#allocation2] sm:$0xff]
  %v36 = vld [vmem:[#allocation2 + $0x8] sm:$0xff]
  %v37 = vld [vmem:[#allocation2 + $0x10] sm:$0xff]
  %v38 = vld [vmem:[#allocation2 + $0x18] sm:$0xff]
  %v39 = vld [vmem:[#allocation2 + $0x20] sm:$0xff]
  %v40 = vld [vmem:[#allocation2 + $0x28] sm:$0xff]
  %v41 = vld [vmem:[#allocation2 + $0x30] sm:$0xff]
  %v42 = vld [vmem:[#allocation2 + $0x38] sm:$0xff]
  %v43 = vld [vmem:[#allocation2 + $0x40] sm:$0xff]
  %v44 = vld [vmem:[#allocation2 + $0x48] sm:$0xff]
  %v45 = vld [vmem:[#allocation2 + $0x50] sm:$0xff]
  %v46 = vld [vmem:[#allocation2 + $0x58] sm:$0xff]
  %v47 = vld [vmem:[#allocation2 + $0x60] sm:$0xff]
  %v48 = vld [vmem:[#allocation2 + $0x68] sm:$0xff]
  %v49 = vld [vmem:[#allocation2 + $0x70] sm:$0xff]
  %v50 = vld [vmem:[#allocation2 + $0x78] sm:$0xff]
  %v51 = vld [vmem:[%s0] sm:$0xf]
  %v52 = vld [vmem:[%s0 + $0x4] sm:$0xf]
  %v53 = vld [vmem:[%s0 + $0x8] sm:$0xf]
  %v54 = vld [vmem:[%s0 + $0xc] sm:$0xf]
  %v55 = vld [vmem:[%s0 + $0x10] sm:$0xf]
  %v56 = vld [vmem:[%s0 + $0x14] sm:$0xf]
  %v57 = vld [vmem:[%s0 + $0x18] sm:$0xf]
  %v58 = vld [vmem:[%s0 + $0x1c] sm:$0xf]
  %v59 = vld [vmem:[%s0 + $0x20] sm:$0xf]
  %v60 = vld [vmem:[%s0 + $0x24] sm:$0xf]
  %v61 = vld [vmem:[%s0 + $0x28] sm:$0xf]
  %v62 = vld [vmem:[%s0 + $0x2c] sm:$0xf]
  %v63 = vld [vmem:[%s0 + $0x30] sm:$0xf]
  %v64 = vld [vmem:[%s0 + $0x34] sm:$0xf]
  %v65 = vld [vmem:[%s0 + $0x38] sm:$0xf]
  %v66 = vld [vmem:[%s0 + $0x3c] sm:$0xf]
  %v67 = vld [vmem:[%s1] sm:$0xf]
  %v68 = vld [vmem:[%s1 + $0x4] sm:$0xf]
  %v69 = vld [vmem:[%s1 + $0x8] sm:$0xf]
  %v70 = vld [vmem:[%s1 + $0xc] sm:$0xf]
  %v71 = vld [vmem:[%s1 + $0x10] sm:$0xf]
  %v72 = vld [vmem:[%s1 + $0x14] sm:$0xf]
  %v73 = vld [vmem:[%s1 + $0x18] sm:$0xf]
  %v74 = vld [vmem:[%s1 + $0x1c] sm:$0xf]
  %v75 = vld [vmem:[%s1 + $0x20] sm:$0xf]
  %v76 = vld [vmem:[%s1 + $0x24] sm:$0xf]
  %v77 = vld [vmem:[%s1 + $0x28] sm:$0xf]
  %v78 = vld [vmem:[%s1 + $0x2c] sm:$0xf]
  %v79 = vld [vmem:[%s1 + $0x30] sm:$0xf]
  %v80 = vld [vmem:[%s1 + $0x34] sm:$0xf]
  %v81 = vld [vmem:[%s1 + $0x38] sm:$0xf]
  %v82 = vld [vmem:[%s1 + $0x3c] sm:$0xf]
  %v99 = vunpack.c.l.b16 %v51
  %v100 = vunpack.c.l.b16 %v52
  %v101 = vunpack.c.l.b16 %v53
  %v102 = vunpack.c.l.b16 %v54
  %v103 = vunpack.c.l.b16 %v55
  %v104 = vunpack.c.l.b16 %v56
  %v105 = vunpack.c.l.b16 %v57
  %v106 = vunpack.c.l.b16 %v58
  %v107 = vunpack.c.l.b16 %v59
  %v108 = vunpack.c.l.b16 %v60
  %v109 = vunpack.c.l.b16 %v61
  %v110 = vunpack.c.l.b16 %v62
  %v111 = vunpack.c.l.b16 %v63
  %v112 = vunpack.c.l.b16 %v64
  %v113 = vunpack.c.l.b16 %v65
  %v114 = vunpack.c.l.b16 %v66
  %v115 = vpack.c.b16 %v100, %v99
  %v116 = vpack.c.b16 %v102, %v101
  %v117 = vpack.c.b16 %v104, %v103
  %v118 = vpack.c.b16 %v106, %v105
  %v119 = vpack.c.b16 %v108, %v107
  %v120 = vpack.c.b16 %v110, %v109
  %v121 = vpack.c.b16 %v112, %v111
  %v122 = vpack.c.b16 %v114, %v113
  %v147 = vunpack.c.l.b16 %v67
  %v148 = vunpack.c.l.b16 %v68
  %v149 = vunpack.c.l.b16 %v69
  %v150 = vunpack.c.l.b16 %v70
  %v151 = vunpack.c.l.b16 %v71
  %v152 = vunpack.c.l.b16 %v72
  %v153 = vunpack.c.l.b16 %v73
  %v154 = vunpack.c.l.b16 %v74
  %v155 = vunpack.c.l.b16 %v75
  %v156 = vunpack.c.l.b16 %v76
  %v157 = vunpack.c.l.b16 %v77
  %v158 = vunpack.c.l.b16 %v78
  %v159 = vunpack.c.l.b16 %v79
  %v160 = vunpack.c.l.b16 %v80
  %v161 = vunpack.c.l.b16 %v81
  %v162 = vunpack.c.l.b16 %v82
  %v163 = vpack.c.b16 %v148, %v147
  %v164 = vpack.c.b16 %v150, %v149
  %v165 = vpack.c.b16 %v152, %v151
  %v166 = vpack.c.b16 %v154, %v153
  %v167 = vpack.c.b16 %v156, %v155
  %v168 = vpack.c.b16 %v158, %v157
  %v169 = vpack.c.b16 %v160, %v159
  %v170 = vpack.c.b16 %v162, %v161
  %179 = vmatprep.subr.bf16.mxu0 0
  %180 = vmatpush1.bf16.msra.mxu0 %v170
  %181 = vmatprep.subr.bf16.mxu0 0
  %182 = vmatpush1.bf16.msra.mxu0 %v169
  %183 = vmatprep.subr.bf16.mxu0 0
  %184 = vmatpush1.bf16.msra.mxu0 %v168
  %185 = vmatprep.subr.bf16.mxu0 0
  %186 = vmatpush1.bf16.msra.mxu0 %v167
  %187 = vmatprep.subr.bf16.mxu0 0
  %188 = vmatpush1.bf16.msra.mxu0 %v166
  %189 = vmatprep.subr.bf16.mxu0 0
  %190 = vmatpush1.bf16.msra.mxu0 %v165
  %191 = vmatprep.subr.bf16.mxu0 0
  %192 = vmatpush1.bf16.msra.mxu0 %v164
  %193 = vmatprep.subr.bf16.mxu0 0
  %194 = vmatpush1.bf16.msra.mxu0 %v163
  %195 = vmatprep.subr.bf16.mxu0 0
  %196 = vmatpush2.bf16.msra.mxu0 0
  %197 = vmatprep.subr.bf16.mxu0 0
  %198 = vmatpush2.bf16.msra.mxu0 0
  %199 = vmatprep.subr.bf16.mxu0 0
  %200 = vmatpush2.bf16.msra.mxu0 0
  %201 = vmatprep.subr.bf16.mxu0 0
  %202 = vmatpush2.bf16.msra.mxu0 0
  %203 = vmatprep.subr.bf16.mxu0 0
  %204 = vmatpush2.bf16.msra.mxu0 0
  %205 = vmatprep.subr.bf16.mxu0 0
  %206 = vmatpush2.bf16.msra.mxu0 0
  %207 = vmatprep.subr.bf16.mxu0 0
  %208 = vmatpush2.bf16.msra.mxu0 0
  %209 = vmatprep.subr.bf16.mxu0 0
  %210 = vmatpush2.bf16.msra.mxu0 0
  %211 = vmatprep.mubr.bf16.mxu0 0
  %212 = vmatmul.mubr.bf16.gmra.mxu0 %v115
  %v213 = vpop.f32.mrf.mxu0
  %v214 = vadd.f32 0.0, %v213
  %v215 = vpop.f32.mrf.mxu0
  %v216 = vpop.f32.mrf.mxu0
  %v217 = vadd.f32 0.0, %v216
  %v218 = vpop.f32.mrf.mxu0
  %219 = vmatprep.mubr.bf16.mxu0 0
  %220 = vmatmul.mubr.bf16.gmra.mxu0 %v116
  %v221 = vpop.f32.mrf.mxu0
  %v222 = vadd.f32 0.0, %v221
  %v223 = vpop.f32.mrf.mxu0
  %v224 = vpop.f32.mrf.mxu0
  %v225 = vadd.f32 0.0, %v224
  %v226 = vpop.f32.mrf.mxu0
  %227 = vmatprep.mubr.bf16.mxu0 0
  %228 = vmatmul.mubr.bf16.gmra.mxu0 %v117
  %v229 = vpop.f32.mrf.mxu0
  %v230 = vadd.f32 0.0, %v229
  %v231 = vpop.f32.mrf.mxu0
  %v232 = vpop.f32.mrf.mxu0
  %v233 = vadd.f32 0.0, %v232
  %v234 = vpop.f32.mrf.mxu0
  %235 = vmatprep.mubr.bf16.mxu0 0
  %236 = vmatmul.mubr.bf16.gmra.mxu0 %v118
  %v237 = vpop.f32.mrf.mxu0
  %v238 = vadd.f32 0.0, %v237
  %v239 = vpop.f32.mrf.mxu0
  %v240 = vpop.f32.mrf.mxu0
  %v241 = vadd.f32 0.0, %v240
  %v242 = vpop.f32.mrf.mxu0
  %243 = vmatprep.mubr.bf16.mxu0 0
  %244 = vmatmul.mubr.bf16.gmra.mxu0 %v119
  %v245 = vpop.f32.mrf.mxu0
  %v246 = vadd.f32 0.0, %v245
  %v247 = vpop.f32.mrf.mxu0
  %v248 = vpop.f32.mrf.mxu0
  %v249 = vadd.f32 0.0, %v248
  %v250 = vpop.f32.mrf.mxu0
  %251 = vmatprep.mubr.bf16.mxu0 0
  %252 = vmatmul.mubr.bf16.gmra.mxu0 %v120
  %v253 = vpop.f32.mrf.mxu0
  %v254 = vadd.f32 0.0, %v253
  %v255 = vpop.f32.mrf.mxu0
  %v256 = vpop.f32.mrf.mxu0
  %v257 = vadd.f32 0.0, %v256
  %v258 = vpop.f32.mrf.mxu0
  %259 = vmatprep.mubr.bf16.mxu0 0
  %260 = vmatmul.mubr.bf16.gmra.mxu0 %v121
  %v261 = vpop.f32.mrf.mxu0
  %v262 = vadd.f32 0.0, %v261
  %v263 = vpop.f32.mrf.mxu0
  %v264 = vpop.f32.mrf.mxu0
  %v265 = vadd.f32 0.0, %v264
  %v266 = vpop.f32.mrf.mxu0
  %267 = vmatprep.mubr.bf16.mxu0 0
  %268 = vmatmul.mubr.bf16.gmra.mxu0 %v122
  %v269 = vpop.f32.mrf.mxu0
  %v270 = vadd.f32 0.0, %v269
  %v271 = vpop.f32.mrf.mxu0
  %v272 = vpop.f32.mrf.mxu0
  %v273 = vadd.f32 0.0, %v272
  %v274 = vpop.f32.mrf.mxu0
  %275 = vdwg.mxu0
  %v276 = vadd.f32 %v35, %v214
  %v277 = vadd.f32 %v36, %v217
  %v278 = vadd.f32 %v37, %v222
  %v279 = vadd.f32 %v38, %v225
  %v280 = vadd.f32 %v39, %v230
  %v281 = vadd.f32 %v40, %v233
  %v282 = vadd.f32 %v41, %v238
  %v283 = vadd.f32 %v42, %v241
  %v284 = vadd.f32 %v43, %v246
  %v285 = vadd.f32 %v44, %v249
  %v286 = vadd.f32 %v45, %v254
  %v287 = vadd.f32 %v46, %v257
  %v288 = vadd.f32 %v47, %v262
  %v289 = vadd.f32 %v48, %v265
  %v290 = vadd.f32 %v49, %v270
  %v291 = vadd.f32 %v50, %v273
  %292 = vst [vmem:[#allocation2] sm:$0xff] %v276
  %293 = vst [vmem:[#allocation2 + $0x8] sm:$0xff] %v277
  %294 = vst [vmem:[#allocation2 + $0x10] sm:$0xff] %v278
  %295 = vst [vmem:[#allocation2 + $0x18] sm:$0xff] %v279
  %296 = vst [vmem:[#allocation2 + $0x20] sm:$0xff] %v280
  %297 = vst [vmem:[#allocation2 + $0x28] sm:$0xff] %v281
  %298 = vst [vmem:[#allocation2 + $0x30] sm:$0xff] %v282
  %299 = vst [vmem:[#allocation2 + $0x38] sm:$0xff] %v283
  %300 = vst [vmem:[#allocation2 + $0x40] sm:$0xff] %v284
  %301 = vst [vmem:[#allocation2 + $0x48] sm:$0xff] %v285
  %302 = vst [vmem:[#allocation2 + $0x50] sm:$0xff] %v286
  %303 = vst [vmem:[#allocation2 + $0x58] sm:$0xff] %v287
  %304 = vst [vmem:[#allocation2 + $0x60] sm:$0xff] %v288
  %305 = vst [vmem:[#allocation2 + $0x68] sm:$0xff] %v289
  %306 = vst [vmem:[#allocation2 + $0x70] sm:$0xff] %v290
  %307 = vst [vmem:[#allocation2 + $0x78] sm:$0xff] %v291
  // Predicated region
  $region18: #{_lambda_.41} parent=0 // pred_check
    %p308 = pneg %p15
  $region19: #{_lambda_.41} parent=0 // pred_check_branch
    %310 = sbr.rel (%p308) target = $region21
  $region20: #{_lambda_.41} parent=0 // pred_region
    %v311 = vld [vmem:[#allocation2] sm:$0xff]
    %v312 = vld [vmem:[#allocation2 + $0x8] sm:$0xff]
    %v313 = vld [vmem:[#allocation2 + $0x10] sm:$0xff]
    %v314 = vld [vmem:[#allocation2 + $0x18] sm:$0xff]
    %v315 = vld [vmem:[#allocation2 + $0x20] sm:$0xff]
    %v316 = vld [vmem:[#allocation2 + $0x28] sm:$0xff]
    %v317 = vld [vmem:[#allocation2 + $0x30] sm:$0xff]
    %v318 = vld [vmem:[#allocation2 + $0x38] sm:$0xff]
    %v319 = vld [vmem:[#allocation2 + $0x40] sm:$0xff]
    %v320 = vld [vmem:[#allocation2 + $0x48] sm:$0xff]
    %v321 = vld [vmem:[#allocation2 + $0x50] sm:$0xff]
    %v322 = vld [vmem:[#allocation2 + $0x58] sm:$0xff]
    %v323 = vld [vmem:[#allocation2 + $0x60] sm:$0xff]
    %v324 = vld [vmem:[#allocation2 + $0x68] sm:$0xff]
    %v325 = vld [vmem:[#allocation2 + $0x70] sm:$0xff]
    %v326 = vld [vmem:[#allocation2 + $0x78] sm:$0xff]
    %v327 = vld [vmem:[%s2] sm:$0x1]
    %v329 = vlaneseq
    %v330 = vshrl.u32 %v329, 7
    %v331 = vsub.s32 0, %v330
    %v332 = vrot.slane %v327, %v331
    %v334 = vadd.f32 %v311, %v332
    %v335 = vadd.f32 %v312, %v332
    %v336 = vadd.f32 %v313, %v332
    %v337 = vadd.f32 %v314, %v332
    %v338 = vadd.f32 %v315, %v332
    %v339 = vadd.f32 %v316, %v332
    %v340 = vadd.f32 %v317, %v332
    %v341 = vadd.f32 %v318, %v332
    %v342 = vadd.f32 %v319, %v332
    %v343 = vadd.f32 %v320, %v332
    %v344 = vadd.f32 %v321, %v332
    %v345 = vadd.f32 %v322, %v332
    %v346 = vadd.f32 %v323, %v332
    %v347 = vadd.f32 %v324, %v332
    %v348 = vadd.f32 %v325, %v332
    %v349 = vadd.f32 %v326, %v332
    %350 = vst [vmem:[%s3] sm:$0xff] %v334
    %351 = vst [vmem:[%s3 + $0x8] sm:$0xff] %v335
    %352 = vst [vmem:[%s3 + $0x10] sm:$0xff] %v336
    %353 = vst [vmem:[%s3 + $0x18] sm:$0xff] %v337
    %354 = vst [vmem:[%s3 + $0x20] sm:$0xff] %v338
    %355 = vst [vmem:[%s3 + $0x28] sm:$0xff] %v339
    %356 = vst [vmem:[%s3 + $0x30] sm:$0xff] %v340
    %357 = vst [vmem:[%s3 + $0x38] sm:$0xff] %v341
    %358 = vst [vmem:[%s3 + $0x40] sm:$0xff] %v342
    %359 = vst [vmem:[%s3 + $0x48] sm:$0xff] %v343
    %360 = vst [vmem:[%s3 + $0x50] sm:$0xff] %v344
    %361 = vst [vmem:[%s3 + $0x58] sm:$0xff] %v345
    %362 = vst [vmem:[%s3 + $0x60] sm:$0xff] %v346
    %363 = vst [vmem:[%s3 + $0x68] sm:$0xff] %v347
    %364 = vst [vmem:[%s3 + $0x70] sm:$0xff] %v348
    %365 = vst [vmem:[%s3 + $0x78] sm:$0xff] %v349
  $region21: #{_lambda_.41} parent=0 // pred_fallthru
    _
  // Predicated region
  $region22: #{_lambda_.41} parent=0 // pred_check
    _
  $region23: #{_lambda_.41} parent=0 // pred_check_branch
    %367 = sbr.rel (0) target = $region25
  $region24: #{_lambda_.41} parent=0 // pred_region
    _
  $region25: #{_lambda_.41} parent=0 // pred_fallthru
    _
  // Predicated region
  $region26: #{_lambda_.41} parent=0 // pred_check
    _
  $region27: #{_lambda_.41} parent=0 // pred_check_branch
    %369 = sbr.rel (0) target = $region29
  $region28: #{_lambda_.41} parent=0 // pred_region
    _
  $region29: #{_lambda_.41} parent=0 // pred_fallthru
    _

// kernel: _lambda_.43
$region0: #{_lambda_.43}
  #allocation0 [shape = 'u32[]', space=smem, size = 0x4, offset = 0x4, fixed_abs, tag = 'smem constant byte address 0x4 - core index']
  #allocation1 [shape = 'u32[144,128]{1,0:T(1,128)}', space=vmem, size = 0x12000, scoped, tag = 'internal scratch']
  #allocation2 [shape = 'f32[256,128]{1,0:T(8,128)}', space=vmem, size = 0x20000, scoped, tag = 'scratch operand']
  %s0 = inlined_call_operand.vmem [shape: bf16[512,2688], index: 0, kind: input, shape index: {}]
  %s1 = inlined_call_operand.vmem [shape: bf16[2688,128], index: 1, kind: input, shape index: {}]
  %s2 = inlined_call_operand.vmem [shape: f32[1,128], index: 2, kind: input, shape index: {}]
  %s3 = inlined_call_operand.vmem [shape: f32[512,128], index: 3, kind: output, shape index: {}]
  %s4 = sld [smem:[#allocation0]]
  $region79: #{_lambda_.43} parent=0
    _
  %s6 = ssub.s32 1, %s4
  %s7 = scalar_select 0, %s6, %s4
  $region1: #{_lambda_.43} parent=0
    #allocation3 [shape = 'u8[393216]{0}', space=vmem, size = 0x60000, scoped, tag = 'input window, operand 0']
    loop: start=0, step=1, limit=16
    $region2: #{_lambda_.43} parent=1 // loop_pre_header
      _
    $region3: #{_lambda_.43} parent=1 // loop_header
      %s9 = sphi 0, %s13
      %p10 = scmp.ge.s32.totalorder %s9, 16
      %s16 = sphi 0, %s35
      %s17 = sphi 0, %s31
      %s18 = sphi 0, %s27
      %s19 = sphi 0, %s16
      %s20 = sphi 0, %s17
      %s21 = sphi 0, %s18
      %s22 = sphi 0, %s19
      %s23 = sphi 0, %s20
      %s24 = sphi 0, %s21
      %s40 = sphi 0, %s42
      %s43 = sphi 0, %s40
      %s44 = sphi 0, %s43
      %s60 = sphi 0, %s44
      %s68 = sphi 0, %s70
      %s71 = sphi 0, %s68
      %s72 = sphi 0, %s71
      %s88 = sphi 0, %s72
      %s94 = sphi 0, %s96
      %s97 = sphi 0, %s94
      %s98 = sphi 0, %s97
      %s114 = sphi 0, %s98
      %s122 = sphi 0, %s124
      %s125 = sphi 0, %s122
      %s126 = sphi 0, %s125
      %s142 = sphi 0, %s126
    $region4: #{_lambda_.43} parent=1 // loop_header_branch
      %12 = sbr.rel (%p10) target = $region8
    $region5: #{_lambda_.43} parent=1 // loop_body
      %s14 = ssub.s32 %s9, 1
      %s15 = ssub.s32 %s9, 2
      %s25 = sadd.s32 1, %s18
      %p26 = scmp.ge.s32.totalorder %s25, 7
      %s27 = scalar_select %p26, 0, %s25
      %s28 = sadd.s32 1, %s17
      %s29 = scalar_select %p26, %s28, %s17
      %p30 = scmp.ge.s32.totalorder %s29, 1
      %s31 = scalar_select %p30, 0, %s29
      %s32 = sadd.s32 1, %s16
      %s33 = scalar_select %p30, %s32, %s16
      %p34 = scmp.ge.s32.totalorder %s33, 2
      %s35 = scalar_select %p34, 0, %s33
      %s36 = ssub.s32 %s16, %s35
      %s37 = ssub.s32 %s18, %s27
      %s38 = sor.u32 %s36, %s37
      %p39 = scmp.eq.s32.totalorder %s38, 0
      %s41 = sadd.s32 %s40, 1
      %s42 = scalar_select %p39, %s40, %s41
      %p45 = pneg %p39
      %p46 = scmp.eq.s32.totalorder %s9, 13
      %p47 = por %p45, %p46
      %p48 = scmp.ne.s32.totalorder %s40, %s43
      %p49 = scmp.eq.s32.totalorder %s9, 0
      %p50 = por %p48, %p49
      %p51 = scmp.ne.s32.totalorder %s40, %s43
      %p52 = scmp.eq.s32.totalorder %s14, 13
      %p53 = por %p51, %p52
      %p54 = scmp.ne.s32.totalorder %s43, %s44
      %p55 = scmp.eq.s32.totalorder %s14, 0
      %p56 = por %p54, %p55
      %p57 = scmp.ne.s32.totalorder %s43, %s44
      %p58 = scmp.eq.s32.totalorder %s15, 13
      %p59 = por %p57, %p58
      %p61 = scmp.ne.s32.totalorder %s44, %s60
      %p62 = scmp.eq.s32.totalorder %s15, 0
      %p63 = por %p61, %p62
      %s64 = ssub.s32 %s18, %s27
      %s65 = ssub.s32 %s17, %s31
      %s66 = sor.u32 %s64, %s65
      %p67 = scmp.eq.s32.totalorder %s66, 0
      %s69 = sadd.s32 %s68, 1
      %s70 = scalar_select %p67, %s68, %s69
      %p73 = pneg %p67
      %p74 = scmp.eq.s32.totalorder %s9, 13
      %p75 = por %p73, %p74
      %p76 = scmp.ne.s32.totalorder %s68, %s71
      %p77 = scmp.eq.s32.totalorder %s9, 0
      %p78 = por %p76, %p77
      %p79 = scmp.ne.s32.totalorder %s68, %s71
      %p80 = scmp.eq.s32.totalorder %s14, 13
      %p81 = por %p79, %p80
      %p82 = scmp.ne.s32.totalorder %s71, %s72
      %p83 = scmp.eq.s32.totalorder %s14, 0
      %p84 = por %p82, %p83
      %p85 = scmp.ne.s32.totalorder %s71, %s72
      %p86 = scmp.eq.s32.totalorder %s15, 13
      %p87 = por %p85, %p86
      %p89 = scmp.ne.s32.totalorder %s72, %s88
      %p90 = scmp.eq.s32.totalorder %s15, 0
      %p91 = por %p89, %p90
      %s92 = ssub.s32 %s17, %s31
      %p93 = scmp.eq.s32.totalorder %s92, 0
      %s95 = sadd.s32 %s94, 1
      %s96 = scalar_select %p93, %s94, %s95
      %p99 = pneg %p93
      %p100 = scmp.eq.s32.totalorder %s9, 13
      %p101 = por %p99, %p100
      %p102 = scmp.ne.s32.totalorder %s94, %s97
      %p103 = scmp.eq.s32.totalorder %s9, 0
      %p104 = por %p102, %p103
      %p105 = scmp.ne.s32.totalorder %s94, %s97
      %p106 = scmp.eq.s32.totalorder %s14, 13
      %p107 = por %p105, %p106
      %p108 = scmp.ne.s32.totalorder %s97, %s98
      %p109 = scmp.eq.s32.totalorder %s14, 0
      %p110 = por %p108, %p109
      %p111 = scmp.ne.s32.totalorder %s97, %s98
      %p112 = scmp.eq.s32.totalorder %s15, 13
      %p113 = por %p111, %p112
      %p115 = scmp.ne.s32.totalorder %s98, %s114
      %p116 = scmp.eq.s32.totalorder %s15, 0
      %p117 = por %p115, %p116
      %s118 = ssub.s32 %s16, %s35
      %s119 = ssub.s32 %s17, %s31
      %s120 = sor.u32 %s118, %s119
      %p121 = scmp.eq.s32.totalorder %s120, 0
      %s123 = sadd.s32 %s122, 1
      %s124 = scalar_select %p121, %s122, %s123
      %p127 = pneg %p121
      %p128 = scmp.eq.s32.totalorder %s9, 13
      %p129 = por %p127, %p128
      %p130 = scmp.ne.s32.totalorder %s122, %s125
      %p131 = scmp.eq.s32.totalorder %s9, 0
      %p132 = por %p130, %p131
      %p133 = scmp.ne.s32.totalorder %s122, %s125
      %p134 = scmp.eq.s32.totalorder %s14, 13
      %p135 = por %p133, %p134
      %p136 = scmp.ne.s32.totalorder %s125, %s126
      %p137 = scmp.eq.s32.totalorder %s14, 0
      %p138 = por %p136, %p137
      %p139 = scmp.ne.s32.totalorder %s125, %s126
      %p140 = scmp.eq.s32.totalorder %s15, 13
      %p141 = por %p139, %p140
      %p143 = scmp.ne.s32.totalorder %s126, %s142
      %p144 = scmp.eq.s32.totalorder %s15, 0
      %p145 = por %p143, %p144
      %p146 = scmp.le.s32.totalorder 1, %s9
      %p147 = scmp.lt.s32.totalorder %s9, 15
      %p148 = pnand %p146, %p147
      %p149 = pneg %p148
      // Predicated region
      $region9: #{_lambda_.43} parent=5 // pred_check
        _
      $region10: #{_lambda_.43} parent=5 // pred_check_branch
        %151 = sbr.rel (%p148) target = $region12
      $region11: #{_lambda_.43} parent=5 // pred_region
        %s152 = ssub.s32 %s9, 1
        // Predicated region
        $region13: #{_lambda_.43} parent=11 // pred_check
          %p153 = pneg %p110
        $region14: #{_lambda_.43} parent=11 // pred_check_branch
          %155 = sbr.rel (%p153) target = $region16
        $region15: #{_lambda_.43} parent=11 // pred_region
          %p156 = scmp.lt.s32.totalorder %s20, 0
          %s157 = scalar_select %p156, %s20, 0
          %s158 = scalar_lea.vmem %s2, %s157
        $region16: #{_lambda_.43} parent=11 // pred_fallthru
          _
      $region12: #{_lambda_.43} parent=5 // pred_fallthru
        _
      %p159 = scmp.lt.s32.totalorder %s9, 14
      // Predicated region
      $region17: #{_lambda_.43} parent=5 // pred_check
        %p160 = pneg %p159
      $region18: #{_lambda_.43} parent=5 // pred_check_branch
        %162 = sbr.rel (%p160) target = $region20
      $region19: #{_lambda_.43} parent=5 // pred_region
        // Predicated region
        $region21: #{_lambda_.43} parent=19 // pred_check
          %p163 = pneg %p50
        $region22: #{_lambda_.43} parent=19 // pred_check_branch
          %165 = sbr.rel (%p163) target = $region24
        $region23: #{_lambda_.43} parent=19 // pred_region
          %s166 = sand.u32 %s40, 1
          %s167 = sand.u32 %s40, 1
          %s168 = smul.addr %s167, 384
          %s169 = scalar_lea.vmem [#allocation3], %s168
          %s170 = smul.u32 32, %s16
          %s171 = smul.u32 3, %s18
          %s172 = smul.addr %s170, 21
          %s173 = sadd.s32 %s171, %s172
          %s174 = smul.addr %s173, 4
          %s175 = scalar_lea.vmem %s0, %s174
          // Predicated region
          $region25: #{_lambda_.43} parent=23 // pred_check
            _
          $region26: #{_lambda_.43} parent=23 // pred_check_branch
            %177 = sbr.rel (0) target = $region28
          $region27: #{_lambda_.43} parent=23 // pred_region
            // Predicated region
            $region29: #{_lambda_.43} parent=27 // pred_check
              _
            $region30: #{_lambda_.43} parent=27 // pred_check_branch
              %179 = sbr.rel (0) target = $region32
            $region31: #{_lambda_.43} parent=27 // pred_region
              %s180 = scalar_lea.vmem %s175, 8
              %s181 = scalar_lea.vmem %s169, 8 [#allocation3]
              loop: start=0, step=1, limit=1
              $region33: #{_lambda_.43} parent=31 // loop_pre_header
                _
              $region34: #{_lambda_.43} parent=31 // loop_header
                %s183 = sphi 0, %s187
                %p184 = scmp.ge.s32.totalorder %s183, 1
                %s188 = sphi %s175, %s175
                %s189 = sphi %s169, %s169
              $region35: #{_lambda_.43} parent=31 // loop_header_branch
                %186 = sbr.rel (%p184) target = $region39
              $region36: #{_lambda_.43} parent=31 // loop_body
                %v190 = vld [vmem:[%s188] sm:$0xff]
                %191 = vst [vmem:[%s189] sm:$0xff] %v190
                %v192 = vld [vmem:[%s188 + $0x54] sm:$0xff]
                %193 = vst [vmem:[%s189 + $0xc] sm:$0xff] %v192
                %v194 = vld [vmem:[%s188 + $0xa8] sm:$0xff]
                %195 = vst [vmem:[%s189 + $0x18] sm:$0xff] %v194
                %v196 = vld [vmem:[%s188 + $0xfc] sm:$0xff]
                %197 = vst [vmem:[%s189 + $0x24] sm:$0xff] %v196
                %v198 = vld [vmem:[%s188 + $0x150] sm:$0xff]
                %199 = vst [vmem:[%s189 + $0x30] sm:$0xff] %v198
                %v200 = vld [vmem:[%s188 + $0x1a4] sm:$0xff]
                %201 = vst [vmem:[%s189 + $0x3c] sm:$0xff] %v200
                %v202 = vld [vmem:[%s188 + $0x1f8] sm:$0xff]
                %203 = vst [vmem:[%s189 + $0x48] sm:$0xff] %v202
                %v204 = vld [vmem:[%s188 + $0x24c] sm:$0xff]
                %205 = vst [vmem:[%s189 + $0x54] sm:$0xff] %v204
                %v206 = vld [vmem:[%s188 + $0x2a0] sm:$0xff]
                %207 = vst [vmem:[%s189 + $0x60] sm:$0xff] %v206
                %v208 = vld [vmem:[%s188 + $0x2f4] sm:$0xff]
                %209 = vst [vmem:[%s189 + $0x6c] sm:$0xff] %v208
                %v210 = vld [vmem:[%s188 + $0x348] sm:$0xff]
                %211 = vst [vmem:[%s189 + $0x78] sm:$0xff] %v210
                %v212 = vld [vmem:[%s188 + $0x39c] sm:$0xff]
                %213 = vst [vmem:[%s189 + $0x84] sm:$0xff] %v212
                %v214 = vld [vmem:[%s188 + $0x3f0] sm:$0xff]
                %215 = vst [vmem:[%s189 + $0x90] sm:$0xff] %v214
                %v216 = vld [vmem:[%s188 + $0x444] sm:$0xff]
                %217 = vst [vmem:[%s189 + $0x9c] sm:$0xff] %v216
                %v218 = vld [vmem:[%s188 + $0x498] sm:$0xff]
                %219 = vst [vmem:[%s189 + $0xa8] sm:$0xff] %v218
                %v220 = vld [vmem:[%s188 + $0x4ec] sm:$0xff]
                %221 = vst [vmem:[%s189 + $0xb4] sm:$0xff] %v220
                %v222 = vld [vmem:[%s188 + $0x540] sm:$0xff]
                %223 = vst [vmem:[%s189 + $0xc0] sm:$0xff] %v222
                %v224 = vld [vmem:[%s188 + $0x594] sm:$0xff]
                %225 = vst [vmem:[%s189 + $0xcc] sm:$0xff] %v224
                %v226 = vld [vmem:[%s188 + $0x5e8] sm:$0xff]
                %227 = vst [vmem:[%s189 + $0xd8] sm:$0xff] %v226
                %v228 = vld [vmem:[%s188 + $0x63c] sm:$0xff]
                %229 = vst [vmem:[%s189 + $0xe4] sm:$0xff] %v228
                %v230 = vld [vmem:[%s188 + $0x690] sm:$0xff]
                %231 = vst [vmem:[%s189 + $0xf0] sm:$0xff] %v230
                %v232 = vld [vmem:[%s188 + $0x6e4] sm:$0xff]
                %233 = vst [vmem:[%s189 + $0xfc] sm:$0xff] %v232
                %v234 = vld [vmem:[%s188 + $0x738] sm:$0xff]
                %235 = vst [vmem:[%s189 + $0x108] sm:$0xff] %v234
                %v236 = vld [vmem:[%s188 + $0x78c] sm:$0xff]
                %237 = vst [vmem:[%s189 + $0x114] sm:$0xff] %v236
                %v238 = vld [vmem:[%s188 + $0x7e0] sm:$0xff]
                %239 = vst [vmem:[%s189 + $0x120] sm:$0xff] %v238
                %v240 = vld [vmem:[%s188 + $0x834] sm:$0xff]
                %241 = vst [vmem:[%s189 + $0x12c] sm:$0xff] %v240
                %v242 = vld [vmem:[%s188 + $0x888] sm:$0xff]
                %243 = vst [vmem:[%s189 + $0x138] sm:$0xff] %v242
                %v244 = vld [vmem:[%s188 + $0x8dc] sm:$0xff]
                %245 = vst [vmem:[%s189 + $0x144] sm:$0xff] %v244
                %v246 = vld [vmem:[%s188 + $0x930] sm:$0xff]
                %247 = vst [vmem:[%s189 + $0x150] sm:$0xff] %v246
                %v248 = vld [vmem:[%s188 + $0x984] sm:$0xff]
                %249 = vst [vmem:[%s189 + $0x15c] sm:$0xff] %v248
                %v250 = vld [vmem:[%s188 + $0x9d8] sm:$0xff]
                %251 = vst [vmem:[%s189 + $0x168] sm:$0xff] %v250
                %v252 = vld [vmem:[%s188 + $0xa2c] sm:$0xff]
                %253 = vst [vmem:[%s189 + $0x174] sm:$0xff] %v252
              $region37: #{_lambda_.43} parent=31 // loop_footer
                %s187 = sadd.s32 1, %s183
              $region38: #{_lambda_.43} parent=31 // loop_footer_branch
                %182 = sbr.rel target = $region34
              $region39: #{_lambda_.43} parent=31 // loop_exit
                _
              %s255 = ssub.s32 16, 1
              loop: start=0, step=1, limit=1
              $region40: #{_lambda_.43} parent=31 // loop_pre_header
                _
              $region41: #{_lambda_.43} parent=31 // loop_header
                %s257 = sphi 0, %s261
                %p258 = scmp.ge.s32.totalorder %s257, 1
                %s262 = sphi %s180, %s180
                %s263 = sphi %s181, %s181
              $region42: #{_lambda_.43} parent=31 // loop_header_branch
                %260 = sbr.rel (%p258) target = $region46
              $region43: #{_lambda_.43} parent=31 // loop_body
                %v264 = vld [vmem:[%s262] sm:%s255]
                %265 = vst [vmem:[%s263] sm:%s255] %v264
                %v266 = vld [vmem:[%s262 + $0x54] sm:%s255]
                %267 = vst [vmem:[%s263 + $0xc] sm:%s255] %v266
                %v268 = vld [vmem:[%s262 + $0xa8] sm:%s255]
                %269 = vst [vmem:[%s263 + $0x18] sm:%s255] %v268
                %v270 = vld [vmem:[%s262 + $0xfc] sm:%s255]
                %271 = vst [vmem:[%s263 + $0x24] sm:%s255] %v270
                %v272 = vld [vmem:[%s262 + $0x150] sm:%s255]
                %273 = vst [vmem:[%s263 + $0x30] sm:%s255] %v272
                %v274 = vld [vmem:[%s262 + $0x1a4] sm:%s255]
                %275 = vst [vmem:[%s263 + $0x3c] sm:%s255] %v274
                %v276 = vld [vmem:[%s262 + $0x1f8] sm:%s255]
                %277 = vst [vmem:[%s263 + $0x48] sm:%s255] %v276
                %v278 = vld [vmem:[%s262 + $0x24c] sm:%s255]
                %279 = vst [vmem:[%s263 + $0x54] sm:%s255] %v278
                %v280 = vld [vmem:[%s262 + $0x2a0] sm:%s255]
                %281 = vst [vmem:[%s263 + $0x60] sm:%s255] %v280
                %v282 = vld [vmem:[%s262 + $0x2f4] sm:%s255]
                %283 = vst [vmem:[%s263 + $0x6c] sm:%s255] %v282
                %v284 = vld [vmem:[%s262 + $0x348] sm:%s255]
                %285 = vst [vmem:[%s263 + $0x78] sm:%s255] %v284
                %v286 = vld [vmem:[%s262 + $0x39c] sm:%s255]
                %287 = vst [vmem:[%s263 + $0x84] sm:%s255] %v286
                %v288 = vld [vmem:[%s262 + $0x3f0] sm:%s255]
                %289 = vst [vmem:[%s263 + $0x90] sm:%s255] %v288
                %v290 = vld [vmem:[%s262 + $0x444] sm:%s255]
                %291 = vst [vmem:[%s263 + $0x9c] sm:%s255] %v290
                %v292 = vld [vmem:[%s262 + $0x498] sm:%s255]
                %293 = vst [vmem:[%s263 + $0xa8] sm:%s255] %v292
                %v294 = vld [vmem:[%s262 + $0x4ec] sm:%s255]
                %295 = vst [vmem:[%s263 + $0xb4] sm:%s255] %v294
                %v296 = vld [vmem:[%s262 + $0x540] sm:%s255]
                %297 = vst [vmem:[%s263 + $0xc0] sm:%s255] %v296
                %v298 = vld [vmem:[%s262 + $0x594] sm:%s255]
                %299 = vst [vmem:[%s263 + $0xcc] sm:%s255] %v298
                %v300 = vld [vmem:[%s262 + $0x5e8] sm:%s255]
                %301 = vst [vmem:[%s263 + $0xd8] sm:%s255] %v300
                %v302 = vld [vmem:[%s262 + $0x63c] sm:%s255]
                %303 = vst [vmem:[%s263 + $0xe4] sm:%s255] %v302
                %v304 = vld [vmem:[%s262 + $0x690] sm:%s255]
                %305 = vst [vmem:[%s263 + $0xf0] sm:%s255] %v304
                %v306 = vld [vmem:[%s262 + $0x6e4] sm:%s255]
                %307 = vst [vmem:[%s263 + $0xfc] sm:%s255] %v306
                %v308 = vld [vmem:[%s262 + $0x738] sm:%s255]
                %309 = vst [vmem:[%s263 + $0x108] sm:%s255] %v308
                %v310 = vld [vmem:[%s262 + $0x78c] sm:%s255]
                %311 = vst [vmem:[%s263 + $0x114] sm:%s255] %v310
                %v312 = vld [vmem:[%s262 + $0x7e0] sm:%s255]
                %313 = vst [vmem:[%s263 + $0x120] sm:%s255] %v312
                %v314 = vld [vmem:[%s262 + $0x834] sm:%s255]
                %315 = vst [vmem:[%s263 + $0x12c] sm:%s255] %v314
                %v316 = vld [vmem:[%s262 + $0x888] sm:%s255]
                %317 = vst [vmem:[%s263 + $0x138] sm:%s255] %v316
                %v318 = vld [vmem:[%s262 + $0x8dc] sm:%s255]
                %319 = vst [vmem:[%s263 + $0x144] sm:%s255] %v318
                %v320 = vld [vmem:[%s262 + $0x930] sm:%s255]
                %321 = vst [vmem:[%s263 + $0x150] sm:%s255] %v320
                %v322 = vld [vmem:[%s262 + $0x984] sm:%s255]
                %323 = vst [vmem:[%s263 + $0x15c] sm:%s255] %v322
                %v324 = vld [vmem:[%s262 + $0x9d8] sm:%s255]
                %325 = vst [vmem:[%s263 + $0x168] sm:%s255] %v324
                %v326 = vld [vmem:[%s262 + $0xa2c] sm:%s255]
                %327 = vst [vmem:[%s263 + $0x174] sm:%s255] %v326
              $region44: #{_lambda_.43} parent=31 // loop_footer
                %s261 = sadd.s32 1, %s257
              $region45: #{_lambda_.43} parent=31 // loop_footer_branch
                %256 = sbr.rel target = $region41
              $region46: #{_lambda_.43} parent=31 // loop_exit
                _
            $region32: #{_lambda_.43} parent=27 // pred_fallthru
              _
          $region28: #{_lambda_.43} parent=23 // pred_fallthru
            _
          %328 = vnop
        $region24: #{_lambda_.43} parent=19 // pred_fallthru
          _
        // Predicated region
        $region47: #{_lambda_.43} parent=19 // pred_check
          %p329 = pneg %p78
        $region48: #{_lambda_.43} parent=19 // pred_check_branch
          %331 = sbr.rel (%p329) target = $region50
        $region49: #{_lambda_.43} parent=19 // pred_region
          %s332 = smul.u32 48, %s18
          %p333 = scmp.lt.s32.totalorder %s332, 335
          %s334 = scalar_select %p333, %s332, 335
          %p335 = scmp.lt.s32.totalorder %s17, 0
          %s336 = scalar_select %p335, %s17, 0
          %s337 = sadd.s32 %s336, %s334
          %s338 = smul.addr %s337, 4
          %s339 = scalar_lea.vmem %s1, %s338
          %s340 = smul.u32 48, %s18
        $region50: #{_lambda_.43} parent=19 // pred_fallthru
          _
      $region20: #{_lambda_.43} parent=5 // pred_fallthru
        _
      %p341 = scmp.le.s32.totalorder 1, %s9
      %p342 = scmp.lt.s32.totalorder %s9, 15
      %p343 = pnand %p341, %p342
      %p344 = pneg %p343
      // Predicated region
      $region51: #{_lambda_.43} parent=5 // pred_check
        _
      $region52: #{_lambda_.43} parent=5 // pred_check_branch
        %346 = sbr.rel (%p343) target = $region54
      $region53: #{_lambda_.43} parent=5 // pred_region
        %s347 = ssub.s32 %s9, 1
        %s348 = sand.u32 %s43, 1
        %s349 = sand.u32 %s43, 1
        %s350 = smul.addr %s349, 384
        %s351 = scalar_lea.vmem [#allocation3], %s350
        // Predicated region
        $region55: #{_lambda_.43} parent=53 // pred_check
          %p352 = pneg %p56
        $region56: #{_lambda_.43} parent=53 // pred_check_branch
          %354 = sbr.rel (%p352) target = $region58
        $region57: #{_lambda_.43} parent=53 // pred_region
          _
        $region58: #{_lambda_.43} parent=53 // pred_fallthru
          _
        %s355 = sand.u32 %s43, 1
        %s356 = sand.u32 %s43, 1
        %s357 = smul.addr %s356, 384
        %s358 = scalar_lea.vmem [#allocation3], %s357
        %p359 = pneg %p56
        %p360 = pneg %p53
        %s361 = smul.u32 48, %s21
        %p362 = scmp.lt.s32.totalorder %s361, 335
        %s363 = scalar_select %p362, %s361, 335
        %p364 = scmp.lt.s32.totalorder %s20, 0
        %s365 = scalar_select %p364, %s20, 0
        %s366 = sadd.s32 %s365, %s363
        %s367 = smul.addr %s366, 4
        %s368 = scalar_lea.vmem %s1, %s367
        %p369 = pneg %p84
        %p370 = pneg %p81
        %p371 = scmp.lt.s32.totalorder %s20, 0
        %s372 = scalar_select %p371, %s20, 0
        %s373 = scalar_lea.vmem %s2, %s372
        %p374 = pneg %p110
        %p375 = pneg %p107
        %p376 = pneg %p138
        %p377 = pneg %p135
        %s378 = smul.u32 32, %s19
        %p379 = scmp.lt.s32.totalorder %s378, 63
        %s380 = scalar_select %p379, %s378, 63
        %p381 = scmp.lt.s32.totalorder %s20, 0
        %s382 = scalar_select %p381, %s20, 0
        %s383 = sadd.s32 %s382, %s380
        %s384 = smul.addr %s383, 8
        %s385 = scalar_lea.vmem %s3, %s384
        %s386 = smul.u32 32, %s19
        %s387 = smul.u32 3, %s21
        %s388 = smul.u32 48, %s21
        %p389 = scmp.lt.s32.totalorder %s388, 335
        %s390 = scalar_select %p389, %s388, 335
        %p391 = scmp.lt.s32.totalorder %s20, 0
        %s392 = scalar_select %p391, %s20, 0
        %s393 = sadd.s32 %s392, %s390
        %s394 = smul.addr %s393, 4
        %s395 = scalar_lea.vmem %s1, %s394
        %s396 = smul.u32 48, %s21
        %p397 = scmp.lt.s32.totalorder %s20, 0
        %s398 = scalar_select %p397, %s20, 0
        %s399 = scalar_lea.vmem %s2, %s398
        %s400 = smul.u32 32, %s19
        %p401 = scmp.lt.s32.totalorder %s400, 63
        %s402 = scalar_select %p401, %s400, 63
        %p403 = scmp.lt.s32.totalorder %s20, 0
        %s404 = scalar_select %p403, %s20, 0
        %s405 = sadd.s32 %s404, %s402
        %s406 = smul.addr %s405, 8
        %s407 = scalar_lea.vmem %s3, %s406
        %s408 = smul.u32 32, %s19
        %p410 = scmp.eq.s32.totalorder %s21, 0
        // Predicated region
        $region59: #{_lambda_.43} parent=53 // pred_check
          %p411 = pneg %p410
        $region60: #{_lambda_.43} parent=53 // pred_check_branch
          %413 = sbr.rel (%p411) target = $region62
        $region61: #{_lambda_.43} parent=53 // pred_region
          %414 = vst [vmem:[#allocation2] sm:$0xff] 0.0
          %415 = vst [vmem:[#allocation2 + $0x8] sm:$0xff] 0.0
          %416 = vst [vmem:[#allocation2 + $0x10] sm:$0xff] 0.0
          %417 = vst [vmem:[#allocation2 + $0x18] sm:$0xff] 0.0
          %418 = vst [vmem:[#allocation2 + $0x20] sm:$0xff] 0.0
          %419 = vst [vmem:[#allocation2 + $0x28] sm:$0xff] 0.0
          %420 = vst [vmem:[#allocation2 + $0x30] sm:$0xff] 0.0
          %421 = vst [vmem:[#allocation2 + $0x38] sm:$0xff] 0.0
          %422 = vst [vmem:[#allocation2 + $0x40] sm:$0xff] 0.0
          %423 = vst [vmem:[#allocation2 + $0x48] sm:$0xff] 0.0
          %424 = vst [vmem:[#allocation2 + $0x50] sm:$0xff] 0.0
          %425 = vst [vmem:[#allocation2 + $0x58] sm:$0xff] 0.0
          %426 = vst [vmem:[#allocation2 + $0x60] sm:$0xff] 0.0
          %427 = vst [vmem:[#allocation2 + $0x68] sm:$0xff] 0.0
          %428 = vst [vmem:[#allocation2 + $0x70] sm:$0xff] 0.0
          %429 = vst [vmem:[#allocation2 + $0x78] sm:$0xff] 0.0
          %430 = vst [vmem:[#allocation2 + $0x80] sm:$0xff] 0.0
          %431 = vst [vmem:[#allocation2 + $0x88] sm:$0xff] 0.0
          %432 = vst [vmem:[#allocation2 + $0x90] sm:$0xff] 0.0
          %433 = vst [vmem:[#allocation2 + $0x98] sm:$0xff] 0.0
          %434 = vst [vmem:[#allocation2 + $0xa0] sm:$0xff] 0.0
          %435 = vst [vmem:[#allocation2 + $0xa8] sm:$0xff] 0.0
          %436 = vst [vmem:[#allocation2 + $0xb0] sm:$0xff] 0.0
          %437 = vst [vmem:[#allocation2 + $0xb8] sm:$0xff] 0.0
          %438 = vst [vmem:[#allocation2 + $0xc0] sm:$0xff] 0.0
          %439 = vst [vmem:[#allocation2 + $0xc8] sm:$0xff] 0.0
          %440 = vst [vmem:[#allocation2 + $0xd0] sm:$0xff] 0.0
          %441 = vst [vmem:[#allocation2 + $0xd8] sm:$0xff] 0.0
          %442 = vst [vmem:[#allocation2 + $0xe0] sm:$0xff] 0.0
          %443 = vst [vmem:[#allocation2 + $0xe8] sm:$0xff] 0.0
          %444 = vst [vmem:[#allocation2 + $0xf0] sm:$0xff] 0.0
          %445 = vst [vmem:[#allocation2 + $0xf8] sm:$0xff] 0.0
        $region62: #{_lambda_.43} parent=53 // pred_fallthru
          _
        %v446 = vld [vmem:[#allocation2] sm:$0xff]
        %v447 = vld [vmem:[#allocation2 + $0x8] sm:$0xff]
        %v448 = vld [vmem:[#allocation2 + $0x10] sm:$0xff]
        %v449 = vld [vmem:[#allocation2 + $0x18] sm:$0xff]
        %v450 = vld [vmem:[#allocation2 + $0x20] sm:$0xff]
        %v451 = vld [vmem:[#allocation2 + $0x28] sm:$0xff]
        %v452 = vld [vmem:[#allocation2 + $0x30] sm:$0xff]
        %v453 = vld [vmem:[#allocation2 + $0x38] sm:$0xff]
        %v454 = vld [vmem:[#allocation2 + $0x40] sm:$0xff]
        %v455 = vld [vmem:[#allocation2 + $0x48] sm:$0xff]
        %v456 = vld [vmem:[#allocation2 + $0x50] sm:$0xff]
        %v457 = vld [vmem:[#allocation2 + $0x58] sm:$0xff]
        %v458 = vld [vmem:[#allocation2 + $0x60] sm:$0xff]
        %v459 = vld [vmem:[#allocation2 + $0x68] sm:$0xff]
        %v460 = vld [vmem:[#allocation2 + $0x70] sm:$0xff]
        %v461 = vld [vmem:[#allocation2 + $0x78] sm:$0xff]
        %v462 = vld [vmem:[#allocation2 + $0x80] sm:$0xff]
        %v463 = vld [vmem:[#allocation2 + $0x88] sm:$0xff]
        %v464 = vld [vmem:[#allocation2 + $0x90] sm:$0xff]
        %v465 = vld [vmem:[#allocation2 + $0x98] sm:$0xff]
        %v466 = vld [vmem:[#allocation2 + $0xa0] sm:$0xff]
        %v467 = vld [vmem:[#allocation2 + $0xa8] sm:$0xff]
        %v468 = vld [vmem:[#allocation2 + $0xb0] sm:$0xff]
        %v469 = vld [vmem:[#allocation2 + $0xb8] sm:$0xff]
        %v470 = vld [vmem:[#allocation2 + $0xc0] sm:$0xff]
        %v471 = vld [vmem:[#allocation2 + $0xc8] sm:$0xff]
        %v472 = vld [vmem:[#allocation2 + $0xd0] sm:$0xff]
        %v473 = vld [vmem:[#allocation2 + $0xd8] sm:$0xff]
        %v474 = vld [vmem:[#allocation2 + $0xe0] sm:$0xff]
        %v475 = vld [vmem:[#allocation2 + $0xe8] sm:$0xff]
        %v476 = vld [vmem:[#allocation2 + $0xf0] sm:$0xff]
        %v477 = vld [vmem:[#allocation2 + $0xf8] sm:$0xff]
        %v478 = vld [vmem:[%s351] sm:$0xff]
        %v479 = vld [vmem:[%s351 + $0x8] sm:$0xf]
        %v480 = vld [vmem:[%s351 + $0xc] sm:$0xff]
        %v481 = vld [vmem:[%s351 + $0x14] sm:$0xf]
        %v482 = vld [vmem:[%s351 + $0x18] sm:$0xff]
        %v483 = vld [vmem:[%s351 + $0x20] sm:$0xf]
        %v484 = vld [vmem:[%s351 + $0x24] sm:$0xff]
        %v485 = vld [vmem:[%s351 + $0x2c] sm:$0xf]
        %v486 = vld [vmem:[%s351 + $0x30] sm:$0xff]
        %v487 = vld [vmem:[%s351 + $0x38] sm:$0xf]
        %v488 = vld [vmem:[%s351 + $0x3c] sm:$0xff]
        %v489 = vld [vmem:[%s351 + $0x44] sm:$0xf]
        %v490 = vld [vmem:[%s351 + $0x48] sm:$0xff]
        %v491 = vld [vmem:[%s351 + $0x50] sm:$0xf]
        %v492 = vld [vmem:[%s351 + $0x54] sm:$0xff]
        %v493 = vld [vmem:[%s351 + $0x5c] sm:$0xf]
        %v494 = vld [vmem:[%s351 + $0x60] sm:$0xff]
        %v495 = vld [vmem:[%s351 + $0x68] sm:$0xf]
        %v496 = vld [vmem:[%s351 + $0x6c] sm:$0xff]
        %v497 = vld [vmem:[%s351 + $0x74] sm:$0xf]
        %v498 = vld [vmem:[%s351 + $0x78] sm:$0xff]
        %v499 = vld [vmem:[%s351 + $0x80] sm:$0xf]
        %v500 = vld [vmem:[%s351 + $0x84] sm:$0xff]
        %v501 = vld [vmem:[%s351 + $0x8c] sm:$0xf]
        %v502 = vld [vmem:[%s351 + $0x90] sm:$0xff]
        %v503 = vld [vmem:[%s351 + $0x98] sm:$0xf]
        %v504 = vld [vmem:[%s351 + $0x9c] sm:$0xff]
        %v505 = vld [vmem:[%s351 + $0xa4] sm:$0xf]
        %v506 = vld [vmem:[%s351 + $0xa8] sm:$0xff]
        %v507 = vld [vmem:[%s351 + $0xb0] sm:$0xf]
        %v508 = vld [vmem:[%s351 + $0xb4] sm:$0xff]
        %v509 = vld [vmem:[%s351 + $0xbc] sm:$0xf]
        %v510 = vld [vmem:[%s351 + $0xc0] sm:$0xff]
        %v511 = vld [vmem:[%s351 + $0xc8] sm:$0xf]
        %v512 = vld [vmem:[%s351 + $0xcc] sm:$0xff]
        %v513 = vld [vmem:[%s351 + $0xd4] sm:$0xf]
        %v514 = vld [vmem:[%s351 + $0xd8] sm:$0xff]
        %v515 = vld [vmem:[%s351 + $0xe0] sm:$0xf]
        %v516 = vld [vmem:[%s351 + $0xe4] sm:$0xff]
        %v517 = vld [vmem:[%s351 + $0xec] sm:$0xf]
        %v518 = vld [vmem:[%s351 + $0xf0] sm:$0xff]
        %v519 = vld [vmem:[%s351 + $0xf8] sm:$0xf]
        %v520 = vld [vmem:[%s351 + $0xfc] sm:$0xff]
        %v521 = vld [vmem:[%s351 + $0x104] sm:$0xf]
        %v522 = vld [vmem:[%s351 + $0x108] sm:$0xff]
        %v523 = vld [vmem:[%s351 + $0x110] sm:$0xf]
        %v524 = vld [vmem:[%s351 + $0x114] sm:$0xff]
        %v525 = vld [vmem:[%s351 + $0x11c] sm:$0xf]
        %v526 = vld [vmem:[%s351 + $0x120] sm:$0xff]
        %v527 = vld [vmem:[%s351 + $0x128] sm:$0xf]
        %v528 = vld [vmem:[%s351 + $0x12c] sm:$0xff]
        %v529 = vld [vmem:[%s351 + $0x134] sm:$0xf]
        %v530 = vld [vmem:[%s351 + $0x138] sm:$0xff]
        %v531 = vld [vmem:[%s351 + $0x140] sm:$0xf]
        %v532 = vld [vmem:[%s351 + $0x144] sm:$0xff]
        %v533 = vld [vmem:[%s351 + $0x14c] sm:$0xf]
        %v534 = vld [vmem:[%s351 + $0x150] sm:$0xff]
        %v535 = vld [vmem:[%s351 + $0x158] sm:$0xf]
        %v536 = vld [vmem:[%s351 + $0x15c] sm:$0xff]
        %v537 = vld [vmem:[%s351 + $0x164] sm:$0xf]
        %v538 = vld [vmem:[%s351 + $0x168] sm:$0xff]
        %v539 = vld [vmem:[%s351 + $0x170] sm:$0xf]
        %v540 = vld [vmem:[%s351 + $0x174] sm:$0xff]
        %v541 = vld [vmem:[%s351 + $0x17c] sm:$0xf]
        %v542 = vld [vmem:[%s395] sm:$0xf]
        %v543 = vld [vmem:[%s395 + $0x4] sm:$0xf]
        %v544 = vld [vmem:[%s395 + $0x8] sm:$0xf]
        %v545 = vld [vmem:[%s395 + $0xc] sm:$0xf]
        %v546 = vld [vmem:[%s395 + $0x10] sm:$0xf]
        %v547 = vld [vmem:[%s395 + $0x14] sm:$0xf]
        %v548 = vld [vmem:[%s395 + $0x18] sm:$0xf]
        %v549 = vld [vmem:[%s395 + $0x1c] sm:$0xf]
        %v550 = vld [vmem:[%s395 + $0x20] sm:$0xf]
        %v551 = vld [vmem:[%s395 + $0x24] sm:$0xf]
        %v552 = vld [vmem:[%s395 + $0x28] sm:$0xf]
        %v553 = vld [vmem:[%s395 + $0x2c] sm:$0xf]
        %v554 = vld [vmem:[%s395 + $0x30] sm:$0xf]
        %v555 = vld [vmem:[%s395 + $0x34] sm:$0xf]
        %v556 = vld [vmem:[%s395 + $0x38] sm:$0xf]
        %v557 = vld [vmem:[%s395 + $0x3c] sm:$0xf]
        %v558 = vld [vmem:[%s395 + $0x40] sm:$0xf]
        %v559 = vld [vmem:[%s395 + $0x44] sm:$0xf]
        %v560 = vld [vmem:[%s395 + $0x48] sm:$0xf]
        %v561 = vld [vmem:[%s395 + $0x4c] sm:$0xf]
        %v562 = vld [vmem:[%s395 + $0x50] sm:$0xf]
        %v563 = vld [vmem:[%s395 + $0x54] sm:$0xf]
        %v564 = vld [vmem:[%s395 + $0x58] sm:$0xf]
        %v565 = vld [vmem:[%s395 + $0x5c] sm:$0xf]
        %v566 = vld [vmem:[%s395 + $0x60] sm:$0xf]
        %v567 = vld [vmem:[%s395 + $0x64] sm:$0xf]
        %v568 = vld [vmem:[%s395 + $0x68] sm:$0xf]
        %v569 = vld [vmem:[%s395 + $0x6c] sm:$0xf]
        %v570 = vld [vmem:[%s395 + $0x70] sm:$0xf]
        %v571 = vld [vmem:[%s395 + $0x74] sm:$0xf]
        %v572 = vld [vmem:[%s395 + $0x78] sm:$0xf]
        %v573 = vld [vmem:[%s395 + $0x7c] sm:$0xf]
        %v574 = vld [vmem:[%s395 + $0x80] sm:$0xf]
        %v575 = vld [vmem:[%s395 + $0x84] sm:$0xf]
        %v576 = vld [vmem:[%s395 + $0x88] sm:$0xf]
        %v577 = vld [vmem:[%s395 + $0x8c] sm:$0xf]
        %v578 = vld [vmem:[%s395 + $0x90] sm:$0xf]
        %v579 = vld [vmem:[%s395 + $0x94] sm:$0xf]
        %v580 = vld [vmem:[%s395 + $0x98] sm:$0xf]
        %v581 = vld [vmem:[%s395 + $0x9c] sm:$0xf]
        %v582 = vld [vmem:[%s395 + $0xa0] sm:$0xf]
        %v583 = vld [vmem:[%s395 + $0xa4] sm:$0xf]
        %v584 = vld [vmem:[%s395 + $0xa8] sm:$0xf]
        %v585 = vld [vmem:[%s395 + $0xac] sm:$0xf]
        %v586 = vld [vmem:[%s395 + $0xb0] sm:$0xf]
        %v587 = vld [vmem:[%s395 + $0xb4] sm:$0xf]
        %v588 = vld [vmem:[%s395 + $0xb8] sm:$0xf]
        %v589 = vld [vmem:[%s395 + $0xbc] sm:$0xf]
        %v654 = vunpack.c.l.b16 %v478
        %v655 = vunpack.c.h.b16 %v478
        %v656 = vunpack.c.l.b16 %v479
        %v657 = vunpack.c.l.b16 %v480
        %v658 = vunpack.c.h.b16 %v480
        %v659 = vunpack.c.l.b16 %v481
        %v660 = vunpack.c.l.b16 %v482
        %v661 = vunpack.c.h.b16 %v482
        %v662 = vunpack.c.l.b16 %v483
        %v663 = vunpack.c.l.b16 %v484
        %v664 = vunpack.c.h.b16 %v484
        %v665 = vunpack.c.l.b16 %v485
        %v666 = vunpack.c.l.b16 %v486
        %v667 = vunpack.c.h.b16 %v486
        %v668 = vunpack.c.l.b16 %v487
        %v669 = vunpack.c.l.b16 %v488
        %v670 = vunpack.c.h.b16 %v488
        %v671 = vunpack.c.l.b16 %v489
        %v672 = vunpack.c.l.b16 %v490
        %v673 = vunpack.c.h.b16 %v490
        %v674 = vunpack.c.l.b16 %v491
        %v675 = vunpack.c.l.b16 %v492
        %v676 = vunpack.c.h.b16 %v492
        %v677 = vunpack.c.l.b16 %v493
        %v678 = vunpack.c.l.b16 %v494
        %v679 = vunpack.c.h.b16 %v494
        %v680 = vunpack.c.l.b16 %v495
        %v681 = vunpack.c.l.b16 %v496
        %v682 = vunpack.c.h.b16 %v496
        %v683 = vunpack.c.l.b16 %v497
        %v684 = vunpack.c.l.b16 %v498
        %v685 = vunpack.c.h.b16 %v498
        %v686 = vunpack.c.l.b16 %v499
        %v687 = vunpack.c.l.b16 %v500
        %v688 = vunpack.c.h.b16 %v500
        %v689 = vunpack.c.l.b16 %v501
        %v690 = vunpack.c.l.b16 %v502
        %v691 = vunpack.c.h.b16 %v502
        %v692 = vunpack.c.l.b16 %v503
        %v693 = vunpack.c.l.b16 %v504
        %v694 = vunpack.c.h.b16 %v504
        %v695 = vunpack.c.l.b16 %v505
        %v696 = vunpack.c.l.b16 %v506
        %v697 = vunpack.c.h.b16 %v506
        %v698 = vunpack.c.l.b16 %v507
        %v699 = vunpack.c.l.b16 %v508
        %v700 = vunpack.c.h.b16 %v508
        %v701 = vunpack.c.l.b16 %v509
        %v702 = vunpack.c.l.b16 %v510
        %v703 = vunpack.c.h.b16 %v510
        %v704 = vunpack.c.l.b16 %v511
        %v705 = vunpack.c.l.b16 %v512
        %v706 = vunpack.c.h.b16 %v512
        %v707 = vunpack.c.l.b16 %v513
        %v708 = vunpack.c.l.b16 %v514
        %v709 = vunpack.c.h.b16 %v514
        %v710 = vunpack.c.l.b16 %v515
        %v711 = vunpack.c.l.b16 %v516
        %v712 = vunpack.c.h.b16 %v516
        %v713 = vunpack.c.l.b16 %v517
        %v714 = vunpack.c.l.b16 %v518
        %v715 = vunpack.c.h.b16 %v518
        %v716 = vunpack.c.l.b16 %v519
        %v717 = vunpack.c.l.b16 %v520
        %v718 = vunpack.c.h.b16 %v520
        %v719 = vunpack.c.l.b16 %v521
        %v720 = vunpack.c.l.b16 %v522
        %v721 = vunpack.c.h.b16 %v522
        %v722 = vunpack.c.l.b16 %v523
        %v723 = vunpack.c.l.b16 %v524
        %v724 = vunpack.c.h.b16 %v524
        %v725 = vunpack.c.l.b16 %v525
        %v726 = vunpack.c.l.b16 %v526
        %v727 = vunpack.c.h.b16 %v526
        %v728 = vunpack.c.l.b16 %v527
        %v729 = vunpack.c.l.b16 %v528
        %v730 = vunpack.c.h.b16 %v528
        %v731 = vunpack.c.l.b16 %v529
        %v732 = vunpack.c.l.b16 %v530
        %v733 = vunpack.c.h.b16 %v530
        %v734 = vunpack.c.l.b16 %v531
        %v735 = vunpack.c.l.b16 %v532
        %v736 = vunpack.c.h.b16 %v532
        %v737 = vunpack.c.l.b16 %v533
        %v738 = vunpack.c.l.b16 %v534
        %v739 = vunpack.c.h.b16 %v534
        %v740 = vunpack.c.l.b16 %v535
        %v741 = vunpack.c.l.b16 %v536
        %v742 = vunpack.c.h.b16 %v536
        %v743 = vunpack.c.l.b16 %v537
        %v744 = vunpack.c.l.b16 %v538
        %v745 = vunpack.c.h.b16 %v538
        %v746 = vunpack.c.l.b16 %v539
        %v747 = vunpack.c.l.b16 %v540
        %v748 = vunpack.c.h.b16 %v540
        %v749 = vunpack.c.l.b16 %v541
        %v750 = vpack.c.b16 %v657, %v654
        %v751 = vpack.c.b16 %v658, %v655
        %v752 = vpack.c.b16 %v659, %v656
        %v753 = vpack.c.b16 %v663, %v660
        %v754 = vpack.c.b16 %v664, %v661
        %v755 = vpack.c.b16 %v665, %v662
        %v756 = vpack.c.b16 %v669, %v666
        %v757 = vpack.c.b16 %v670, %v667
        %v758 = vpack.c.b16 %v671, %v668
        %v759 = vpack.c.b16 %v675, %v672
        %v760 = vpack.c.b16 %v676, %v673
        %v761 = vpack.c.b16 %v677, %v674
        %v762 = vpack.c.b16 %v681, %v678
        %v763 = vpack.c.b16 %v682, %v679
        %v764 = vpack.c.b16 %v683, %v680
        %v765 = vpack.c.b16 %v687, %v684
        %v766 = vpack.c.b16 %v688, %v685
        %v767 = vpack.c.b16 %v689, %v686
        %v768 = vpack.c.b16 %v693, %v690
        %v769 = vpack.c.b16 %v694, %v691
        %v770 = vpack.c.b16 %v695, %v692
        %v771 = vpack.c.b16 %v699, %v696
        %v772 = vpack.c.b16 %v700, %v697
        %v773 = vpack.c.b16 %v701, %v698
        %v774 = vpack.c.b16 %v705, %v702
        %v775 = vpack.c.b16 %v706, %v703
        %v776 = vpack.c.b16 %v707, %v704
        %v777 = vpack.c.b16 %v711, %v708
        %v778 = vpack.c.b16 %v712, %v709
        %v779 = vpack.c.b16 %v713, %v710
        %v780 = vpack.c.b16 %v717, %v714
        %v781 = vpack.c.b16 %v718, %v715
        %v782 = vpack.c.b16 %v719, %v716
        %v783 = vpack.c.b16 %v723, %v720
        %v784 = vpack.c.b16 %v724, %v721
        %v785 = vpack.c.b16 %v725, %v722
        %v786 = vpack.c.b16 %v729, %v726
        %v787 = vpack.c.b16 %v730, %v727
        %v788 = vpack.c.b16 %v731, %v728
        %v789 = vpack.c.b16 %v735, %v732
        %v790 = vpack.c.b16 %v736, %v733
        %v791 = vpack.c.b16 %v737, %v734
        %v792 = vpack.c.b16 %v741, %v738
        %v793 = vpack.c.b16 %v742, %v739
        %v794 = vpack.c.b16 %v743, %v740
        %v795 = vpack.c.b16 %v747, %v744
        %v796 = vpack.c.b16 %v748, %v745
        %v797 = vpack.c.b16 %v749, %v746
        %v894 = vunpack.c.l.b16 %v542
        %v895 = vunpack.c.l.b16 %v543
        %v896 = vunpack.c.l.b16 %v544
        %v897 = vunpack.c.l.b16 %v545
        %v898 = vunpack.c.l.b16 %v546
        %v899 = vunpack.c.l.b16 %v547
        %v900 = vunpack.c.l.b16 %v548
        %v901 = vunpack.c.l.b16 %v549
        %v902 = vunpack.c.l.b16 %v550
        %v903 = vunpack.c.l.b16 %v551
        %v904 = vunpack.c.l.b16 %v552
        %v905 = vunpack.c.l.b16 %v553
        %v906 = vunpack.c.l.b16 %v554
        %v907 = vunpack.c.l.b16 %v555
        %v908 = vunpack.c.l.b16 %v556
        %v909 = vunpack.c.l.b16 %v557
        %v910 = vunpack.c.l.b16 %v558
        %v911 = vunpack.c.l.b16 %v559
        %v912 = vunpack.c.l.b16 %v560
        %v913 = vunpack.c.l.b16 %v561
        %v914 = vunpack.c.l.b16 %v562
        %v915 = vunpack.c.l.b16 %v563
        %v916 = vunpack.c.l.b16 %v564
        %v917 = vunpack.c.l.b16 %v565
        %v918 = vunpack.c.l.b16 %v566
        %v919 = vunpack.c.l.b16 %v567
        %v920 = vunpack.c.l.b16 %v568
        %v921 = vunpack.c.l.b16 %v569
        %v922 = vunpack.c.l.b16 %v570
        %v923 = vunpack.c.l.b16 %v571
        %v924 = vunpack.c.l.b16 %v572
        %v925 = vunpack.c.l.b16 %v573
        %v926 = vunpack.c.l.b16 %v574
        %v927 = vunpack.c.l.b16 %v575
        %v928 = vunpack.c.l.b16 %v576
        %v929 = vunpack.c.l.b16 %v577
        %v930 = vunpack.c.l.b16 %v578
        %v931 = vunpack.c.l.b16 %v579
        %v932 = vunpack.c.l.b16 %v580
        %v933 = vunpack.c.l.b16 %v581
        %v934 = vunpack.c.l.b16 %v582
        %v935 = vunpack.c.l.b16 %v583
        %v936 = vunpack.c.l.b16 %v584
        %v937 = vunpack.c.l.b16 %v585
        %v938 = vunpack.c.l.b16 %v586
        %v939 = vunpack.c.l.b16 %v587
        %v940 = vunpack.c.l.b16 %v588
        %v941 = vunpack.c.l.b16 %v589
        %v942 = vpack.c.b16 %v895, %v894
        %v943 = vpack.c.b16 %v897, %v896
        %v944 = vpack.c.b16 %v899, %v898
        %v945 = vpack.c.b16 %v901, %v900
        %v946 = vpack.c.b16 %v903, %v902
        %v947 = vpack.c.b16 %v905, %v904
        %v948 = vpack.c.b16 %v907, %v906
        %v949 = vpack.c.b16 %v909, %v908
        %v950 = vpack.c.b16 %v911, %v910
        %v951 = vpack.c.b16 %v913, %v912
        %v952 = vpack.c.b16 %v915, %v914
        %v953 = vpack.c.b16 %v917, %v916
        %v954 = vpack.c.b16 %v919, %v918
        %v955 = vpack.c.b16 %v921, %v920
        %v956 = vpack.c.b16 %v923, %v922
        %v957 = vpack.c.b16 %v925, %v924
        %v958 = vpack.c.b16 %v927, %v926
        %v959 = vpack.c.b16 %v929, %v928
        %v960 = vpack.c.b16 %v931, %v930
        %v961 = vpack.c.b16 %v933, %v932
        %v962 = vpack.c.b16 %v935, %v934
        %v963 = vpack.c.b16 %v937, %v936
        %v964 = vpack.c.b16 %v939, %v938
        %v965 = vpack.c.b16 %v941, %v940
        %990 = vmatprep.subr.bf16.mxu0 0
        %991 = vmatpush1.bf16.msra.mxu0 %v949
        %992 = vmatprep.subr.bf16.mxu0 0
        %993 = vmatpush1.bf16.msra.mxu0 %v948
        %994 = vmatprep.subr.bf16.mxu0 0
        %995 = vmatpush1.bf16.msra.mxu0 %v947
        %996 = vmatprep.subr.bf16.mxu0 0
        %997 = vmatpush1.bf16.msra.mxu0 %v946
        %998 = vmatprep.subr.bf16.mxu0 0
        %999 = vmatpush1.bf16.msra.mxu0 %v945
        %1000 = vmatprep.subr.bf16.mxu0 0
        %1001 = vmatpush1.bf16.msra.mxu0 %v944
        %1002 = vmatprep.subr.bf16.mxu0 0
        %1003 = vmatpush1.bf16.msra.mxu0 %v943
        %1004 = vmatprep.subr.bf16.mxu0 0
        %1005 = vmatpush1.bf16.msra.mxu0 %v942
        %1006 = vmatprep.subr.bf16.mxu0 0
        %1007 = vmatpush2.bf16.msra.mxu0 %v957
        %1008 = vmatprep.subr.bf16.mxu0 0
        %1009 = vmatpush2.bf16.msra.mxu0 %v956
        %1010 = vmatprep.subr.bf16.mxu0 0
        %1011 = vmatpush2.bf16.msra.mxu0 %v955
        %1012 = vmatprep.subr.bf16.mxu0 0
        %1013 = vmatpush2.bf16.msra.mxu0 %v954
        %1014 = vmatprep.subr.bf16.mxu0 0
        %1015 = vmatpush2.bf16.msra.mxu0 %v953
        %1016 = vmatprep.subr.bf16.mxu0 0
        %1017 = vmatpush2.bf16.msra.mxu0 %v952
        %1018 = vmatprep.subr.bf16.mxu0 0
        %1019 = vmatpush2.bf16.msra.mxu0 %v951
        %1020 = vmatprep.subr.bf16.mxu0 0
        %1021 = vmatpush2.bf16.msra.mxu0 %v950
        %1022 = vmatprep.mubr.bf16.mxu0 %v751
        %1023 = vmatmul.mubr.bf16.gmra.mxu0 %v750
        %v1024 = vpop.f32.mrf.mxu0
        %v1025 = vadd.f32 0.0, %v1024
        %v1026 = vpop.f32.mrf.mxu0
        %v1027 = vpop.f32.mrf.mxu0
        %v1028 = vadd.f32 0.0, %v1027
        %v1029 = vpop.f32.mrf.mxu0
        %1030 = vmatprep.mubr.bf16.mxu0 %v754
        %1031 = vmatmul.mubr.bf16.gmra.mxu0 %v753
        %v1032 = vpop.f32.mrf.mxu0
        %v1033 = vadd.f32 0.0, %v1032
        %v1034 = vpop.f32.mrf.mxu0
        %v1035 = vpop.f32.mrf.mxu0
        %v1036 = vadd.f32 0.0, %v1035
        %v1037 = vpop.f32.mrf.mxu0
        %1038 = vmatprep.mubr.bf16.mxu0 %v757
        %1039 = vmatmul.mubr.bf16.gmra.mxu0 %v756
        %v1040 = vpop.f32.mrf.mxu0
        %v1041 = vadd.f32 0.0, %v1040
        %v1042 = vpop.f32.mrf.mxu0
        %v1043 = vpop.f32.mrf.mxu0
        %v1044 = vadd.f32 0.0, %v1043
        %v1045 = vpop.f32.mrf.mxu0
        %1046 = vmatprep.mubr.bf16.mxu0 %v760
        %1047 = vmatmul.mubr.bf16.gmra.mxu0 %v759
        %v1048 = vpop.f32.mrf.mxu0
        %v1049 = vadd.f32 0.0, %v1048
        %v1050 = vpop.f32.mrf.mxu0
        %v1051 = vpop.f32.mrf.mxu0
        %v1052 = vadd.f32 0.0, %v1051
        %v1053 = vpop.f32.mrf.mxu0
        %1054 = vmatprep.mubr.bf16.mxu0 %v763
        %1055 = vmatmul.mubr.bf16.gmra.mxu0 %v762
        %v1056 = vpop.f32.mrf.mxu0
        %v1057 = vadd.f32 0.0, %v1056
        %v1058 = vpop.f32.mrf.mxu0
        %v1059 = vpop.f32.mrf.mxu0
        %v1060 = vadd.f32 0.0, %v1059
        %v1061 = vpop.f32.mrf.mxu0
        %1062 = vmatprep.mubr.bf16.mxu0 %v766
        %1063 = vmatmul.mubr.bf16.gmra.mxu0 %v765
        %v1064 = vpop.f32.mrf.mxu0
        %v1065 = vadd.f32 0.0, %v1064
        %v1066 = vpop.f32.mrf.mxu0
        %v1067 = vpop.f32.mrf.mxu0
        %v1068 = vadd.f32 0.0, %v1067
        %v1069 = vpop.f32.mrf.mxu0
        %1070 = vmatprep.mubr.bf16.mxu0 %v769
        %1071 = vmatmul.mubr.bf16.gmra.mxu0 %v768
        %v1072 = vpop.f32.mrf.mxu0
        %v1073 = vadd.f32 0.0, %v1072
        %v1074 = vpop.f32.mrf.mxu0
        %v1075 = vpop.f32.mrf.mxu0
        %v1076 = vadd.f32 0.0, %v1075
        %v1077 = vpop.f32.mrf.mxu0
        %1078 = vmatprep.mubr.bf16.mxu0 %v772
        %1079 = vmatmul.mubr.bf16.gmra.mxu0 %v771
        %v1080 = vpop.f32.mrf.mxu0
        %v1081 = vadd.f32 0.0, %v1080
        %v1082 = vpop.f32.mrf.mxu0
        %v1083 = vpop.f32.mrf.mxu0
        %v1084 = vadd.f32 0.0, %v1083
        %v1085 = vpop.f32.mrf.mxu0
        %1086 = vmatprep.mubr.bf16.mxu0 %v775
        %1087 = vmatmul.mubr.bf16.gmra.mxu0 %v774
        %v1088 = vpop.f32.mrf.mxu0
        %v1089 = vadd.f32 0.0, %v1088
        %v1090 = vpop.f32.mrf.mxu0
        %v1091 = vpop.f32.mrf.mxu0
        %v1092 = vadd.f32 0.0, %v1091
        %v1093 = vpop.f32.mrf.mxu0
        %1094 = vmatprep.mubr.bf16.mxu0 %v778
        %1095 = vmatmul.mubr.bf16.gmra.mxu0 %v777
        %v1096 = vpop.f32.mrf.mxu0
        %v1097 = vadd.f32 0.0, %v1096
        %v1098 = vpop.f32.mrf.mxu0
        %v1099 = vpop.f32.mrf.mxu0
        %v1100 = vadd.f32 0.0, %v1099
        %v1101 = vpop.f32.mrf.mxu0
        %1102 = vmatprep.mubr.bf16.mxu0 %v781
        %1103 = vmatmul.mubr.bf16.gmra.mxu0 %v780
        %v1104 = vpop.f32.mrf.mxu0
        %v1105 = vadd.f32 0.0, %v1104
        %v1106 = vpop.f32.mrf.mxu0
        %v1107 = vpop.f32.mrf.mxu0
        %v1108 = vadd.f32 0.0, %v1107
        %v1109 = vpop.f32.mrf.mxu0
        %1110 = vmatprep.mubr.bf16.mxu0 %v784
        %1111 = vmatmul.mubr.bf16.gmra.mxu0 %v783
        %v1112 = vpop.f32.mrf.mxu0
        %v1113 = vadd.f32 0.0, %v1112
        %v1114 = vpop.f32.mrf.mxu0
        %v1115 = vpop.f32.mrf.mxu0
        %v1116 = vadd.f32 0.0, %v1115
        %v1117 = vpop.f32.mrf.mxu0
        %1118 = vmatprep.mubr.bf16.mxu0 %v787
        %1119 = vmatmul.mubr.bf16.gmra.mxu0 %v786
        %v1120 = vpop.f32.mrf.mxu0
        %v1121 = vadd.f32 0.0, %v1120
        %v1122 = vpop.f32.mrf.mxu0
        %v1123 = vpop.f32.mrf.mxu0
        %v1124 = vadd.f32 0.0, %v1123
        %v1125 = vpop.f32.mrf.mxu0
        %1126 = vmatprep.mubr.bf16.mxu0 %v790
        %1127 = vmatmul.mubr.bf16.gmra.mxu0 %v789
        %v1128 = vpop.f32.mrf.mxu0
        %v1129 = vadd.f32 0.0, %v1128
        %v1130 = vpop.f32.mrf.mxu0
        %v1131 = vpop.f32.mrf.mxu0
        %v1132 = vadd.f32 0.0, %v1131
        %v1133 = vpop.f32.mrf.mxu0
        %1134 = vmatprep.mubr.bf16.mxu0 %v793
        %1135 = vmatmul.mubr.bf16.gmra.mxu0 %v792
        %v1136 = vpop.f32.mrf.mxu0
        %v1137 = vadd.f32 0.0, %v1136
        %v1138 = vpop.f32.mrf.mxu0
        %v1139 = vpop.f32.mrf.mxu0
        %v1140 = vadd.f32 0.0, %v1139
        %v1141 = vpop.f32.mrf.mxu0
        %1142 = vmatprep.mubr.bf16.mxu0 %v796
        %1143 = vmatmul.mubr.bf16.gmra.mxu0 %v795
        %v1144 = vpop.f32.mrf.mxu0
        %v1145 = vadd.f32 0.0, %v1144
        %v1146 = vpop.f32.mrf.mxu0
        %v1147 = vpop.f32.mrf.mxu0
        %v1148 = vadd.f32 0.0, %v1147
        %v1149 = vpop.f32.mrf.mxu0
        %1150 = vdwg.mxu0
        %1151 = vmatprep.subr.bf16.mxu0 0
        %1152 = vmatpush1.bf16.msra.mxu0 %v965
        %1153 = vmatprep.subr.bf16.mxu0 0
        %1154 = vmatpush1.bf16.msra.mxu0 %v964
        %1155 = vmatprep.subr.bf16.mxu0 0
        %1156 = vmatpush1.bf16.msra.mxu0 %v963
        %1157 = vmatprep.subr.bf16.mxu0 0
        %1158 = vmatpush1.bf16.msra.mxu0 %v962
        %1159 = vmatprep.subr.bf16.mxu0 0
        %1160 = vmatpush1.bf16.msra.mxu0 %v961
        %1161 = vmatprep.subr.bf16.mxu0 0
        %1162 = vmatpush1.bf16.msra.mxu0 %v960
        %1163 = vmatprep.subr.bf16.mxu0 0
        %1164 = vmatpush1.bf16.msra.mxu0 %v959
        %1165 = vmatprep.subr.bf16.mxu0 0
        %1166 = vmatpush1.bf16.msra.mxu0 %v958
        %1167 = vmatprep.subr.bf16.mxu0 0
        %1168 = vmatpush2.bf16.msra.mxu0 0
        %1169 = vmatprep.subr.bf16.mxu0 0
        %1170 = vmatpush2.bf16.msra.mxu0 0
        %1171 = vmatprep.subr.bf16.mxu0 0
        %1172 = vmatpush2.bf16.msra.mxu0 0
        %1173 = vmatprep.subr.bf16.mxu0 0
        %1174 = vmatpush2.bf16.msra.mxu0 0
        %1175 = vmatprep.subr.bf16.mxu0 0
        %1176 = vmatpush2.bf16.msra.mxu0 0
        %1177 = vmatprep.subr.bf16.mxu0 0
        %1178 = vmatpush2.bf16.msra.mxu0 0
        %1179 = vmatprep.subr.bf16.mxu0 0
        %1180 = vmatpush2.bf16.msra.mxu0 0
        %1181 = vmatprep.subr.bf16.mxu0 0
        %1182 = vmatpush2.bf16.msra.mxu0 0
        %1183 = vmatprep.mubr.bf16.mxu0 0
        %1184 = vmatmul.mubr.bf16.gmra.mxu0 %v752
        %v1185 = vpop.f32.mrf.mxu0
        %v1186 = vadd.f32 %v1025, %v1185
        %v1187 = vpop.f32.mrf.mxu0
        %v1188 = vpop.f32.mrf.mxu0
        %v1189 = vadd.f32 %v1028, %v1188
        %v1190 = vpop.f32.mrf.mxu0
        %1191 = vmatprep.mubr.bf16.mxu0 0
        %1192 = vmatmul.mubr.bf16.gmra.mxu0 %v755
        %v1193 = vpop.f32.mrf.mxu0
        %v1194 = vadd.f32 %v1033, %v1193
        %v1195 = vpop.f32.mrf.mxu0
        %v1196 = vpop.f32.mrf.mxu0
        %v1197 = vadd.f32 %v1036, %v1196
        %v1198 = vpop.f32.mrf.mxu0
        %1199 = vmatprep.mubr.bf16.mxu0 0
        %1200 = vmatmul.mubr.bf16.gmra.mxu0 %v758
        %v1201 = vpop.f32.mrf.mxu0
        %v1202 = vadd.f32 %v1041, %v1201
        %v1203 = vpop.f32.mrf.mxu0
        %v1204 = vpop.f32.mrf.mxu0
        %v1205 = vadd.f32 %v1044, %v1204
        %v1206 = vpop.f32.mrf.mxu0
        %1207 = vmatprep.mubr.bf16.mxu0 0
        %1208 = vmatmul.mubr.bf16.gmra.mxu0 %v761
        %v1209 = vpop.f32.mrf.mxu0
        %v1210 = vadd.f32 %v1049, %v1209
        %v1211 = vpop.f32.mrf.mxu0
        %v1212 = vpop.f32.mrf.mxu0
        %v1213 = vadd.f32 %v1052, %v1212
        %v1214 = vpop.f32.mrf.mxu0
        %1215 = vmatprep.mubr.bf16.mxu0 0
        %1216 = vmatmul.mubr.bf16.gmra.mxu0 %v764
        %v1217 = vpop.f32.mrf.mxu0
        %v1218 = vadd.f32 %v1057, %v1217
        %v1219 = vpop.f32.mrf.mxu0
        %v1220 = vpop.f32.mrf.mxu0
        %v1221 = vadd.f32 %v1060, %v1220
        %v1222 = vpop.f32.mrf.mxu0
        %1223 = vmatprep.mubr.bf16.mxu0 0
        %1224 = vmatmul.mubr.bf16.gmra.mxu0 %v767
        %v1225 = vpop.f32.mrf.mxu0
        %v1226 = vadd.f32 %v1065, %v1225
        %v1227 = vpop.f32.mrf.mxu0
        %v1228 = vpop.f32.mrf.mxu0
        %v1229 = vadd.f32 %v1068, %v1228
        %v1230 = vpop.f32.mrf.mxu0
        %1231 = vmatprep.mubr.bf16.mxu0 0
        %1232 = vmatmul.mubr.bf16.gmra.mxu0 %v770
        %v1233 = vpop.f32.mrf.mxu0
        %v1234 = vadd.f32 %v1073, %v1233
        %v1235 = vpop.f32.mrf.mxu0
        %v1236 = vpop.f32.mrf.mxu0
        %v1237 = vadd.f32 %v1076, %v1236
        %v1238 = vpop.f32.mrf.mxu0
        %1239 = vmatprep.mubr.bf16.mxu0 0
        %1240 = vmatmul.mubr.bf16.gmra.mxu0 %v773
        %v1241 = vpop.f32.mrf.mxu0
        %v1242 = vadd.f32 %v1081, %v1241
        %v1243 = vpop.f32.mrf.mxu0
        %v1244 = vpop.f32.mrf.mxu0
        %v1245 = vadd.f32 %v1084, %v1244
        %v1246 = vpop.f32.mrf.mxu0
        %1247 = vmatprep.mubr.bf16.mxu0 0
        %1248 = vmatmul.mubr.bf16.gmra.mxu0 %v776
        %v1249 = vpop.f32.mrf.mxu0
        %v1250 = vadd.f32 %v1089, %v1249
        %v1251 = vpop.f32.mrf.mxu0
        %v1252 = vpop.f32.mrf.mxu0
        %v1253 = vadd.f32 %v1092, %v1252
        %v1254 = vpop.f32.mrf.mxu0
        %1255 = vmatprep.mubr.bf16.mxu0 0
        %1256 = vmatmul.mubr.bf16.gmra.mxu0 %v779
        %v1257 = vpop.f32.mrf.mxu0
        %v1258 = vadd.f32 %v1097, %v1257
        %v1259 = vpop.f32.mrf.mxu0
        %v1260 = vpop.f32.mrf.mxu0
        %v1261 = vadd.f32 %v1100, %v1260
        %v1262 = vpop.f32.mrf.mxu0
        %1263 = vmatprep.mubr.bf16.mxu0 0
        %1264 = vmatmul.mubr.bf16.gmra.mxu0 %v782
        %v1265 = vpop.f32.mrf.mxu0
        %v1266 = vadd.f32 %v1105, %v1265
        %v1267 = vpop.f32.mrf.mxu0
        %v1268 = vpop.f32.mrf.mxu0
        %v1269 = vadd.f32 %v1108, %v1268
        %v1270 = vpop.f32.mrf.mxu0
        %1271 = vmatprep.mubr.bf16.mxu0 0
        %1272 = vmatmul.mubr.bf16.gmra.mxu0 %v785
        %v1273 = vpop.f32.mrf.mxu0
        %v1274 = vadd.f32 %v1113, %v1273
        %v1275 = vpop.f32.mrf.mxu0
        %v1276 = vpop.f32.mrf.mxu0
        %v1277 = vadd.f32 %v1116, %v1276
        %v1278 = vpop.f32.mrf.mxu0
        %1279 = vmatprep.mubr.bf16.mxu0 0
        %1280 = vmatmul.mubr.bf16.gmra.mxu0 %v788
        %v1281 = vpop.f32.mrf.mxu0
        %v1282 = vadd.f32 %v1121, %v1281
        %v1283 = vpop.f32.mrf.mxu0
        %v1284 = vpop.f32.mrf.mxu0
        %v1285 = vadd.f32 %v1124, %v1284
        %v1286 = vpop.f32.mrf.mxu0
        %1287 = vmatprep.mubr.bf16.mxu0 0
        %1288 = vmatmul.mubr.bf16.gmra.mxu0 %v791
        %v1289 = vpop.f32.mrf.mxu0
        %v1290 = vadd.f32 %v1129, %v1289
        %v1291 = vpop.f32.mrf.mxu0
        %v1292 = vpop.f32.mrf.mxu0
        %v1293 = vadd.f32 %v1132, %v1292
        %v1294 = vpop.f32.mrf.mxu0
        %1295 = vmatprep.mubr.bf16.mxu0 0
        %1296 = vmatmul.mubr.bf16.gmra.mxu0 %v794
        %v1297 = vpop.f32.mrf.mxu0
        %v1298 = vadd.f32 %v1137, %v1297
        %v1299 = vpop.f32.mrf.mxu0
        %v1300 = vpop.f32.mrf.mxu0
        %v1301 = vadd.f32 %v1140, %v1300
        %v1302 = vpop.f32.mrf.mxu0
        %1303 = vmatprep.mubr.bf16.mxu0 0
        %1304 = vmatmul.mubr.bf16.gmra.mxu0 %v797
        %v1305 = vpop.f32.mrf.mxu0
        %v1306 = vadd.f32 %v1145, %v1305
        %v1307 = vpop.f32.mrf.mxu0
        %v1308 = vpop.f32.mrf.mxu0
        %v1309 = vadd.f32 %v1148, %v1308
        %v1310 = vpop.f32.mrf.mxu0
        %1311 = vdwg.mxu0
        %v1312 = vadd.f32 %v446, %v1186
        %v1313 = vadd.f32 %v447, %v1189
        %v1314 = vadd.f32 %v448, %v1194
        %v1315 = vadd.f32 %v449, %v1197
        %v1316 = vadd.f32 %v450, %v1202
        %v1317 = vadd.f32 %v451, %v1205
        %v1318 = vadd.f32 %v452, %v1210
        %v1319 = vadd.f32 %v453, %v1213
        %v1320 = vadd.f32 %v454, %v1218
        %v1321 = vadd.f32 %v455, %v1221
        %v1322 = vadd.f32 %v456, %v1226
        %v1323 = vadd.f32 %v457, %v1229
        %v1324 = vadd.f32 %v458, %v1234
        %v1325 = vadd.f32 %v459, %v1237
        %v1326 = vadd.f32 %v460, %v1242
        %v1327 = vadd.f32 %v461, %v1245
        %v1328 = vadd.f32 %v462, %v1250
        %v1329 = vadd.f32 %v463, %v1253
        %v1330 = vadd.f32 %v464, %v1258
        %v1331 = vadd.f32 %v465, %v1261
        %v1332 = vadd.f32 %v466, %v1266
        %v1333 = vadd.f32 %v467, %v1269
        %v1334 = vadd.f32 %v468, %v1274
        %v1335 = vadd.f32 %v469, %v1277
        %v1336 = vadd.f32 %v470, %v1282
        %v1337 = vadd.f32 %v471, %v1285
        %v1338 = vadd.f32 %v472, %v1290
        %v1339 = vadd.f32 %v473, %v1293
        %v1340 = vadd.f32 %v474, %v1298
        %v1341 = vadd.f32 %v475, %v1301
        %v1342 = vadd.f32 %v476, %v1306
        %v1343 = vadd.f32 %v477, %v1309
        %1344 = vst [vmem:[#allocation2] sm:$0xff] %v1312
        %1345 = vst [vmem:[#allocation2 + $0x8] sm:$0xff] %v1313
        %1346 = vst [vmem:[#allocation2 + $0x10] sm:$0xff] %v1314
        %1347 = vst [vmem:[#allocation2 + $0x18] sm:$0xff] %v1315
        %1348 = vst [vmem:[#allocation2 + $0x20] sm:$0xff] %v1316
        %1349 = vst [vmem:[#allocation2 + $0x28] sm:$0xff] %v1317
        %1350 = vst [vmem:[#allocation2 + $0x30] sm:$0xff] %v1318
        %1351 = vst [vmem:[#allocation2 + $0x38] sm:$0xff] %v1319
        %1352 = vst [vmem:[#allocation2 + $0x40] sm:$0xff] %v1320
        %1353 = vst [vmem:[#allocation2 + $0x48] sm:$0xff] %v1321
        %1354 = vst [vmem:[#allocation2 + $0x50] sm:$0xff] %v1322
        %1355 = vst [vmem:[#allocation2 + $0x58] sm:$0xff] %v1323
        %1356 = vst [vmem:[#allocation2 + $0x60] sm:$0xff] %v1324
        %1357 = vst [vmem:[#allocation2 + $0x68] sm:$0xff] %v1325
        %1358 = vst [vmem:[#allocation2 + $0x70] sm:$0xff] %v1326
        %1359 = vst [vmem:[#allocation2 + $0x78] sm:$0xff] %v1327
        %1360 = vst [vmem:[#allocation2 + $0x80] sm:$0xff] %v1328
        %1361 = vst [vmem:[#allocation2 + $0x88] sm:$0xff] %v1329
        %1362 = vst [vmem:[#allocation2 + $0x90] sm:$0xff] %v1330
        %1363 = vst [vmem:[#allocation2 + $0x98] sm:$0xff] %v1331
        %1364 = vst [vmem:[#allocation2 + $0xa0] sm:$0xff] %v1332
        %1365 = vst [vmem:[#allocation2 + $0xa8] sm:$0xff] %v1333
        %1366 = vst [vmem:[#allocation2 + $0xb0] sm:$0xff] %v1334
        %1367 = vst [vmem:[#allocation2 + $0xb8] sm:$0xff] %v1335
        %1368 = vst [vmem:[#allocation2 + $0xc0] sm:$0xff] %v1336
        %1369 = vst [vmem:[#allocation2 + $0xc8] sm:$0xff] %v1337
        %1370 = vst [vmem:[#allocation2 + $0xd0] sm:$0xff] %v1338
        %1371 = vst [vmem:[#allocation2 + $0xd8] sm:$0xff] %v1339
        %1372 = vst [vmem:[#allocation2 + $0xe0] sm:$0xff] %v1340
        %1373 = vst [vmem:[#allocation2 + $0xe8] sm:$0xff] %v1341
        %1374 = vst [vmem:[#allocation2 + $0xf0] sm:$0xff] %v1342
        %1375 = vst [vmem:[#allocation2 + $0xf8] sm:$0xff] %v1343
        %p1376 = scmp.eq.s32.totalorder %s21, 6
        // Predicated region
        $region63: #{_lambda_.43} parent=53 // pred_check
          %p1377 = pneg %p1376
        $region64: #{_lambda_.43} parent=53 // pred_check_branch
          %1379 = sbr.rel (%p1377) target = $region66
        $region65: #{_lambda_.43} parent=53 // pred_region
          %v1380 = vld [vmem:[#allocation2] sm:$0xff]
          %v1381 = vld [vmem:[#allocation2 + $0x8] sm:$0xff]
          %v1382 = vld [vmem:[#allocation2 + $0x10] sm:$0xff]
          %v1383 = vld [vmem:[#allocation2 + $0x18] sm:$0xff]
          %v1384 = vld [vmem:[#allocation2 + $0x20] sm:$0xff]
          %v1385 = vld [vmem:[#allocation2 + $0x28] sm:$0xff]
          %v1386 = vld [vmem:[#allocation2 + $0x30] sm:$0xff]
          %v1387 = vld [vmem:[#allocation2 + $0x38] sm:$0xff]
          %v1388 = vld [vmem:[#allocation2 + $0x40] sm:$0xff]
          %v1389 = vld [vmem:[#allocation2 + $0x48] sm:$0xff]
          %v1390 = vld [vmem:[#allocation2 + $0x50] sm:$0xff]
          %v1391 = vld [vmem:[#allocation2 + $0x58] sm:$0xff]
          %v1392 = vld [vmem:[#allocation2 + $0x60] sm:$0xff]
          %v1393 = vld [vmem:[#allocation2 + $0x68] sm:$0xff]
          %v1394 = vld [vmem:[#allocation2 + $0x70] sm:$0xff]
          %v1395 = vld [vmem:[#allocation2 + $0x78] sm:$0xff]
          %v1396 = vld [vmem:[#allocation2 + $0x80] sm:$0xff]
          %v1397 = vld [vmem:[#allocation2 + $0x88] sm:$0xff]
          %v1398 = vld [vmem:[#allocation2 + $0x90] sm:$0xff]
          %v1399 = vld [vmem:[#allocation2 + $0x98] sm:$0xff]
          %v1400 = vld [vmem:[#allocation2 + $0xa0] sm:$0xff]
          %v1401 = vld [vmem:[#allocation2 + $0xa8] sm:$0xff]
          %v1402 = vld [vmem:[#allocation2 + $0xb0] sm:$0xff]
          %v1403 = vld [vmem:[#allocation2 + $0xb8] sm:$0xff]
          %v1404 = vld [vmem:[#allocation2 + $0xc0] sm:$0xff]
          %v1405 = vld [vmem:[#allocation2 + $0xc8] sm:$0xff]
          %v1406 = vld [vmem:[#allocation2 + $0xd0] sm:$0xff]
          %v1407 = vld [vmem:[#allocation2 + $0xd8] sm:$0xff]
          %v1408 = vld [vmem:[#allocation2 + $0xe0] sm:$0xff]
          %v1409 = vld [vmem:[#allocation2 + $0xe8] sm:$0xff]
          %v1410 = vld [vmem:[#allocation2 + $0xf0] sm:$0xff]
          %v1411 = vld [vmem:[#allocation2 + $0xf8] sm:$0xff]
          %v1412 = vld [vmem:[%s399] sm:$0x1]
          %v1414 = vlaneseq
          %v1415 = vshrl.u32 %v1414, 7
          %v1416 = vsub.s32 0, %v1415
          %v1417 = vrot.slane %v1412, %v1416
          %v1419 = vadd.f32 %v1380, %v1417
          %v1420 = vadd.f32 %v1381, %v1417
          %v1421 = vadd.f32 %v1382, %v1417
          %v1422 = vadd.f32 %v1383, %v1417
          %v1423 = vadd.f32 %v1384, %v1417
          %v1424 = vadd.f32 %v1385, %v1417
          %v1425 = vadd.f32 %v1386, %v1417
          %v1426 = vadd.f32 %v1387, %v1417
          %v1427 = vadd.f32 %v1388, %v1417
          %v1428 = vadd.f32 %v1389, %v1417
          %v1429 = vadd.f32 %v1390, %v1417
          %v1430 = vadd.f32 %v1391, %v1417
          %v1431 = vadd.f32 %v1392, %v1417
          %v1432 = vadd.f32 %v1393, %v1417
          %v1433 = vadd.f32 %v1394, %v1417
          %v1434 = vadd.f32 %v1395, %v1417
          %v1435 = vadd.f32 %v1396, %v1417
          %v1436 = vadd.f32 %v1397, %v1417
          %v1437 = vadd.f32 %v1398, %v1417
          %v1438 = vadd.f32 %v1399, %v1417
          %v1439 = vadd.f32 %v1400, %v1417
          %v1440 = vadd.f32 %v1401, %v1417
          %v1441 = vadd.f32 %v1402, %v1417
          %v1442 = vadd.f32 %v1403, %v1417
          %v1443 = vadd.f32 %v1404, %v1417
          %v1444 = vadd.f32 %v1405, %v1417
          %v1445 = vadd.f32 %v1406, %v1417
          %v1446 = vadd.f32 %v1407, %v1417
          %v1447 = vadd.f32 %v1408, %v1417
          %v1448 = vadd.f32 %v1409, %v1417
          %v1449 = vadd.f32 %v1410, %v1417
          %v1450 = vadd.f32 %v1411, %v1417
          %v1451 = vtanh.pop %v1419
          %v1452 = vtanh.pop %v1420
          %v1453 = vtanh.pop %v1421
          %v1454 = vtanh.pop %v1422
          %v1455 = vtanh.pop %v1423
          %v1456 = vtanh.pop %v1424
          %v1457 = vtanh.pop %v1425
          %v1458 = vtanh.pop %v1426
          %v1459 = vtanh.pop %v1427
          %v1460 = vtanh.pop %v1428
          %v1461 = vtanh.pop %v1429
          %v1462 = vtanh.pop %v1430
          %v1463 = vtanh.pop %v1431
          %v1464 = vtanh.pop %v1432
          %v1465 = vtanh.pop %v1433
          %v1466 = vtanh.pop %v1434
          %v1467 = vtanh.pop %v1435
          %v1468 = vtanh.pop %v1436
          %v1469 = vtanh.pop %v1437
          %v1470 = vtanh.pop %v1438
          %v1471 = vtanh.pop %v1439
          %v1472 = vtanh.pop %v1440
          %v1473 = vtanh.pop %v1441
          %v1474 = vtanh.pop %v1442
          %v1475 = vtanh.pop %v1443
          %v1476 = vtanh.pop %v1444
          %v1477 = vtanh.pop %v1445
          %v1478 = vtanh.pop %v1446
          %v1479 = vtanh.pop %v1447
          %v1480 = vtanh.pop %v1448
          %v1481 = vtanh.pop %v1449
          %v1482 = vtanh.pop %v1450
          %v1483 = vmul.f32 %v1451, 150.0
          %v1484 = vmul.f32 %v1452, 150.0
          %v1485 = vmul.f32 %v1453, 150.0
          %v1486 = vmul.f32 %v1454, 150.0
          %v1487 = vmul.f32 %v1455, 150.0
          %v1488 = vmul.f32 %v1456, 150.0
          %v1489 = vmul.f32 %v1457, 150.0
          %v1490 = vmul.f32 %v1458, 150.0
          %v1491 = vmul.f32 %v1459, 150.0
          %v1492 = vmul.f32 %v1460, 150.0
          %v1493 = vmul.f32 %v1461, 150.0
          %v1494 = vmul.f32 %v1462, 150.0
          %v1495 = vmul.f32 %v1463, 150.0
          %v1496 = vmul.f32 %v1464, 150.0
          %v1497 = vmul.f32 %v1465, 150.0
          %v1498 = vmul.f32 %v1466, 150.0
          %v1499 = vmul.f32 %v1467, 150.0
          %v1500 = vmul.f32 %v1468, 150.0
          %v1501 = vmul.f32 %v1469, 150.0
          %v1502 = vmul.f32 %v1470, 150.0
          %v1503 = vmul.f32 %v1471, 150.0
          %v1504 = vmul.f32 %v1472, 150.0
          %v1505 = vmul.f32 %v1473, 150.0
          %v1506 = vmul.f32 %v1474, 150.0
          %v1507 = vmul.f32 %v1475, 150.0
          %v1508 = vmul.f32 %v1476, 150.0
          %v1509 = vmul.f32 %v1477, 150.0
          %v1510 = vmul.f32 %v1478, 150.0
          %v1511 = vmul.f32 %v1479, 150.0
          %v1512 = vmul.f32 %v1480, 150.0
          %v1513 = vmul.f32 %v1481, 150.0
          %v1514 = vmul.f32 %v1482, 150.0
          %1515 = vst [vmem:[%s407] sm:$0xff] %v1483
          %1516 = vst [vmem:[%s407 + $0x8] sm:$0xff] %v1484
          %1517 = vst [vmem:[%s407 + $0x10] sm:$0xff] %v1485
          %1518 = vst [vmem:[%s407 + $0x18] sm:$0xff] %v1486
          %1519 = vst [vmem:[%s407 + $0x20] sm:$0xff] %v1487
          %1520 = vst [vmem:[%s407 + $0x28] sm:$0xff] %v1488
          %1521 = vst [vmem:[%s407 + $0x30] sm:$0xff] %v1489
          %1522 = vst [vmem:[%s407 + $0x38] sm:$0xff] %v1490
          %1523 = vst [vmem:[%s407 + $0x40] sm:$0xff] %v1491
          %1524 = vst [vmem:[%s407 + $0x48] sm:$0xff] %v1492
          %1525 = vst [vmem:[%s407 + $0x50] sm:$0xff] %v1493
          %1526 = vst [vmem:[%s407 + $0x58] sm:$0xff] %v1494
          %1527 = vst [vmem:[%s407 + $0x60] sm:$0xff] %v1495
          %1528 = vst [vmem:[%s407 + $0x68] sm:$0xff] %v1496
          %1529 = vst [vmem:[%s407 + $0x70] sm:$0xff] %v1497
          %1530 = vst [vmem:[%s407 + $0x78] sm:$0xff] %v1498
          %1531 = vst [vmem:[%s407 + $0x80] sm:$0xff] %v1499
          %1532 = vst [vmem:[%s407 + $0x88] sm:$0xff] %v1500
          %1533 = vst [vmem:[%s407 + $0x90] sm:$0xff] %v1501
          %1534 = vst [vmem:[%s407 + $0x98] sm:$0xff] %v1502
          %1535 = vst [vmem:[%s407 + $0xa0] sm:$0xff] %v1503
          %1536 = vst [vmem:[%s407 + $0xa8] sm:$0xff] %v1504
          %1537 = vst [vmem:[%s407 + $0xb0] sm:$0xff] %v1505
          %1538 = vst [vmem:[%s407 + $0xb8] sm:$0xff] %v1506
          %1539 = vst [vmem:[%s407 + $0xc0] sm:$0xff] %v1507
          %1540 = vst [vmem:[%s407 + $0xc8] sm:$0xff] %v1508
          %1541 = vst [vmem:[%s407 + $0xd0] sm:$0xff] %v1509
          %1542 = vst [vmem:[%s407 + $0xd8] sm:$0xff] %v1510
          %1543 = vst [vmem:[%s407 + $0xe0] sm:$0xff] %v1511
          %1544 = vst [vmem:[%s407 + $0xe8] sm:$0xff] %v1512
          %1545 = vst [vmem:[%s407 + $0xf0] sm:$0xff] %v1513
          %1546 = vst [vmem:[%s407 + $0xf8] sm:$0xff] %v1514
        $region66: #{_lambda_.43} parent=53 // pred_fallthru
          _
        %s1547 = smul.u32 32, %s19
        %p1548 = scmp.lt.s32.totalorder %s1547, 63
        %s1549 = scalar_select %p1548, %s1547, 63
        %p1550 = scmp.lt.s32.totalorder %s20, 0
        %s1551 = scalar_select %p1550, %s20, 0
        %s1552 = sadd.s32 %s1551, %s1549
        %s1553 = smul.addr %s1552, 8
        %s1554 = scalar_lea.vmem %s3, %s1553
        // Predicated region
        $region67: #{_lambda_.43} parent=53 // pred_check
          %p1555 = pneg %p135
        $region68: #{_lambda_.43} parent=53 // pred_check_branch
          %1557 = sbr.rel (%p1555) target = $region70
        $region69: #{_lambda_.43} parent=53 // pred_region
          %s1558 = smul.u32 32, %s19
        $region70: #{_lambda_.43} parent=53 // pred_fallthru
          _
      $region54: #{_lambda_.43} parent=5 // pred_fallthru
        _
      %p1559 = scmp.le.s32.totalorder 2, %s9
      // Predicated region
      $region71: #{_lambda_.43} parent=5 // pred_check
        %p1560 = pneg %p1559
      $region72: #{_lambda_.43} parent=5 // pred_check_branch
        %1562 = sbr.rel (%p1560) target = $region74
      $region73: #{_lambda_.43} parent=5 // pred_region
        %s1563 = ssub.s32 %s9, 2
        // Predicated region
        $region75: #{_lambda_.43} parent=73 // pred_check
          %p1564 = pneg %p141
        $region76: #{_lambda_.43} parent=73 // pred_check_branch
          %1566 = sbr.rel (%p1564) target = $region78
        $region77: #{_lambda_.43} parent=73 // pred_region
          %s1567 = smul.u32 32, %s22
          %p1568 = scmp.lt.s32.totalorder %s1567, 63
          %s1569 = scalar_select %p1568, %s1567, 63
          %p1570 = scmp.lt.s32.totalorder %s23, 0
          %s1571 = scalar_select %p1570, %s23, 0
          %s1572 = sadd.s32 %s1571, %s1569
          %s1573 = smul.addr %s1572, 8
          %s1574 = scalar_lea.vmem %s3, %s1573
        $region78: #{_lambda_.43} parent=73 // pred_fallthru
          _
      $region74: #{_lambda_.43} parent=5 // pred_fallthru
        _
    $region6: #{_lambda_.43} parent=1 // loop_footer
      %s13 = sadd.s32 1, %s9
    $region7: #{_lambda_.43} parent=1 // loop_footer_branch
      %8 = sbr.rel target = $region3
    $region8: #{_lambda_.43} parent=1 // loop_exit
      _

</llo_original>
